<compile_context>
chip_gen: v7x
topology: tpu7x:2x2x1
jax: 0.10.0
libtpu: 0.0.40
codegen_flags: <defaults>
</compile_context>

<pallas_src>
import functools
import math

import jax
import jax.numpy as jnp
from jax.experimental import pallas as pl
from jax.experimental.pallas import tpu as pltpu

EPS = 1e-5  # nn.BatchNorm2d default eps (eval mode, stats folded into conv)


def _round_up(x, m):
    return ((x + m - 1) // m) * m


# ----------------------------------------------------------------------------
# Pallas kernels
# ----------------------------------------------------------------------------
def _mm_bias_silu_kernel(x_ref, w_ref, b_ref, o_ref, acc_ref):
    """acc += x @ w (bf16 MXU, f32 accumulate); last K step: SiLU(acc + b)."""
    k = pl.program_id(2)

    @pl.when(k == 0)
    def _():
        acc_ref[...] = jnp.zeros_like(acc_ref)

    acc_ref[...] += jnp.dot(x_ref[...], w_ref[...],
                            preferred_element_type=jnp.float32)

    @pl.when(k == pl.num_programs(2) - 1)
    def _():
        z = acc_ref[...] + b_ref[...]
        # Numerically-stable sigmoid: exp on EUP, approx reciprocal on EUP,
        # no overflow possible since exp(-|z|) <= 1.
        e = jnp.exp(-jnp.abs(z))
        sig_pos = pl.reciprocal(1.0 + e, approx=True)
        sig = jnp.where(z >= 0.0, sig_pos, 1.0 - sig_pos)
        o_ref[...] = (z * sig).astype(o_ref.dtype)


def _maxpool5_kernel(x_ref, o_ref):
    """5x5 stride-1 max pool; input pre-padded by 2 with -max.  Separable:
    5 row-shift maxes then 5 col-shift maxes (8 vector maxes total)."""
    H, W = o_ref.shape[1], o_ref.shape[2]
    x = x_ref[0]                       # (H+4, W+4, CT)
    r = x[0:H]
    for dy in range(1, 5):
        r = jnp.maximum(r, x[dy:dy + H])
    c = r[:, 0:W, :]
    for dx in range(1, 5):
        c = jnp.maximum(c, r[:, dx:dx + W, :])
    o_ref[0] = c


# ----------------------------------------------------------------------------
# Pallas wrappers
# ----------------------------------------------------------------------------
_MM_COMPILER_PARAMS = pltpu.CompilerParams(
    dimension_semantics=("parallel", "parallel", "arbitrary"),
    vmem_limit_bytes=32 * 1024 * 1024,  # explicit budget; safe on v5e/v6e/v7x
)


def fused_matmul_bias_silu(x, w, b):
    """x: (M, K) bf16, w: (K, C) bf16, b: (C,) f32 -> SiLU(x @ w + b) bf16."""
    M, K = x.shape
    _, C = w.shape

    # M tile: 256 (native v6e/v7x MXU rows) when possible, else 16-aligned.
    TM = 256 if M >= 256 else _round_up(M, 16)
    Mp = _round_up(M, TM)
    # C / K padded to 128 and tiled with the largest 128-multiple divisor.
    Cp = _round_up(C, 128)
    TC = Cp if Cp <= 256 else (256 if Cp % 256 == 0 else 128)
    Kp = _round_up(K, 128)
    TK = Kp if Kp <= 512 else (512 if Kp % 512 == 0 else
                               (256 if Kp % 256 == 0 else 128))

    xp = x if (Mp == M and Kp == K) else jnp.pad(x, ((0, Mp - M), (0, Kp - K)))
    wp = w if (Kp == K and Cp == C) else jnp.pad(w, ((0, Kp - K), (0, Cp - C)))
    bp = (b if Cp == C else jnp.pad(b, (0, Cp - C))).reshape(1, Cp)

    out = pl.pallas_call(
        _mm_bias_silu_kernel,
        out_shape=jax.ShapeDtypeStruct((Mp, Cp), jnp.bfloat16),
        grid=(Mp // TM, Cp // TC, Kp // TK),
        in_specs=[
            pl.BlockSpec((TM, TK), lambda i, j, k: (i, k)),
            pl.BlockSpec((TK, TC), lambda i, j, k: (k, j)),
            pl.BlockSpec((1, TC), lambda i, j, k: (0, j)),
        ],
        out_specs=pl.BlockSpec((TM, TC), lambda i, j, k: (i, j)),
        scratch_shapes=[pltpu.VMEM((TM, TC), jnp.float32)],
        compiler_params=_MM_COMPILER_PARAMS,
    )(xp, wp, bp)

    if Mp != M or Cp != C:
        out = out[:M, :C]
    return out


def max_pool5_same(x):
    """MaxPool2d(kernel=5, stride=1, padding=2) on NHWC (bf16)."""
    N, H, W, C = x.shape
    neg = float(jnp.finfo(jnp.bfloat16).min)
    xp = jnp.pad(x, ((0, 0), (2, 2), (2, 2), (0, 0)), constant_values=neg)
    CT = 128 if C % 128 == 0 else C
    return pl.pallas_call(
        _maxpool5_kernel,
        out_shape=jax.ShapeDtypeStruct((N, H, W, C), x.dtype),
        grid=(N, C // CT),
        in_specs=[pl.BlockSpec((1, H + 4, W + 4, CT),
                               lambda n, c: (n, 0, 0, c))],
        out_specs=pl.BlockSpec((1, H, W, CT), lambda n, c: (n, 0, 0, c)),
        compiler_params=pltpu.CompilerParams(
            dimension_semantics=("parallel", "parallel")),
    )(xp)


# ----------------------------------------------------------------------------
# Parameter init (deterministic, synthetic) — BatchNorm folded into conv
# ----------------------------------------------------------------------------
class ParamGen:
    def __init__(self, key):
        self.key = key
        self.i = 0

    def next(self):
        self.i += 1
        return jax.random.fold_in(self.key, self.i)


def init_base_conv(pg, cin, cout, ksize, stride):
    w = jax.random.normal(pg.next(), (cout, cin, ksize, ksize), jnp.float32)
    w = w * (1.0 / math.sqrt(cin * ksize * ksize))
    gamma = 1.0 + 0.1 * jax.random.normal(pg.next(), (cout,), jnp.float32)
    beta = 0.1 * jax.random.normal(pg.next(), (cout,), jnp.float32)
    mean = 0.1 * jax.random.normal(pg.next(), (cout,), jnp.float32)
    var = 1.0 + 0.1 * jax.random.uniform(pg.next(), (cout,), jnp.float32)
    scale = gamma / jnp.sqrt(var + EPS)
    # (Cout, Cin, kh, kw) -> (kh, kw, Cin, Cout) -> (K, Cout), fold BN scale.
    w_mat = jnp.transpose(w, (2, 3, 1, 0)).reshape(ksize * ksize * cin, cout)
    return {"w": (w_mat * scale[None, :]).astype(jnp.bfloat16),
            "b": beta - mean * scale,          # bias stays f32
            "ksize": ksize,
            "stride": stride}


def init_bottleneck(pg, cin, cout, shortcut, expansion=1.0):
    hidden = int(cout * expansion)
    return {"conv1": init_base_conv(pg, cin, hidden, 1, 1),
            "conv2": init_base_conv(pg, hidden, cout, 3, 1),
            "add": bool(shortcut and cin == cout)}


def init_csp_layer(pg, cin, cout, n, shortcut, expansion=0.5):
    hidden = int(cout * expansion)
    c1 = init_base_conv(pg, cin, hidden, 1, 1)
    c2 = init_base_conv(pg, cin, hidden, 1, 1)
    # Fuse conv1 + conv2 (both 1x1 over the same input) into one matmul.
    conv12 = {"w": jnp.concatenate([c1["w"], c2["w"]], axis=1),
              "b": jnp.concatenate([c1["b"], c2["b"]], axis=0),
              "ksize": 1, "stride": 1}
    return {"conv12": conv12,
            "hidden": hidden,
            "conv3": init_base_conv(pg, 2 * hidden, cout, 1, 1),
            "m": [init_bottleneck(pg, hidden, hidden, shortcut)
                  for _ in range(n)]}


def init_focus(pg, cin, cout, ksize):
    return {"conv": init_base_conv(pg, cin * 4, cout, ksize, 1)}


def init_spp(pg, cin, cout, ks=(5, 9, 13)):
    assert tuple(ks) == (5, 9, 13)  # SPPF chaining relies on this
    hidden = cin // 2
    return {"conv1": init_base_conv(pg, cin, hidden, 1, 1),
            "conv2": init_base_conv(pg, hidden * (len(ks) + 1), cout, 1, 1),
            "ks": ks}


def init_darknet(pg, img_channel, dep_mul, wid_mul):
    bc = int(wid_mul * 64)
    bd = max(round(dep_mul * 3), 1)
    return {
        "stem": init_focus(pg, img_channel, bc, 3),
        "dark2": {"conv": init_base_conv(pg, bc, bc * 2, 3, 2),
                  "csp": init_csp_layer(pg, bc * 2, bc * 2, bd, True)},
        "dark3": {"conv": init_base_conv(pg, bc * 2, bc * 4, 3, 2),
                  "csp": init_csp_layer(pg, bc * 4, bc * 4, bd * 3, True)},
        "dark4": {"conv": init_base_conv(pg, bc * 4, bc * 8, 3, 2),
                  "csp": init_csp_layer(pg, bc * 8, bc * 8, bd * 3, True)},
        "dark5": {"conv": init_base_conv(pg, bc * 8, bc * 16, 3, 2),
                  "spp": init_spp(pg, bc * 16, bc * 16),
                  "csp": init_csp_layer(pg, bc * 16, bc * 16, bd, False)},
    }


def init_yolo_pafpn(key, img_channel=3, depth=1.0, width=1.0,
                    in_channels=(256, 512, 1024)):
    pg = ParamGen(key)
    c = [int(ci * width) for ci in in_channels]
    n = round(3 * depth)
    return {
        "backbone": init_darknet(pg, img_channel, depth, width),
        "lateral_conv0": init_base_conv(pg, c[2], c[1], 1, 1),
        "C3_p4": init_csp_layer(pg, 2 * c[1], c[1], n, False),
        "reduce_conv1": init_base_conv(pg, c[1], c[0], 1, 1),
        "C3_p3": init_csp_layer(pg, 2 * c[0], c[0], n, False),
        "bu_conv2": init_base_conv(pg, c[0], c[0], 3, 2),
        "C3_n3": init_csp_layer(pg, 2 * c[0], c[1], n, False),
        "bu_conv1": init_base_conv(pg, c[1], c[1], 3, 2),
        "C3_n4": init_csp_layer(pg, 2 * c[1], c[2], n, False),
    }


# ----------------------------------------------------------------------------
# Forward ops (NHWC, bf16 activations)
# ----------------------------------------------------------------------------
def base_conv(x, p):
    """BaseConv = Conv2d(no bias) + BN(eval, folded) + SiLU.  x: NHWC bf16."""
    k, s = p["ksize"], p["stride"]
    pad = (k - 1) // 2
    N, H, W, C = x.shape
    Ho = (H + 2 * pad - k) // s + 1
    Wo = (W + 2 * pad - k) // s + 1
    if k == 1 and s == 1:
        patches = x
    else:
        # Note: im2col (bf16) is still materialized by XLA; a fully in-kernel
        # patch gather would need overlapping/strided BlockSpecs and is left
        # out here in favor of robustness.
        xp = jnp.pad(x, ((0, 0), (pad, pad), (pad, pad), (0, 0)))
        cols = []
        for dy in range(k):
            for dx in range(k):
                cols.append(xp[:, dy:dy + s * (Ho - 1) + 1:s,
                               dx:dx + s * (Wo - 1) + 1:s, :])
        patches = jnp.concatenate(cols, axis=-1)   # K order = (kh, kw, Cin)
    M = N * Ho * Wo
    out = fused_matmul_bias_silu(patches.reshape(M, -1), p["w"], p["b"])
    return out.reshape(N, Ho, Wo, -1)


def bottleneck(x, p):
    y = base_conv(base_conv(x, p["conv1"]), p["conv2"])
    return y + x if p["add"] else y


def csp_layer(x, p):
    hidden = p["hidden"]
    y = base_conv(x, p["conv12"])            # fused conv1 + conv2 (1x1)
    x1, x2 = y[..., :hidden], y[..., hidden:]
    for bp in p["m"]:
        x1 = bottleneck(x1, bp)
    return base_conv(jnp.concatenate([x1, x2], axis=-1), p["conv3"])


def focus(x, p):
    tl = x[:, ::2, ::2, :]
    tr = x[:, ::2, 1::2, :]
    bl = x[:, 1::2, ::2, :]
    br = x[:, 1::2, 1::2, :]
    x = jnp.concatenate([tl, bl, tr, br], axis=-1)
    return base_conv(x, p["conv"])


def spp(x, p):
    x = base_conv(x, p["conv1"])
    # SPPF: chained 5x5/stride-1 max pools == max pools with windows 5, 9, 13.
    m1 = max_pool5_same(x)
    m2 = max_pool5_same(m1)
    m3 = max_pool5_same(m2)
    return base_conv(jnp.concatenate([x, m1, m2, m3], axis=-1), p["conv2"])


def darknet_forward(x, p):
    x = focus(x, p["stem"])
    x = csp_layer(base_conv(x, p["dark2"]["conv"]), p["dark2"]["csp"])
    d3 = csp_layer(base_conv(x, p["dark3"]["conv"]), p["dark3"]["csp"])
    d4 = csp_layer(base_conv(d3, p["dark4"]["conv"]), p["dark4"]["csp"])
    x = base_conv(d4, p["dark5"]["conv"])
    x = spp(x, p["dark5"]["spp"])
    d5 = csp_layer(x, p["dark5"]["csp"])
    return {"dark3": d3, "dark4": d4, "dark5": d5}


def upsample2x(x):
    """Nearest-neighbor 2x upsample via broadcast/reshape (no double repeat)."""
    N, H, W, C = x.shape
    y = jnp.broadcast_to(x[:, :, None, :, None, :], (N, H, 2, W, 2, C))
    return y.reshape(N, 2 * H, 2 * W, C)


def yolo_pafpn_forward(x_nchw, params):
    x = jnp.transpose(x_nchw, (0, 2, 3, 1)).astype(jnp.bfloat16)  # NCHW->NHWC
    feats = darknet_forward(x, params["backbone"])
    x2, x1, x0 = feats["dark3"], feats["dark4"], feats["dark5"]

    fpn_out0 = base_conv(x0, params["lateral_conv0"])
    f_out0 = upsample2x(fpn_out0)
    f_out0 = jnp.concatenate([f_out0, x1], axis=-1)
    f_out0 = csp_layer(f_out0, params["C3_p4"])

    fpn_out1 = base_conv(f_out0, params["reduce_conv1"])
    f_out1 = upsample2x(fpn_out1)
    f_out1 = jnp.concatenate([f_out1, x2], axis=-1)
    pan_out2 = csp_layer(f_out1, params["C3_p3"])

    p_out1 = base_conv(pan_out2, params["bu_conv2"])
    p_out1 = jnp.concatenate([p_out1, fpn_out1], axis=-1)
    pan_out1 = csp_layer(p_out1, params["C3_n3"])

    p_out0 = base_conv(pan_out1, params["bu_conv1"])
    p_out0 = jnp.concatenate([p_out0, fpn_out0], axis=-1)
    pan_out0 = csp_layer(p_out0, params["C3_n4"])

    to_nchw = lambda t: jnp.transpose(t.astype(jnp.float32), (0, 3, 1, 2))
    return to_nchw(pan_out2), to_nchw(pan_out1), to_nchw(pan_out0)


# ----------------------------------------------------------------------------
if __name__ == "__main__":
    key = jax.random.PRNGKey(0)
    # Small config (YOLOX-nano-ish): width=0.25, depth=0.33
    DEPTH, WIDTH = 0.33, 0.25
    params = init_yolo_pafpn(jax.random.fold_in(key, 1),
                             img_channel=3, depth=DEPTH, width=WIDTH,
                             in_channels=(256, 512, 1024))
    x = jax.random.normal(jax.random.fold_in(key, 2), (2, 3, 64, 64),
                          jnp.float32)

    fwd = jax.jit(functools.partial(yolo_pafpn_forward, params=params))
    outs = jax.block_until_ready(fwd(x))

    assert outs[0].shape == (2, 64, 8, 8), outs[0].shape
    assert outs[1].shape == (2, 128, 4, 4), outs[1].shape
    assert outs[2].shape == (2, 256, 2, 2), outs[2].shape
    assert all(bool(jnp.all(jnp.isfinite(o))) for o in outs)
    print("KERNEL_OK")
</pallas_src>

<mosaic_0001>
module attributes {stable_mosaic.version = 11 : i64} {
  func.func @_mm_bias_silu_kernel(%arg0: i32, %arg1: i32, %arg2: i32, %arg3: memref<256x128xbf16, #tpu.memory_space<vmem>>, %arg4: memref<128x128xbf16, #tpu.memory_space<vmem>>, %arg5: memref<1x128xf32, #tpu.memory_space<vmem>>, %arg6: memref<256x128xbf16, #tpu.memory_space<vmem>>, %arg7: memref<256x128xf32, #tpu.memory_space<vmem>>) attributes {dimension_semantics = [#tpu.dimension_semantics<parallel>, #tpu.dimension_semantics<parallel>, #tpu.dimension_semantics<arbitrary>], iteration_bounds = array<i64: 8, 1, 1>, scalar_prefetch = 0 : i64, scratch_operands = 1 : i64, tpu.core_type = #tpu.core_type<tc>, window_params = [{transform_indices = @transform_0, window_bounds = array<i64: 256, 128>}, {transform_indices = @transform_1, window_bounds = array<i64: 128, 128>}, {transform_indices = @transform_2, window_bounds = array<i64: 1, 128>}, {transform_indices = @transform_3, window_bounds = array<i64: 256, 128>}]} {
    %c0_i32 = arith.constant 0 : i32
    %0 = arith.cmpi eq, %arg2, %c0_i32 : i32
    %1 = arith.extui %0 : i1 to i32
    %c0_i32_0 = arith.constant 0 : i32
    %2 = arith.cmpi ne, %1, %c0_i32_0 : i32
    scf.if %2 {
      %cst_10 = arith.constant 0.000000e+00 : f32
      %12 = vector.broadcast %cst_10 : f32 to vector<256x128xf32>
      %c0_11 = arith.constant 0 : index
      %c0_12 = arith.constant 0 : index
      %13 = vector.load %arg7[%c0_11, %c0_12] : memref<256x128xf32, #tpu.memory_space<vmem>>, vector<256x128xf32>
      tpu.vector_store %arg7[%c0_11, %c0_12], %12 {strides = array<i32>} : memref<256x128xf32, #tpu.memory_space<vmem>>, vector<256x128xf32>,
    } else {
    }
    %c0 = arith.constant 0 : index
    %c0_1 = arith.constant 0 : index
    %3 = vector.load %arg7[%c0, %c0_1] : memref<256x128xf32, #tpu.memory_space<vmem>>, vector<256x128xf32>
    %c0_2 = arith.constant 0 : index
    %c0_3 = arith.constant 0 : index
    %4 = vector.load %arg3[%c0_2, %c0_3] : memref<256x128xbf16, #tpu.memory_space<vmem>>, vector<256x128xbf16>
    %c0_4 = arith.constant 0 : index
    %c0_5 = arith.constant 0 : index
    %5 = vector.load %arg4[%c0_4, %c0_5] : memref<128x128xbf16, #tpu.memory_space<vmem>>, vector<128x128xbf16>
    %cst = arith.constant dense<0.000000e+00> : vector<256x128xf32>
    %6 = tpu.matmul %4, %5, %cst {dimension_numbers = #tpu.dot_dimension_numbers<[1], [0], [0], [1], [0, 0, 1, 1], [], []>} : vector<256x128xbf16>, vector<128x128xbf16>, vector<256x128xf32> -> vector<256x128xf32>
    %7 = arith.addf %3, %6 : vector<256x128xf32>
    %c0_6 = arith.constant 0 : index
    %c0_7 = arith.constant 0 : index
    %8 = vector.load %arg7[%c0_6, %c0_7] : memref<256x128xf32, #tpu.memory_space<vmem>>, vector<256x128xf32>
    tpu.vector_store %arg7[%c0_6, %c0_7], %7 {strides = array<i32>} : memref<256x128xf32, #tpu.memory_space<vmem>>, vector<256x128xf32>,
    %c0_i32_8 = arith.constant 0 : i32
    %9 = arith.cmpi eq, %arg2, %c0_i32_8 : i32
    %10 = arith.extui %9 : i1 to i32
    %c0_i32_9 = arith.constant 0 : i32
    %11 = arith.cmpi ne, %10, %c0_i32_9 : i32
    scf.if %11 {
      %c0_10 = arith.constant 0 : index
      %c0_11 = arith.constant 0 : index
      %12 = vector.load %arg7[%c0_10, %c0_11] : memref<256x128xf32, #tpu.memory_space<vmem>>, vector<256x128xf32>
      %c0_12 = arith.constant 0 : index
      %c0_13 = arith.constant 0 : index
      %13 = vector.load %arg5[%c0_12, %c0_13] : memref<1x128xf32, #tpu.memory_space<vmem>>, vector<1x128xf32>
      %14 = vector.broadcast %13 : vector<1x128xf32> to vector<256x128xf32>
      %15 = arith.addf %12, %14 : vector<256x128xf32>
      %16 = math.absf %15 : vector<256x128xf32>
      %cst_14 = arith.constant 0.000000e+00 : f32
      %17 = vector.broadcast %cst_14 : f32 to vector<256x128xf32>
      %18 = arith.subf %17, %16 : vector<256x128xf32>
      %19 = math.exp %18 : vector<256x128xf32>
      %cst_15 = arith.constant 1.000000e+00 : f32
      %20 = vector.broadcast %cst_15 : f32 to vector<256x128xf32>
      %21 = arith.addf %20, %19 : vector<256x128xf32>
      %22 = tpu.reciprocal %21 {approx = true} : vector<256x128xf32> -> vector<256x128xf32>
      %cst_16 = arith.constant 0.000000e+00 : f32
      %23 = vector.broadcast %cst_16 : f32 to vector<256x128xf32>
      %24 = arith.cmpf oge, %15, %23 : vector<256x128xf32>
      %cst_17 = arith.constant 1.000000e+00 : f32
      %25 = vector.broadcast %cst_17 : f32 to vector<256x128xf32>
      %26 = arith.subf %25, %22 : vector<256x128xf32>
      %27 = arith.select %24, %22, %26 : vector<256x128xi1>, vector<256x128xf32>
      %28 = arith.mulf %15, %27 : vector<256x128xf32>
      %29 = arith.truncf %28 : vector<256x128xf32> to vector<256x128xbf16>
      %c0_18 = arith.constant 0 : index
      %c0_19 = arith.constant 0 : index
      %30 = vector.load %arg6[%c0_18, %c0_19] : memref<256x128xbf16, #tpu.memory_space<vmem>>, vector<256x128xbf16>
      tpu.vector_store %arg6[%c0_18, %c0_19], %29 {strides = array<i32>} : memref<256x128xbf16, #tpu.memory_space<vmem>>, vector<256x128xbf16>,
    } else {
    }
    return
  }
  func.func @transform_0(%arg0: i32, %arg1: i32, %arg2: i32) -> (i32, i32) {
    %c0_i32 = arith.constant 0 : i32
    return %arg0, %arg2 : i32, i32
  }
  func.func @transform_1(%arg0: i32, %arg1: i32, %arg2: i32) -> (i32, i32) {
    %c0_i32 = arith.constant 0 : i32
    return %arg2, %arg1 : i32, i32
  }
  func.func @transform_2(%arg0: i32, %arg1: i32, %arg2: i32) -> (i32, i32) {
    %c0_i32 = arith.constant 0 : i32
    %c0_i32_0 = arith.constant 0 : i32
    return %c0_i32, %arg1 : i32, i32
  }
  func.func @transform_3(%arg0: i32, %arg1: i32, %arg2: i32) -> (i32, i32) {
    %c0_i32 = arith.constant 0 : i32
    return %arg0, %arg1 : i32, i32
  }
}

module attributes {stable_mosaic.version = 11 : i64} {
  func.func @_mm_bias_silu_kernel(%arg0: i32, %arg1: i32, %arg2: i32, %arg3: memref<256x128xbf16, #tpu.memory_space<vmem>>, %arg4: memref<128x128xbf16, #tpu.memory_space<vmem>>, %arg5: memref<1x128xf32, #tpu.memory_space<vmem>>, %arg6: memref<256x128xbf16, #tpu.memory_space<vmem>>, %arg7: memref<256x128xf32, #tpu.memory_space<vmem>>) attributes {dimension_semantics = [#tpu.dimension_semantics<parallel>, #tpu.dimension_semantics<parallel>, #tpu.dimension_semantics<arbitrary>], iteration_bounds = array<i64: 2, 1, 1>, scalar_prefetch = 0 : i64, scratch_operands = 1 : i64, tpu.core_type = #tpu.core_type<tc>, window_params = [{transform_indices = @transform_0, window_bounds = array<i64: 256, 128>}, {transform_indices = @transform_1, window_bounds = array<i64: 128, 128>}, {transform_indices = @transform_2, window_bounds = array<i64: 1, 128>}, {transform_indices = @transform_3, window_bounds = array<i64: 256, 128>}]} {
    %c0_i32 = arith.constant 0 : i32
    %0 = arith.cmpi eq, %arg2, %c0_i32 : i32
    %1 = arith.extui %0 : i1 to i32
    %c0_i32_0 = arith.constant 0 : i32
    %2 = arith.cmpi ne, %1, %c0_i32_0 : i32
    scf.if %2 {
      %cst_10 = arith.constant 0.000000e+00 : f32
      %12 = vector.broadcast %cst_10 : f32 to vector<256x128xf32>
      %c0_11 = arith.constant 0 : index
      %c0_12 = arith.constant 0 : index
      %13 = vector.load %arg7[%c0_11, %c0_12] : memref<256x128xf32, #tpu.memory_space<vmem>>, vector<256x128xf32>
      tpu.vector_store %arg7[%c0_11, %c0_12], %12 {strides = array<i32>} : memref<256x128xf32, #tpu.memory_space<vmem>>, vector<256x128xf32>,
    } else {
    }
    %c0 = arith.constant 0 : index
    %c0_1 = arith.constant 0 : index
    %3 = vector.load %arg7[%c0, %c0_1] : memref<256x128xf32, #tpu.memory_space<vmem>>, vector<256x128xf32>
    %c0_2 = arith.constant 0 : index
    %c0_3 = arith.constant 0 : index
    %4 = vector.load %arg3[%c0_2, %c0_3] : memref<256x128xbf16, #tpu.memory_space<vmem>>, vector<256x128xbf16>
    %c0_4 = arith.constant 0 : index
    %c0_5 = arith.constant 0 : index
    %5 = vector.load %arg4[%c0_4, %c0_5] : memref<128x128xbf16, #tpu.memory_space<vmem>>, vector<128x128xbf16>
    %cst = arith.constant dense<0.000000e+00> : vector<256x128xf32>
    %6 = tpu.matmul %4, %5, %cst {dimension_numbers = #tpu.dot_dimension_numbers<[1], [0], [0], [1], [0, 0, 1, 1], [], []>} : vector<256x128xbf16>, vector<128x128xbf16>, vector<256x128xf32> -> vector<256x128xf32>
    %7 = arith.addf %3, %6 : vector<256x128xf32>
    %c0_6 = arith.constant 0 : index
    %c0_7 = arith.constant 0 : index
    %8 = vector.load %arg7[%c0_6, %c0_7] : memref<256x128xf32, #tpu.memory_space<vmem>>, vector<256x128xf32>
    tpu.vector_store %arg7[%c0_6, %c0_7], %7 {strides = array<i32>} : memref<256x128xf32, #tpu.memory_space<vmem>>, vector<256x128xf32>,
    %c0_i32_8 = arith.constant 0 : i32
    %9 = arith.cmpi eq, %arg2, %c0_i32_8 : i32
    %10 = arith.extui %9 : i1 to i32
    %c0_i32_9 = arith.constant 0 : i32
    %11 = arith.cmpi ne, %10, %c0_i32_9 : i32
    scf.if %11 {
      %c0_10 = arith.constant 0 : index
      %c0_11 = arith.constant 0 : index
      %12 = vector.load %arg7[%c0_10, %c0_11] : memref<256x128xf32, #tpu.memory_space<vmem>>, vector<256x128xf32>
      %c0_12 = arith.constant 0 : index
      %c0_13 = arith.constant 0 : index
      %13 = vector.load %arg5[%c0_12, %c0_13] : memref<1x128xf32, #tpu.memory_space<vmem>>, vector<1x128xf32>
      %14 = vector.broadcast %13 : vector<1x128xf32> to vector<256x128xf32>
      %15 = arith.addf %12, %14 : vector<256x128xf32>
      %16 = math.absf %15 : vector<256x128xf32>
      %cst_14 = arith.constant 0.000000e+00 : f32
      %17 = vector.broadcast %cst_14 : f32 to vector<256x128xf32>
      %18 = arith.subf %17, %16 : vector<256x128xf32>
      %19 = math.exp %18 : vector<256x128xf32>
      %cst_15 = arith.constant 1.000000e+00 : f32
      %20 = vector.broadcast %cst_15 : f32 to vector<256x128xf32>
      %21 = arith.addf %20, %19 : vector<256x128xf32>
      %22 = tpu.reciprocal %21 {approx = true} : vector<256x128xf32> -> vector<256x128xf32>
      %cst_16 = arith.constant 0.000000e+00 : f32
      %23 = vector.broadcast %cst_16 : f32 to vector<256x128xf32>
      %24 = arith.cmpf oge, %15, %23 : vector<256x128xf32>
      %cst_17 = arith.constant 1.000000e+00 : f32
      %25 = vector.broadcast %cst_17 : f32 to vector<256x128xf32>
      %26 = arith.subf %25, %22 : vector<256x128xf32>
      %27 = arith.select %24, %22, %26 : vector<256x128xi1>, vector<256x128xf32>
      %28 = arith.mulf %15, %27 : vector<256x128xf32>
      %29 = arith.truncf %28 : vector<256x128xf32> to vector<256x128xbf16>
      %c0_18 = arith.constant 0 : index
      %c0_19 = arith.constant 0 : index
      %30 = vector.load %arg6[%c0_18, %c0_19] : memref<256x128xbf16, #tpu.memory_space<vmem>>, vector<256x128xbf16>
      tpu.vector_store %arg6[%c0_18, %c0_19], %29 {strides = array<i32>} : memref<256x128xbf16, #tpu.memory_space<vmem>>, vector<256x128xbf16>,
    } else {
    }
    return
  }
  func.func @transform_0(%arg0: i32, %arg1: i32, %arg2: i32) -> (i32, i32) {
    %c0_i32 = arith.constant 0 : i32
    return %arg0, %arg2 : i32, i32
  }
  func.func @transform_1(%arg0: i32, %arg1: i32, %arg2: i32) -> (i32, i32) {
    %c0_i32 = arith.constant 0 : i32
    return %arg2, %arg1 : i32, i32
  }
  func.func @transform_2(%arg0: i32, %arg1: i32, %arg2: i32) -> (i32, i32) {
    %c0_i32 = arith.constant 0 : i32
    %c0_i32_0 = arith.constant 0 : i32
    return %c0_i32, %arg1 : i32, i32
  }
  func.func @transform_3(%arg0: i32, %arg1: i32, %arg2: i32) -> (i32, i32) {
    %c0_i32 = arith.constant 0 : i32
    return %arg0, %arg1 : i32, i32
  }
}

module attributes {stable_mosaic.version = 11 : i64} {
  func.func @_mm_bias_silu_kernel(%arg0: i32, %arg1: i32, %arg2: i32, %arg3: memref<256x256xbf16, #tpu.memory_space<vmem>>, %arg4: memref<256x128xbf16, #tpu.memory_space<vmem>>, %arg5: memref<1x128xf32, #tpu.memory_space<vmem>>, %arg6: memref<256x128xbf16, #tpu.memory_space<vmem>>, %arg7: memref<256x128xf32, #tpu.memory_space<vmem>>) attributes {dimension_semantics = [#tpu.dimension_semantics<parallel>, #tpu.dimension_semantics<parallel>, #tpu.dimension_semantics<arbitrary>], iteration_bounds = array<i64: 2, 1, 1>, scalar_prefetch = 0 : i64, scratch_operands = 1 : i64, tpu.core_type = #tpu.core_type<tc>, window_params = [{transform_indices = @transform_0, window_bounds = array<i64: 256, 256>}, {transform_indices = @transform_1, window_bounds = array<i64: 256, 128>}, {transform_indices = @transform_2, window_bounds = array<i64: 1, 128>}, {transform_indices = @transform_3, window_bounds = array<i64: 256, 128>}]} {
    %c0_i32 = arith.constant 0 : i32
    %0 = arith.cmpi eq, %arg2, %c0_i32 : i32
    %1 = arith.extui %0 : i1 to i32
    %c0_i32_0 = arith.constant 0 : i32
    %2 = arith.cmpi ne, %1, %c0_i32_0 : i32
    scf.if %2 {
      %cst_10 = arith.constant 0.000000e+00 : f32
      %12 = vector.broadcast %cst_10 : f32 to vector<256x128xf32>
      %c0_11 = arith.constant 0 : index
      %c0_12 = arith.constant 0 : index
      %13 = vector.load %arg7[%c0_11, %c0_12] : memref<256x128xf32, #tpu.memory_space<vmem>>, vector<256x128xf32>
      tpu.vector_store %arg7[%c0_11, %c0_12], %12 {strides = array<i32>} : memref<256x128xf32, #tpu.memory_space<vmem>>, vector<256x128xf32>,
    } else {
    }
    %c0 = arith.constant 0 : index
    %c0_1 = arith.constant 0 : index
    %3 = vector.load %arg7[%c0, %c0_1] : memref<256x128xf32, #tpu.memory_space<vmem>>, vector<256x128xf32>
    %c0_2 = arith.constant 0 : index
    %c0_3 = arith.constant 0 : index
    %4 = vector.load %arg3[%c0_2, %c0_3] : memref<256x256xbf16, #tpu.memory_space<vmem>>, vector<256x256xbf16>
    %c0_4 = arith.constant 0 : index
    %c0_5 = arith.constant 0 : index
    %5 = vector.load %arg4[%c0_4, %c0_5] : memref<256x128xbf16, #tpu.memory_space<vmem>>, vector<256x128xbf16>
    %cst = arith.constant dense<0.000000e+00> : vector<256x128xf32>
    %6 = tpu.matmul %4, %5, %cst {dimension_numbers = #tpu.dot_dimension_numbers<[1], [0], [0], [1], [0, 0, 1, 1], [], []>} : vector<256x256xbf16>, vector<256x128xbf16>, vector<256x128xf32> -> vector<256x128xf32>
    %7 = arith.addf %3, %6 : vector<256x128xf32>
    %c0_6 = arith.constant 0 : index
    %c0_7 = arith.constant 0 : index
    %8 = vector.load %arg7[%c0_6, %c0_7] : memref<256x128xf32, #tpu.memory_space<vmem>>, vector<256x128xf32>
    tpu.vector_store %arg7[%c0_6, %c0_7], %7 {strides = array<i32>} : memref<256x128xf32, #tpu.memory_space<vmem>>, vector<256x128xf32>,
    %c0_i32_8 = arith.constant 0 : i32
    %9 = arith.cmpi eq, %arg2, %c0_i32_8 : i32
    %10 = arith.extui %9 : i1 to i32
    %c0_i32_9 = arith.constant 0 : i32
    %11 = arith.cmpi ne, %10, %c0_i32_9 : i32
    scf.if %11 {
      %c0_10 = arith.constant 0 : index
      %c0_11 = arith.constant 0 : index
      %12 = vector.load %arg7[%c0_10, %c0_11] : memref<256x128xf32, #tpu.memory_space<vmem>>, vector<256x128xf32>
      %c0_12 = arith.constant 0 : index
      %c0_13 = arith.constant 0 : index
      %13 = vector.load %arg5[%c0_12, %c0_13] : memref<1x128xf32, #tpu.memory_space<vmem>>, vector<1x128xf32>
      %14 = vector.broadcast %13 : vector<1x128xf32> to vector<256x128xf32>
      %15 = arith.addf %12, %14 : vector<256x128xf32>
      %16 = math.absf %15 : vector<256x128xf32>
      %cst_14 = arith.constant 0.000000e+00 : f32
      %17 = vector.broadcast %cst_14 : f32 to vector<256x128xf32>
      %18 = arith.subf %17, %16 : vector<256x128xf32>
      %19 = math.exp %18 : vector<256x128xf32>
      %cst_15 = arith.constant 1.000000e+00 : f32
      %20 = vector.broadcast %cst_15 : f32 to vector<256x128xf32>
      %21 = arith.addf %20, %19 : vector<256x128xf32>
      %22 = tpu.reciprocal %21 {approx = true} : vector<256x128xf32> -> vector<256x128xf32>
      %cst_16 = arith.constant 0.000000e+00 : f32
      %23 = vector.broadcast %cst_16 : f32 to vector<256x128xf32>
      %24 = arith.cmpf oge, %15, %23 : vector<256x128xf32>
      %cst_17 = arith.constant 1.000000e+00 : f32
      %25 = vector.broadcast %cst_17 : f32 to vector<256x128xf32>
      %26 = arith.subf %25, %22 : vector<256x128xf32>
      %27 = arith.select %24, %22, %26 : vector<256x128xi1>, vector<256x128xf32>
      %28 = arith.mulf %15, %27 : vector<256x128xf32>
      %29 = arith.truncf %28 : vector<256x128xf32> to vector<256x128xbf16>
      %c0_18 = arith.constant 0 : index
      %c0_19 = arith.constant 0 : index
      %30 = vector.load %arg6[%c0_18, %c0_19] : memref<256x128xbf16, #tpu.memory_space<vmem>>, vector<256x128xbf16>
      tpu.vector_store %arg6[%c0_18, %c0_19], %29 {strides = array<i32>} : memref<256x128xbf16, #tpu.memory_space<vmem>>, vector<256x128xbf16>,
    } else {
    }
    return
  }
  func.func @transform_0(%arg0: i32, %arg1: i32, %arg2: i32) -> (i32, i32) {
    %c0_i32 = arith.constant 0 : i32
    return %arg0, %arg2 : i32, i32
  }
  func.func @transform_1(%arg0: i32, %arg1: i32, %arg2: i32) -> (i32, i32) {
    %c0_i32 = arith.constant 0 : i32
    return %arg2, %arg1 : i32, i32
  }
  func.func @transform_2(%arg0: i32, %arg1: i32, %arg2: i32) -> (i32, i32) {
    %c0_i32 = arith.constant 0 : i32
    %c0_i32_0 = arith.constant 0 : i32
    return %c0_i32, %arg1 : i32, i32
  }
  func.func @transform_3(%arg0: i32, %arg1: i32, %arg2: i32) -> (i32, i32) {
    %c0_i32 = arith.constant 0 : i32
    return %arg0, %arg1 : i32, i32
  }
}

module attributes {stable_mosaic.version = 11 : i64} {
  func.func @_mm_bias_silu_kernel(%arg0: i32, %arg1: i32, %arg2: i32, %arg3: memref<128x384xbf16, #tpu.memory_space<vmem>>, %arg4: memref<384x128xbf16, #tpu.memory_space<vmem>>, %arg5: memref<1x128xf32, #tpu.memory_space<vmem>>, %arg6: memref<128x128xbf16, #tpu.memory_space<vmem>>, %arg7: memref<128x128xf32, #tpu.memory_space<vmem>>) attributes {dimension_semantics = [#tpu.dimension_semantics<parallel>, #tpu.dimension_semantics<parallel>, #tpu.dimension_semantics<arbitrary>], iteration_bounds = array<i64: 1, 1, 1>, scalar_prefetch = 0 : i64, scratch_operands = 1 : i64, tpu.core_type = #tpu.core_type<tc>, window_params = [{transform_indices = @transform_0, window_bounds = array<i64: 128, 384>}, {transform_indices = @transform_1, window_bounds = array<i64: 384, 128>}, {transform_indices = @transform_2, window_bounds = array<i64: 1, 128>}, {transform_indices = @transform_3, window_bounds = array<i64: 128, 128>}]} {
    %c0_i32 = arith.constant 0 : i32
    %0 = arith.cmpi eq, %arg2, %c0_i32 : i32
    %1 = arith.extui %0 : i1 to i32
    %c0_i32_0 = arith.constant 0 : i32
    %2 = arith.cmpi ne, %1, %c0_i32_0 : i32
    scf.if %2 {
      %cst_10 = arith.constant 0.000000e+00 : f32
      %12 = vector.broadcast %cst_10 : f32 to vector<128x128xf32>
      %c0_11 = arith.constant 0 : index
      %c0_12 = arith.constant 0 : index
      %13 = vector.load %arg7[%c0_11, %c0_12] : memref<128x128xf32, #tpu.memory_space<vmem>>, vector<128x128xf32>
      tpu.vector_store %arg7[%c0_11, %c0_12], %12 {strides = array<i32>} : memref<128x128xf32, #tpu.memory_space<vmem>>, vector<128x128xf32>,
    } else {
    }
    %c0 = arith.constant 0 : index
    %c0_1 = arith.constant 0 : index
    %3 = vector.load %arg7[%c0, %c0_1] : memref<128x128xf32, #tpu.memory_space<vmem>>, vector<128x128xf32>
    %c0_2 = arith.constant 0 : index
    %c0_3 = arith.constant 0 : index
    %4 = vector.load %arg3[%c0_2, %c0_3] : memref<128x384xbf16, #tpu.memory_space<vmem>>, vector<128x384xbf16>
    %c0_4 = arith.constant 0 : index
    %c0_5 = arith.constant 0 : index
    %5 = vector.load %arg4[%c0_4, %c0_5] : memref<384x128xbf16, #tpu.memory_space<vmem>>, vector<384x128xbf16>
    %cst = arith.constant dense<0.000000e+00> : vector<128x128xf32>
    %6 = tpu.matmul %4, %5, %cst {dimension_numbers = #tpu.dot_dimension_numbers<[1], [0], [0], [1], [0, 0, 1, 1], [], []>} : vector<128x384xbf16>, vector<384x128xbf16>, vector<128x128xf32> -> vector<128x128xf32>
    %7 = arith.addf %3, %6 : vector<128x128xf32>
    %c0_6 = arith.constant 0 : index
    %c0_7 = arith.constant 0 : index
    %8 = vector.load %arg7[%c0_6, %c0_7] : memref<128x128xf32, #tpu.memory_space<vmem>>, vector<128x128xf32>
    tpu.vector_store %arg7[%c0_6, %c0_7], %7 {strides = array<i32>} : memref<128x128xf32, #tpu.memory_space<vmem>>, vector<128x128xf32>,
    %c0_i32_8 = arith.constant 0 : i32
    %9 = arith.cmpi eq, %arg2, %c0_i32_8 : i32
    %10 = arith.extui %9 : i1 to i32
    %c0_i32_9 = arith.constant 0 : i32
    %11 = arith.cmpi ne, %10, %c0_i32_9 : i32
    scf.if %11 {
      %c0_10 = arith.constant 0 : index
      %c0_11 = arith.constant 0 : index
      %12 = vector.load %arg7[%c0_10, %c0_11] : memref<128x128xf32, #tpu.memory_space<vmem>>, vector<128x128xf32>
      %c0_12 = arith.constant 0 : index
      %c0_13 = arith.constant 0 : index
      %13 = vector.load %arg5[%c0_12, %c0_13] : memref<1x128xf32, #tpu.memory_space<vmem>>, vector<1x128xf32>
      %14 = vector.broadcast %13 : vector<1x128xf32> to vector<128x128xf32>
      %15 = arith.addf %12, %14 : vector<128x128xf32>
      %16 = math.absf %15 : vector<128x128xf32>
      %cst_14 = arith.constant 0.000000e+00 : f32
      %17 = vector.broadcast %cst_14 : f32 to vector<128x128xf32>
      %18 = arith.subf %17, %16 : vector<128x128xf32>
      %19 = math.exp %18 : vector<128x128xf32>
      %cst_15 = arith.constant 1.000000e+00 : f32
      %20 = vector.broadcast %cst_15 : f32 to vector<128x128xf32>
      %21 = arith.addf %20, %19 : vector<128x128xf32>
      %22 = tpu.reciprocal %21 {approx = true} : vector<128x128xf32> -> vector<128x128xf32>
      %cst_16 = arith.constant 0.000000e+00 : f32
      %23 = vector.broadcast %cst_16 : f32 to vector<128x128xf32>
      %24 = arith.cmpf oge, %15, %23 : vector<128x128xf32>
      %cst_17 = arith.constant 1.000000e+00 : f32
      %25 = vector.broadcast %cst_17 : f32 to vector<128x128xf32>
      %26 = arith.subf %25, %22 : vector<128x128xf32>
      %27 = arith.select %24, %22, %26 : vector<128x128xi1>, vector<128x128xf32>
      %28 = arith.mulf %15, %27 : vector<128x128xf32>
      %29 = arith.truncf %28 : vector<128x128xf32> to vector<128x128xbf16>
      %c0_18 = arith.constant 0 : index
      %c0_19 = arith.constant 0 : index
      %30 = vector.load %arg6[%c0_18, %c0_19] : memref<128x128xbf16, #tpu.memory_space<vmem>>, vector<128x128xbf16>
      tpu.vector_store %arg6[%c0_18, %c0_19], %29 {strides = array<i32>} : memref<128x128xbf16, #tpu.memory_space<vmem>>, vector<128x128xbf16>,
    } else {
    }
    return
  }
  func.func @transform_0(%arg0: i32, %arg1: i32, %arg2: i32) -> (i32, i32) {
    %c0_i32 = arith.constant 0 : i32
    return %arg0, %arg2 : i32, i32
  }
  func.func @transform_1(%arg0: i32, %arg1: i32, %arg2: i32) -> (i32, i32) {
    %c0_i32 = arith.constant 0 : i32
    return %arg2, %arg1 : i32, i32
  }
  func.func @transform_2(%arg0: i32, %arg1: i32, %arg2: i32) -> (i32, i32) {
    %c0_i32 = arith.constant 0 : i32
    %c0_i32_0 = arith.constant 0 : i32
    return %c0_i32, %arg1 : i32, i32
  }
  func.func @transform_3(%arg0: i32, %arg1: i32, %arg2: i32) -> (i32, i32) {
    %c0_i32 = arith.constant 0 : i32
    return %arg0, %arg1 : i32, i32
  }
}

module attributes {stable_mosaic.version = 11 : i64} {
  func.func @_mm_bias_silu_kernel(%arg0: i32, %arg1: i32, %arg2: i32, %arg3: memref<128x128xbf16, #tpu.memory_space<vmem>>, %arg4: memref<128x128xbf16, #tpu.memory_space<vmem>>, %arg5: memref<1x128xf32, #tpu.memory_space<vmem>>, %arg6: memref<128x128xbf16, #tpu.memory_space<vmem>>, %arg7: memref<128x128xf32, #tpu.memory_space<vmem>>) attributes {dimension_semantics = [#tpu.dimension_semantics<parallel>, #tpu.dimension_semantics<parallel>, #tpu.dimension_semantics<arbitrary>], iteration_bounds = array<i64: 1, 1, 1>, scalar_prefetch = 0 : i64, scratch_operands = 1 : i64, tpu.core_type = #tpu.core_type<tc>, window_params = [{transform_indices = @transform_0, window_bounds = array<i64: 128, 128>}, {transform_indices = @transform_1, window_bounds = array<i64: 128, 128>}, {transform_indices = @transform_2, window_bounds = array<i64: 1, 128>}, {transform_indices = @transform_3, window_bounds = array<i64: 128, 128>}]} {
    %c0_i32 = arith.constant 0 : i32
    %0 = arith.cmpi eq, %arg2, %c0_i32 : i32
    %1 = arith.extui %0 : i1 to i32
    %c0_i32_0 = arith.constant 0 : i32
    %2 = arith.cmpi ne, %1, %c0_i32_0 : i32
    scf.if %2 {
      %cst_10 = arith.constant 0.000000e+00 : f32
      %12 = vector.broadcast %cst_10 : f32 to vector<128x128xf32>
      %c0_11 = arith.constant 0 : index
      %c0_12 = arith.constant 0 : index
      %13 = vector.load %arg7[%c0_11, %c0_12] : memref<128x128xf32, #tpu.memory_space<vmem>>, vector<128x128xf32>
      tpu.vector_store %arg7[%c0_11, %c0_12], %12 {strides = array<i32>} : memref<128x128xf32, #tpu.memory_space<vmem>>, vector<128x128xf32>,
    } else {
    }
    %c0 = arith.constant 0 : index
    %c0_1 = arith.constant 0 : index
    %3 = vector.load %arg7[%c0, %c0_1] : memref<128x128xf32, #tpu.memory_space<vmem>>, vector<128x128xf32>
    %c0_2 = arith.constant 0 : index
    %c0_3 = arith.constant 0 : index
    %4 = vector.load %arg3[%c0_2, %c0_3] : memref<128x128xbf16, #tpu.memory_space<vmem>>, vector<128x128xbf16>
    %c0_4 = arith.constant 0 : index
    %c0_5 = arith.constant 0 : index
    %5 = vector.load %arg4[%c0_4, %c0_5] : memref<128x128xbf16, #tpu.memory_space<vmem>>, vector<128x128xbf16>
    %cst = arith.constant dense<0.000000e+00> : vector<128x128xf32>
    %6 = tpu.matmul %4, %5, %cst {dimension_numbers = #tpu.dot_dimension_numbers<[1], [0], [0], [1], [0, 0, 1, 1], [], []>} : vector<128x128xbf16>, vector<128x128xbf16>, vector<128x128xf32> -> vector<128x128xf32>
    %7 = arith.addf %3, %6 : vector<128x128xf32>
    %c0_6 = arith.constant 0 : index
    %c0_7 = arith.constant 0 : index
    %8 = vector.load %arg7[%c0_6, %c0_7] : memref<128x128xf32, #tpu.memory_space<vmem>>, vector<128x128xf32>
    tpu.vector_store %arg7[%c0_6, %c0_7], %7 {strides = array<i32>} : memref<128x128xf32, #tpu.memory_space<vmem>>, vector<128x128xf32>,
    %c0_i32_8 = arith.constant 0 : i32
    %9 = arith.cmpi eq, %arg2, %c0_i32_8 : i32
    %10 = arith.extui %9 : i1 to i32
    %c0_i32_9 = arith.constant 0 : i32
    %11 = arith.cmpi ne, %10, %c0_i32_9 : i32
    scf.if %11 {
      %c0_10 = arith.constant 0 : index
      %c0_11 = arith.constant 0 : index
      %12 = vector.load %arg7[%c0_10, %c0_11] : memref<128x128xf32, #tpu.memory_space<vmem>>, vector<128x128xf32>
      %c0_12 = arith.constant 0 : index
      %c0_13 = arith.constant 0 : index
      %13 = vector.load %arg5[%c0_12, %c0_13] : memref<1x128xf32, #tpu.memory_space<vmem>>, vector<1x128xf32>
      %14 = vector.broadcast %13 : vector<1x128xf32> to vector<128x128xf32>
      %15 = arith.addf %12, %14 : vector<128x128xf32>
      %16 = math.absf %15 : vector<128x128xf32>
      %cst_14 = arith.constant 0.000000e+00 : f32
      %17 = vector.broadcast %cst_14 : f32 to vector<128x128xf32>
      %18 = arith.subf %17, %16 : vector<128x128xf32>
      %19 = math.exp %18 : vector<128x128xf32>
      %cst_15 = arith.constant 1.000000e+00 : f32
      %20 = vector.broadcast %cst_15 : f32 to vector<128x128xf32>
      %21 = arith.addf %20, %19 : vector<128x128xf32>
      %22 = tpu.reciprocal %21 {approx = true} : vector<128x128xf32> -> vector<128x128xf32>
      %cst_16 = arith.constant 0.000000e+00 : f32
      %23 = vector.broadcast %cst_16 : f32 to vector<128x128xf32>
      %24 = arith.cmpf oge, %15, %23 : vector<128x128xf32>
      %cst_17 = arith.constant 1.000000e+00 : f32
      %25 = vector.broadcast %cst_17 : f32 to vector<128x128xf32>
      %26 = arith.subf %25, %22 : vector<128x128xf32>
      %27 = arith.select %24, %22, %26 : vector<128x128xi1>, vector<128x128xf32>
      %28 = arith.mulf %15, %27 : vector<128x128xf32>
      %29 = arith.truncf %28 : vector<128x128xf32> to vector<128x128xbf16>
      %c0_18 = arith.constant 0 : index
      %c0_19 = arith.constant 0 : index
      %30 = vector.load %arg6[%c0_18, %c0_19] : memref<128x128xbf16, #tpu.memory_space<vmem>>, vector<128x128xbf16>
      tpu.vector_store %arg6[%c0_18, %c0_19], %29 {strides = array<i32>} : memref<128x128xbf16, #tpu.memory_space<vmem>>, vector<128x128xbf16>,
    } else {
    }
    return
  }
  func.func @transform_0(%arg0: i32, %arg1: i32, %arg2: i32) -> (i32, i32) {
    %c0_i32 = arith.constant 0 : i32
    return %arg0, %arg2 : i32, i32
  }
  func.func @transform_1(%arg0: i32, %arg1: i32, %arg2: i32) -> (i32, i32) {
    %c0_i32 = arith.constant 0 : i32
    return %arg2, %arg1 : i32, i32
  }
  func.func @transform_2(%arg0: i32, %arg1: i32, %arg2: i32) -> (i32, i32) {
    %c0_i32 = arith.constant 0 : i32
    %c0_i32_0 = arith.constant 0 : i32
    return %c0_i32, %arg1 : i32, i32
  }
  func.func @transform_3(%arg0: i32, %arg1: i32, %arg2: i32) -> (i32, i32) {
    %c0_i32 = arith.constant 0 : i32
    return %arg0, %arg1 : i32, i32
  }
}

module attributes {stable_mosaic.version = 11 : i64} {
  func.func @_mm_bias_silu_kernel(%arg0: i32, %arg1: i32, %arg2: i32, %arg3: memref<32x128xbf16, #tpu.memory_space<vmem>>, %arg4: memref<128x128xbf16, #tpu.memory_space<vmem>>, %arg5: memref<1x128xf32, #tpu.memory_space<vmem>>, %arg6: memref<32x128xbf16, #tpu.memory_space<vmem>>, %arg7: memref<32x128xf32, #tpu.memory_space<vmem>>) attributes {dimension_semantics = [#tpu.dimension_semantics<parallel>, #tpu.dimension_semantics<parallel>, #tpu.dimension_semantics<arbitrary>], iteration_bounds = array<i64: 1, 1, 1>, scalar_prefetch = 0 : i64, scratch_operands = 1 : i64, tpu.core_type = #tpu.core_type<tc>, window_params = [{transform_indices = @transform_0, window_bounds = array<i64: 32, 128>}, {transform_indices = @transform_1, window_bounds = array<i64: 128, 128>}, {transform_indices = @transform_2, window_bounds = array<i64: 1, 128>}, {transform_indices = @transform_3, window_bounds = array<i64: 32, 128>}]} {
    %c0_i32 = arith.constant 0 : i32
    %0 = arith.cmpi eq, %arg2, %c0_i32 : i32
    %1 = arith.extui %0 : i1 to i32
    %c0_i32_0 = arith.constant 0 : i32
    %2 = arith.cmpi ne, %1, %c0_i32_0 : i32
    scf.if %2 {
      %cst_10 = arith.constant 0.000000e+00 : f32
      %12 = vector.broadcast %cst_10 : f32 to vector<32x128xf32>
      %c0_11 = arith.constant 0 : index
      %c0_12 = arith.constant 0 : index
      %13 = vector.load %arg7[%c0_11, %c0_12] : memref<32x128xf32, #tpu.memory_space<vmem>>, vector<32x128xf32>
      tpu.vector_store %arg7[%c0_11, %c0_12], %12 {strides = array<i32>} : memref<32x128xf32, #tpu.memory_space<vmem>>, vector<32x128xf32>,
    } else {
    }
    %c0 = arith.constant 0 : index
    %c0_1 = arith.constant 0 : index
    %3 = vector.load %arg7[%c0, %c0_1] : memref<32x128xf32, #tpu.memory_space<vmem>>, vector<32x128xf32>
    %c0_2 = arith.constant 0 : index
    %c0_3 = arith.constant 0 : index
    %4 = vector.load %arg3[%c0_2, %c0_3] : memref<32x128xbf16, #tpu.memory_space<vmem>>, vector<32x128xbf16>
    %c0_4 = arith.constant 0 : index
    %c0_5 = arith.constant 0 : index
    %5 = vector.load %arg4[%c0_4, %c0_5] : memref<128x128xbf16, #tpu.memory_space<vmem>>, vector<128x128xbf16>
    %cst = arith.constant dense<0.000000e+00> : vector<32x128xf32>
    %6 = tpu.matmul %4, %5, %cst {dimension_numbers = #tpu.dot_dimension_numbers<[1], [0], [0], [1], [0, 0, 1, 1], [], []>} : vector<32x128xbf16>, vector<128x128xbf16>, vector<32x128xf32> -> vector<32x128xf32>
    %7 = arith.addf %3, %6 : vector<32x128xf32>
    %c0_6 = arith.constant 0 : index
    %c0_7 = arith.constant 0 : index
    %8 = vector.load %arg7[%c0_6, %c0_7] : memref<32x128xf32, #tpu.memory_space<vmem>>, vector<32x128xf32>
    tpu.vector_store %arg7[%c0_6, %c0_7], %7 {strides = array<i32>} : memref<32x128xf32, #tpu.memory_space<vmem>>, vector<32x128xf32>,
    %c0_i32_8 = arith.constant 0 : i32
    %9 = arith.cmpi eq, %arg2, %c0_i32_8 : i32
    %10 = arith.extui %9 : i1 to i32
    %c0_i32_9 = arith.constant 0 : i32
    %11 = arith.cmpi ne, %10, %c0_i32_9 : i32
    scf.if %11 {
      %c0_10 = arith.constant 0 : index
      %c0_11 = arith.constant 0 : index
      %12 = vector.load %arg7[%c0_10, %c0_11] : memref<32x128xf32, #tpu.memory_space<vmem>>, vector<32x128xf32>
      %c0_12 = arith.constant 0 : index
      %c0_13 = arith.constant 0 : index
      %13 = vector.load %arg5[%c0_12, %c0_13] : memref<1x128xf32, #tpu.memory_space<vmem>>, vector<1x128xf32>
      %14 = vector.broadcast %13 : vector<1x128xf32> to vector<32x128xf32>
      %15 = arith.addf %12, %14 : vector<32x128xf32>
      %16 = math.absf %15 : vector<32x128xf32>
      %cst_14 = arith.constant 0.000000e+00 : f32
      %17 = vector.broadcast %cst_14 : f32 to vector<32x128xf32>
      %18 = arith.subf %17, %16 : vector<32x128xf32>
      %19 = math.exp %18 : vector<32x128xf32>
      %cst_15 = arith.constant 1.000000e+00 : f32
      %20 = vector.broadcast %cst_15 : f32 to vector<32x128xf32>
      %21 = arith.addf %20, %19 : vector<32x128xf32>
      %22 = tpu.reciprocal %21 {approx = true} : vector<32x128xf32> -> vector<32x128xf32>
      %cst_16 = arith.constant 0.000000e+00 : f32
      %23 = vector.broadcast %cst_16 : f32 to vector<32x128xf32>
      %24 = arith.cmpf oge, %15, %23 : vector<32x128xf32>
      %cst_17 = arith.constant 1.000000e+00 : f32
      %25 = vector.broadcast %cst_17 : f32 to vector<32x128xf32>
      %26 = arith.subf %25, %22 : vector<32x128xf32>
      %27 = arith.select %24, %22, %26 : vector<32x128xi1>, vector<32x128xf32>
      %28 = arith.mulf %15, %27 : vector<32x128xf32>
      %29 = arith.truncf %28 : vector<32x128xf32> to vector<32x128xbf16>
      %c0_18 = arith.constant 0 : index
      %c0_19 = arith.constant 0 : index
      %30 = vector.load %arg6[%c0_18, %c0_19] : memref<32x128xbf16, #tpu.memory_space<vmem>>, vector<32x128xbf16>
      tpu.vector_store %arg6[%c0_18, %c0_19], %29 {strides = array<i32>} : memref<32x128xbf16, #tpu.memory_space<vmem>>, vector<32x128xbf16>,
    } else {
    }
    return
  }
  func.func @transform_0(%arg0: i32, %arg1: i32, %arg2: i32) -> (i32, i32) {
    %c0_i32 = arith.constant 0 : i32
    return %arg0, %arg2 : i32, i32
  }
  func.func @transform_1(%arg0: i32, %arg1: i32, %arg2: i32) -> (i32, i32) {
    %c0_i32 = arith.constant 0 : i32
    return %arg2, %arg1 : i32, i32
  }
  func.func @transform_2(%arg0: i32, %arg1: i32, %arg2: i32) -> (i32, i32) {
    %c0_i32 = arith.constant 0 : i32
    %c0_i32_0 = arith.constant 0 : i32
    return %c0_i32, %arg1 : i32, i32
  }
  func.func @transform_3(%arg0: i32, %arg1: i32, %arg2: i32) -> (i32, i32) {
    %c0_i32 = arith.constant 0 : i32
    return %arg0, %arg1 : i32, i32
  }
}

module attributes {stable_mosaic.version = 11 : i64} {
  func.func @_mm_bias_silu_kernel(%arg0: i32, %arg1: i32, %arg2: i32, %arg3: memref<32x128xbf16, #tpu.memory_space<vmem>>, %arg4: memref<128x128xbf16, #tpu.memory_space<vmem>>, %arg5: memref<1x128xf32, #tpu.memory_space<vmem>>, %arg6: memref<32x128xbf16, #tpu.memory_space<vmem>>, %arg7: memref<32x128xf32, #tpu.memory_space<vmem>>) attributes {dimension_semantics = [#tpu.dimension_semantics<parallel>, #tpu.dimension_semantics<parallel>, #tpu.dimension_semantics<arbitrary>], iteration_bounds = array<i64: 1, 1, 5>, scalar_prefetch = 0 : i64, scratch_operands = 1 : i64, tpu.core_type = #tpu.core_type<tc>, window_params = [{transform_indices = @transform_0, window_bounds = array<i64: 32, 128>}, {transform_indices = @transform_1, window_bounds = array<i64: 128, 128>}, {transform_indices = @transform_2, window_bounds = array<i64: 1, 128>}, {transform_indices = @transform_3, window_bounds = array<i64: 32, 128>}]} {
    %c0_i32 = arith.constant 0 : i32
    %0 = arith.cmpi eq, %arg2, %c0_i32 : i32
    %1 = arith.extui %0 : i1 to i32
    %c0_i32_0 = arith.constant 0 : i32
    %2 = arith.cmpi ne, %1, %c0_i32_0 : i32
    scf.if %2 {
      %cst_9 = arith.constant 0.000000e+00 : f32
      %12 = vector.broadcast %cst_9 : f32 to vector<32x128xf32>
      %c0_10 = arith.constant 0 : index
      %c0_11 = arith.constant 0 : index
      %13 = vector.load %arg7[%c0_10, %c0_11] : memref<32x128xf32, #tpu.memory_space<vmem>>, vector<32x128xf32>
      tpu.vector_store %arg7[%c0_10, %c0_11], %12 {strides = array<i32>} : memref<32x128xf32, #tpu.memory_space<vmem>>, vector<32x128xf32>,
    } else {
    }
    %c0 = arith.constant 0 : index
    %c0_1 = arith.constant 0 : index
    %3 = vector.load %arg7[%c0, %c0_1] : memref<32x128xf32, #tpu.memory_space<vmem>>, vector<32x128xf32>
    %c0_2 = arith.constant 0 : index
    %c0_3 = arith.constant 0 : index
    %4 = vector.load %arg3[%c0_2, %c0_3] : memref<32x128xbf16, #tpu.memory_space<vmem>>, vector<32x128xbf16>
    %c0_4 = arith.constant 0 : index
    %c0_5 = arith.constant 0 : index
    %5 = vector.load %arg4[%c0_4, %c0_5] : memref<128x128xbf16, #tpu.memory_space<vmem>>, vector<128x128xbf16>
    %cst = arith.constant dense<0.000000e+00> : vector<32x128xf32>
    %6 = tpu.matmul %4, %5, %cst {dimension_numbers = #tpu.dot_dimension_numbers<[1], [0], [0], [1], [0, 0, 1, 1], [], []>} : vector<32x128xbf16>, vector<128x128xbf16>, vector<32x128xf32> -> vector<32x128xf32>
    %7 = arith.addf %3, %6 : vector<32x128xf32>
    %c0_6 = arith.constant 0 : index
    %c0_7 = arith.constant 0 : index
    %8 = vector.load %arg7[%c0_6, %c0_7] : memref<32x128xf32, #tpu.memory_space<vmem>>, vector<32x128xf32>
    tpu.vector_store %arg7[%c0_6, %c0_7], %7 {strides = array<i32>} : memref<32x128xf32, #tpu.memory_space<vmem>>, vector<32x128xf32>,
    %c4_i32 = arith.constant 4 : i32
    %9 = arith.cmpi eq, %arg2, %c4_i32 : i32
    %10 = arith.extui %9 : i1 to i32
    %c0_i32_8 = arith.constant 0 : i32
    %11 = arith.cmpi ne, %10, %c0_i32_8 : i32
    scf.if %11 {
      %c0_9 = arith.constant 0 : index
      %c0_10 = arith.constant 0 : index
      %12 = vector.load %arg7[%c0_9, %c0_10] : memref<32x128xf32, #tpu.memory_space<vmem>>, vector<32x128xf32>
      %c0_11 = arith.constant 0 : index
      %c0_12 = arith.constant 0 : index
      %13 = vector.load %arg5[%c0_11, %c0_12] : memref<1x128xf32, #tpu.memory_space<vmem>>, vector<1x128xf32>
      %14 = vector.broadcast %13 : vector<1x128xf32> to vector<32x128xf32>
      %15 = arith.addf %12, %14 : vector<32x128xf32>
      %16 = math.absf %15 : vector<32x128xf32>
      %cst_13 = arith.constant 0.000000e+00 : f32
      %17 = vector.broadcast %cst_13 : f32 to vector<32x128xf32>
      %18 = arith.subf %17, %16 : vector<32x128xf32>
      %19 = math.exp %18 : vector<32x128xf32>
      %cst_14 = arith.constant 1.000000e+00 : f32
      %20 = vector.broadcast %cst_14 : f32 to vector<32x128xf32>
      %21 = arith.addf %20, %19 : vector<32x128xf32>
      %22 = tpu.reciprocal %21 {approx = true} : vector<32x128xf32> -> vector<32x128xf32>
      %cst_15 = arith.constant 0.000000e+00 : f32
      %23 = vector.broadcast %cst_15 : f32 to vector<32x128xf32>
      %24 = arith.cmpf oge, %15, %23 : vector<32x128xf32>
      %cst_16 = arith.constant 1.000000e+00 : f32
      %25 = vector.broadcast %cst_16 : f32 to vector<32x128xf32>
      %26 = arith.subf %25, %22 : vector<32x128xf32>
      %27 = arith.select %24, %22, %26 : vector<32x128xi1>, vector<32x128xf32>
      %28 = arith.mulf %15, %27 : vector<32x128xf32>
      %29 = arith.truncf %28 : vector<32x128xf32> to vector<32x128xbf16>
      %c0_17 = arith.constant 0 : index
      %c0_18 = arith.constant 0 : index
      %30 = vector.load %arg6[%c0_17, %c0_18] : memref<32x128xbf16, #tpu.memory_space<vmem>>, vector<32x128xbf16>
      tpu.vector_store %arg6[%c0_17, %c0_18], %29 {strides = array<i32>} : memref<32x128xbf16, #tpu.memory_space<vmem>>, vector<32x128xbf16>,
    } else {
    }
    return
  }
  func.func @transform_0(%arg0: i32, %arg1: i32, %arg2: i32) -> (i32, i32) {
    %c0_i32 = arith.constant 0 : i32
    return %arg0, %arg2 : i32, i32
  }
  func.func @transform_1(%arg0: i32, %arg1: i32, %arg2: i32) -> (i32, i32) {
    %c0_i32 = arith.constant 0 : i32
    return %arg2, %arg1 : i32, i32
  }
  func.func @transform_2(%arg0: i32, %arg1: i32, %arg2: i32) -> (i32, i32) {
    %c0_i32 = arith.constant 0 : i32
    %c0_i32_0 = arith.constant 0 : i32
    return %c0_i32, %arg1 : i32, i32
  }
  func.func @transform_3(%arg0: i32, %arg1: i32, %arg2: i32) -> (i32, i32) {
    %c0_i32 = arith.constant 0 : i32
    return %arg0, %arg1 : i32, i32
  }
}

module attributes {stable_mosaic.version = 11 : i64} {
  func.func @_mm_bias_silu_kernel(%arg0: i32, %arg1: i32, %arg2: i32, %arg3: memref<16x128xbf16, #tpu.memory_space<vmem>>, %arg4: memref<128x256xbf16, #tpu.memory_space<vmem>>, %arg5: memref<1x256xf32, #tpu.memory_space<vmem>>, %arg6: memref<16x256xbf16, #tpu.memory_space<vmem>>, %arg7: memref<16x256xf32, #tpu.memory_space<vmem>>) attributes {dimension_semantics = [#tpu.dimension_semantics<parallel>, #tpu.dimension_semantics<parallel>, #tpu.dimension_semantics<arbitrary>], iteration_bounds = array<i64: 1, 1, 9>, scalar_prefetch = 0 : i64, scratch_operands = 1 : i64, tpu.core_type = #tpu.core_type<tc>, window_params = [{transform_indices = @transform_0, window_bounds = array<i64: 16, 128>}, {transform_indices = @transform_1, window_bounds = array<i64: 128, 256>}, {transform_indices = @transform_2, window_bounds = array<i64: 1, 256>}, {transform_indices = @transform_3, window_bounds = array<i64: 16, 256>}]} {
    %c0_i32 = arith.constant 0 : i32
    %0 = arith.cmpi eq, %arg2, %c0_i32 : i32
    %1 = arith.extui %0 : i1 to i32
    %c0_i32_0 = arith.constant 0 : i32
    %2 = arith.cmpi ne, %1, %c0_i32_0 : i32
    scf.if %2 {
      %cst_9 = arith.constant 0.000000e+00 : f32
      %12 = vector.broadcast %cst_9 : f32 to vector<16x256xf32>
      %c0_10 = arith.constant 0 : index
      %c0_11 = arith.constant 0 : index
      %13 = vector.load %arg7[%c0_10, %c0_11] : memref<16x256xf32, #tpu.memory_space<vmem>>, vector<16x256xf32>
      tpu.vector_store %arg7[%c0_10, %c0_11], %12 {strides = array<i32>} : memref<16x256xf32, #tpu.memory_space<vmem>>, vector<16x256xf32>,
    } else {
    }
    %c0 = arith.constant 0 : index
    %c0_1 = arith.constant 0 : index
    %3 = vector.load %arg7[%c0, %c0_1] : memref<16x256xf32, #tpu.memory_space<vmem>>, vector<16x256xf32>
    %c0_2 = arith.constant 0 : index
    %c0_3 = arith.constant 0 : index
    %4 = vector.load %arg3[%c0_2, %c0_3] : memref<16x128xbf16, #tpu.memory_space<vmem>>, vector<16x128xbf16>
    %c0_4 = arith.constant 0 : index
    %c0_5 = arith.constant 0 : index
    %5 = vector.load %arg4[%c0_4, %c0_5] : memref<128x256xbf16, #tpu.memory_space<vmem>>, vector<128x256xbf16>
    %cst = arith.constant dense<0.000000e+00> : vector<16x256xf32>
    %6 = tpu.matmul %4, %5, %cst {dimension_numbers = #tpu.dot_dimension_numbers<[1], [0], [0], [1], [0, 0, 1, 1], [], []>} : vector<16x128xbf16>, vector<128x256xbf16>, vector<16x256xf32> -> vector<16x256xf32>
    %7 = arith.addf %3, %6 : vector<16x256xf32>
    %c0_6 = arith.constant 0 : index
    %c0_7 = arith.constant 0 : index
    %8 = vector.load %arg7[%c0_6, %c0_7] : memref<16x256xf32, #tpu.memory_space<vmem>>, vector<16x256xf32>
    tpu.vector_store %arg7[%c0_6, %c0_7], %7 {strides = array<i32>} : memref<16x256xf32, #tpu.memory_space<vmem>>, vector<16x256xf32>,
    %c8_i32 = arith.constant 8 : i32
    %9 = arith.cmpi eq, %arg2, %c8_i32 : i32
    %10 = arith.extui %9 : i1 to i32
    %c0_i32_8 = arith.constant 0 : i32
    %11 = arith.cmpi ne, %10, %c0_i32_8 : i32
    scf.if %11 {
      %c0_9 = arith.constant 0 : index
      %c0_10 = arith.constant 0 : index
      %12 = vector.load %arg7[%c0_9, %c0_10] : memref<16x256xf32, #tpu.memory_space<vmem>>, vector<16x256xf32>
      %c0_11 = arith.constant 0 : index
      %c0_12 = arith.constant 0 : index
      %13 = vector.load %arg5[%c0_11, %c0_12] : memref<1x256xf32, #tpu.memory_space<vmem>>, vector<1x256xf32>
      %14 = vector.broadcast %13 : vector<1x256xf32> to vector<16x256xf32>
      %15 = arith.addf %12, %14 : vector<16x256xf32>
      %16 = math.absf %15 : vector<16x256xf32>
      %cst_13 = arith.constant 0.000000e+00 : f32
      %17 = vector.broadcast %cst_13 : f32 to vector<16x256xf32>
      %18 = arith.subf %17, %16 : vector<16x256xf32>
      %19 = math.exp %18 : vector<16x256xf32>
      %cst_14 = arith.constant 1.000000e+00 : f32
      %20 = vector.broadcast %cst_14 : f32 to vector<16x256xf32>
      %21 = arith.addf %20, %19 : vector<16x256xf32>
      %22 = tpu.reciprocal %21 {approx = true} : vector<16x256xf32> -> vector<16x256xf32>
      %cst_15 = arith.constant 0.000000e+00 : f32
      %23 = vector.broadcast %cst_15 : f32 to vector<16x256xf32>
      %24 = arith.cmpf oge, %15, %23 : vector<16x256xf32>
      %cst_16 = arith.constant 1.000000e+00 : f32
      %25 = vector.broadcast %cst_16 : f32 to vector<16x256xf32>
      %26 = arith.subf %25, %22 : vector<16x256xf32>
      %27 = arith.select %24, %22, %26 : vector<16x256xi1>, vector<16x256xf32>
      %28 = arith.mulf %15, %27 : vector<16x256xf32>
      %29 = arith.truncf %28 : vector<16x256xf32> to vector<16x256xbf16>
      %c0_17 = arith.constant 0 : index
      %c0_18 = arith.constant 0 : index
      %30 = vector.load %arg6[%c0_17, %c0_18] : memref<16x256xbf16, #tpu.memory_space<vmem>>, vector<16x256xbf16>
      tpu.vector_store %arg6[%c0_17, %c0_18], %29 {strides = array<i32>} : memref<16x256xbf16, #tpu.memory_space<vmem>>, vector<16x256xbf16>,
    } else {
    }
    return
  }
  func.func @transform_0(%arg0: i32, %arg1: i32, %arg2: i32) -> (i32, i32) {
    %c0_i32 = arith.constant 0 : i32
    return %arg0, %arg2 : i32, i32
  }
  func.func @transform_1(%arg0: i32, %arg1: i32, %arg2: i32) -> (i32, i32) {
    %c0_i32 = arith.constant 0 : i32
    return %arg2, %arg1 : i32, i32
  }
  func.func @transform_2(%arg0: i32, %arg1: i32, %arg2: i32) -> (i32, i32) {
    %c0_i32 = arith.constant 0 : i32
    %c0_i32_0 = arith.constant 0 : i32
    return %c0_i32, %arg1 : i32, i32
  }
  func.func @transform_3(%arg0: i32, %arg1: i32, %arg2: i32) -> (i32, i32) {
    %c0_i32 = arith.constant 0 : i32
    return %arg0, %arg1 : i32, i32
  }
}

module attributes {stable_mosaic.version = 11 : i64} {
  func.func @_mm_bias_silu_kernel(%arg0: i32, %arg1: i32, %arg2: i32, %arg3: memref<16x256xbf16, #tpu.memory_space<vmem>>, %arg4: memref<256x128xbf16, #tpu.memory_space<vmem>>, %arg5: memref<1x128xf32, #tpu.memory_space<vmem>>, %arg6: memref<16x128xbf16, #tpu.memory_space<vmem>>, %arg7: memref<16x128xf32, #tpu.memory_space<vmem>>) attributes {dimension_semantics = [#tpu.dimension_semantics<parallel>, #tpu.dimension_semantics<parallel>, #tpu.dimension_semantics<arbitrary>], iteration_bounds = array<i64: 1, 1, 1>, scalar_prefetch = 0 : i64, scratch_operands = 1 : i64, tpu.core_type = #tpu.core_type<tc>, window_params = [{transform_indices = @transform_0, window_bounds = array<i64: 16, 256>}, {transform_indices = @transform_1, window_bounds = array<i64: 256, 128>}, {transform_indices = @transform_2, window_bounds = array<i64: 1, 128>}, {transform_indices = @transform_3, window_bounds = array<i64: 16, 128>}]} {
    %c0_i32 = arith.constant 0 : i32
    %0 = arith.cmpi eq, %arg2, %c0_i32 : i32
    %1 = arith.extui %0 : i1 to i32
    %c0_i32_0 = arith.constant 0 : i32
    %2 = arith.cmpi ne, %1, %c0_i32_0 : i32
    scf.if %2 {
      %cst_10 = arith.constant 0.000000e+00 : f32
      %12 = vector.broadcast %cst_10 : f32 to vector<16x128xf32>
      %c0_11 = arith.constant 0 : index
      %c0_12 = arith.constant 0 : index
      %13 = vector.load %arg7[%c0_11, %c0_12] : memref<16x128xf32, #tpu.memory_space<vmem>>, vector<16x128xf32>
      tpu.vector_store %arg7[%c0_11, %c0_12], %12 {strides = array<i32>} : memref<16x128xf32, #tpu.memory_space<vmem>>, vector<16x128xf32>,
    } else {
    }
    %c0 = arith.constant 0 : index
    %c0_1 = arith.constant 0 : index
    %3 = vector.load %arg7[%c0, %c0_1] : memref<16x128xf32, #tpu.memory_space<vmem>>, vector<16x128xf32>
    %c0_2 = arith.constant 0 : index
    %c0_3 = arith.constant 0 : index
    %4 = vector.load %arg3[%c0_2, %c0_3] : memref<16x256xbf16, #tpu.memory_space<vmem>>, vector<16x256xbf16>
    %c0_4 = arith.constant 0 : index
    %c0_5 = arith.constant 0 : index
    %5 = vector.load %arg4[%c0_4, %c0_5] : memref<256x128xbf16, #tpu.memory_space<vmem>>, vector<256x128xbf16>
    %cst = arith.constant dense<0.000000e+00> : vector<16x128xf32>
    %6 = tpu.matmul %4, %5, %cst {dimension_numbers = #tpu.dot_dimension_numbers<[1], [0], [0], [1], [0, 0, 1, 1], [], []>} : vector<16x256xbf16>, vector<256x128xbf16>, vector<16x128xf32> -> vector<16x128xf32>
    %7 = arith.addf %3, %6 : vector<16x128xf32>
    %c0_6 = arith.constant 0 : index
    %c0_7 = arith.constant 0 : index
    %8 = vector.load %arg7[%c0_6, %c0_7] : memref<16x128xf32, #tpu.memory_space<vmem>>, vector<16x128xf32>
    tpu.vector_store %arg7[%c0_6, %c0_7], %7 {strides = array<i32>} : memref<16x128xf32, #tpu.memory_space<vmem>>, vector<16x128xf32>,
    %c0_i32_8 = arith.constant 0 : i32
    %9 = arith.cmpi eq, %arg2, %c0_i32_8 : i32
    %10 = arith.extui %9 : i1 to i32
    %c0_i32_9 = arith.constant 0 : i32
    %11 = arith.cmpi ne, %10, %c0_i32_9 : i32
    scf.if %11 {
      %c0_10 = arith.constant 0 : index
      %c0_11 = arith.constant 0 : index
      %12 = vector.load %arg7[%c0_10, %c0_11] : memref<16x128xf32, #tpu.memory_space<vmem>>, vector<16x128xf32>
      %c0_12 = arith.constant 0 : index
      %c0_13 = arith.constant 0 : index
      %13 = vector.load %arg5[%c0_12, %c0_13] : memref<1x128xf32, #tpu.memory_space<vmem>>, vector<1x128xf32>
      %14 = vector.broadcast %13 : vector<1x128xf32> to vector<16x128xf32>
      %15 = arith.addf %12, %14 : vector<16x128xf32>
      %16 = math.absf %15 : vector<16x128xf32>
      %cst_14 = arith.constant 0.000000e+00 : f32
      %17 = vector.broadcast %cst_14 : f32 to vector<16x128xf32>
      %18 = arith.subf %17, %16 : vector<16x128xf32>
      %19 = math.exp %18 : vector<16x128xf32>
      %cst_15 = arith.constant 1.000000e+00 : f32
      %20 = vector.broadcast %cst_15 : f32 to vector<16x128xf32>
      %21 = arith.addf %20, %19 : vector<16x128xf32>
      %22 = tpu.reciprocal %21 {approx = true} : vector<16x128xf32> -> vector<16x128xf32>
      %cst_16 = arith.constant 0.000000e+00 : f32
      %23 = vector.broadcast %cst_16 : f32 to vector<16x128xf32>
      %24 = arith.cmpf oge, %15, %23 : vector<16x128xf32>
      %cst_17 = arith.constant 1.000000e+00 : f32
      %25 = vector.broadcast %cst_17 : f32 to vector<16x128xf32>
      %26 = arith.subf %25, %22 : vector<16x128xf32>
      %27 = arith.select %24, %22, %26 : vector<16x128xi1>, vector<16x128xf32>
      %28 = arith.mulf %15, %27 : vector<16x128xf32>
      %29 = arith.truncf %28 : vector<16x128xf32> to vector<16x128xbf16>
      %c0_18 = arith.constant 0 : index
      %c0_19 = arith.constant 0 : index
      %30 = vector.load %arg6[%c0_18, %c0_19] : memref<16x128xbf16, #tpu.memory_space<vmem>>, vector<16x128xbf16>
      tpu.vector_store %arg6[%c0_18, %c0_19], %29 {strides = array<i32>} : memref<16x128xbf16, #tpu.memory_space<vmem>>, vector<16x128xbf16>,
    } else {
    }
    return
  }
  func.func @transform_0(%arg0: i32, %arg1: i32, %arg2: i32) -> (i32, i32) {
    %c0_i32 = arith.constant 0 : i32
    return %arg0, %arg2 : i32, i32
  }
  func.func @transform_1(%arg0: i32, %arg1: i32, %arg2: i32) -> (i32, i32) {
    %c0_i32 = arith.constant 0 : i32
    return %arg2, %arg1 : i32, i32
  }
  func.func @transform_2(%arg0: i32, %arg1: i32, %arg2: i32) -> (i32, i32) {
    %c0_i32 = arith.constant 0 : i32
    %c0_i32_0 = arith.constant 0 : i32
    return %c0_i32, %arg1 : i32, i32
  }
  func.func @transform_3(%arg0: i32, %arg1: i32, %arg2: i32) -> (i32, i32) {
    %c0_i32 = arith.constant 0 : i32
    return %arg0, %arg1 : i32, i32
  }
}

module attributes {stable_mosaic.version = 11 : i64} {
  func.func @_maxpool5_kernel(%arg0: i32, %arg1: i32, %arg2: memref<1x6x6x128xbf16, #tpu.memory_space<vmem>>, %arg3: memref<1x2x2x128xbf16, #tpu.memory_space<vmem>>) attributes {dimension_semantics = [#tpu.dimension_semantics<parallel>, #tpu.dimension_semantics<parallel>], iteration_bounds = array<i64: 2, 1>, scalar_prefetch = 0 : i64, scratch_operands = 0 : i64, tpu.core_type = #tpu.core_type<tc>, window_params = [{transform_indices = @transform_0, window_bounds = array<i64: 1, 6, 6, 128>}, {transform_indices = @transform_1, window_bounds = array<i64: 1, 2, 2, 128>}]} {
    %c0 = arith.constant 0 : index
    %c0_0 = arith.constant 0 : index
    %c0_1 = arith.constant 0 : index
    %c0_2 = arith.constant 0 : index
    %0 = vector.load %arg2[%c0, %c0_0, %c0_1, %c0_2] : memref<1x6x6x128xbf16, #tpu.memory_space<vmem>>, vector<1x6x6x128xbf16>
    %1 = vector.shape_cast %0 : vector<1x6x6x128xbf16> to vector<6x6x128xbf16>
    %2 = vector.extract_strided_slice %1 {offsets = [0, 0, 0], sizes = [2, 6, 128], strides = [1, 1, 1]} : vector<6x6x128xbf16> to vector<2x6x128xbf16>
    %3 = vector.extract_strided_slice %1 {offsets = [1, 0, 0], sizes = [2, 6, 128], strides = [1, 1, 1]} : vector<6x6x128xbf16> to vector<2x6x128xbf16>
    %4 = arith.maximumf %2, %3 : vector<2x6x128xbf16>
    %5 = vector.extract_strided_slice %1 {offsets = [2, 0, 0], sizes = [2, 6, 128], strides = [1, 1, 1]} : vector<6x6x128xbf16> to vector<2x6x128xbf16>
    %6 = arith.maximumf %4, %5 : vector<2x6x128xbf16>
    %7 = vector.extract_strided_slice %1 {offsets = [3, 0, 0], sizes = [2, 6, 128], strides = [1, 1, 1]} : vector<6x6x128xbf16> to vector<2x6x128xbf16>
    %8 = arith.maximumf %6, %7 : vector<2x6x128xbf16>
    %9 = vector.extract_strided_slice %1 {offsets = [4, 0, 0], sizes = [2, 6, 128], strides = [1, 1, 1]} : vector<6x6x128xbf16> to vector<2x6x128xbf16>
    %10 = arith.maximumf %8, %9 : vector<2x6x128xbf16>
    %11 = vector.extract_strided_slice %10 {offsets = [0, 0, 0], sizes = [2, 2, 128], strides = [1, 1, 1]} : vector<2x6x128xbf16> to vector<2x2x128xbf16>
    %12 = vector.extract_strided_slice %10 {offsets = [0, 1, 0], sizes = [2, 2, 128], strides = [1, 1, 1]} : vector<2x6x128xbf16> to vector<2x2x128xbf16>
    %13 = arith.maximumf %11, %12 : vector<2x2x128xbf16>
    %14 = vector.extract_strided_slice %10 {offsets = [0, 2, 0], sizes = [2, 2, 128], strides = [1, 1, 1]} : vector<2x6x128xbf16> to vector<2x2x128xbf16>
    %15 = arith.maximumf %13, %14 : vector<2x2x128xbf16>
    %16 = vector.extract_strided_slice %10 {offsets = [0, 3, 0], sizes = [2, 2, 128], strides = [1, 1, 1]} : vector<2x6x128xbf16> to vector<2x2x128xbf16>
    %17 = arith.maximumf %15, %16 : vector<2x2x128xbf16>
    %18 = vector.extract_strided_slice %10 {offsets = [0, 4, 0], sizes = [2, 2, 128], strides = [1, 1, 1]} : vector<2x6x128xbf16> to vector<2x2x128xbf16>
    %19 = arith.maximumf %17, %18 : vector<2x2x128xbf16>
    %c0_3 = arith.constant 0 : index
    %c0_4 = arith.constant 0 : index
    %c0_5 = arith.constant 0 : index
    %c0_6 = arith.constant 0 : index
    %20 = vector.load %arg3[%c0_3, %c0_4, %c0_5, %c0_6] : memref<1x2x2x128xbf16, #tpu.memory_space<vmem>>, vector<1x2x2x128xbf16>
    %21 = vector.shape_cast %20 : vector<1x2x2x128xbf16> to vector<2x2x128xbf16>
    %22 = vector.shape_cast %19 : vector<2x2x128xbf16> to vector<1x2x2x128xbf16>
    tpu.vector_store %arg3[%c0_3, %c0_4, %c0_5, %c0_6], %22 {strides = array<i32>} : memref<1x2x2x128xbf16, #tpu.memory_space<vmem>>, vector<1x2x2x128xbf16>,
    return
  }
  func.func @transform_0(%arg0: i32, %arg1: i32) -> (i32, i32, i32, i32) {
    %c0_i32 = arith.constant 0 : i32
    %c0_i32_0 = arith.constant 0 : i32
    %c0_i32_1 = arith.constant 0 : i32
    return %arg0, %c0_i32, %c0_i32_0, %arg1 : i32, i32, i32, i32
  }
  func.func @transform_1(%arg0: i32, %arg1: i32) -> (i32, i32, i32, i32) {
    %c0_i32 = arith.constant 0 : i32
    %c0_i32_0 = arith.constant 0 : i32
    %c0_i32_1 = arith.constant 0 : i32
    return %arg0, %c0_i32, %c0_i32_0, %arg1 : i32, i32, i32, i32
  }
}

module attributes {stable_mosaic.version = 11 : i64} {
  func.func @_mm_bias_silu_kernel(%arg0: i32, %arg1: i32, %arg2: i32, %arg3: memref<16x512xbf16, #tpu.memory_space<vmem>>, %arg4: memref<512x256xbf16, #tpu.memory_space<vmem>>, %arg5: memref<1x256xf32, #tpu.memory_space<vmem>>, %arg6: memref<16x256xbf16, #tpu.memory_space<vmem>>, %arg7: memref<16x256xf32, #tpu.memory_space<vmem>>) attributes {dimension_semantics = [#tpu.dimension_semantics<parallel>, #tpu.dimension_semantics<parallel>, #tpu.dimension_semantics<arbitrary>], iteration_bounds = array<i64: 1, 1, 1>, scalar_prefetch = 0 : i64, scratch_operands = 1 : i64, tpu.core_type = #tpu.core_type<tc>, window_params = [{transform_indices = @transform_0, window_bounds = array<i64: 16, 512>}, {transform_indices = @transform_1, window_bounds = array<i64: 512, 256>}, {transform_indices = @transform_2, window_bounds = array<i64: 1, 256>}, {transform_indices = @transform_3, window_bounds = array<i64: 16, 256>}]} {
    %c0_i32 = arith.constant 0 : i32
    %0 = arith.cmpi eq, %arg2, %c0_i32 : i32
    %1 = arith.extui %0 : i1 to i32
    %c0_i32_0 = arith.constant 0 : i32
    %2 = arith.cmpi ne, %1, %c0_i32_0 : i32
    scf.if %2 {
      %cst_10 = arith.constant 0.000000e+00 : f32
      %12 = vector.broadcast %cst_10 : f32 to vector<16x256xf32>
      %c0_11 = arith.constant 0 : index
      %c0_12 = arith.constant 0 : index
      %13 = vector.load %arg7[%c0_11, %c0_12] : memref<16x256xf32, #tpu.memory_space<vmem>>, vector<16x256xf32>
      tpu.vector_store %arg7[%c0_11, %c0_12], %12 {strides = array<i32>} : memref<16x256xf32, #tpu.memory_space<vmem>>, vector<16x256xf32>,
    } else {
    }
    %c0 = arith.constant 0 : index
    %c0_1 = arith.constant 0 : index
    %3 = vector.load %arg7[%c0, %c0_1] : memref<16x256xf32, #tpu.memory_space<vmem>>, vector<16x256xf32>
    %c0_2 = arith.constant 0 : index
    %c0_3 = arith.constant 0 : index
    %4 = vector.load %arg3[%c0_2, %c0_3] : memref<16x512xbf16, #tpu.memory_space<vmem>>, vector<16x512xbf16>
    %c0_4 = arith.constant 0 : index
    %c0_5 = arith.constant 0 : index
    %5 = vector.load %arg4[%c0_4, %c0_5] : memref<512x256xbf16, #tpu.memory_space<vmem>>, vector<512x256xbf16>
    %cst = arith.constant dense<0.000000e+00> : vector<16x256xf32>
    %6 = tpu.matmul %4, %5, %cst {dimension_numbers = #tpu.dot_dimension_numbers<[1], [0], [0], [1], [0, 0, 1, 1], [], []>} : vector<16x512xbf16>, vector<512x256xbf16>, vector<16x256xf32> -> vector<16x256xf32>
    %7 = arith.addf %3, %6 : vector<16x256xf32>
    %c0_6 = arith.constant 0 : index
    %c0_7 = arith.constant 0 : index
    %8 = vector.load %arg7[%c0_6, %c0_7] : memref<16x256xf32, #tpu.memory_space<vmem>>, vector<16x256xf32>
    tpu.vector_store %arg7[%c0_6, %c0_7], %7 {strides = array<i32>} : memref<16x256xf32, #tpu.memory_space<vmem>>, vector<16x256xf32>,
    %c0_i32_8 = arith.constant 0 : i32
    %9 = arith.cmpi eq, %arg2, %c0_i32_8 : i32
    %10 = arith.extui %9 : i1 to i32
    %c0_i32_9 = arith.constant 0 : i32
    %11 = arith.cmpi ne, %10, %c0_i32_9 : i32
    scf.if %11 {
      %c0_10 = arith.constant 0 : index
      %c0_11 = arith.constant 0 : index
      %12 = vector.load %arg7[%c0_10, %c0_11] : memref<16x256xf32, #tpu.memory_space<vmem>>, vector<16x256xf32>
      %c0_12 = arith.constant 0 : index
      %c0_13 = arith.constant 0 : index
      %13 = vector.load %arg5[%c0_12, %c0_13] : memref<1x256xf32, #tpu.memory_space<vmem>>, vector<1x256xf32>
      %14 = vector.broadcast %13 : vector<1x256xf32> to vector<16x256xf32>
      %15 = arith.addf %12, %14 : vector<16x256xf32>
      %16 = math.absf %15 : vector<16x256xf32>
      %cst_14 = arith.constant 0.000000e+00 : f32
      %17 = vector.broadcast %cst_14 : f32 to vector<16x256xf32>
      %18 = arith.subf %17, %16 : vector<16x256xf32>
      %19 = math.exp %18 : vector<16x256xf32>
      %cst_15 = arith.constant 1.000000e+00 : f32
      %20 = vector.broadcast %cst_15 : f32 to vector<16x256xf32>
      %21 = arith.addf %20, %19 : vector<16x256xf32>
      %22 = tpu.reciprocal %21 {approx = true} : vector<16x256xf32> -> vector<16x256xf32>
      %cst_16 = arith.constant 0.000000e+00 : f32
      %23 = vector.broadcast %cst_16 : f32 to vector<16x256xf32>
      %24 = arith.cmpf oge, %15, %23 : vector<16x256xf32>
      %cst_17 = arith.constant 1.000000e+00 : f32
      %25 = vector.broadcast %cst_17 : f32 to vector<16x256xf32>
      %26 = arith.subf %25, %22 : vector<16x256xf32>
      %27 = arith.select %24, %22, %26 : vector<16x256xi1>, vector<16x256xf32>
      %28 = arith.mulf %15, %27 : vector<16x256xf32>
      %29 = arith.truncf %28 : vector<16x256xf32> to vector<16x256xbf16>
      %c0_18 = arith.constant 0 : index
      %c0_19 = arith.constant 0 : index
      %30 = vector.load %arg6[%c0_18, %c0_19] : memref<16x256xbf16, #tpu.memory_space<vmem>>, vector<16x256xbf16>
      tpu.vector_store %arg6[%c0_18, %c0_19], %29 {strides = array<i32>} : memref<16x256xbf16, #tpu.memory_space<vmem>>, vector<16x256xbf16>,
    } else {
    }
    return
  }
  func.func @transform_0(%arg0: i32, %arg1: i32, %arg2: i32) -> (i32, i32) {
    %c0_i32 = arith.constant 0 : i32
    return %arg0, %arg2 : i32, i32
  }
  func.func @transform_1(%arg0: i32, %arg1: i32, %arg2: i32) -> (i32, i32) {
    %c0_i32 = arith.constant 0 : i32
    return %arg2, %arg1 : i32, i32
  }
  func.func @transform_2(%arg0: i32, %arg1: i32, %arg2: i32) -> (i32, i32) {
    %c0_i32 = arith.constant 0 : i32
    %c0_i32_0 = arith.constant 0 : i32
    return %c0_i32, %arg1 : i32, i32
  }
  func.func @transform_3(%arg0: i32, %arg1: i32, %arg2: i32) -> (i32, i32) {
    %c0_i32 = arith.constant 0 : i32
    return %arg0, %arg1 : i32, i32
  }
}

module attributes {stable_mosaic.version = 11 : i64} {
  func.func @_mm_bias_silu_kernel(%arg0: i32, %arg1: i32, %arg2: i32, %arg3: memref<16x256xbf16, #tpu.memory_space<vmem>>, %arg4: memref<256x256xbf16, #tpu.memory_space<vmem>>, %arg5: memref<1x256xf32, #tpu.memory_space<vmem>>, %arg6: memref<16x256xbf16, #tpu.memory_space<vmem>>, %arg7: memref<16x256xf32, #tpu.memory_space<vmem>>) attributes {dimension_semantics = [#tpu.dimension_semantics<parallel>, #tpu.dimension_semantics<parallel>, #tpu.dimension_semantics<arbitrary>], iteration_bounds = array<i64: 1, 1, 1>, scalar_prefetch = 0 : i64, scratch_operands = 1 : i64, tpu.core_type = #tpu.core_type<tc>, window_params = [{transform_indices = @transform_0, window_bounds = array<i64: 16, 256>}, {transform_indices = @transform_1, window_bounds = array<i64: 256, 256>}, {transform_indices = @transform_2, window_bounds = array<i64: 1, 256>}, {transform_indices = @transform_3, window_bounds = array<i64: 16, 256>}]} {
    %c0_i32 = arith.constant 0 : i32
    %0 = arith.cmpi eq, %arg2, %c0_i32 : i32
    %1 = arith.extui %0 : i1 to i32
    %c0_i32_0 = arith.constant 0 : i32
    %2 = arith.cmpi ne, %1, %c0_i32_0 : i32
    scf.if %2 {
      %cst_10 = arith.constant 0.000000e+00 : f32
      %12 = vector.broadcast %cst_10 : f32 to vector<16x256xf32>
      %c0_11 = arith.constant 0 : index
      %c0_12 = arith.constant 0 : index
      %13 = vector.load %arg7[%c0_11, %c0_12] : memref<16x256xf32, #tpu.memory_space<vmem>>, vector<16x256xf32>
      tpu.vector_store %arg7[%c0_11, %c0_12], %12 {strides = array<i32>} : memref<16x256xf32, #tpu.memory_space<vmem>>, vector<16x256xf32>,
    } else {
    }
    %c0 = arith.constant 0 : index
    %c0_1 = arith.constant 0 : index
    %3 = vector.load %arg7[%c0, %c0_1] : memref<16x256xf32, #tpu.memory_space<vmem>>, vector<16x256xf32>
    %c0_2 = arith.constant 0 : index
    %c0_3 = arith.constant 0 : index
    %4 = vector.load %arg3[%c0_2, %c0_3] : memref<16x256xbf16, #tpu.memory_space<vmem>>, vector<16x256xbf16>
    %c0_4 = arith.constant 0 : index
    %c0_5 = arith.constant 0 : index
    %5 = vector.load %arg4[%c0_4, %c0_5] : memref<256x256xbf16, #tpu.memory_space<vmem>>, vector<256x256xbf16>
    %cst = arith.constant dense<0.000000e+00> : vector<16x256xf32>
    %6 = tpu.matmul %4, %5, %cst {dimension_numbers = #tpu.dot_dimension_numbers<[1], [0], [0], [1], [0, 0, 1, 1], [], []>} : vector<16x256xbf16>, vector<256x256xbf16>, vector<16x256xf32> -> vector<16x256xf32>
    %7 = arith.addf %3, %6 : vector<16x256xf32>
    %c0_6 = arith.constant 0 : index
    %c0_7 = arith.constant 0 : index
    %8 = vector.load %arg7[%c0_6, %c0_7] : memref<16x256xf32, #tpu.memory_space<vmem>>, vector<16x256xf32>
    tpu.vector_store %arg7[%c0_6, %c0_7], %7 {strides = array<i32>} : memref<16x256xf32, #tpu.memory_space<vmem>>, vector<16x256xf32>,
    %c0_i32_8 = arith.constant 0 : i32
    %9 = arith.cmpi eq, %arg2, %c0_i32_8 : i32
    %10 = arith.extui %9 : i1 to i32
    %c0_i32_9 = arith.constant 0 : i32
    %11 = arith.cmpi ne, %10, %c0_i32_9 : i32
    scf.if %11 {
      %c0_10 = arith.constant 0 : index
      %c0_11 = arith.constant 0 : index
      %12 = vector.load %arg7[%c0_10, %c0_11] : memref<16x256xf32, #tpu.memory_space<vmem>>, vector<16x256xf32>
      %c0_12 = arith.constant 0 : index
      %c0_13 = arith.constant 0 : index
      %13 = vector.load %arg5[%c0_12, %c0_13] : memref<1x256xf32, #tpu.memory_space<vmem>>, vector<1x256xf32>
      %14 = vector.broadcast %13 : vector<1x256xf32> to vector<16x256xf32>
      %15 = arith.addf %12, %14 : vector<16x256xf32>
      %16 = math.absf %15 : vector<16x256xf32>
      %cst_14 = arith.constant 0.000000e+00 : f32
      %17 = vector.broadcast %cst_14 : f32 to vector<16x256xf32>
      %18 = arith.subf %17, %16 : vector<16x256xf32>
      %19 = math.exp %18 : vector<16x256xf32>
      %cst_15 = arith.constant 1.000000e+00 : f32
      %20 = vector.broadcast %cst_15 : f32 to vector<16x256xf32>
      %21 = arith.addf %20, %19 : vector<16x256xf32>
      %22 = tpu.reciprocal %21 {approx = true} : vector<16x256xf32> -> vector<16x256xf32>
      %cst_16 = arith.constant 0.000000e+00 : f32
      %23 = vector.broadcast %cst_16 : f32 to vector<16x256xf32>
      %24 = arith.cmpf oge, %15, %23 : vector<16x256xf32>
      %cst_17 = arith.constant 1.000000e+00 : f32
      %25 = vector.broadcast %cst_17 : f32 to vector<16x256xf32>
      %26 = arith.subf %25, %22 : vector<16x256xf32>
      %27 = arith.select %24, %22, %26 : vector<16x256xi1>, vector<16x256xf32>
      %28 = arith.mulf %15, %27 : vector<16x256xf32>
      %29 = arith.truncf %28 : vector<16x256xf32> to vector<16x256xbf16>
      %c0_18 = arith.constant 0 : index
      %c0_19 = arith.constant 0 : index
      %30 = vector.load %arg6[%c0_18, %c0_19] : memref<16x256xbf16, #tpu.memory_space<vmem>>, vector<16x256xbf16>
      tpu.vector_store %arg6[%c0_18, %c0_19], %29 {strides = array<i32>} : memref<16x256xbf16, #tpu.memory_space<vmem>>, vector<16x256xbf16>,
    } else {
    }
    return
  }
  func.func @transform_0(%arg0: i32, %arg1: i32, %arg2: i32) -> (i32, i32) {
    %c0_i32 = arith.constant 0 : i32
    return %arg0, %arg2 : i32, i32
  }
  func.func @transform_1(%arg0: i32, %arg1: i32, %arg2: i32) -> (i32, i32) {
    %c0_i32 = arith.constant 0 : i32
    return %arg2, %arg1 : i32, i32
  }
  func.func @transform_2(%arg0: i32, %arg1: i32, %arg2: i32) -> (i32, i32) {
    %c0_i32 = arith.constant 0 : i32
    %c0_i32_0 = arith.constant 0 : i32
    return %c0_i32, %arg1 : i32, i32
  }
  func.func @transform_3(%arg0: i32, %arg1: i32, %arg2: i32) -> (i32, i32) {
    %c0_i32 = arith.constant 0 : i32
    return %arg0, %arg1 : i32, i32
  }
}

module attributes {stable_mosaic.version = 11 : i64} {
  func.func @_mm_bias_silu_kernel(%arg0: i32, %arg1: i32, %arg2: i32, %arg3: memref<16x128xbf16, #tpu.memory_space<vmem>>, %arg4: memref<128x128xbf16, #tpu.memory_space<vmem>>, %arg5: memref<1x128xf32, #tpu.memory_space<vmem>>, %arg6: memref<16x128xbf16, #tpu.memory_space<vmem>>, %arg7: memref<16x128xf32, #tpu.memory_space<vmem>>) attributes {dimension_semantics = [#tpu.dimension_semantics<parallel>, #tpu.dimension_semantics<parallel>, #tpu.dimension_semantics<arbitrary>], iteration_bounds = array<i64: 1, 1, 1>, scalar_prefetch = 0 : i64, scratch_operands = 1 : i64, tpu.core_type = #tpu.core_type<tc>, window_params = [{transform_indices = @transform_0, window_bounds = array<i64: 16, 128>}, {transform_indices = @transform_1, window_bounds = array<i64: 128, 128>}, {transform_indices = @transform_2, window_bounds = array<i64: 1, 128>}, {transform_indices = @transform_3, window_bounds = array<i64: 16, 128>}]} {
    %c0_i32 = arith.constant 0 : i32
    %0 = arith.cmpi eq, %arg2, %c0_i32 : i32
    %1 = arith.extui %0 : i1 to i32
    %c0_i32_0 = arith.constant 0 : i32
    %2 = arith.cmpi ne, %1, %c0_i32_0 : i32
    scf.if %2 {
      %cst_10 = arith.constant 0.000000e+00 : f32
      %12 = vector.broadcast %cst_10 : f32 to vector<16x128xf32>
      %c0_11 = arith.constant 0 : index
      %c0_12 = arith.constant 0 : index
      %13 = vector.load %arg7[%c0_11, %c0_12] : memref<16x128xf32, #tpu.memory_space<vmem>>, vector<16x128xf32>
      tpu.vector_store %arg7[%c0_11, %c0_12], %12 {strides = array<i32>} : memref<16x128xf32, #tpu.memory_space<vmem>>, vector<16x128xf32>,
    } else {
    }
    %c0 = arith.constant 0 : index
    %c0_1 = arith.constant 0 : index
    %3 = vector.load %arg7[%c0, %c0_1] : memref<16x128xf32, #tpu.memory_space<vmem>>, vector<16x128xf32>
    %c0_2 = arith.constant 0 : index
    %c0_3 = arith.constant 0 : index
    %4 = vector.load %arg3[%c0_2, %c0_3] : memref<16x128xbf16, #tpu.memory_space<vmem>>, vector<16x128xbf16>
    %c0_4 = arith.constant 0 : index
    %c0_5 = arith.constant 0 : index
    %5 = vector.load %arg4[%c0_4, %c0_5] : memref<128x128xbf16, #tpu.memory_space<vmem>>, vector<128x128xbf16>
    %cst = arith.constant dense<0.000000e+00> : vector<16x128xf32>
    %6 = tpu.matmul %4, %5, %cst {dimension_numbers = #tpu.dot_dimension_numbers<[1], [0], [0], [1], [0, 0, 1, 1], [], []>} : vector<16x128xbf16>, vector<128x128xbf16>, vector<16x128xf32> -> vector<16x128xf32>
    %7 = arith.addf %3, %6 : vector<16x128xf32>
    %c0_6 = arith.constant 0 : index
    %c0_7 = arith.constant 0 : index
    %8 = vector.load %arg7[%c0_6, %c0_7] : memref<16x128xf32, #tpu.memory_space<vmem>>, vector<16x128xf32>
    tpu.vector_store %arg7[%c0_6, %c0_7], %7 {strides = array<i32>} : memref<16x128xf32, #tpu.memory_space<vmem>>, vector<16x128xf32>,
    %c0_i32_8 = arith.constant 0 : i32
    %9 = arith.cmpi eq, %arg2, %c0_i32_8 : i32
    %10 = arith.extui %9 : i1 to i32
    %c0_i32_9 = arith.constant 0 : i32
    %11 = arith.cmpi ne, %10, %c0_i32_9 : i32
    scf.if %11 {
      %c0_10 = arith.constant 0 : index
      %c0_11 = arith.constant 0 : index
      %12 = vector.load %arg7[%c0_10, %c0_11] : memref<16x128xf32, #tpu.memory_space<vmem>>, vector<16x128xf32>
      %c0_12 = arith.constant 0 : index
      %c0_13 = arith.constant 0 : index
      %13 = vector.load %arg5[%c0_12, %c0_13] : memref<1x128xf32, #tpu.memory_space<vmem>>, vector<1x128xf32>
      %14 = vector.broadcast %13 : vector<1x128xf32> to vector<16x128xf32>
      %15 = arith.addf %12, %14 : vector<16x128xf32>
      %16 = math.absf %15 : vector<16x128xf32>
      %cst_14 = arith.constant 0.000000e+00 : f32
      %17 = vector.broadcast %cst_14 : f32 to vector<16x128xf32>
      %18 = arith.subf %17, %16 : vector<16x128xf32>
      %19 = math.exp %18 : vector<16x128xf32>
      %cst_15 = arith.constant 1.000000e+00 : f32
      %20 = vector.broadcast %cst_15 : f32 to vector<16x128xf32>
      %21 = arith.addf %20, %19 : vector<16x128xf32>
      %22 = tpu.reciprocal %21 {approx = true} : vector<16x128xf32> -> vector<16x128xf32>
      %cst_16 = arith.constant 0.000000e+00 : f32
      %23 = vector.broadcast %cst_16 : f32 to vector<16x128xf32>
      %24 = arith.cmpf oge, %15, %23 : vector<16x128xf32>
      %cst_17 = arith.constant 1.000000e+00 : f32
      %25 = vector.broadcast %cst_17 : f32 to vector<16x128xf32>
      %26 = arith.subf %25, %22 : vector<16x128xf32>
      %27 = arith.select %24, %22, %26 : vector<16x128xi1>, vector<16x128xf32>
      %28 = arith.mulf %15, %27 : vector<16x128xf32>
      %29 = arith.truncf %28 : vector<16x128xf32> to vector<16x128xbf16>
      %c0_18 = arith.constant 0 : index
      %c0_19 = arith.constant 0 : index
      %30 = vector.load %arg6[%c0_18, %c0_19] : memref<16x128xbf16, #tpu.memory_space<vmem>>, vector<16x128xbf16>
      tpu.vector_store %arg6[%c0_18, %c0_19], %29 {strides = array<i32>} : memref<16x128xbf16, #tpu.memory_space<vmem>>, vector<16x128xbf16>,
    } else {
    }
    return
  }
  func.func @transform_0(%arg0: i32, %arg1: i32, %arg2: i32) -> (i32, i32) {
    %c0_i32 = arith.constant 0 : i32
    return %arg0, %arg2 : i32, i32
  }
  func.func @transform_1(%arg0: i32, %arg1: i32, %arg2: i32) -> (i32, i32) {
    %c0_i32 = arith.constant 0 : i32
    return %arg2, %arg1 : i32, i32
  }
  func.func @transform_2(%arg0: i32, %arg1: i32, %arg2: i32) -> (i32, i32) {
    %c0_i32 = arith.constant 0 : i32
    %c0_i32_0 = arith.constant 0 : i32
    return %c0_i32, %arg1 : i32, i32
  }
  func.func @transform_3(%arg0: i32, %arg1: i32, %arg2: i32) -> (i32, i32) {
    %c0_i32 = arith.constant 0 : i32
    return %arg0, %arg1 : i32, i32
  }
}

module attributes {stable_mosaic.version = 11 : i64} {
  func.func @_mm_bias_silu_kernel(%arg0: i32, %arg1: i32, %arg2: i32, %arg3: memref<16x128xbf16, #tpu.memory_space<vmem>>, %arg4: memref<128x128xbf16, #tpu.memory_space<vmem>>, %arg5: memref<1x128xf32, #tpu.memory_space<vmem>>, %arg6: memref<16x128xbf16, #tpu.memory_space<vmem>>, %arg7: memref<16x128xf32, #tpu.memory_space<vmem>>) attributes {dimension_semantics = [#tpu.dimension_semantics<parallel>, #tpu.dimension_semantics<parallel>, #tpu.dimension_semantics<arbitrary>], iteration_bounds = array<i64: 1, 1, 9>, scalar_prefetch = 0 : i64, scratch_operands = 1 : i64, tpu.core_type = #tpu.core_type<tc>, window_params = [{transform_indices = @transform_0, window_bounds = array<i64: 16, 128>}, {transform_indices = @transform_1, window_bounds = array<i64: 128, 128>}, {transform_indices = @transform_2, window_bounds = array<i64: 1, 128>}, {transform_indices = @transform_3, window_bounds = array<i64: 16, 128>}]} {
    %c0_i32 = arith.constant 0 : i32
    %0 = arith.cmpi eq, %arg2, %c0_i32 : i32
    %1 = arith.extui %0 : i1 to i32
    %c0_i32_0 = arith.constant 0 : i32
    %2 = arith.cmpi ne, %1, %c0_i32_0 : i32
    scf.if %2 {
      %cst_9 = arith.constant 0.000000e+00 : f32
      %12 = vector.broadcast %cst_9 : f32 to vector<16x128xf32>
      %c0_10 = arith.constant 0 : index
      %c0_11 = arith.constant 0 : index
      %13 = vector.load %arg7[%c0_10, %c0_11] : memref<16x128xf32, #tpu.memory_space<vmem>>, vector<16x128xf32>
      tpu.vector_store %arg7[%c0_10, %c0_11], %12 {strides = array<i32>} : memref<16x128xf32, #tpu.memory_space<vmem>>, vector<16x128xf32>,
    } else {
    }
    %c0 = arith.constant 0 : index
    %c0_1 = arith.constant 0 : index
    %3 = vector.load %arg7[%c0, %c0_1] : memref<16x128xf32, #tpu.memory_space<vmem>>, vector<16x128xf32>
    %c0_2 = arith.constant 0 : index
    %c0_3 = arith.constant 0 : index
    %4 = vector.load %arg3[%c0_2, %c0_3] : memref<16x128xbf16, #tpu.memory_space<vmem>>, vector<16x128xbf16>
    %c0_4 = arith.constant 0 : index
    %c0_5 = arith.constant 0 : index
    %5 = vector.load %arg4[%c0_4, %c0_5] : memref<128x128xbf16, #tpu.memory_space<vmem>>, vector<128x128xbf16>
    %cst = arith.constant dense<0.000000e+00> : vector<16x128xf32>
    %6 = tpu.matmul %4, %5, %cst {dimension_numbers = #tpu.dot_dimension_numbers<[1], [0], [0], [1], [0, 0, 1, 1], [], []>} : vector<16x128xbf16>, vector<128x128xbf16>, vector<16x128xf32> -> vector<16x128xf32>
    %7 = arith.addf %3, %6 : vector<16x128xf32>
    %c0_6 = arith.constant 0 : index
    %c0_7 = arith.constant 0 : index
    %8 = vector.load %arg7[%c0_6, %c0_7] : memref<16x128xf32, #tpu.memory_space<vmem>>, vector<16x128xf32>
    tpu.vector_store %arg7[%c0_6, %c0_7], %7 {strides = array<i32>} : memref<16x128xf32, #tpu.memory_space<vmem>>, vector<16x128xf32>,
    %c8_i32 = arith.constant 8 : i32
    %9 = arith.cmpi eq, %arg2, %c8_i32 : i32
    %10 = arith.extui %9 : i1 to i32
    %c0_i32_8 = arith.constant 0 : i32
    %11 = arith.cmpi ne, %10, %c0_i32_8 : i32
    scf.if %11 {
      %c0_9 = arith.constant 0 : index
      %c0_10 = arith.constant 0 : index
      %12 = vector.load %arg7[%c0_9, %c0_10] : memref<16x128xf32, #tpu.memory_space<vmem>>, vector<16x128xf32>
      %c0_11 = arith.constant 0 : index
      %c0_12 = arith.constant 0 : index
      %13 = vector.load %arg5[%c0_11, %c0_12] : memref<1x128xf32, #tpu.memory_space<vmem>>, vector<1x128xf32>
      %14 = vector.broadcast %13 : vector<1x128xf32> to vector<16x128xf32>
      %15 = arith.addf %12, %14 : vector<16x128xf32>
      %16 = math.absf %15 : vector<16x128xf32>
      %cst_13 = arith.constant 0.000000e+00 : f32
      %17 = vector.broadcast %cst_13 : f32 to vector<16x128xf32>
      %18 = arith.subf %17, %16 : vector<16x128xf32>
      %19 = math.exp %18 : vector<16x128xf32>
      %cst_14 = arith.constant 1.000000e+00 : f32
      %20 = vector.broadcast %cst_14 : f32 to vector<16x128xf32>
      %21 = arith.addf %20, %19 : vector<16x128xf32>
      %22 = tpu.reciprocal %21 {approx = true} : vector<16x128xf32> -> vector<16x128xf32>
      %cst_15 = arith.constant 0.000000e+00 : f32
      %23 = vector.broadcast %cst_15 : f32 to vector<16x128xf32>
      %24 = arith.cmpf oge, %15, %23 : vector<16x128xf32>
      %cst_16 = arith.constant 1.000000e+00 : f32
      %25 = vector.broadcast %cst_16 : f32 to vector<16x128xf32>
      %26 = arith.subf %25, %22 : vector<16x128xf32>
      %27 = arith.select %24, %22, %26 : vector<16x128xi1>, vector<16x128xf32>
      %28 = arith.mulf %15, %27 : vector<16x128xf32>
      %29 = arith.truncf %28 : vector<16x128xf32> to vector<16x128xbf16>
      %c0_17 = arith.constant 0 : index
      %c0_18 = arith.constant 0 : index
      %30 = vector.load %arg6[%c0_17, %c0_18] : memref<16x128xbf16, #tpu.memory_space<vmem>>, vector<16x128xbf16>
      tpu.vector_store %arg6[%c0_17, %c0_18], %29 {strides = array<i32>} : memref<16x128xbf16, #tpu.memory_space<vmem>>, vector<16x128xbf16>,
    } else {
    }
    return
  }
  func.func @transform_0(%arg0: i32, %arg1: i32, %arg2: i32) -> (i32, i32) {
    %c0_i32 = arith.constant 0 : i32
    return %arg0, %arg2 : i32, i32
  }
  func.func @transform_1(%arg0: i32, %arg1: i32, %arg2: i32) -> (i32, i32) {
    %c0_i32 = arith.constant 0 : i32
    return %arg2, %arg1 : i32, i32
  }
  func.func @transform_2(%arg0: i32, %arg1: i32, %arg2: i32) -> (i32, i32) {
    %c0_i32 = arith.constant 0 : i32
    %c0_i32_0 = arith.constant 0 : i32
    return %c0_i32, %arg1 : i32, i32
  }
  func.func @transform_3(%arg0: i32, %arg1: i32, %arg2: i32) -> (i32, i32) {
    %c0_i32 = arith.constant 0 : i32
    return %arg0, %arg1 : i32, i32
  }
}

module attributes {stable_mosaic.version = 11 : i64} {
  func.func @_mm_bias_silu_kernel(%arg0: i32, %arg1: i32, %arg2: i32, %arg3: memref<32x256xbf16, #tpu.memory_space<vmem>>, %arg4: memref<256x128xbf16, #tpu.memory_space<vmem>>, %arg5: memref<1x128xf32, #tpu.memory_space<vmem>>, %arg6: memref<32x128xbf16, #tpu.memory_space<vmem>>, %arg7: memref<32x128xf32, #tpu.memory_space<vmem>>) attributes {dimension_semantics = [#tpu.dimension_semantics<parallel>, #tpu.dimension_semantics<parallel>, #tpu.dimension_semantics<arbitrary>], iteration_bounds = array<i64: 1, 1, 1>, scalar_prefetch = 0 : i64, scratch_operands = 1 : i64, tpu.core_type = #tpu.core_type<tc>, window_params = [{transform_indices = @transform_0, window_bounds = array<i64: 32, 256>}, {transform_indices = @transform_1, window_bounds = array<i64: 256, 128>}, {transform_indices = @transform_2, window_bounds = array<i64: 1, 128>}, {transform_indices = @transform_3, window_bounds = array<i64: 32, 128>}]} {
    %c0_i32 = arith.constant 0 : i32
    %0 = arith.cmpi eq, %arg2, %c0_i32 : i32
    %1 = arith.extui %0 : i1 to i32
    %c0_i32_0 = arith.constant 0 : i32
    %2 = arith.cmpi ne, %1, %c0_i32_0 : i32
    scf.if %2 {
      %cst_10 = arith.constant 0.000000e+00 : f32
      %12 = vector.broadcast %cst_10 : f32 to vector<32x128xf32>
      %c0_11 = arith.constant 0 : index
      %c0_12 = arith.constant 0 : index
      %13 = vector.load %arg7[%c0_11, %c0_12] : memref<32x128xf32, #tpu.memory_space<vmem>>, vector<32x128xf32>
      tpu.vector_store %arg7[%c0_11, %c0_12], %12 {strides = array<i32>} : memref<32x128xf32, #tpu.memory_space<vmem>>, vector<32x128xf32>,
    } else {
    }
    %c0 = arith.constant 0 : index
    %c0_1 = arith.constant 0 : index
    %3 = vector.load %arg7[%c0, %c0_1] : memref<32x128xf32, #tpu.memory_space<vmem>>, vector<32x128xf32>
    %c0_2 = arith.constant 0 : index
    %c0_3 = arith.constant 0 : index
    %4 = vector.load %arg3[%c0_2, %c0_3] : memref<32x256xbf16, #tpu.memory_space<vmem>>, vector<32x256xbf16>
    %c0_4 = arith.constant 0 : index
    %c0_5 = arith.constant 0 : index
    %5 = vector.load %arg4[%c0_4, %c0_5] : memref<256x128xbf16, #tpu.memory_space<vmem>>, vector<256x128xbf16>
    %cst = arith.constant dense<0.000000e+00> : vector<32x128xf32>
    %6 = tpu.matmul %4, %5, %cst {dimension_numbers = #tpu.dot_dimension_numbers<[1], [0], [0], [1], [0, 0, 1, 1], [], []>} : vector<32x256xbf16>, vector<256x128xbf16>, vector<32x128xf32> -> vector<32x128xf32>
    %7 = arith.addf %3, %6 : vector<32x128xf32>
    %c0_6 = arith.constant 0 : index
    %c0_7 = arith.constant 0 : index
    %8 = vector.load %arg7[%c0_6, %c0_7] : memref<32x128xf32, #tpu.memory_space<vmem>>, vector<32x128xf32>
    tpu.vector_store %arg7[%c0_6, %c0_7], %7 {strides = array<i32>} : memref<32x128xf32, #tpu.memory_space<vmem>>, vector<32x128xf32>,
    %c0_i32_8 = arith.constant 0 : i32
    %9 = arith.cmpi eq, %arg2, %c0_i32_8 : i32
    %10 = arith.extui %9 : i1 to i32
    %c0_i32_9 = arith.constant 0 : i32
    %11 = arith.cmpi ne, %10, %c0_i32_9 : i32
    scf.if %11 {
      %c0_10 = arith.constant 0 : index
      %c0_11 = arith.constant 0 : index
      %12 = vector.load %arg7[%c0_10, %c0_11] : memref<32x128xf32, #tpu.memory_space<vmem>>, vector<32x128xf32>
      %c0_12 = arith.constant 0 : index
      %c0_13 = arith.constant 0 : index
      %13 = vector.load %arg5[%c0_12, %c0_13] : memref<1x128xf32, #tpu.memory_space<vmem>>, vector<1x128xf32>
      %14 = vector.broadcast %13 : vector<1x128xf32> to vector<32x128xf32>
      %15 = arith.addf %12, %14 : vector<32x128xf32>
      %16 = math.absf %15 : vector<32x128xf32>
      %cst_14 = arith.constant 0.000000e+00 : f32
      %17 = vector.broadcast %cst_14 : f32 to vector<32x128xf32>
      %18 = arith.subf %17, %16 : vector<32x128xf32>
      %19 = math.exp %18 : vector<32x128xf32>
      %cst_15 = arith.constant 1.000000e+00 : f32
      %20 = vector.broadcast %cst_15 : f32 to vector<32x128xf32>
      %21 = arith.addf %20, %19 : vector<32x128xf32>
      %22 = tpu.reciprocal %21 {approx = true} : vector<32x128xf32> -> vector<32x128xf32>
      %cst_16 = arith.constant 0.000000e+00 : f32
      %23 = vector.broadcast %cst_16 : f32 to vector<32x128xf32>
      %24 = arith.cmpf oge, %15, %23 : vector<32x128xf32>
      %cst_17 = arith.constant 1.000000e+00 : f32
      %25 = vector.broadcast %cst_17 : f32 to vector<32x128xf32>
      %26 = arith.subf %25, %22 : vector<32x128xf32>
      %27 = arith.select %24, %22, %26 : vector<32x128xi1>, vector<32x128xf32>
      %28 = arith.mulf %15, %27 : vector<32x128xf32>
      %29 = arith.truncf %28 : vector<32x128xf32> to vector<32x128xbf16>
      %c0_18 = arith.constant 0 : index
      %c0_19 = arith.constant 0 : index
      %30 = vector.load %arg6[%c0_18, %c0_19] : memref<32x128xbf16, #tpu.memory_space<vmem>>, vector<32x128xbf16>
      tpu.vector_store %arg6[%c0_18, %c0_19], %29 {strides = array<i32>} : memref<32x128xbf16, #tpu.memory_space<vmem>>, vector<32x128xbf16>,
    } else {
    }
    return
  }
  func.func @transform_0(%arg0: i32, %arg1: i32, %arg2: i32) -> (i32, i32) {
    %c0_i32 = arith.constant 0 : i32
    return %arg0, %arg2 : i32, i32
  }
  func.func @transform_1(%arg0: i32, %arg1: i32, %arg2: i32) -> (i32, i32) {
    %c0_i32 = arith.constant 0 : i32
    return %arg2, %arg1 : i32, i32
  }
  func.func @transform_2(%arg0: i32, %arg1: i32, %arg2: i32) -> (i32, i32) {
    %c0_i32 = arith.constant 0 : i32
    %c0_i32_0 = arith.constant 0 : i32
    return %c0_i32, %arg1 : i32, i32
  }
  func.func @transform_3(%arg0: i32, %arg1: i32, %arg2: i32) -> (i32, i32) {
    %c0_i32 = arith.constant 0 : i32
    return %arg0, %arg1 : i32, i32
  }
}

</mosaic_0001>

<llo_original>
// kernel: yolo_pafpn_forward.54
$region0: #{yolo_pafpn_forward.54}
  #allocation0 [shape = 'u32[]', space=smem, size = 0x4, offset = 0x4, fixed_abs, tag = 'smem constant byte address 0x4 - core index']
  #allocation1 [shape = 'u32[144,128]{1,0:T(1,128)}', space=vmem, size = 0x12000, scoped, tag = 'internal scratch']
  #allocation2 [shape = 'f32[256,128]{1,0:T(8,128)}', space=vmem, size = 0x20000, scoped, tag = 'scratch operand']
  %s0 = inlined_call_operand.vmem [shape: bf16[2048,128], index: 0, kind: input, shape index: {}]
  %s1 = inlined_call_operand.vmem [shape: bf16[128,128], index: 1, kind: input, shape index: {}]
  %s2 = inlined_call_operand.vmem [shape: f32[1,128], index: 2, kind: input, shape index: {}]
  %s3 = inlined_call_operand.vmem [shape: bf16[2048,128], index: 3, kind: output, shape index: {}]
  %s4 = sld [smem:[#allocation0]]
  $region53: #{yolo_pafpn_forward.54} parent=0
    _
  %s6 = ssub.s32 1, %s4
  %s7 = scalar_select 0, %s6, %s4
  loop: start=0, step=1, limit=10
  $region2: #{yolo_pafpn_forward.54} parent=0 // loop_pre_header
    _
  $region3: #{yolo_pafpn_forward.54} parent=0 // loop_header
    %s9 = sphi 0, %s13
    %p10 = scmp.ge.s32.totalorder %s9, 10
    %s16 = sphi 0, %s35
    %s17 = sphi 0, %s31
    %s18 = sphi 0, %s27
    %s19 = sphi 0, %s16
    %s20 = sphi 0, %s17
    %s21 = sphi 0, %s18
    %s22 = sphi 0, %s19
    %s23 = sphi 0, %s20
    %s24 = sphi 0, %s21
    %s40 = sphi 0, %s42
    %s43 = sphi 0, %s40
    %s44 = sphi 0, %s43
    %s60 = sphi 0, %s44
    %s68 = sphi 0, %s70
    %s71 = sphi 0, %s68
    %s72 = sphi 0, %s71
    %s88 = sphi 0, %s72
    %s94 = sphi 0, %s96
    %s97 = sphi 0, %s94
    %s98 = sphi 0, %s97
    %s114 = sphi 0, %s98
    %s122 = sphi 0, %s124
    %s125 = sphi 0, %s122
    %s126 = sphi 0, %s125
    %s142 = sphi 0, %s126
  $region4: #{yolo_pafpn_forward.54} parent=0 // loop_header_branch
    %12 = sbr.rel (%p10) target = $region8
  $region5: #{yolo_pafpn_forward.54} parent=0 // loop_body
    %s14 = ssub.s32 %s9, 1
    %s15 = ssub.s32 %s9, 2
    %s25 = sadd.s32 1, %s18
    %p26 = scmp.ge.s32.totalorder %s25, 1
    %s27 = scalar_select %p26, 0, %s25
    %s28 = sadd.s32 1, %s17
    %s29 = scalar_select %p26, %s28, %s17
    %p30 = scmp.ge.s32.totalorder %s29, 1
    %s31 = scalar_select %p30, 0, %s29
    %s32 = sadd.s32 1, %s16
    %s33 = scalar_select %p30, %s32, %s16
    %p34 = scmp.ge.s32.totalorder %s33, 8
    %s35 = scalar_select %p34, 0, %s33
    %s36 = ssub.s32 %s16, %s35
    %s37 = ssub.s32 %s18, %s27
    %s38 = sor.u32 %s36, %s37
    %p39 = scmp.eq.s32.totalorder %s38, 0
    %s41 = sadd.s32 %s40, 1
    %s42 = scalar_select %p39, %s40, %s41
    %p45 = pneg %p39
    %p46 = scmp.eq.s32.totalorder %s9, 7
    %p47 = por %p45, %p46
    %p48 = scmp.ne.s32.totalorder %s40, %s43
    %p49 = scmp.eq.s32.totalorder %s9, 0
    %p50 = por %p48, %p49
    %p51 = scmp.ne.s32.totalorder %s40, %s43
    %p52 = scmp.eq.s32.totalorder %s14, 7
    %p53 = por %p51, %p52
    %p54 = scmp.ne.s32.totalorder %s43, %s44
    %p55 = scmp.eq.s32.totalorder %s14, 0
    %p56 = por %p54, %p55
    %p57 = scmp.ne.s32.totalorder %s43, %s44
    %p58 = scmp.eq.s32.totalorder %s15, 7
    %p59 = por %p57, %p58
    %p61 = scmp.ne.s32.totalorder %s44, %s60
    %p62 = scmp.eq.s32.totalorder %s15, 0
    %p63 = por %p61, %p62
    %s64 = ssub.s32 %s18, %s27
    %s65 = ssub.s32 %s17, %s31
    %s66 = sor.u32 %s64, %s65
    %p67 = scmp.eq.s32.totalorder %s66, 0
    %s69 = sadd.s32 %s68, 1
    %s70 = scalar_select %p67, %s68, %s69
    %p73 = pneg %p67
    %p74 = scmp.eq.s32.totalorder %s9, 7
    %p75 = por %p73, %p74
    %p76 = scmp.ne.s32.totalorder %s68, %s71
    %p77 = scmp.eq.s32.totalorder %s9, 0
    %p78 = por %p76, %p77
    %p79 = scmp.ne.s32.totalorder %s68, %s71
    %p80 = scmp.eq.s32.totalorder %s14, 7
    %p81 = por %p79, %p80
    %p82 = scmp.ne.s32.totalorder %s71, %s72
    %p83 = scmp.eq.s32.totalorder %s14, 0
    %p84 = por %p82, %p83
    %p85 = scmp.ne.s32.totalorder %s71, %s72
    %p86 = scmp.eq.s32.totalorder %s15, 7
    %p87 = por %p85, %p86
    %p89 = scmp.ne.s32.totalorder %s72, %s88
    %p90 = scmp.eq.s32.totalorder %s15, 0
    %p91 = por %p89, %p90
    %s92 = ssub.s32 %s17, %s31
    %p93 = scmp.eq.s32.totalorder %s92, 0
    %s95 = sadd.s32 %s94, 1
    %s96 = scalar_select %p93, %s94, %s95
    %p99 = pneg %p93
    %p100 = scmp.eq.s32.totalorder %s9, 7
    %p101 = por %p99, %p100
    %p102 = scmp.ne.s32.totalorder %s94, %s97
    %p103 = scmp.eq.s32.totalorder %s9, 0
    %p104 = por %p102, %p103
    %p105 = scmp.ne.s32.totalorder %s94, %s97
    %p106 = scmp.eq.s32.totalorder %s14, 7
    %p107 = por %p105, %p106
    %p108 = scmp.ne.s32.totalorder %s97, %s98
    %p109 = scmp.eq.s32.totalorder %s14, 0
    %p110 = por %p108, %p109
    %p111 = scmp.ne.s32.totalorder %s97, %s98
    %p112 = scmp.eq.s32.totalorder %s15, 7
    %p113 = por %p111, %p112
    %p115 = scmp.ne.s32.totalorder %s98, %s114
    %p116 = scmp.eq.s32.totalorder %s15, 0
    %p117 = por %p115, %p116
    %s118 = ssub.s32 %s16, %s35
    %s119 = ssub.s32 %s17, %s31
    %s120 = sor.u32 %s118, %s119
    %p121 = scmp.eq.s32.totalorder %s120, 0
    %s123 = sadd.s32 %s122, 1
    %s124 = scalar_select %p121, %s122, %s123
    %p127 = pneg %p121
    %p128 = scmp.eq.s32.totalorder %s9, 7
    %p129 = por %p127, %p128
    %p130 = scmp.ne.s32.totalorder %s122, %s125
    %p131 = scmp.eq.s32.totalorder %s9, 0
    %p132 = por %p130, %p131
    %p133 = scmp.ne.s32.totalorder %s122, %s125
    %p134 = scmp.eq.s32.totalorder %s14, 7
    %p135 = por %p133, %p134
    %p136 = scmp.ne.s32.totalorder %s125, %s126
    %p137 = scmp.eq.s32.totalorder %s14, 0
    %p138 = por %p136, %p137
    %p139 = scmp.ne.s32.totalorder %s125, %s126
    %p140 = scmp.eq.s32.totalorder %s15, 7
    %p141 = por %p139, %p140
    %p143 = scmp.ne.s32.totalorder %s126, %s142
    %p144 = scmp.eq.s32.totalorder %s15, 0
    %p145 = por %p143, %p144
    %p146 = scmp.le.s32.totalorder 1, %s9
    %p147 = scmp.lt.s32.totalorder %s9, 9
    %p148 = pnand %p146, %p147
    %p149 = pneg %p148
    // Predicated region
    $region9: #{yolo_pafpn_forward.54} parent=5 // pred_check
      _
    $region10: #{yolo_pafpn_forward.54} parent=5 // pred_check_branch
      %151 = sbr.rel (%p148) target = $region12
    $region11: #{yolo_pafpn_forward.54} parent=5 // pred_region
      %s152 = ssub.s32 %s9, 1
      // Predicated region
      $region13: #{yolo_pafpn_forward.54} parent=11 // pred_check
        %p153 = pneg %p84
      $region14: #{yolo_pafpn_forward.54} parent=11 // pred_check_branch
        %155 = sbr.rel (%p153) target = $region16
      $region15: #{yolo_pafpn_forward.54} parent=11 // pred_region
        %s156 = smul.u32 16, %s21
        %p157 = scmp.lt.s32.totalorder %s156, 15
        %s158 = scalar_select %p157, %s156, 15
        %p159 = scmp.lt.s32.totalorder %s20, 0
        %s160 = scalar_select %p159, %s20, 0
        %s161 = sadd.s32 %s160, %s158
        %s162 = smul.addr %s161, 4
        %s163 = scalar_lea.vmem %s1, %s162
        %s164 = smul.u32 16, %s21
      $region16: #{yolo_pafpn_forward.54} parent=11 // pred_fallthru
        _
      // Predicated region
      $region17: #{yolo_pafpn_forward.54} parent=11 // pred_check
        %p165 = pneg %p110
      $region18: #{yolo_pafpn_forward.54} parent=11 // pred_check_branch
        %167 = sbr.rel (%p165) target = $region20
      $region19: #{yolo_pafpn_forward.54} parent=11 // pred_region
        %p168 = scmp.lt.s32.totalorder %s20, 0
        %s169 = scalar_select %p168, %s20, 0
        %s170 = scalar_lea.vmem %s2, %s169
      $region20: #{yolo_pafpn_forward.54} parent=11 // pred_fallthru
        _
    $region12: #{yolo_pafpn_forward.54} parent=5 // pred_fallthru
      _
    %p171 = scmp.lt.s32.totalorder %s9, 8
    // Predicated region
    $region21: #{yolo_pafpn_forward.54} parent=5 // pred_check
      %p172 = pneg %p171
    $region22: #{yolo_pafpn_forward.54} parent=5 // pred_check_branch
      %174 = sbr.rel (%p172) target = $region24
    $region23: #{yolo_pafpn_forward.54} parent=5 // pred_region
      // Predicated region
      $region25: #{yolo_pafpn_forward.54} parent=23 // pred_check
        %p175 = pneg %p50
      $region26: #{yolo_pafpn_forward.54} parent=23 // pred_check_branch
        %177 = sbr.rel (%p175) target = $region28
      $region27: #{yolo_pafpn_forward.54} parent=23 // pred_region
        %s178 = smul.u32 32, %s16
        %p179 = scmp.lt.s32.totalorder %s178, 255
        %s180 = scalar_select %p179, %s178, 255
        %p181 = scmp.lt.s32.totalorder %s18, 0
        %s182 = scalar_select %p181, %s18, 0
        %s183 = sadd.s32 %s182, %s180
        %s184 = smul.addr %s183, 4
        %s185 = scalar_lea.vmem %s0, %s184
        %s186 = smul.u32 32, %s16
      $region28: #{yolo_pafpn_forward.54} parent=23 // pred_fallthru
        _
    $region24: #{yolo_pafpn_forward.54} parent=5 // pred_fallthru
      _
    %p187 = scmp.le.s32.totalorder 1, %s9
    %p188 = scmp.lt.s32.totalorder %s9, 9
    %p189 = pnand %p187, %p188
    %p190 = pneg %p189
    // Predicated region
    $region29: #{yolo_pafpn_forward.54} parent=5 // pred_check
      _
    $region30: #{yolo_pafpn_forward.54} parent=5 // pred_check_branch
      %192 = sbr.rel (%p189) target = $region32
    $region31: #{yolo_pafpn_forward.54} parent=5 // pred_region
      %s193 = ssub.s32 %s9, 1
      %s194 = smul.u32 32, %s19
      %p195 = scmp.lt.s32.totalorder %s194, 255
      %s196 = scalar_select %p195, %s194, 255
      %p197 = scmp.lt.s32.totalorder %s21, 0
      %s198 = scalar_select %p197, %s21, 0
      %s199 = sadd.s32 %s198, %s196
      %s200 = smul.addr %s199, 4
      %s201 = scalar_lea.vmem %s0, %s200
      %p202 = pneg %p56
      %p203 = pneg %p53
      %s204 = smul.u32 16, %s21
      %p205 = scmp.lt.s32.totalorder %s204, 15
      %s206 = scalar_select %p205, %s204, 15
      %p207 = scmp.lt.s32.totalorder %s20, 0
      %s208 = scalar_select %p207, %s20, 0
      %s209 = sadd.s32 %s208, %s206
      %s210 = smul.addr %s209, 4
      %s211 = scalar_lea.vmem %s1, %s210
      %p212 = pneg %p84
      %p213 = pneg %p81
      %p214 = scmp.lt.s32.totalorder %s20, 0
      %s215 = scalar_select %p214, %s20, 0
      %s216 = scalar_lea.vmem %s2, %s215
      %p217 = pneg %p110
      %p218 = pneg %p107
      %p219 = pneg %p138
      %p220 = pneg %p135
      %s221 = smul.u32 32, %s19
      %p222 = scmp.lt.s32.totalorder %s221, 255
      %s223 = scalar_select %p222, %s221, 255
      %p224 = scmp.lt.s32.totalorder %s20, 0
      %s225 = scalar_select %p224, %s20, 0
      %s226 = sadd.s32 %s225, %s223
      %s227 = smul.addr %s226, 4
      %s228 = scalar_lea.vmem %s3, %s227
      %s229 = smul.u32 32, %s19
      %p230 = scmp.lt.s32.totalorder %s229, 255
      %s231 = scalar_select %p230, %s229, 255
      %p232 = scmp.lt.s32.totalorder %s21, 0
      %s233 = scalar_select %p232, %s21, 0
      %s234 = sadd.s32 %s233, %s231
      %s235 = smul.addr %s234, 4
      %s236 = scalar_lea.vmem %s0, %s235
      %s237 = smul.u32 32, %s19
      %s238 = smul.u32 16, %s21
      %p239 = scmp.lt.s32.totalorder %s238, 15
      %s240 = scalar_select %p239, %s238, 15
      %p241 = scmp.lt.s32.totalorder %s20, 0
      %s242 = scalar_select %p241, %s20, 0
      %s243 = sadd.s32 %s242, %s240
      %s244 = smul.addr %s243, 4
      %s245 = scalar_lea.vmem %s1, %s244
      %s246 = smul.u32 16, %s21
      %p247 = scmp.lt.s32.totalorder %s20, 0
      %s248 = scalar_select %p247, %s20, 0
      %s249 = scalar_lea.vmem %s2, %s248
      %s250 = smul.u32 32, %s19
      %p251 = scmp.lt.s32.totalorder %s250, 255
      %s252 = scalar_select %p251, %s250, 255
      %p253 = scmp.lt.s32.totalorder %s20, 0
      %s254 = scalar_select %p253, %s20, 0
      %s255 = sadd.s32 %s254, %s252
      %s256 = smul.addr %s255, 4
      %s257 = scalar_lea.vmem %s3, %s256
      %s258 = smul.u32 32, %s19
      %p260 = scmp.eq.s32.totalorder %s21, 0
      // Predicated region
      $region33: #{yolo_pafpn_forward.54} parent=31 // pred_check
        %p261 = pneg %p260
      $region34: #{yolo_pafpn_forward.54} parent=31 // pred_check_branch
        %263 = sbr.rel (%p261) target = $region36
      $region35: #{yolo_pafpn_forward.54} parent=31 // pred_region
        %264 = vst [vmem:[#allocation2] sm:$0xff] 0.0
        %265 = vst [vmem:[#allocation2 + $0x8] sm:$0xff] 0.0
        %266 = vst [vmem:[#allocation2 + $0x10] sm:$0xff] 0.0
        %267 = vst [vmem:[#allocation2 + $0x18] sm:$0xff] 0.0
        %268 = vst [vmem:[#allocation2 + $0x20] sm:$0xff] 0.0
        %269 = vst [vmem:[#allocation2 + $0x28] sm:$0xff] 0.0
        %270 = vst [vmem:[#allocation2 + $0x30] sm:$0xff] 0.0
        %271 = vst [vmem:[#allocation2 + $0x38] sm:$0xff] 0.0
        %272 = vst [vmem:[#allocation2 + $0x40] sm:$0xff] 0.0
        %273 = vst [vmem:[#allocation2 + $0x48] sm:$0xff] 0.0
        %274 = vst [vmem:[#allocation2 + $0x50] sm:$0xff] 0.0
        %275 = vst [vmem:[#allocation2 + $0x58] sm:$0xff] 0.0
        %276 = vst [vmem:[#allocation2 + $0x60] sm:$0xff] 0.0
        %277 = vst [vmem:[#allocation2 + $0x68] sm:$0xff] 0.0
        %278 = vst [vmem:[#allocation2 + $0x70] sm:$0xff] 0.0
        %279 = vst [vmem:[#allocation2 + $0x78] sm:$0xff] 0.0
        %280 = vst [vmem:[#allocation2 + $0x80] sm:$0xff] 0.0
        %281 = vst [vmem:[#allocation2 + $0x88] sm:$0xff] 0.0
        %282 = vst [vmem:[#allocation2 + $0x90] sm:$0xff] 0.0
        %283 = vst [vmem:[#allocation2 + $0x98] sm:$0xff] 0.0
        %284 = vst [vmem:[#allocation2 + $0xa0] sm:$0xff] 0.0
        %285 = vst [vmem:[#allocation2 + $0xa8] sm:$0xff] 0.0
        %286 = vst [vmem:[#allocation2 + $0xb0] sm:$0xff] 0.0
        %287 = vst [vmem:[#allocation2 + $0xb8] sm:$0xff] 0.0
        %288 = vst [vmem:[#allocation2 + $0xc0] sm:$0xff] 0.0
        %289 = vst [vmem:[#allocation2 + $0xc8] sm:$0xff] 0.0
        %290 = vst [vmem:[#allocation2 + $0xd0] sm:$0xff] 0.0
        %291 = vst [vmem:[#allocation2 + $0xd8] sm:$0xff] 0.0
        %292 = vst [vmem:[#allocation2 + $0xe0] sm:$0xff] 0.0
        %293 = vst [vmem:[#allocation2 + $0xe8] sm:$0xff] 0.0
        %294 = vst [vmem:[#allocation2 + $0xf0] sm:$0xff] 0.0
        %295 = vst [vmem:[#allocation2 + $0xf8] sm:$0xff] 0.0
      $region36: #{yolo_pafpn_forward.54} parent=31 // pred_fallthru
        _
      %v296 = vld [vmem:[#allocation2] sm:$0xff]
      %v297 = vld [vmem:[#allocation2 + $0x8] sm:$0xff]
      %v298 = vld [vmem:[#allocation2 + $0x10] sm:$0xff]
      %v299 = vld [vmem:[#allocation2 + $0x18] sm:$0xff]
      %v300 = vld [vmem:[#allocation2 + $0x20] sm:$0xff]
      %v301 = vld [vmem:[#allocation2 + $0x28] sm:$0xff]
      %v302 = vld [vmem:[#allocation2 + $0x30] sm:$0xff]
      %v303 = vld [vmem:[#allocation2 + $0x38] sm:$0xff]
      %v304 = vld [vmem:[#allocation2 + $0x40] sm:$0xff]
      %v305 = vld [vmem:[#allocation2 + $0x48] sm:$0xff]
      %v306 = vld [vmem:[#allocation2 + $0x50] sm:$0xff]
      %v307 = vld [vmem:[#allocation2 + $0x58] sm:$0xff]
      %v308 = vld [vmem:[#allocation2 + $0x60] sm:$0xff]
      %v309 = vld [vmem:[#allocation2 + $0x68] sm:$0xff]
      %v310 = vld [vmem:[#allocation2 + $0x70] sm:$0xff]
      %v311 = vld [vmem:[#allocation2 + $0x78] sm:$0xff]
      %v312 = vld [vmem:[#allocation2 + $0x80] sm:$0xff]
      %v313 = vld [vmem:[#allocation2 + $0x88] sm:$0xff]
      %v314 = vld [vmem:[#allocation2 + $0x90] sm:$0xff]
      %v315 = vld [vmem:[#allocation2 + $0x98] sm:$0xff]
      %v316 = vld [vmem:[#allocation2 + $0xa0] sm:$0xff]
      %v317 = vld [vmem:[#allocation2 + $0xa8] sm:$0xff]
      %v318 = vld [vmem:[#allocation2 + $0xb0] sm:$0xff]
      %v319 = vld [vmem:[#allocation2 + $0xb8] sm:$0xff]
      %v320 = vld [vmem:[#allocation2 + $0xc0] sm:$0xff]
      %v321 = vld [vmem:[#allocation2 + $0xc8] sm:$0xff]
      %v322 = vld [vmem:[#allocation2 + $0xd0] sm:$0xff]
      %v323 = vld [vmem:[#allocation2 + $0xd8] sm:$0xff]
      %v324 = vld [vmem:[#allocation2 + $0xe0] sm:$0xff]
      %v325 = vld [vmem:[#allocation2 + $0xe8] sm:$0xff]
      %v326 = vld [vmem:[#allocation2 + $0xf0] sm:$0xff]
      %v327 = vld [vmem:[#allocation2 + $0xf8] sm:$0xff]
      %v328 = vld [vmem:[%s236] sm:$0xf]
      %v329 = vld [vmem:[%s236 + $0x4] sm:$0xf]
      %v330 = vld [vmem:[%s236 + $0x8] sm:$0xf]
      %v331 = vld [vmem:[%s236 + $0xc] sm:$0xf]
      %v332 = vld [vmem:[%s236 + $0x10] sm:$0xf]
      %v333 = vld [vmem:[%s236 + $0x14] sm:$0xf]
      %v334 = vld [vmem:[%s236 + $0x18] sm:$0xf]
      %v335 = vld [vmem:[%s236 + $0x1c] sm:$0xf]
      %v336 = vld [vmem:[%s236 + $0x20] sm:$0xf]
      %v337 = vld [vmem:[%s236 + $0x24] sm:$0xf]
      %v338 = vld [vmem:[%s236 + $0x28] sm:$0xf]
      %v339 = vld [vmem:[%s236 + $0x2c] sm:$0xf]
      %v340 = vld [vmem:[%s236 + $0x30] sm:$0xf]
      %v341 = vld [vmem:[%s236 + $0x34] sm:$0xf]
      %v342 = vld [vmem:[%s236 + $0x38] sm:$0xf]
      %v343 = vld [vmem:[%s236 + $0x3c] sm:$0xf]
      %v344 = vld [vmem:[%s236 + $0x40] sm:$0xf]
      %v345 = vld [vmem:[%s236 + $0x44] sm:$0xf]
      %v346 = vld [vmem:[%s236 + $0x48] sm:$0xf]
      %v347 = vld [vmem:[%s236 + $0x4c] sm:$0xf]
      %v348 = vld [vmem:[%s236 + $0x50] sm:$0xf]
      %v349 = vld [vmem:[%s236 + $0x54] sm:$0xf]
      %v350 = vld [vmem:[%s236 + $0x58] sm:$0xf]
      %v351 = vld [vmem:[%s236 + $0x5c] sm:$0xf]
      %v352 = vld [vmem:[%s236 + $0x60] sm:$0xf]
      %v353 = vld [vmem:[%s236 + $0x64] sm:$0xf]
      %v354 = vld [vmem:[%s236 + $0x68] sm:$0xf]
      %v355 = vld [vmem:[%s236 + $0x6c] sm:$0xf]
      %v356 = vld [vmem:[%s236 + $0x70] sm:$0xf]
      %v357 = vld [vmem:[%s236 + $0x74] sm:$0xf]
      %v358 = vld [vmem:[%s236 + $0x78] sm:$0xf]
      %v359 = vld [vmem:[%s236 + $0x7c] sm:$0xf]
      %v360 = vld [vmem:[%s245] sm:$0xf]
      %v361 = vld [vmem:[%s245 + $0x4] sm:$0xf]
      %v362 = vld [vmem:[%s245 + $0x8] sm:$0xf]
      %v363 = vld [vmem:[%s245 + $0xc] sm:$0xf]
      %v364 = vld [vmem:[%s245 + $0x10] sm:$0xf]
      %v365 = vld [vmem:[%s245 + $0x14] sm:$0xf]
      %v366 = vld [vmem:[%s245 + $0x18] sm:$0xf]
      %v367 = vld [vmem:[%s245 + $0x1c] sm:$0xf]
      %v368 = vld [vmem:[%s245 + $0x20] sm:$0xf]
      %v369 = vld [vmem:[%s245 + $0x24] sm:$0xf]
      %v370 = vld [vmem:[%s245 + $0x28] sm:$0xf]
      %v371 = vld [vmem:[%s245 + $0x2c] sm:$0xf]
      %v372 = vld [vmem:[%s245 + $0x30] sm:$0xf]
      %v373 = vld [vmem:[%s245 + $0x34] sm:$0xf]
      %v374 = vld [vmem:[%s245 + $0x38] sm:$0xf]
      %v375 = vld [vmem:[%s245 + $0x3c] sm:$0xf]
      %v408 = vunpack.c.l.b16 %v328
      %v409 = vunpack.c.l.b16 %v329
      %v410 = vunpack.c.l.b16 %v330
      %v411 = vunpack.c.l.b16 %v331
      %v412 = vunpack.c.l.b16 %v332
      %v413 = vunpack.c.l.b16 %v333
      %v414 = vunpack.c.l.b16 %v334
      %v415 = vunpack.c.l.b16 %v335
      %v416 = vunpack.c.l.b16 %v336
      %v417 = vunpack.c.l.b16 %v337
      %v418 = vunpack.c.l.b16 %v338
      %v419 = vunpack.c.l.b16 %v339
      %v420 = vunpack.c.l.b16 %v340
      %v421 = vunpack.c.l.b16 %v341
      %v422 = vunpack.c.l.b16 %v342
      %v423 = vunpack.c.l.b16 %v343
      %v424 = vunpack.c.l.b16 %v344
      %v425 = vunpack.c.l.b16 %v345
      %v426 = vunpack.c.l.b16 %v346
      %v427 = vunpack.c.l.b16 %v347
      %v428 = vunpack.c.l.b16 %v348
      %v429 = vunpack.c.l.b16 %v349
      %v430 = vunpack.c.l.b16 %v350
      %v431 = vunpack.c.l.b16 %v351
      %v432 = vunpack.c.l.b16 %v352
      %v433 = vunpack.c.l.b16 %v353
      %v434 = vunpack.c.l.b16 %v354
      %v435 = vunpack.c.l.b16 %v355
      %v436 = vunpack.c.l.b16 %v356
      %v437 = vunpack.c.l.b16 %v357
      %v438 = vunpack.c.l.b16 %v358
      %v439 = vunpack.c.l.b16 %v359
      %v440 = vpack.c.b16 %v409, %v408
      %v441 = vpack.c.b16 %v411, %v410
      %v442 = vpack.c.b16 %v413, %v412
      %v443 = vpack.c.b16 %v415, %v414
      %v444 = vpack.c.b16 %v417, %v416
      %v445 = vpack.c.b16 %v419, %v418
      %v446 = vpack.c.b16 %v421, %v420
      %v447 = vpack.c.b16 %v423, %v422
      %v448 = vpack.c.b16 %v425, %v424
      %v449 = vpack.c.b16 %v427, %v426
      %v450 = vpack.c.b16 %v429, %v428
      %v451 = vpack.c.b16 %v431, %v430
      %v452 = vpack.c.b16 %v433, %v432
      %v453 = vpack.c.b16 %v435, %v434
      %v454 = vpack.c.b16 %v437, %v436
      %v455 = vpack.c.b16 %v439, %v438
      %v488 = vunpack.c.l.b16 %v360
      %v489 = vunpack.c.l.b16 %v361
      %v490 = vunpack.c.l.b16 %v362
      %v491 = vunpack.c.l.b16 %v363
      %v492 = vunpack.c.l.b16 %v364
      %v493 = vunpack.c.l.b16 %v365
      %v494 = vunpack.c.l.b16 %v366
      %v495 = vunpack.c.l.b16 %v367
      %v496 = vunpack.c.l.b16 %v368
      %v497 = vunpack.c.l.b16 %v369
      %v498 = vunpack.c.l.b16 %v370
      %v499 = vunpack.c.l.b16 %v371
      %v500 = vunpack.c.l.b16 %v372
      %v501 = vunpack.c.l.b16 %v373
      %v502 = vunpack.c.l.b16 %v374
      %v503 = vunpack.c.l.b16 %v375
      %v504 = vpack.c.b16 %v489, %v488
      %v505 = vpack.c.b16 %v491, %v490
      %v506 = vpack.c.b16 %v493, %v492
      %v507 = vpack.c.b16 %v495, %v494
      %v508 = vpack.c.b16 %v497, %v496
      %v509 = vpack.c.b16 %v499, %v498
      %v510 = vpack.c.b16 %v501, %v500
      %v511 = vpack.c.b16 %v503, %v502
      %520 = vmatprep.subr.bf16.mxu0 0
      %521 = vmatpush1.bf16.msra.mxu0 %v504
      %522 = vmatprep.subr.bf16.mxu0 0
      %523 = vmatpush1.bf16.msra.mxu0 %v505
      %524 = vmatprep.subr.bf16.mxu0 0
      %525 = vmatpush1.bf16.msra.mxu0 %v506
      %526 = vmatprep.subr.bf16.mxu0 0
      %527 = vmatpush1.bf16.msra.mxu0 %v507
      %528 = vmatprep.subr.bf16.mxu0 0
      %529 = vmatpush1.bf16.msra.mxu0 %v508
      %530 = vmatprep.subr.bf16.mxu0 0
      %531 = vmatpush1.bf16.msra.mxu0 %v509
      %532 = vmatprep.subr.bf16.mxu0 0
      %533 = vmatpush1.bf16.msra.mxu0 %v510
      %534 = vmatprep.subr.bf16.mxu0 0
      %535 = vmatpush1.bf16.msra.mxu0 %v511
      %536 = vmatprep.subr.bf16.mxu0 0
      %537 = vmatpush1.bf16.msra.mxu0 0
      %538 = vmatprep.subr.bf16.mxu0 0
      %539 = vmatpush1.bf16.msra.mxu0 0
      %540 = vmatprep.subr.bf16.mxu0 0
      %541 = vmatpush1.bf16.msra.mxu0 0
      %542 = vmatprep.subr.bf16.mxu0 0
      %543 = vmatpush1.bf16.msra.mxu0 0
      %544 = vmatprep.subr.bf16.mxu0 0
      %545 = vmatpush1.bf16.msra.mxu0 0
      %546 = vmatprep.subr.bf16.mxu0 0
      %547 = vmatpush1.bf16.msra.mxu0 0
      %548 = vmatprep.subr.bf16.mxu0 0
      %549 = vmatpush1.bf16.msra.mxu0 0
      %550 = vmatprep.subr.bf16.mxu0 0
      %551 = vmatpush1.bf16.msra.mxu0 0
      %552 = vmatprep.mubr.bf16.mxu0 0
      %553 = vmatmul.mubr.bf16.gmra.mrb[0].mxu0 %v440
      %v554 = vpop.f32.mrb[0].mxu0
      %v555 = vadd.f32 0.0, %v554
      %v556 = vpop.f32.mrb[0].mxu0
      %v557 = vpop.f32.mrb[0].mxu0
      %v558 = vadd.f32 0.0, %v557
      %v559 = vpop.f32.mrb[0].mxu0
      %560 = vmatprep.mubr.bf16.mxu0 0
      %561 = vmatmul.mubr.bf16.gmra.mrb[0].mxu0 %v441
      %v562 = vpop.f32.mrb[0].mxu0
      %v563 = vadd.f32 0.0, %v562
      %v564 = vpop.f32.mrb[0].mxu0
      %v565 = vpop.f32.mrb[0].mxu0
      %v566 = vadd.f32 0.0, %v565
      %v567 = vpop.f32.mrb[0].mxu0
      %568 = vmatprep.mubr.bf16.mxu0 0
      %569 = vmatmul.mubr.bf16.gmra.mrb[0].mxu0 %v442
      %v570 = vpop.f32.mrb[0].mxu0
      %v571 = vadd.f32 0.0, %v570
      %v572 = vpop.f32.mrb[0].mxu0
      %v573 = vpop.f32.mrb[0].mxu0
      %v574 = vadd.f32 0.0, %v573
      %v575 = vpop.f32.mrb[0].mxu0
      %576 = vmatprep.mubr.bf16.mxu0 0
      %577 = vmatmul.mubr.bf16.gmra.mrb[0].mxu0 %v443
      %v578 = vpop.f32.mrb[0].mxu0
      %v579 = vadd.f32 0.0, %v578
      %v580 = vpop.f32.mrb[0].mxu0
      %v581 = vpop.f32.mrb[0].mxu0
      %v582 = vadd.f32 0.0, %v581
      %v583 = vpop.f32.mrb[0].mxu0
      %584 = vmatprep.mubr.bf16.mxu0 0
      %585 = vmatmul.mubr.bf16.gmra.mrb[0].mxu0 %v444
      %v586 = vpop.f32.mrb[0].mxu0
      %v587 = vadd.f32 0.0, %v586
      %v588 = vpop.f32.mrb[0].mxu0
      %v589 = vpop.f32.mrb[0].mxu0
      %v590 = vadd.f32 0.0, %v589
      %v591 = vpop.f32.mrb[0].mxu0
      %592 = vmatprep.mubr.bf16.mxu0 0
      %593 = vmatmul.mubr.bf16.gmra.mrb[0].mxu0 %v445
      %v594 = vpop.f32.mrb[0].mxu0
      %v595 = vadd.f32 0.0, %v594
      %v596 = vpop.f32.mrb[0].mxu0
      %v597 = vpop.f32.mrb[0].mxu0
      %v598 = vadd.f32 0.0, %v597
      %v599 = vpop.f32.mrb[0].mxu0
      %600 = vmatprep.mubr.bf16.mxu0 0
      %601 = vmatmul.mubr.bf16.gmra.mrb[0].mxu0 %v446
      %v602 = vpop.f32.mrb[0].mxu0
      %v603 = vadd.f32 0.0, %v602
      %v604 = vpop.f32.mrb[0].mxu0
      %v605 = vpop.f32.mrb[0].mxu0
      %v606 = vadd.f32 0.0, %v605
      %v607 = vpop.f32.mrb[0].mxu0
      %608 = vmatprep.mubr.bf16.mxu0 0
      %609 = vmatmul.mubr.bf16.gmra.mrb[0].mxu0 %v447
      %v610 = vpop.f32.mrb[0].mxu0
      %v611 = vadd.f32 0.0, %v610
      %v612 = vpop.f32.mrb[0].mxu0
      %v613 = vpop.f32.mrb[0].mxu0
      %v614 = vadd.f32 0.0, %v613
      %v615 = vpop.f32.mrb[0].mxu0
      %616 = vmatprep.mubr.bf16.mxu0 0
      %617 = vmatmul.mubr.bf16.gmra.mrb[0].mxu0 %v448
      %v618 = vpop.f32.mrb[0].mxu0
      %v619 = vadd.f32 0.0, %v618
      %v620 = vpop.f32.mrb[0].mxu0
      %v621 = vpop.f32.mrb[0].mxu0
      %v622 = vadd.f32 0.0, %v621
      %v623 = vpop.f32.mrb[0].mxu0
      %624 = vmatprep.mubr.bf16.mxu0 0
      %625 = vmatmul.mubr.bf16.gmra.mrb[0].mxu0 %v449
      %v626 = vpop.f32.mrb[0].mxu0
      %v627 = vadd.f32 0.0, %v626
      %v628 = vpop.f32.mrb[0].mxu0
      %v629 = vpop.f32.mrb[0].mxu0
      %v630 = vadd.f32 0.0, %v629
      %v631 = vpop.f32.mrb[0].mxu0
      %632 = vmatprep.mubr.bf16.mxu0 0
      %633 = vmatmul.mubr.bf16.gmra.mrb[0].mxu0 %v450
      %v634 = vpop.f32.mrb[0].mxu0
      %v635 = vadd.f32 0.0, %v634
      %v636 = vpop.f32.mrb[0].mxu0
      %v637 = vpop.f32.mrb[0].mxu0
      %v638 = vadd.f32 0.0, %v637
      %v639 = vpop.f32.mrb[0].mxu0
      %640 = vmatprep.mubr.bf16.mxu0 0
      %641 = vmatmul.mubr.bf16.gmra.mrb[0].mxu0 %v451
      %v642 = vpop.f32.mrb[0].mxu0
      %v643 = vadd.f32 0.0, %v642
      %v644 = vpop.f32.mrb[0].mxu0
      %v645 = vpop.f32.mrb[0].mxu0
      %v646 = vadd.f32 0.0, %v645
      %v647 = vpop.f32.mrb[0].mxu0
      %648 = vmatprep.mubr.bf16.mxu0 0
      %649 = vmatmul.mubr.bf16.gmra.mrb[0].mxu0 %v452
      %v650 = vpop.f32.mrb[0].mxu0
      %v651 = vadd.f32 0.0, %v650
      %v652 = vpop.f32.mrb[0].mxu0
      %v653 = vpop.f32.mrb[0].mxu0
      %v654 = vadd.f32 0.0, %v653
      %v655 = vpop.f32.mrb[0].mxu0
      %656 = vmatprep.mubr.bf16.mxu0 0
      %657 = vmatmul.mubr.bf16.gmra.mrb[0].mxu0 %v453
      %v658 = vpop.f32.mrb[0].mxu0
      %v659 = vadd.f32 0.0, %v658
      %v660 = vpop.f32.mrb[0].mxu0
      %v661 = vpop.f32.mrb[0].mxu0
      %v662 = vadd.f32 0.0, %v661
      %v663 = vpop.f32.mrb[0].mxu0
      %664 = vmatprep.mubr.bf16.mxu0 0
      %665 = vmatmul.mubr.bf16.gmra.mrb[0].mxu0 %v454
      %v666 = vpop.f32.mrb[0].mxu0
      %v667 = vadd.f32 0.0, %v666
      %v668 = vpop.f32.mrb[0].mxu0
      %v669 = vpop.f32.mrb[0].mxu0
      %v670 = vadd.f32 0.0, %v669
      %v671 = vpop.f32.mrb[0].mxu0
      %672 = vmatprep.mubr.bf16.mxu0 0
      %673 = vmatmul.mubr.bf16.gmra.mrb[0].mxu0 %v455
      %v674 = vpop.f32.mrb[0].mxu0
      %v675 = vadd.f32 0.0, %v674
      %v676 = vpop.f32.mrb[0].mxu0
      %v677 = vpop.f32.mrb[0].mxu0
      %v678 = vadd.f32 0.0, %v677
      %v679 = vpop.f32.mrb[0].mxu0
      %680 = vdwg.mxu0
      %v681 = vadd.f32 %v296, %v555
      %v682 = vadd.f32 %v297, %v558
      %v683 = vadd.f32 %v298, %v563
      %v684 = vadd.f32 %v299, %v566
      %v685 = vadd.f32 %v300, %v571
      %v686 = vadd.f32 %v301, %v574
      %v687 = vadd.f32 %v302, %v579
      %v688 = vadd.f32 %v303, %v582
      %v689 = vadd.f32 %v304, %v587
      %v690 = vadd.f32 %v305, %v590
      %v691 = vadd.f32 %v306, %v595
      %v692 = vadd.f32 %v307, %v598
      %v693 = vadd.f32 %v308, %v603
      %v694 = vadd.f32 %v309, %v606
      %v695 = vadd.f32 %v310, %v611
      %v696 = vadd.f32 %v311, %v614
      %v697 = vadd.f32 %v312, %v619
      %v698 = vadd.f32 %v313, %v622
      %v699 = vadd.f32 %v314, %v627
      %v700 = vadd.f32 %v315, %v630
      %v701 = vadd.f32 %v316, %v635
      %v702 = vadd.f32 %v317, %v638
      %v703 = vadd.f32 %v318, %v643
      %v704 = vadd.f32 %v319, %v646
      %v705 = vadd.f32 %v320, %v651
      %v706 = vadd.f32 %v321, %v654
      %v707 = vadd.f32 %v322, %v659
      %v708 = vadd.f32 %v323, %v662
      %v709 = vadd.f32 %v324, %v667
      %v710 = vadd.f32 %v325, %v670
      %v711 = vadd.f32 %v326, %v675
      %v712 = vadd.f32 %v327, %v678
      %713 = vst [vmem:[#allocation2] sm:$0xff] %v681
      %714 = vst [vmem:[#allocation2 + $0x8] sm:$0xff] %v682
      %715 = vst [vmem:[#allocation2 + $0x10] sm:$0xff] %v683
      %716 = vst [vmem:[#allocation2 + $0x18] sm:$0xff] %v684
      %717 = vst [vmem:[#allocation2 + $0x20] sm:$0xff] %v685
      %718 = vst [vmem:[#allocation2 + $0x28] sm:$0xff] %v686
      %719 = vst [vmem:[#allocation2 + $0x30] sm:$0xff] %v687
      %720 = vst [vmem:[#allocation2 + $0x38] sm:$0xff] %v688
      %721 = vst [vmem:[#allocation2 + $0x40] sm:$0xff] %v689
      %722 = vst [vmem:[#allocation2 + $0x48] sm:$0xff] %v690
      %723 = vst [vmem:[#allocation2 + $0x50] sm:$0xff] %v691
      %724 = vst [vmem:[#allocation2 + $0x58] sm:$0xff] %v692
      %725 = vst [vmem:[#allocation2 + $0x60] sm:$0xff] %v693
      %726 = vst [vmem:[#allocation2 + $0x68] sm:$0xff] %v694
      %727 = vst [vmem:[#allocation2 + $0x70] sm:$0xff] %v695
      %728 = vst [vmem:[#allocation2 + $0x78] sm:$0xff] %v696
      %729 = vst [vmem:[#allocation2 + $0x80] sm:$0xff] %v697
      %730 = vst [vmem:[#allocation2 + $0x88] sm:$0xff] %v698
      %731 = vst [vmem:[#allocation2 + $0x90] sm:$0xff] %v699
      %732 = vst [vmem:[#allocation2 + $0x98] sm:$0xff] %v700
      %733 = vst [vmem:[#allocation2 + $0xa0] sm:$0xff] %v701
      %734 = vst [vmem:[#allocation2 + $0xa8] sm:$0xff] %v702
      %735 = vst [vmem:[#allocation2 + $0xb0] sm:$0xff] %v703
      %736 = vst [vmem:[#allocation2 + $0xb8] sm:$0xff] %v704
      %737 = vst [vmem:[#allocation2 + $0xc0] sm:$0xff] %v705
      %738 = vst [vmem:[#allocation2 + $0xc8] sm:$0xff] %v706
      %739 = vst [vmem:[#allocation2 + $0xd0] sm:$0xff] %v707
      %740 = vst [vmem:[#allocation2 + $0xd8] sm:$0xff] %v708
      %741 = vst [vmem:[#allocation2 + $0xe0] sm:$0xff] %v709
      %742 = vst [vmem:[#allocation2 + $0xe8] sm:$0xff] %v710
      %743 = vst [vmem:[#allocation2 + $0xf0] sm:$0xff] %v711
      %744 = vst [vmem:[#allocation2 + $0xf8] sm:$0xff] %v712
      // Predicated region
      $region37: #{yolo_pafpn_forward.54} parent=31 // pred_check
        %p745 = pneg %p260
      $region38: #{yolo_pafpn_forward.54} parent=31 // pred_check_branch
        %747 = sbr.rel (%p745) target = $region40
      $region39: #{yolo_pafpn_forward.54} parent=31 // pred_region
        %v748 = vld [vmem:[#allocation2] sm:$0xff]
        %v749 = vld [vmem:[#allocation2 + $0x8] sm:$0xff]
        %v750 = vld [vmem:[#allocation2 + $0x10] sm:$0xff]
        %v751 = vld [vmem:[#allocation2 + $0x18] sm:$0xff]
        %v752 = vld [vmem:[#allocation2 + $0x20] sm:$0xff]
        %v753 = vld [vmem:[#allocation2 + $0x28] sm:$0xff]
        %v754 = vld [vmem:[#allocation2 + $0x30] sm:$0xff]
        %v755 = vld [vmem:[#allocation2 + $0x38] sm:$0xff]
        %v756 = vld [vmem:[#allocation2 + $0x40] sm:$0xff]
        %v757 = vld [vmem:[#allocation2 + $0x48] sm:$0xff]
        %v758 = vld [vmem:[#allocation2 + $0x50] sm:$0xff]
        %v759 = vld [vmem:[#allocation2 + $0x58] sm:$0xff]
        %v760 = vld [vmem:[#allocation2 + $0x60] sm:$0xff]
        %v761 = vld [vmem:[#allocation2 + $0x68] sm:$0xff]
        %v762 = vld [vmem:[#allocation2 + $0x70] sm:$0xff]
        %v763 = vld [vmem:[#allocation2 + $0x78] sm:$0xff]
        %v764 = vld [vmem:[#allocation2 + $0x80] sm:$0xff]
        %v765 = vld [vmem:[#allocation2 + $0x88] sm:$0xff]
        %v766 = vld [vmem:[#allocation2 + $0x90] sm:$0xff]
        %v767 = vld [vmem:[#allocation2 + $0x98] sm:$0xff]
        %v768 = vld [vmem:[#allocation2 + $0xa0] sm:$0xff]
        %v769 = vld [vmem:[#allocation2 + $0xa8] sm:$0xff]
        %v770 = vld [vmem:[#allocation2 + $0xb0] sm:$0xff]
        %v771 = vld [vmem:[#allocation2 + $0xb8] sm:$0xff]
        %v772 = vld [vmem:[#allocation2 + $0xc0] sm:$0xff]
        %v773 = vld [vmem:[#allocation2 + $0xc8] sm:$0xff]
        %v774 = vld [vmem:[#allocation2 + $0xd0] sm:$0xff]
        %v775 = vld [vmem:[#allocation2 + $0xd8] sm:$0xff]
        %v776 = vld [vmem:[#allocation2 + $0xe0] sm:$0xff]
        %v777 = vld [vmem:[#allocation2 + $0xe8] sm:$0xff]
        %v778 = vld [vmem:[#allocation2 + $0xf0] sm:$0xff]
        %v779 = vld [vmem:[#allocation2 + $0xf8] sm:$0xff]
        %v780 = vld [vmem:[%s249] sm:$0x1]
        %v782 = vlaneseq
        %v783 = vshrl.u32 %v782, 7
        %v784 = vsub.s32 0, %v783
        %v785 = vrot.slane %v780, %v784
        %v787 = vadd.f32 %v748, %v785
        %v788 = vadd.f32 %v749, %v785
        %v789 = vadd.f32 %v750, %v785
        %v790 = vadd.f32 %v751, %v785
        %v791 = vadd.f32 %v752, %v785
        %v792 = vadd.f32 %v753, %v785
        %v793 = vadd.f32 %v754, %v785
        %v794 = vadd.f32 %v755, %v785
        %v795 = vadd.f32 %v756, %v785
        %v796 = vadd.f32 %v757, %v785
        %v797 = vadd.f32 %v758, %v785
        %v798 = vadd.f32 %v759, %v785
        %v799 = vadd.f32 %v760, %v785
        %v800 = vadd.f32 %v761, %v785
        %v801 = vadd.f32 %v762, %v785
        %v802 = vadd.f32 %v763, %v785
        %v803 = vadd.f32 %v764, %v785
        %v804 = vadd.f32 %v765, %v785
        %v805 = vadd.f32 %v766, %v785
        %v806 = vadd.f32 %v767, %v785
        %v807 = vadd.f32 %v768, %v785
        %v808 = vadd.f32 %v769, %v785
        %v809 = vadd.f32 %v770, %v785
        %v810 = vadd.f32 %v771, %v785
        %v811 = vadd.f32 %v772, %v785
        %v812 = vadd.f32 %v773, %v785
        %v813 = vadd.f32 %v774, %v785
        %v814 = vadd.f32 %v775, %v785
        %v815 = vadd.f32 %v776, %v785
        %v816 = vadd.f32 %v777, %v785
        %v817 = vadd.f32 %v778, %v785
        %v818 = vadd.f32 %v779, %v785
        %v819 = vand.u32 2147483647, %v787
        %v820 = vand.u32 2147483647, %v788
        %v821 = vand.u32 2147483647, %v789
        %v822 = vand.u32 2147483647, %v790
        %v823 = vand.u32 2147483647, %v791
        %v824 = vand.u32 2147483647, %v792
        %v825 = vand.u32 2147483647, %v793
        %v826 = vand.u32 2147483647, %v794
        %v827 = vand.u32 2147483647, %v795
        %v828 = vand.u32 2147483647, %v796
        %v829 = vand.u32 2147483647, %v797
        %v830 = vand.u32 2147483647, %v798
        %v831 = vand.u32 2147483647, %v799
        %v832 = vand.u32 2147483647, %v800
        %v833 = vand.u32 2147483647, %v801
        %v834 = vand.u32 2147483647, %v802
        %v835 = vand.u32 2147483647, %v803
        %v836 = vand.u32 2147483647, %v804
        %v837 = vand.u32 2147483647, %v805
        %v838 = vand.u32 2147483647, %v806
        %v839 = vand.u32 2147483647, %v807
        %v840 = vand.u32 2147483647, %v808
        %v841 = vand.u32 2147483647, %v809
        %v842 = vand.u32 2147483647, %v810
        %v843 = vand.u32 2147483647, %v811
        %v844 = vand.u32 2147483647, %v812
        %v845 = vand.u32 2147483647, %v813
        %v846 = vand.u32 2147483647, %v814
        %v847 = vand.u32 2147483647, %v815
        %v848 = vand.u32 2147483647, %v816
        %v849 = vand.u32 2147483647, %v817
        %v850 = vand.u32 2147483647, %v818
        %v851 = vsub.f32 0.0, %v819
        %v852 = vsub.f32 0.0, %v820
        %v853 = vsub.f32 0.0, %v821
        %v854 = vsub.f32 0.0, %v822
        %v855 = vsub.f32 0.0, %v823
        %v856 = vsub.f32 0.0, %v824
        %v857 = vsub.f32 0.0, %v825
        %v858 = vsub.f32 0.0, %v826
        %v859 = vsub.f32 0.0, %v827
        %v860 = vsub.f32 0.0, %v828
        %v861 = vsub.f32 0.0, %v829
        %v862 = vsub.f32 0.0, %v830
        %v863 = vsub.f32 0.0, %v831
        %v864 = vsub.f32 0.0, %v832
        %v865 = vsub.f32 0.0, %v833
        %v866 = vsub.f32 0.0, %v834
        %v867 = vsub.f32 0.0, %v835
        %v868 = vsub.f32 0.0, %v836
        %v869 = vsub.f32 0.0, %v837
        %v870 = vsub.f32 0.0, %v838
        %v871 = vsub.f32 0.0, %v839
        %v872 = vsub.f32 0.0, %v840
        %v873 = vsub.f32 0.0, %v841
        %v874 = vsub.f32 0.0, %v842
        %v875 = vsub.f32 0.0, %v843
        %v876 = vsub.f32 0.0, %v844
        %v877 = vsub.f32 0.0, %v845
        %v878 = vsub.f32 0.0, %v846
        %v879 = vsub.f32 0.0, %v847
        %v880 = vsub.f32 0.0, %v848
        %v881 = vsub.f32 0.0, %v849
        %v882 = vsub.f32 0.0, %v850
        %v883 = vmul.f32 %v851, 1.442695
        %v884 = vpow.pop %v883
        %v885 = vmul.f32 %v852, 1.442695
        %v886 = vpow.pop %v885
        %v887 = vmul.f32 %v853, 1.442695
        %v888 = vpow.pop %v887
        %v889 = vmul.f32 %v854, 1.442695
        %v890 = vpow.pop %v889
        %v891 = vmul.f32 %v855, 1.442695
        %v892 = vpow.pop %v891
        %v893 = vmul.f32 %v856, 1.442695
        %v894 = vpow.pop %v893
        %v895 = vmul.f32 %v857, 1.442695
        %v896 = vpow.pop %v895
        %v897 = vmul.f32 %v858, 1.442695
        %v898 = vpow.pop %v897
        %v899 = vmul.f32 %v859, 1.442695
        %v900 = vpow.pop %v899
        %v901 = vmul.f32 %v860, 1.442695
        %v902 = vpow.pop %v901
        %v903 = vmul.f32 %v861, 1.442695
        %v904 = vpow.pop %v903
        %v905 = vmul.f32 %v862, 1.442695
        %v906 = vpow.pop %v905
        %v907 = vmul.f32 %v863, 1.442695
        %v908 = vpow.pop %v907
        %v909 = vmul.f32 %v864, 1.442695
        %v910 = vpow.pop %v909
        %v911 = vmul.f32 %v865, 1.442695
        %v912 = vpow.pop %v911
        %v913 = vmul.f32 %v866, 1.442695
        %v914 = vpow.pop %v913
        %v915 = vmul.f32 %v867, 1.442695
        %v916 = vpow.pop %v915
        %v917 = vmul.f32 %v868, 1.442695
        %v918 = vpow.pop %v917
        %v919 = vmul.f32 %v869, 1.442695
        %v920 = vpow.pop %v919
        %v921 = vmul.f32 %v870, 1.442695
        %v922 = vpow.pop %v921
        %v923 = vmul.f32 %v871, 1.442695
        %v924 = vpow.pop %v923
        %v925 = vmul.f32 %v872, 1.442695
        %v926 = vpow.pop %v925
        %v927 = vmul.f32 %v873, 1.442695
        %v928 = vpow.pop %v927
        %v929 = vmul.f32 %v874, 1.442695
        %v930 = vpow.pop %v929
        %v931 = vmul.f32 %v875, 1.442695
        %v932 = vpow.pop %v931
        %v933 = vmul.f32 %v876, 1.442695
        %v934 = vpow.pop %v933
        %v935 = vmul.f32 %v877, 1.442695
        %v936 = vpow.pop %v935
        %v937 = vmul.f32 %v878, 1.442695
        %v938 = vpow.pop %v937
        %v939 = vmul.f32 %v879, 1.442695
        %v940 = vpow.pop %v939
        %v941 = vmul.f32 %v880, 1.442695
        %v942 = vpow.pop %v941
        %v943 = vmul.f32 %v881, 1.442695
        %v944 = vpow.pop %v943
        %v945 = vmul.f32 %v882, 1.442695
        %v946 = vpow.pop %v945
        %v947 = vadd.f32 %v884, 1.0
        %v948 = vadd.f32 %v886, 1.0
        %v949 = vadd.f32 %v888, 1.0
        %v950 = vadd.f32 %v890, 1.0
        %v951 = vadd.f32 %v892, 1.0
        %v952 = vadd.f32 %v894, 1.0
        %v953 = vadd.f32 %v896, 1.0
        %v954 = vadd.f32 %v898, 1.0
        %v955 = vadd.f32 %v900, 1.0
        %v956 = vadd.f32 %v902, 1.0
        %v957 = vadd.f32 %v904, 1.0
        %v958 = vadd.f32 %v906, 1.0
        %v959 = vadd.f32 %v908, 1.0
        %v960 = vadd.f32 %v910, 1.0
        %v961 = vadd.f32 %v912, 1.0
        %v962 = vadd.f32 %v914, 1.0
        %v963 = vadd.f32 %v916, 1.0
        %v964 = vadd.f32 %v918, 1.0
        %v965 = vadd.f32 %v920, 1.0
        %v966 = vadd.f32 %v922, 1.0
        %v967 = vadd.f32 %v924, 1.0
        %v968 = vadd.f32 %v926, 1.0
        %v969 = vadd.f32 %v928, 1.0
        %v970 = vadd.f32 %v930, 1.0
        %v971 = vadd.f32 %v932, 1.0
        %v972 = vadd.f32 %v934, 1.0
        %v973 = vadd.f32 %v936, 1.0
        %v974 = vadd.f32 %v938, 1.0
        %v975 = vadd.f32 %v940, 1.0
        %v976 = vadd.f32 %v942, 1.0
        %v977 = vadd.f32 %v944, 1.0
        %v978 = vadd.f32 %v946, 1.0
        %v979 = vrcp.pop %v947
        %v980 = vrcp.pop %v948
        %v981 = vrcp.pop %v949
        %v982 = vrcp.pop %v950
        %v983 = vrcp.pop %v951
        %v984 = vrcp.pop %v952
        %v985 = vrcp.pop %v953
        %v986 = vrcp.pop %v954
        %v987 = vrcp.pop %v955
        %v988 = vrcp.pop %v956
        %v989 = vrcp.pop %v957
        %v990 = vrcp.pop %v958
        %v991 = vrcp.pop %v959
        %v992 = vrcp.pop %v960
        %v993 = vrcp.pop %v961
        %v994 = vrcp.pop %v962
        %v995 = vrcp.pop %v963
        %v996 = vrcp.pop %v964
        %v997 = vrcp.pop %v965
        %v998 = vrcp.pop %v966
        %v999 = vrcp.pop %v967
        %v1000 = vrcp.pop %v968
        %v1001 = vrcp.pop %v969
        %v1002 = vrcp.pop %v970
        %v1003 = vrcp.pop %v971
        %v1004 = vrcp.pop %v972
        %v1005 = vrcp.pop %v973
        %v1006 = vrcp.pop %v974
        %v1007 = vrcp.pop %v975
        %v1008 = vrcp.pop %v976
        %v1009 = vrcp.pop %v977
        %v1010 = vrcp.pop %v978
        %vm1011 = vcmp.ge.f32.partialorder %v787, 0.0
        %vm1012 = vcmp.ge.f32.partialorder %v788, 0.0
        %vm1013 = vcmp.ge.f32.partialorder %v789, 0.0
        %vm1014 = vcmp.ge.f32.partialorder %v790, 0.0
        %vm1015 = vcmp.ge.f32.partialorder %v791, 0.0
        %vm1016 = vcmp.ge.f32.partialorder %v792, 0.0
        %vm1017 = vcmp.ge.f32.partialorder %v793, 0.0
        %vm1018 = vcmp.ge.f32.partialorder %v794, 0.0
        %vm1019 = vcmp.ge.f32.partialorder %v795, 0.0
        %vm1020 = vcmp.ge.f32.partialorder %v796, 0.0
        %vm1021 = vcmp.ge.f32.partialorder %v797, 0.0
        %vm1022 = vcmp.ge.f32.partialorder %v798, 0.0
        %vm1023 = vcmp.ge.f32.partialorder %v799, 0.0
        %vm1024 = vcmp.ge.f32.partialorder %v800, 0.0
        %vm1025 = vcmp.ge.f32.partialorder %v801, 0.0
        %vm1026 = vcmp.ge.f32.partialorder %v802, 0.0
        %vm1027 = vcmp.ge.f32.partialorder %v803, 0.0
        %vm1028 = vcmp.ge.f32.partialorder %v804, 0.0
        %vm1029 = vcmp.ge.f32.partialorder %v805, 0.0
        %vm1030 = vcmp.ge.f32.partialorder %v806, 0.0
        %vm1031 = vcmp.ge.f32.partialorder %v807, 0.0
        %vm1032 = vcmp.ge.f32.partialorder %v808, 0.0
        %vm1033 = vcmp.ge.f32.partialorder %v809, 0.0
        %vm1034 = vcmp.ge.f32.partialorder %v810, 0.0
        %vm1035 = vcmp.ge.f32.partialorder %v811, 0.0
        %vm1036 = vcmp.ge.f32.partialorder %v812, 0.0
        %vm1037 = vcmp.ge.f32.partialorder %v813, 0.0
        %vm1038 = vcmp.ge.f32.partialorder %v814, 0.0
        %vm1039 = vcmp.ge.f32.partialorder %v815, 0.0
        %vm1040 = vcmp.ge.f32.partialorder %v816, 0.0
        %vm1041 = vcmp.ge.f32.partialorder %v817, 0.0
        %vm1042 = vcmp.ge.f32.partialorder %v818, 0.0
        %v1043 = vsub.f32 1.0, %v979
        %v1044 = vsub.f32 1.0, %v980
        %v1045 = vsub.f32 1.0, %v981
        %v1046 = vsub.f32 1.0, %v982
        %v1047 = vsub.f32 1.0, %v983
        %v1048 = vsub.f32 1.0, %v984
        %v1049 = vsub.f32 1.0, %v985
        %v1050 = vsub.f32 1.0, %v986
        %v1051 = vsub.f32 1.0, %v987
        %v1052 = vsub.f32 1.0, %v988
        %v1053 = vsub.f32 1.0, %v989
        %v1054 = vsub.f32 1.0, %v990
        %v1055 = vsub.f32 1.0, %v991
        %v1056 = vsub.f32 1.0, %v992
        %v1057 = vsub.f32 1.0, %v993
        %v1058 = vsub.f32 1.0, %v994
        %v1059 = vsub.f32 1.0, %v995
        %v1060 = vsub.f32 1.0, %v996
        %v1061 = vsub.f32 1.0, %v997
        %v1062 = vsub.f32 1.0, %v998
        %v1063 = vsub.f32 1.0, %v999
        %v1064 = vsub.f32 1.0, %v1000
        %v1065 = vsub.f32 1.0, %v1001
        %v1066 = vsub.f32 1.0, %v1002
        %v1067 = vsub.f32 1.0, %v1003
        %v1068 = vsub.f32 1.0, %v1004
        %v1069 = vsub.f32 1.0, %v1005
        %v1070 = vsub.f32 1.0, %v1006
        %v1071 = vsub.f32 1.0, %v1007
        %v1072 = vsub.f32 1.0, %v1008
        %v1073 = vsub.f32 1.0, %v1009
        %v1074 = vsub.f32 1.0, %v1010
        %v1075 = vsel %vm1011, %v979, %v1043
        %v1076 = vsel %vm1012, %v980, %v1044
        %v1077 = vsel %vm1013, %v981, %v1045
        %v1078 = vsel %vm1014, %v982, %v1046
        %v1079 = vsel %vm1015, %v983, %v1047
        %v1080 = vsel %vm1016, %v984, %v1048
        %v1081 = vsel %vm1017, %v985, %v1049
        %v1082 = vsel %vm1018, %v986, %v1050
        %v1083 = vsel %vm1019, %v987, %v1051
        %v1084 = vsel %vm1020, %v988, %v1052
        %v1085 = vsel %vm1021, %v989, %v1053
        %v1086 = vsel %vm1022, %v990, %v1054
        %v1087 = vsel %vm1023, %v991, %v1055
        %v1088 = vsel %vm1024, %v992, %v1056
        %v1089 = vsel %vm1025, %v993, %v1057
        %v1090 = vsel %vm1026, %v994, %v1058
        %v1091 = vsel %vm1027, %v995, %v1059
        %v1092 = vsel %vm1028, %v996, %v1060
        %v1093 = vsel %vm1029, %v997, %v1061
        %v1094 = vsel %vm1030, %v998, %v1062
        %v1095 = vsel %vm1031, %v999, %v1063
        %v1096 = vsel %vm1032, %v1000, %v1064
        %v1097 = vsel %vm1033, %v1001, %v1065
        %v1098 = vsel %vm1034, %v1002, %v1066
        %v1099 = vsel %vm1035, %v1003, %v1067
        %v1100 = vsel %vm1036, %v1004, %v1068
        %v1101 = vsel %vm1037, %v1005, %v1069
        %v1102 = vsel %vm1038, %v1006, %v1070
        %v1103 = vsel %vm1039, %v1007, %v1071
        %v1104 = vsel %vm1040, %v1008, %v1072
        %v1105 = vsel %vm1041, %v1009, %v1073
        %v1106 = vsel %vm1042, %v1010, %v1074
        %v1107 = vmul.f32 %v787, %v1075
        %v1108 = vmul.f32 %v788, %v1076
        %v1109 = vmul.f32 %v789, %v1077
        %v1110 = vmul.f32 %v790, %v1078
        %v1111 = vmul.f32 %v791, %v1079
        %v1112 = vmul.f32 %v792, %v1080
        %v1113 = vmul.f32 %v793, %v1081
        %v1114 = vmul.f32 %v794, %v1082
        %v1115 = vmul.f32 %v795, %v1083
        %v1116 = vmul.f32 %v796, %v1084
        %v1117 = vmul.f32 %v797, %v1085
        %v1118 = vmul.f32 %v798, %v1086
        %v1119 = vmul.f32 %v799, %v1087
        %v1120 = vmul.f32 %v800, %v1088
        %v1121 = vmul.f32 %v801, %v1089
        %v1122 = vmul.f32 %v802, %v1090
        %v1123 = vmul.f32 %v803, %v1091
        %v1124 = vmul.f32 %v804, %v1092
        %v1125 = vmul.f32 %v805, %v1093
        %v1126 = vmul.f32 %v806, %v1094
        %v1127 = vmul.f32 %v807, %v1095
        %v1128 = vmul.f32 %v808, %v1096
        %v1129 = vmul.f32 %v809, %v1097
        %v1130 = vmul.f32 %v810, %v1098
        %v1131 = vmul.f32 %v811, %v1099
        %v1132 = vmul.f32 %v812, %v1100
        %v1133 = vmul.f32 %v813, %v1101
        %v1134 = vmul.f32 %v814, %v1102
        %v1135 = vmul.f32 %v815, %v1103
        %v1136 = vmul.f32 %v816, %v1104
        %v1137 = vmul.f32 %v817, %v1105
        %v1138 = vmul.f32 %v818, %v1106
        %v1139 = vpack.c.bf16 %v1108, %v1107
        %v1140 = vpack.c.bf16 %v1110, %v1109
        %v1141 = vpack.c.bf16 %v1112, %v1111
        %v1142 = vpack.c.bf16 %v1114, %v1113
        %v1143 = vpack.c.bf16 %v1116, %v1115
        %v1144 = vpack.c.bf16 %v1118, %v1117
        %v1145 = vpack.c.bf16 %v1120, %v1119
        %v1146 = vpack.c.bf16 %v1122, %v1121
        %v1147 = vpack.c.bf16 %v1124, %v1123
        %v1148 = vpack.c.bf16 %v1126, %v1125
        %v1149 = vpack.c.bf16 %v1128, %v1127
        %v1150 = vpack.c.bf16 %v1130, %v1129
        %v1151 = vpack.c.bf16 %v1132, %v1131
        %v1152 = vpack.c.bf16 %v1134, %v1133
        %v1153 = vpack.c.bf16 %v1136, %v1135
        %v1154 = vpack.c.bf16 %v1138, %v1137
        %v1171 = vunpack.c.l.b16 %v1139
        %v1172 = vunpack.c.h.b16 %v1139
        %v1173 = vunpack.c.l.b16 %v1140
        %v1174 = vunpack.c.h.b16 %v1140
        %v1175 = vunpack.c.l.b16 %v1141
        %v1176 = vunpack.c.h.b16 %v1141
        %v1177 = vunpack.c.l.b16 %v1142
        %v1178 = vunpack.c.h.b16 %v1142
        %v1179 = vunpack.c.l.b16 %v1143
        %v1180 = vunpack.c.h.b16 %v1143
        %v1181 = vunpack.c.l.b16 %v1144
        %v1182 = vunpack.c.h.b16 %v1144
        %v1183 = vunpack.c.l.b16 %v1145
        %v1184 = vunpack.c.h.b16 %v1145
        %v1185 = vunpack.c.l.b16 %v1146
        %v1186 = vunpack.c.h.b16 %v1146
        %v1187 = vunpack.c.l.b16 %v1147
        %v1188 = vunpack.c.h.b16 %v1147
        %v1189 = vunpack.c.l.b16 %v1148
        %v1190 = vunpack.c.h.b16 %v1148
        %v1191 = vunpack.c.l.b16 %v1149
        %v1192 = vunpack.c.h.b16 %v1149
        %v1193 = vunpack.c.l.b16 %v1150
        %v1194 = vunpack.c.h.b16 %v1150
        %v1195 = vunpack.c.l.b16 %v1151
        %v1196 = vunpack.c.h.b16 %v1151
        %v1197 = vunpack.c.l.b16 %v1152
        %v1198 = vunpack.c.h.b16 %v1152
        %v1199 = vunpack.c.l.b16 %v1153
        %v1200 = vunpack.c.h.b16 %v1153
        %v1201 = vunpack.c.l.b16 %v1154
        %v1202 = vunpack.c.h.b16 %v1154
        %v1203 = vpack.c.b16 %v1171, %v1171
        %v1204 = vpack.c.b16 %v1172, %v1172
        %v1205 = vpack.c.b16 %v1173, %v1173
        %v1206 = vpack.c.b16 %v1174, %v1174
        %v1207 = vpack.c.b16 %v1175, %v1175
        %v1208 = vpack.c.b16 %v1176, %v1176
        %v1209 = vpack.c.b16 %v1177, %v1177
        %v1210 = vpack.c.b16 %v1178, %v1178
        %v1211 = vpack.c.b16 %v1179, %v1179
        %v1212 = vpack.c.b16 %v1180, %v1180
        %v1213 = vpack.c.b16 %v1181, %v1181
        %v1214 = vpack.c.b16 %v1182, %v1182
        %v1215 = vpack.c.b16 %v1183, %v1183
        %v1216 = vpack.c.b16 %v1184, %v1184
        %v1217 = vpack.c.b16 %v1185, %v1185
        %v1218 = vpack.c.b16 %v1186, %v1186
        %v1219 = vpack.c.b16 %v1187, %v1187
        %v1220 = vpack.c.b16 %v1188, %v1188
        %v1221 = vpack.c.b16 %v1189, %v1189
        %v1222 = vpack.c.b16 %v1190, %v1190
        %v1223 = vpack.c.b16 %v1191, %v1191
        %v1224 = vpack.c.b16 %v1192, %v1192
        %v1225 = vpack.c.b16 %v1193, %v1193
        %v1226 = vpack.c.b16 %v1194, %v1194
        %v1227 = vpack.c.b16 %v1195, %v1195
        %v1228 = vpack.c.b16 %v1196, %v1196
        %v1229 = vpack.c.b16 %v1197, %v1197
        %v1230 = vpack.c.b16 %v1198, %v1198
        %v1231 = vpack.c.b16 %v1199, %v1199
        %v1232 = vpack.c.b16 %v1200, %v1200
        %v1233 = vpack.c.b16 %v1201, %v1201
        %v1234 = vpack.c.b16 %v1202, %v1202
        %1267 = vst [vmem:[%s257] sm:$0xf] %v1203
        %1268 = vst [vmem:[%s257 + $0x4] sm:$0xf] %v1204
        %1269 = vst [vmem:[%s257 + $0x8] sm:$0xf] %v1205
        %1270 = vst [vmem:[%s257 + $0xc] sm:$0xf] %v1206
        %1271 = vst [vmem:[%s257 + $0x10] sm:$0xf] %v1207
        %1272 = vst [vmem:[%s257 + $0x14] sm:$0xf] %v1208
        %1273 = vst [vmem:[%s257 + $0x18] sm:$0xf] %v1209
        %1274 = vst [vmem:[%s257 + $0x1c] sm:$0xf] %v1210
        %1275 = vst [vmem:[%s257 + $0x20] sm:$0xf] %v1211
        %1276 = vst [vmem:[%s257 + $0x24] sm:$0xf] %v1212
        %1277 = vst [vmem:[%s257 + $0x28] sm:$0xf] %v1213
        %1278 = vst [vmem:[%s257 + $0x2c] sm:$0xf] %v1214
        %1279 = vst [vmem:[%s257 + $0x30] sm:$0xf] %v1215
        %1280 = vst [vmem:[%s257 + $0x34] sm:$0xf] %v1216
        %1281 = vst [vmem:[%s257 + $0x38] sm:$0xf] %v1217
        %1282 = vst [vmem:[%s257 + $0x3c] sm:$0xf] %v1218
        %1283 = vst [vmem:[%s257 + $0x40] sm:$0xf] %v1219
        %1284 = vst [vmem:[%s257 + $0x44] sm:$0xf] %v1220
        %1285 = vst [vmem:[%s257 + $0x48] sm:$0xf] %v1221
        %1286 = vst [vmem:[%s257 + $0x4c] sm:$0xf] %v1222
        %1287 = vst [vmem:[%s257 + $0x50] sm:$0xf] %v1223
        %1288 = vst [vmem:[%s257 + $0x54] sm:$0xf] %v1224
        %1289 = vst [vmem:[%s257 + $0x58] sm:$0xf] %v1225
        %1290 = vst [vmem:[%s257 + $0x5c] sm:$0xf] %v1226
        %1291 = vst [vmem:[%s257 + $0x60] sm:$0xf] %v1227
        %1292 = vst [vmem:[%s257 + $0x64] sm:$0xf] %v1228
        %1293 = vst [vmem:[%s257 + $0x68] sm:$0xf] %v1229
        %1294 = vst [vmem:[%s257 + $0x6c] sm:$0xf] %v1230
        %1295 = vst [vmem:[%s257 + $0x70] sm:$0xf] %v1231
        %1296 = vst [vmem:[%s257 + $0x74] sm:$0xf] %v1232
        %1297 = vst [vmem:[%s257 + $0x78] sm:$0xf] %v1233
        %1298 = vst [vmem:[%s257 + $0x7c] sm:$0xf] %v1234
      $region40: #{yolo_pafpn_forward.54} parent=31 // pred_fallthru
        _
      %s1299 = smul.u32 32, %s19
      %p1300 = scmp.lt.s32.totalorder %s1299, 255
      %s1301 = scalar_select %p1300, %s1299, 255
      %p1302 = scmp.lt.s32.totalorder %s20, 0
      %s1303 = scalar_select %p1302, %s20, 0
      %s1304 = sadd.s32 %s1303, %s1301
      %s1305 = smul.addr %s1304, 4
      %s1306 = scalar_lea.vmem %s3, %s1305
      // Predicated region
      $region41: #{yolo_pafpn_forward.54} parent=31 // pred_check
        %p1307 = pneg %p135
      $region42: #{yolo_pafpn_forward.54} parent=31 // pred_check_branch
        %1309 = sbr.rel (%p1307) target = $region44
      $region43: #{yolo_pafpn_forward.54} parent=31 // pred_region
        %s1310 = smul.u32 32, %s19
      $region44: #{yolo_pafpn_forward.54} parent=31 // pred_fallthru
        _
    $region32: #{yolo_pafpn_forward.54} parent=5 // pred_fallthru
      _
    %p1311 = scmp.le.s32.totalorder 2, %s9
    // Predicated region
    $region45: #{yolo_pafpn_forward.54} parent=5 // pred_check
      %p1312 = pneg %p1311
    $region46: #{yolo_pafpn_forward.54} parent=5 // pred_check_branch
      %1314 = sbr.rel (%p1312) target = $region48
    $region47: #{yolo_pafpn_forward.54} parent=5 // pred_region
      %s1315 = ssub.s32 %s9, 2
      // Predicated region
      $region49: #{yolo_pafpn_forward.54} parent=47 // pred_check
        %p1316 = pneg %p141
      $region50: #{yolo_pafpn_forward.54} parent=47 // pred_check_branch
        %1318 = sbr.rel (%p1316) target = $region52
      $region51: #{yolo_pafpn_forward.54} parent=47 // pred_region
        %s1319 = smul.u32 32, %s22
        %p1320 = scmp.lt.s32.totalorder %s1319, 255
        %s1321 = scalar_select %p1320, %s1319, 255
        %p1322 = scmp.lt.s32.totalorder %s23, 0
        %s1323 = scalar_select %p1322, %s23, 0
        %s1324 = sadd.s32 %s1323, %s1321
        %s1325 = smul.addr %s1324, 4
        %s1326 = scalar_lea.vmem %s3, %s1325
      $region52: #{yolo_pafpn_forward.54} parent=47 // pred_fallthru
        _
    $region48: #{yolo_pafpn_forward.54} parent=5 // pred_fallthru
      _
  $region6: #{yolo_pafpn_forward.54} parent=0 // loop_footer
    %s13 = sadd.s32 1, %s9
  $region7: #{yolo_pafpn_forward.54} parent=0 // loop_footer_branch
    %8 = sbr.rel target = $region3
  $region8: #{yolo_pafpn_forward.54} parent=0 // loop_exit
    _

// kernel: yolo_pafpn_forward.56
$region0: #{yolo_pafpn_forward.56}
  #allocation0 [shape = 'u32[]', space=smem, size = 0x4, offset = 0x4, fixed_abs, tag = 'smem constant byte address 0x4 - core index']
  #allocation1 [shape = 'u32[144,128]{1,0:T(1,128)}', space=vmem, size = 0x12000, scoped, tag = 'internal scratch']
  #allocation2 [shape = 'f32[256,128]{1,0:T(8,128)}', space=vmem, size = 0x20000, scoped, tag = 'scratch operand']
  %s0 = inlined_call_operand.vmem [shape: bf16[512,128], index: 0, kind: input, shape index: {}]
  %s1 = inlined_call_operand.vmem [shape: bf16[128,128], index: 1, kind: input, shape index: {}]
  %s2 = inlined_call_operand.vmem [shape: f32[1,128], index: 2, kind: input, shape index: {}]
  %s3 = inlined_call_operand.vmem [shape: bf16[512,128], index: 3, kind: output, shape index: {}]
  %s4 = sld [smem:[#allocation0]]
  $region53: #{yolo_pafpn_forward.56} parent=0
    _
  %s6 = ssub.s32 1, %s4
  %s7 = scalar_select 0, %s6, %s4
  loop: start=0, step=1, limit=4
  $region2: #{yolo_pafpn_forward.56} parent=0 // loop_pre_header
    _
  $region3: #{yolo_pafpn_forward.56} parent=0 // loop_header
    %s9 = sphi 0, %s13
    %p10 = scmp.ge.s32.totalorder %s9, 4
    %s16 = sphi 0, %s35
    %s17 = sphi 0, %s31
    %s18 = sphi 0, %s27
    %s19 = sphi 0, %s16
    %s20 = sphi 0, %s17
    %s21 = sphi 0, %s18
    %s22 = sphi 0, %s19
    %s23 = sphi 0, %s20
    %s24 = sphi 0, %s21
    %s40 = sphi 0, %s42
    %s43 = sphi 0, %s40
    %s44 = sphi 0, %s43
    %s60 = sphi 0, %s44
    %s68 = sphi 0, %s70
    %s71 = sphi 0, %s68
    %s72 = sphi 0, %s71
    %s88 = sphi 0, %s72
    %s94 = sphi 0, %s96
    %s97 = sphi 0, %s94
    %s98 = sphi 0, %s97
    %s114 = sphi 0, %s98
    %s122 = sphi 0, %s124
    %s125 = sphi 0, %s122
    %s126 = sphi 0, %s125
    %s142 = sphi 0, %s126
  $region4: #{yolo_pafpn_forward.56} parent=0 // loop_header_branch
    %12 = sbr.rel (%p10) target = $region8
  $region5: #{yolo_pafpn_forward.56} parent=0 // loop_body
    %s14 = ssub.s32 %s9, 1
    %s15 = ssub.s32 %s9, 2
    %s25 = sadd.s32 1, %s18
    %p26 = scmp.ge.s32.totalorder %s25, 1
    %s27 = scalar_select %p26, 0, %s25
    %s28 = sadd.s32 1, %s17
    %s29 = scalar_select %p26, %s28, %s17
    %p30 = scmp.ge.s32.totalorder %s29, 1
    %s31 = scalar_select %p30, 0, %s29
    %s32 = sadd.s32 1, %s16
    %s33 = scalar_select %p30, %s32, %s16
    %p34 = scmp.ge.s32.totalorder %s33, 2
    %s35 = scalar_select %p34, 0, %s33
    %s36 = ssub.s32 %s16, %s35
    %s37 = ssub.s32 %s18, %s27
    %s38 = sor.u32 %s36, %s37
    %p39 = scmp.eq.s32.totalorder %s38, 0
    %s41 = sadd.s32 %s40, 1
    %s42 = scalar_select %p39, %s40, %s41
    %p45 = pneg %p39
    %p46 = scmp.eq.s32.totalorder %s9, 1
    %p47 = por %p45, %p46
    %p48 = scmp.ne.s32.totalorder %s40, %s43
    %p49 = scmp.eq.s32.totalorder %s9, 0
    %p50 = por %p48, %p49
    %p51 = scmp.ne.s32.totalorder %s40, %s43
    %p52 = scmp.eq.s32.totalorder %s14, 1
    %p53 = por %p51, %p52
    %p54 = scmp.ne.s32.totalorder %s43, %s44
    %p55 = scmp.eq.s32.totalorder %s14, 0
    %p56 = por %p54, %p55
    %p57 = scmp.ne.s32.totalorder %s43, %s44
    %p58 = scmp.eq.s32.totalorder %s15, 1
    %p59 = por %p57, %p58
    %p61 = scmp.ne.s32.totalorder %s44, %s60
    %p62 = scmp.eq.s32.totalorder %s15, 0
    %p63 = por %p61, %p62
    %s64 = ssub.s32 %s18, %s27
    %s65 = ssub.s32 %s17, %s31
    %s66 = sor.u32 %s64, %s65
    %p67 = scmp.eq.s32.totalorder %s66, 0
    %s69 = sadd.s32 %s68, 1
    %s70 = scalar_select %p67, %s68, %s69
    %p73 = pneg %p67
    %p74 = scmp.eq.s32.totalorder %s9, 1
    %p75 = por %p73, %p74
    %p76 = scmp.ne.s32.totalorder %s68, %s71
    %p77 = scmp.eq.s32.totalorder %s9, 0
    %p78 = por %p76, %p77
    %p79 = scmp.ne.s32.totalorder %s68, %s71
    %p80 = scmp.eq.s32.totalorder %s14, 1
    %p81 = por %p79, %p80
    %p82 = scmp.ne.s32.totalorder %s71, %s72
    %p83 = scmp.eq.s32.totalorder %s14, 0
    %p84 = por %p82, %p83
    %p85 = scmp.ne.s32.totalorder %s71, %s72
    %p86 = scmp.eq.s32.totalorder %s15, 1
    %p87 = por %p85, %p86
    %p89 = scmp.ne.s32.totalorder %s72, %s88
    %p90 = scmp.eq.s32.totalorder %s15, 0
    %p91 = por %p89, %p90
    %s92 = ssub.s32 %s17, %s31
    %p93 = scmp.eq.s32.totalorder %s92, 0
    %s95 = sadd.s32 %s94, 1
    %s96 = scalar_select %p93, %s94, %s95
    %p99 = pneg %p93
    %p100 = scmp.eq.s32.totalorder %s9, 1
    %p101 = por %p99, %p100
    %p102 = scmp.ne.s32.totalorder %s94, %s97
    %p103 = scmp.eq.s32.totalorder %s9, 0
    %p104 = por %p102, %p103
    %p105 = scmp.ne.s32.totalorder %s94, %s97
    %p106 = scmp.eq.s32.totalorder %s14, 1
    %p107 = por %p105, %p106
    %p108 = scmp.ne.s32.totalorder %s97, %s98
    %p109 = scmp.eq.s32.totalorder %s14, 0
    %p110 = por %p108, %p109
    %p111 = scmp.ne.s32.totalorder %s97, %s98
    %p112 = scmp.eq.s32.totalorder %s15, 1
    %p113 = por %p111, %p112
    %p115 = scmp.ne.s32.totalorder %s98, %s114
    %p116 = scmp.eq.s32.totalorder %s15, 0
    %p117 = por %p115, %p116
    %s118 = ssub.s32 %s16, %s35
    %s119 = ssub.s32 %s17, %s31
    %s120 = sor.u32 %s118, %s119
    %p121 = scmp.eq.s32.totalorder %s120, 0
    %s123 = sadd.s32 %s122, 1
    %s124 = scalar_select %p121, %s122, %s123
    %p127 = pneg %p121
    %p128 = scmp.eq.s32.totalorder %s9, 1
    %p129 = por %p127, %p128
    %p130 = scmp.ne.s32.totalorder %s122, %s125
    %p131 = scmp.eq.s32.totalorder %s9, 0
    %p132 = por %p130, %p131
    %p133 = scmp.ne.s32.totalorder %s122, %s125
    %p134 = scmp.eq.s32.totalorder %s14, 1
    %p135 = por %p133, %p134
    %p136 = scmp.ne.s32.totalorder %s125, %s126
    %p137 = scmp.eq.s32.totalorder %s14, 0
    %p138 = por %p136, %p137
    %p139 = scmp.ne.s32.totalorder %s125, %s126
    %p140 = scmp.eq.s32.totalorder %s15, 1
    %p141 = por %p139, %p140
    %p143 = scmp.ne.s32.totalorder %s126, %s142
    %p144 = scmp.eq.s32.totalorder %s15, 0
    %p145 = por %p143, %p144
    %p146 = scmp.le.s32.totalorder 1, %s9
    %p147 = scmp.lt.s32.totalorder %s9, 3
    %p148 = pnand %p146, %p147
    %p149 = pneg %p148
    // Predicated region
    $region9: #{yolo_pafpn_forward.56} parent=5 // pred_check
      _
    $region10: #{yolo_pafpn_forward.56} parent=5 // pred_check_branch
      %151 = sbr.rel (%p148) target = $region12
    $region11: #{yolo_pafpn_forward.56} parent=5 // pred_region
      %s152 = ssub.s32 %s9, 1
      // Predicated region
      $region13: #{yolo_pafpn_forward.56} parent=11 // pred_check
        %p153 = pneg %p84
      $region14: #{yolo_pafpn_forward.56} parent=11 // pred_check_branch
        %155 = sbr.rel (%p153) target = $region16
      $region15: #{yolo_pafpn_forward.56} parent=11 // pred_region
        %s156 = smul.u32 16, %s21
        %p157 = scmp.lt.s32.totalorder %s156, 15
        %s158 = scalar_select %p157, %s156, 15
        %p159 = scmp.lt.s32.totalorder %s20, 0
        %s160 = scalar_select %p159, %s20, 0
        %s161 = sadd.s32 %s160, %s158
        %s162 = smul.addr %s161, 4
        %s163 = scalar_lea.vmem %s1, %s162
        %s164 = smul.u32 16, %s21
      $region16: #{yolo_pafpn_forward.56} parent=11 // pred_fallthru
        _
      // Predicated region
      $region17: #{yolo_pafpn_forward.56} parent=11 // pred_check
        %p165 = pneg %p110
      $region18: #{yolo_pafpn_forward.56} parent=11 // pred_check_branch
        %167 = sbr.rel (%p165) target = $region20
      $region19: #{yolo_pafpn_forward.56} parent=11 // pred_region
        %p168 = scmp.lt.s32.totalorder %s20, 0
        %s169 = scalar_select %p168, %s20, 0
        %s170 = scalar_lea.vmem %s2, %s169
      $region20: #{yolo_pafpn_forward.56} parent=11 // pred_fallthru
        _
    $region12: #{yolo_pafpn_forward.56} parent=5 // pred_fallthru
      _
    %p171 = scmp.lt.s32.totalorder %s9, 2
    // Predicated region
    $region21: #{yolo_pafpn_forward.56} parent=5 // pred_check
      %p172 = pneg %p171
    $region22: #{yolo_pafpn_forward.56} parent=5 // pred_check_branch
      %174 = sbr.rel (%p172) target = $region24
    $region23: #{yolo_pafpn_forward.56} parent=5 // pred_region
      // Predicated region
      $region25: #{yolo_pafpn_forward.56} parent=23 // pred_check
        %p175 = pneg %p50
      $region26: #{yolo_pafpn_forward.56} parent=23 // pred_check_branch
        %177 = sbr.rel (%p175) target = $region28
      $region27: #{yolo_pafpn_forward.56} parent=23 // pred_region
        %s178 = smul.u32 32, %s16
        %p179 = scmp.lt.s32.totalorder %s178, 63
        %s180 = scalar_select %p179, %s178, 63
        %p181 = scmp.lt.s32.totalorder %s18, 0
        %s182 = scalar_select %p181, %s18, 0
        %s183 = sadd.s32 %s182, %s180
        %s184 = smul.addr %s183, 4
        %s185 = scalar_lea.vmem %s0, %s184
        %s186 = smul.u32 32, %s16
      $region28: #{yolo_pafpn_forward.56} parent=23 // pred_fallthru
        _
    $region24: #{yolo_pafpn_forward.56} parent=5 // pred_fallthru
      _
    %p187 = scmp.le.s32.totalorder 1, %s9
    %p188 = scmp.lt.s32.totalorder %s9, 3
    %p189 = pnand %p187, %p188
    %p190 = pneg %p189
    // Predicated region
    $region29: #{yolo_pafpn_forward.56} parent=5 // pred_check
      _
    $region30: #{yolo_pafpn_forward.56} parent=5 // pred_check_branch
      %192 = sbr.rel (%p189) target = $region32
    $region31: #{yolo_pafpn_forward.56} parent=5 // pred_region
      %s193 = ssub.s32 %s9, 1
      %s194 = smul.u32 32, %s19
      %p195 = scmp.lt.s32.totalorder %s194, 63
      %s196 = scalar_select %p195, %s194, 63
      %p197 = scmp.lt.s32.totalorder %s21, 0
      %s198 = scalar_select %p197, %s21, 0
      %s199 = sadd.s32 %s198, %s196
      %s200 = smul.addr %s199, 4
      %s201 = scalar_lea.vmem %s0, %s200
      %p202 = pneg %p56
      %p203 = pneg %p53
      %s204 = smul.u32 16, %s21
      %p205 = scmp.lt.s32.totalorder %s204, 15
      %s206 = scalar_select %p205, %s204, 15
      %p207 = scmp.lt.s32.totalorder %s20, 0
      %s208 = scalar_select %p207, %s20, 0
      %s209 = sadd.s32 %s208, %s206
      %s210 = smul.addr %s209, 4
      %s211 = scalar_lea.vmem %s1, %s210
      %p212 = pneg %p84
      %p213 = pneg %p81
      %p214 = scmp.lt.s32.totalorder %s20, 0
      %s215 = scalar_select %p214, %s20, 0
      %s216 = scalar_lea.vmem %s2, %s215
      %p217 = pneg %p110
      %p218 = pneg %p107
      %p219 = pneg %p138
      %p220 = pneg %p135
      %s221 = smul.u32 32, %s19
      %p222 = scmp.lt.s32.totalorder %s221, 63
      %s223 = scalar_select %p222, %s221, 63
      %p224 = scmp.lt.s32.totalorder %s20, 0
      %s225 = scalar_select %p224, %s20, 0
      %s226 = sadd.s32 %s225, %s223
      %s227 = smul.addr %s226, 4
      %s228 = scalar_lea.vmem %s3, %s227
      %s229 = smul.u32 32, %s19
      %p230 = scmp.lt.s32.totalorder %s229, 63
      %s231 = scalar_select %p230, %s229, 63
      %p232 = scmp.lt.s32.totalorder %s21, 0
      %s233 = scalar_select %p232, %s21, 0
      %s234 = sadd.s32 %s233, %s231
      %s235 = smul.addr %s234, 4
      %s236 = scalar_lea.vmem %s0, %s235
      %s237 = smul.u32 32, %s19
      %s238 = smul.u32 16, %s21
      %p239 = scmp.lt.s32.totalorder %s238, 15
      %s240 = scalar_select %p239, %s238, 15
      %p241 = scmp.lt.s32.totalorder %s20, 0
      %s242 = scalar_select %p241, %s20, 0
      %s243 = sadd.s32 %s242, %s240
      %s244 = smul.addr %s243, 4
      %s245 = scalar_lea.vmem %s1, %s244
      %s246 = smul.u32 16, %s21
      %p247 = scmp.lt.s32.totalorder %s20, 0
      %s248 = scalar_select %p247, %s20, 0
      %s249 = scalar_lea.vmem %s2, %s248
      %s250 = smul.u32 32, %s19
      %p251 = scmp.lt.s32.totalorder %s250, 63
      %s252 = scalar_select %p251, %s250, 63
      %p253 = scmp.lt.s32.totalorder %s20, 0
      %s254 = scalar_select %p253, %s20, 0
      %s255 = sadd.s32 %s254, %s252
      %s256 = smul.addr %s255, 4
      %s257 = scalar_lea.vmem %s3, %s256
      %s258 = smul.u32 32, %s19
      %p260 = scmp.eq.s32.totalorder %s21, 0
      // Predicated region
      $region33: #{yolo_pafpn_forward.56} parent=31 // pred_check
        %p261 = pneg %p260
      $region34: #{yolo_pafpn_forward.56} parent=31 // pred_check_branch
        %263 = sbr.rel (%p261) target = $region36
      $region35: #{yolo_pafpn_forward.56} parent=31 // pred_region
        %264 = vst [vmem:[#allocation2] sm:$0xff] 0.0
        %265 = vst [vmem:[#allocation2 + $0x8] sm:$0xff] 0.0
        %266 = vst [vmem:[#allocation2 + $0x10] sm:$0xff] 0.0
        %267 = vst [vmem:[#allocation2 + $0x18] sm:$0xff] 0.0
        %268 = vst [vmem:[#allocation2 + $0x20] sm:$0xff] 0.0
        %269 = vst [vmem:[#allocation2 + $0x28] sm:$0xff] 0.0
        %270 = vst [vmem:[#allocation2 + $0x30] sm:$0xff] 0.0
        %271 = vst [vmem:[#allocation2 + $0x38] sm:$0xff] 0.0
        %272 = vst [vmem:[#allocation2 + $0x40] sm:$0xff] 0.0
        %273 = vst [vmem:[#allocation2 + $0x48] sm:$0xff] 0.0
        %274 = vst [vmem:[#allocation2 + $0x50] sm:$0xff] 0.0
        %275 = vst [vmem:[#allocation2 + $0x58] sm:$0xff] 0.0
        %276 = vst [vmem:[#allocation2 + $0x60] sm:$0xff] 0.0
        %277 = vst [vmem:[#allocation2 + $0x68] sm:$0xff] 0.0
        %278 = vst [vmem:[#allocation2 + $0x70] sm:$0xff] 0.0
        %279 = vst [vmem:[#allocation2 + $0x78] sm:$0xff] 0.0
        %280 = vst [vmem:[#allocation2 + $0x80] sm:$0xff] 0.0
        %281 = vst [vmem:[#allocation2 + $0x88] sm:$0xff] 0.0
        %282 = vst [vmem:[#allocation2 + $0x90] sm:$0xff] 0.0
        %283 = vst [vmem:[#allocation2 + $0x98] sm:$0xff] 0.0
        %284 = vst [vmem:[#allocation2 + $0xa0] sm:$0xff] 0.0
        %285 = vst [vmem:[#allocation2 + $0xa8] sm:$0xff] 0.0
        %286 = vst [vmem:[#allocation2 + $0xb0] sm:$0xff] 0.0
        %287 = vst [vmem:[#allocation2 + $0xb8] sm:$0xff] 0.0
        %288 = vst [vmem:[#allocation2 + $0xc0] sm:$0xff] 0.0
        %289 = vst [vmem:[#allocation2 + $0xc8] sm:$0xff] 0.0
        %290 = vst [vmem:[#allocation2 + $0xd0] sm:$0xff] 0.0
        %291 = vst [vmem:[#allocation2 + $0xd8] sm:$0xff] 0.0
        %292 = vst [vmem:[#allocation2 + $0xe0] sm:$0xff] 0.0
        %293 = vst [vmem:[#allocation2 + $0xe8] sm:$0xff] 0.0
        %294 = vst [vmem:[#allocation2 + $0xf0] sm:$0xff] 0.0
        %295 = vst [vmem:[#allocation2 + $0xf8] sm:$0xff] 0.0
      $region36: #{yolo_pafpn_forward.56} parent=31 // pred_fallthru
        _
      %v296 = vld [vmem:[#allocation2] sm:$0xff]
      %v297 = vld [vmem:[#allocation2 + $0x8] sm:$0xff]
      %v298 = vld [vmem:[#allocation2 + $0x10] sm:$0xff]
      %v299 = vld [vmem:[#allocation2 + $0x18] sm:$0xff]
      %v300 = vld [vmem:[#allocation2 + $0x20] sm:$0xff]
      %v301 = vld [vmem:[#allocation2 + $0x28] sm:$0xff]
      %v302 = vld [vmem:[#allocation2 + $0x30] sm:$0xff]
      %v303 = vld [vmem:[#allocation2 + $0x38] sm:$0xff]
      %v304 = vld [vmem:[#allocation2 + $0x40] sm:$0xff]
      %v305 = vld [vmem:[#allocation2 + $0x48] sm:$0xff]
      %v306 = vld [vmem:[#allocation2 + $0x50] sm:$0xff]
      %v307 = vld [vmem:[#allocation2 + $0x58] sm:$0xff]
      %v308 = vld [vmem:[#allocation2 + $0x60] sm:$0xff]
      %v309 = vld [vmem:[#allocation2 + $0x68] sm:$0xff]
      %v310 = vld [vmem:[#allocation2 + $0x70] sm:$0xff]
      %v311 = vld [vmem:[#allocation2 + $0x78] sm:$0xff]
      %v312 = vld [vmem:[#allocation2 + $0x80] sm:$0xff]
      %v313 = vld [vmem:[#allocation2 + $0x88] sm:$0xff]
      %v314 = vld [vmem:[#allocation2 + $0x90] sm:$0xff]
      %v315 = vld [vmem:[#allocation2 + $0x98] sm:$0xff]
      %v316 = vld [vmem:[#allocation2 + $0xa0] sm:$0xff]
      %v317 = vld [vmem:[#allocation2 + $0xa8] sm:$0xff]
      %v318 = vld [vmem:[#allocation2 + $0xb0] sm:$0xff]
      %v319 = vld [vmem:[#allocation2 + $0xb8] sm:$0xff]
      %v320 = vld [vmem:[#allocation2 + $0xc0] sm:$0xff]
      %v321 = vld [vmem:[#allocation2 + $0xc8] sm:$0xff]
      %v322 = vld [vmem:[#allocation2 + $0xd0] sm:$0xff]
      %v323 = vld [vmem:[#allocation2 + $0xd8] sm:$0xff]
      %v324 = vld [vmem:[#allocation2 + $0xe0] sm:$0xff]
      %v325 = vld [vmem:[#allocation2 + $0xe8] sm:$0xff]
      %v326 = vld [vmem:[#allocation2 + $0xf0] sm:$0xff]
      %v327 = vld [vmem:[#allocation2 + $0xf8] sm:$0xff]
      %v328 = vld [vmem:[%s236] sm:$0xf]
      %v329 = vld [vmem:[%s236 + $0x4] sm:$0xf]
      %v330 = vld [vmem:[%s236 + $0x8] sm:$0xf]
      %v331 = vld [vmem:[%s236 + $0xc] sm:$0xf]
      %v332 = vld [vmem:[%s236 + $0x10] sm:$0xf]
      %v333 = vld [vmem:[%s236 + $0x14] sm:$0xf]
      %v334 = vld [vmem:[%s236 + $0x18] sm:$0xf]
      %v335 = vld [vmem:[%s236 + $0x1c] sm:$0xf]
      %v336 = vld [vmem:[%s236 + $0x20] sm:$0xf]
      %v337 = vld [vmem:[%s236 + $0x24] sm:$0xf]
      %v338 = vld [vmem:[%s236 + $0x28] sm:$0xf]
      %v339 = vld [vmem:[%s236 + $0x2c] sm:$0xf]
      %v340 = vld [vmem:[%s236 + $0x30] sm:$0xf]
      %v341 = vld [vmem:[%s236 + $0x34] sm:$0xf]
      %v342 = vld [vmem:[%s236 + $0x38] sm:$0xf]
      %v343 = vld [vmem:[%s236 + $0x3c] sm:$0xf]
      %v344 = vld [vmem:[%s236 + $0x40] sm:$0xf]
      %v345 = vld [vmem:[%s236 + $0x44] sm:$0xf]
      %v346 = vld [vmem:[%s236 + $0x48] sm:$0xf]
      %v347 = vld [vmem:[%s236 + $0x4c] sm:$0xf]
      %v348 = vld [vmem:[%s236 + $0x50] sm:$0xf]
      %v349 = vld [vmem:[%s236 + $0x54] sm:$0xf]
      %v350 = vld [vmem:[%s236 + $0x58] sm:$0xf]
      %v351 = vld [vmem:[%s236 + $0x5c] sm:$0xf]
      %v352 = vld [vmem:[%s236 + $0x60] sm:$0xf]
      %v353 = vld [vmem:[%s236 + $0x64] sm:$0xf]
      %v354 = vld [vmem:[%s236 + $0x68] sm:$0xf]
      %v355 = vld [vmem:[%s236 + $0x6c] sm:$0xf]
      %v356 = vld [vmem:[%s236 + $0x70] sm:$0xf]
      %v357 = vld [vmem:[%s236 + $0x74] sm:$0xf]
      %v358 = vld [vmem:[%s236 + $0x78] sm:$0xf]
      %v359 = vld [vmem:[%s236 + $0x7c] sm:$0xf]
      %v360 = vld [vmem:[%s245] sm:$0xf]
      %v361 = vld [vmem:[%s245 + $0x4] sm:$0xf]
      %v362 = vld [vmem:[%s245 + $0x8] sm:$0xf]
      %v363 = vld [vmem:[%s245 + $0xc] sm:$0xf]
      %v364 = vld [vmem:[%s245 + $0x10] sm:$0xf]
      %v365 = vld [vmem:[%s245 + $0x14] sm:$0xf]
      %v366 = vld [vmem:[%s245 + $0x18] sm:$0xf]
      %v367 = vld [vmem:[%s245 + $0x1c] sm:$0xf]
      %v368 = vld [vmem:[%s245 + $0x20] sm:$0xf]
      %v369 = vld [vmem:[%s245 + $0x24] sm:$0xf]
      %v370 = vld [vmem:[%s245 + $0x28] sm:$0xf]
      %v371 = vld [vmem:[%s245 + $0x2c] sm:$0xf]
      %v372 = vld [vmem:[%s245 + $0x30] sm:$0xf]
      %v373 = vld [vmem:[%s245 + $0x34] sm:$0xf]
      %v374 = vld [vmem:[%s245 + $0x38] sm:$0xf]
      %v375 = vld [vmem:[%s245 + $0x3c] sm:$0xf]
      %v408 = vunpack.c.l.b16 %v328
      %v409 = vunpack.c.l.b16 %v329
      %v410 = vunpack.c.l.b16 %v330
      %v411 = vunpack.c.l.b16 %v331
      %v412 = vunpack.c.l.b16 %v332
      %v413 = vunpack.c.l.b16 %v333
      %v414 = vunpack.c.l.b16 %v334
      %v415 = vunpack.c.l.b16 %v335
      %v416 = vunpack.c.l.b16 %v336
      %v417 = vunpack.c.l.b16 %v337
      %v418 = vunpack.c.l.b16 %v338
      %v419 = vunpack.c.l.b16 %v339
      %v420 = vunpack.c.l.b16 %v340
      %v421 = vunpack.c.l.b16 %v341
      %v422 = vunpack.c.l.b16 %v342
      %v423 = vunpack.c.l.b16 %v343
      %v424 = vunpack.c.l.b16 %v344
      %v425 = vunpack.c.l.b16 %v345
      %v426 = vunpack.c.l.b16 %v346
      %v427 = vunpack.c.l.b16 %v347
      %v428 = vunpack.c.l.b16 %v348
      %v429 = vunpack.c.l.b16 %v349
      %v430 = vunpack.c.l.b16 %v350
      %v431 = vunpack.c.l.b16 %v351
      %v432 = vunpack.c.l.b16 %v352
      %v433 = vunpack.c.l.b16 %v353
      %v434 = vunpack.c.l.b16 %v354
      %v435 = vunpack.c.l.b16 %v355
      %v436 = vunpack.c.l.b16 %v356
      %v437 = vunpack.c.l.b16 %v357
      %v438 = vunpack.c.l.b16 %v358
      %v439 = vunpack.c.l.b16 %v359
      %v440 = vpack.c.b16 %v409, %v408
      %v441 = vpack.c.b16 %v411, %v410
      %v442 = vpack.c.b16 %v413, %v412
      %v443 = vpack.c.b16 %v415, %v414
      %v444 = vpack.c.b16 %v417, %v416
      %v445 = vpack.c.b16 %v419, %v418
      %v446 = vpack.c.b16 %v421, %v420
      %v447 = vpack.c.b16 %v423, %v422
      %v448 = vpack.c.b16 %v425, %v424
      %v449 = vpack.c.b16 %v427, %v426
      %v450 = vpack.c.b16 %v429, %v428
      %v451 = vpack.c.b16 %v431, %v430
      %v452 = vpack.c.b16 %v433, %v432
      %v453 = vpack.c.b16 %v435, %v434
      %v454 = vpack.c.b16 %v437, %v436
      %v455 = vpack.c.b16 %v439, %v438
      %v488 = vunpack.c.l.b16 %v360
      %v489 = vunpack.c.l.b16 %v361
      %v490 = vunpack.c.l.b16 %v362
      %v491 = vunpack.c.l.b16 %v363
      %v492 = vunpack.c.l.b16 %v364
      %v493 = vunpack.c.l.b16 %v365
      %v494 = vunpack.c.l.b16 %v366
      %v495 = vunpack.c.l.b16 %v367
      %v496 = vunpack.c.l.b16 %v368
      %v497 = vunpack.c.l.b16 %v369
      %v498 = vunpack.c.l.b16 %v370
      %v499 = vunpack.c.l.b16 %v371
      %v500 = vunpack.c.l.b16 %v372
      %v501 = vunpack.c.l.b16 %v373
      %v502 = vunpack.c.l.b16 %v374
      %v503 = vunpack.c.l.b16 %v375
      %v504 = vpack.c.b16 %v489, %v488
      %v505 = vpack.c.b16 %v491, %v490
      %v506 = vpack.c.b16 %v493, %v492
      %v507 = vpack.c.b16 %v495, %v494
      %v508 = vpack.c.b16 %v497, %v496
      %v509 = vpack.c.b16 %v499, %v498
      %v510 = vpack.c.b16 %v501, %v500
      %v511 = vpack.c.b16 %v503, %v502
      %520 = vmatprep.subr.bf16.mxu0 0
      %521 = vmatpush1.bf16.msra.mxu0 %v504
      %522 = vmatprep.subr.bf16.mxu0 0
      %523 = vmatpush1.bf16.msra.mxu0 %v505
      %524 = vmatprep.subr.bf16.mxu0 0
      %525 = vmatpush1.bf16.msra.mxu0 %v506
      %526 = vmatprep.subr.bf16.mxu0 0
      %527 = vmatpush1.bf16.msra.mxu0 %v507
      %528 = vmatprep.subr.bf16.mxu0 0
      %529 = vmatpush1.bf16.msra.mxu0 %v508
      %530 = vmatprep.subr.bf16.mxu0 0
      %531 = vmatpush1.bf16.msra.mxu0 %v509
      %532 = vmatprep.subr.bf16.mxu0 0
      %533 = vmatpush1.bf16.msra.mxu0 %v510
      %534 = vmatprep.subr.bf16.mxu0 0
      %535 = vmatpush1.bf16.msra.mxu0 %v511
      %536 = vmatprep.subr.bf16.mxu0 0
      %537 = vmatpush1.bf16.msra.mxu0 0
      %538 = vmatprep.subr.bf16.mxu0 0
      %539 = vmatpush1.bf16.msra.mxu0 0
      %540 = vmatprep.subr.bf16.mxu0 0
      %541 = vmatpush1.bf16.msra.mxu0 0
      %542 = vmatprep.subr.bf16.mxu0 0
      %543 = vmatpush1.bf16.msra.mxu0 0
      %544 = vmatprep.subr.bf16.mxu0 0
      %545 = vmatpush1.bf16.msra.mxu0 0
      %546 = vmatprep.subr.bf16.mxu0 0
      %547 = vmatpush1.bf16.msra.mxu0 0
      %548 = vmatprep.subr.bf16.mxu0 0
      %549 = vmatpush1.bf16.msra.mxu0 0
      %550 = vmatprep.subr.bf16.mxu0 0
      %551 = vmatpush1.bf16.msra.mxu0 0
      %552 = vmatprep.mubr.bf16.mxu0 0
      %553 = vmatmul.mubr.bf16.gmra.mrb[0].mxu0 %v440
      %v554 = vpop.f32.mrb[0].mxu0
      %v555 = vadd.f32 0.0, %v554
      %v556 = vpop.f32.mrb[0].mxu0
      %v557 = vpop.f32.mrb[0].mxu0
      %v558 = vadd.f32 0.0, %v557
      %v559 = vpop.f32.mrb[0].mxu0
      %560 = vmatprep.mubr.bf16.mxu0 0
      %561 = vmatmul.mubr.bf16.gmra.mrb[0].mxu0 %v441
      %v562 = vpop.f32.mrb[0].mxu0
      %v563 = vadd.f32 0.0, %v562
      %v564 = vpop.f32.mrb[0].mxu0
      %v565 = vpop.f32.mrb[0].mxu0
      %v566 = vadd.f32 0.0, %v565
      %v567 = vpop.f32.mrb[0].mxu0
      %568 = vmatprep.mubr.bf16.mxu0 0
      %569 = vmatmul.mubr.bf16.gmra.mrb[0].mxu0 %v442
      %v570 = vpop.f32.mrb[0].mxu0
      %v571 = vadd.f32 0.0, %v570
      %v572 = vpop.f32.mrb[0].mxu0
      %v573 = vpop.f32.mrb[0].mxu0
      %v574 = vadd.f32 0.0, %v573
      %v575 = vpop.f32.mrb[0].mxu0
      %576 = vmatprep.mubr.bf16.mxu0 0
      %577 = vmatmul.mubr.bf16.gmra.mrb[0].mxu0 %v443
      %v578 = vpop.f32.mrb[0].mxu0
      %v579 = vadd.f32 0.0, %v578
      %v580 = vpop.f32.mrb[0].mxu0
      %v581 = vpop.f32.mrb[0].mxu0
      %v582 = vadd.f32 0.0, %v581
      %v583 = vpop.f32.mrb[0].mxu0
      %584 = vmatprep.mubr.bf16.mxu0 0
      %585 = vmatmul.mubr.bf16.gmra.mrb[0].mxu0 %v444
      %v586 = vpop.f32.mrb[0].mxu0
      %v587 = vadd.f32 0.0, %v586
      %v588 = vpop.f32.mrb[0].mxu0
      %v589 = vpop.f32.mrb[0].mxu0
      %v590 = vadd.f32 0.0, %v589
      %v591 = vpop.f32.mrb[0].mxu0
      %592 = vmatprep.mubr.bf16.mxu0 0
      %593 = vmatmul.mubr.bf16.gmra.mrb[0].mxu0 %v445
      %v594 = vpop.f32.mrb[0].mxu0
      %v595 = vadd.f32 0.0, %v594
      %v596 = vpop.f32.mrb[0].mxu0
      %v597 = vpop.f32.mrb[0].mxu0
      %v598 = vadd.f32 0.0, %v597
      %v599 = vpop.f32.mrb[0].mxu0
      %600 = vmatprep.mubr.bf16.mxu0 0
      %601 = vmatmul.mubr.bf16.gmra.mrb[0].mxu0 %v446
      %v602 = vpop.f32.mrb[0].mxu0
      %v603 = vadd.f32 0.0, %v602
      %v604 = vpop.f32.mrb[0].mxu0
      %v605 = vpop.f32.mrb[0].mxu0
      %v606 = vadd.f32 0.0, %v605
      %v607 = vpop.f32.mrb[0].mxu0
      %608 = vmatprep.mubr.bf16.mxu0 0
      %609 = vmatmul.mubr.bf16.gmra.mrb[0].mxu0 %v447
      %v610 = vpop.f32.mrb[0].mxu0
      %v611 = vadd.f32 0.0, %v610
      %v612 = vpop.f32.mrb[0].mxu0
      %v613 = vpop.f32.mrb[0].mxu0
      %v614 = vadd.f32 0.0, %v613
      %v615 = vpop.f32.mrb[0].mxu0
      %616 = vmatprep.mubr.bf16.mxu0 0
      %617 = vmatmul.mubr.bf16.gmra.mrb[0].mxu0 %v448
      %v618 = vpop.f32.mrb[0].mxu0
      %v619 = vadd.f32 0.0, %v618
      %v620 = vpop.f32.mrb[0].mxu0
      %v621 = vpop.f32.mrb[0].mxu0
      %v622 = vadd.f32 0.0, %v621
      %v623 = vpop.f32.mrb[0].mxu0
      %624 = vmatprep.mubr.bf16.mxu0 0
      %625 = vmatmul.mubr.bf16.gmra.mrb[0].mxu0 %v449
      %v626 = vpop.f32.mrb[0].mxu0
      %v627 = vadd.f32 0.0, %v626
      %v628 = vpop.f32.mrb[0].mxu0
      %v629 = vpop.f32.mrb[0].mxu0
      %v630 = vadd.f32 0.0, %v629
      %v631 = vpop.f32.mrb[0].mxu0
      %632 = vmatprep.mubr.bf16.mxu0 0
      %633 = vmatmul.mubr.bf16.gmra.mrb[0].mxu0 %v450
      %v634 = vpop.f32.mrb[0].mxu0
      %v635 = vadd.f32 0.0, %v634
      %v636 = vpop.f32.mrb[0].mxu0
      %v637 = vpop.f32.mrb[0].mxu0
      %v638 = vadd.f32 0.0, %v637
      %v639 = vpop.f32.mrb[0].mxu0
      %640 = vmatprep.mubr.bf16.mxu0 0
      %641 = vmatmul.mubr.bf16.gmra.mrb[0].mxu0 %v451
      %v642 = vpop.f32.mrb[0].mxu0
      %v643 = vadd.f32 0.0, %v642
      %v644 = vpop.f32.mrb[0].mxu0
      %v645 = vpop.f32.mrb[0].mxu0
      %v646 = vadd.f32 0.0, %v645
      %v647 = vpop.f32.mrb[0].mxu0
      %648 = vmatprep.mubr.bf16.mxu0 0
      %649 = vmatmul.mubr.bf16.gmra.mrb[0].mxu0 %v452
      %v650 = vpop.f32.mrb[0].mxu0
      %v651 = vadd.f32 0.0, %v650
      %v652 = vpop.f32.mrb[0].mxu0
      %v653 = vpop.f32.mrb[0].mxu0
      %v654 = vadd.f32 0.0, %v653
      %v655 = vpop.f32.mrb[0].mxu0
      %656 = vmatprep.mubr.bf16.mxu0 0
      %657 = vmatmul.mubr.bf16.gmra.mrb[0].mxu0 %v453
      %v658 = vpop.f32.mrb[0].mxu0
      %v659 = vadd.f32 0.0, %v658
      %v660 = vpop.f32.mrb[0].mxu0
      %v661 = vpop.f32.mrb[0].mxu0
      %v662 = vadd.f32 0.0, %v661
      %v663 = vpop.f32.mrb[0].mxu0
      %664 = vmatprep.mubr.bf16.mxu0 0
      %665 = vmatmul.mubr.bf16.gmra.mrb[0].mxu0 %v454
      %v666 = vpop.f32.mrb[0].mxu0
      %v667 = vadd.f32 0.0, %v666
      %v668 = vpop.f32.mrb[0].mxu0
      %v669 = vpop.f32.mrb[0].mxu0
      %v670 = vadd.f32 0.0, %v669
      %v671 = vpop.f32.mrb[0].mxu0
      %672 = vmatprep.mubr.bf16.mxu0 0
      %673 = vmatmul.mubr.bf16.gmra.mrb[0].mxu0 %v455
      %v674 = vpop.f32.mrb[0].mxu0
      %v675 = vadd.f32 0.0, %v674
      %v676 = vpop.f32.mrb[0].mxu0
      %v677 = vpop.f32.mrb[0].mxu0
      %v678 = vadd.f32 0.0, %v677
      %v679 = vpop.f32.mrb[0].mxu0
      %680 = vdwg.mxu0
      %v681 = vadd.f32 %v296, %v555
      %v682 = vadd.f32 %v297, %v558
      %v683 = vadd.f32 %v298, %v563
      %v684 = vadd.f32 %v299, %v566
      %v685 = vadd.f32 %v300, %v571
      %v686 = vadd.f32 %v301, %v574
      %v687 = vadd.f32 %v302, %v579
      %v688 = vadd.f32 %v303, %v582
      %v689 = vadd.f32 %v304, %v587
      %v690 = vadd.f32 %v305, %v590
      %v691 = vadd.f32 %v306, %v595
      %v692 = vadd.f32 %v307, %v598
      %v693 = vadd.f32 %v308, %v603
      %v694 = vadd.f32 %v309, %v606
      %v695 = vadd.f32 %v310, %v611
      %v696 = vadd.f32 %v311, %v614
      %v697 = vadd.f32 %v312, %v619
      %v698 = vadd.f32 %v313, %v622
      %v699 = vadd.f32 %v314, %v627
      %v700 = vadd.f32 %v315, %v630
      %v701 = vadd.f32 %v316, %v635
      %v702 = vadd.f32 %v317, %v638
      %v703 = vadd.f32 %v318, %v643
      %v704 = vadd.f32 %v319, %v646
      %v705 = vadd.f32 %v320, %v651
      %v706 = vadd.f32 %v321, %v654
      %v707 = vadd.f32 %v322, %v659
      %v708 = vadd.f32 %v323, %v662
      %v709 = vadd.f32 %v324, %v667
      %v710 = vadd.f32 %v325, %v670
      %v711 = vadd.f32 %v326, %v675
      %v712 = vadd.f32 %v327, %v678
      %713 = vst [vmem:[#allocation2] sm:$0xff] %v681
      %714 = vst [vmem:[#allocation2 + $0x8] sm:$0xff] %v682
      %715 = vst [vmem:[#allocation2 + $0x10] sm:$0xff] %v683
      %716 = vst [vmem:[#allocation2 + $0x18] sm:$0xff] %v684
      %717 = vst [vmem:[#allocation2 + $0x20] sm:$0xff] %v685
      %718 = vst [vmem:[#allocation2 + $0x28] sm:$0xff] %v686
      %719 = vst [vmem:[#allocation2 + $0x30] sm:$0xff] %v687
      %720 = vst [vmem:[#allocation2 + $0x38] sm:$0xff] %v688
      %721 = vst [vmem:[#allocation2 + $0x40] sm:$0xff] %v689
      %722 = vst [vmem:[#allocation2 + $0x48] sm:$0xff] %v690
      %723 = vst [vmem:[#allocation2 + $0x50] sm:$0xff] %v691
      %724 = vst [vmem:[#allocation2 + $0x58] sm:$0xff] %v692
      %725 = vst [vmem:[#allocation2 + $0x60] sm:$0xff] %v693
      %726 = vst [vmem:[#allocation2 + $0x68] sm:$0xff] %v694
      %727 = vst [vmem:[#allocation2 + $0x70] sm:$0xff] %v695
      %728 = vst [vmem:[#allocation2 + $0x78] sm:$0xff] %v696
      %729 = vst [vmem:[#allocation2 + $0x80] sm:$0xff] %v697
      %730 = vst [vmem:[#allocation2 + $0x88] sm:$0xff] %v698
      %731 = vst [vmem:[#allocation2 + $0x90] sm:$0xff] %v699
      %732 = vst [vmem:[#allocation2 + $0x98] sm:$0xff] %v700
      %733 = vst [vmem:[#allocation2 + $0xa0] sm:$0xff] %v701
      %734 = vst [vmem:[#allocation2 + $0xa8] sm:$0xff] %v702
      %735 = vst [vmem:[#allocation2 + $0xb0] sm:$0xff] %v703
      %736 = vst [vmem:[#allocation2 + $0xb8] sm:$0xff] %v704
      %737 = vst [vmem:[#allocation2 + $0xc0] sm:$0xff] %v705
      %738 = vst [vmem:[#allocation2 + $0xc8] sm:$0xff] %v706
      %739 = vst [vmem:[#allocation2 + $0xd0] sm:$0xff] %v707
      %740 = vst [vmem:[#allocation2 + $0xd8] sm:$0xff] %v708
      %741 = vst [vmem:[#allocation2 + $0xe0] sm:$0xff] %v709
      %742 = vst [vmem:[#allocation2 + $0xe8] sm:$0xff] %v710
      %743 = vst [vmem:[#allocation2 + $0xf0] sm:$0xff] %v711
      %744 = vst [vmem:[#allocation2 + $0xf8] sm:$0xff] %v712
      // Predicated region
      $region37: #{yolo_pafpn_forward.56} parent=31 // pred_check
        %p745 = pneg %p260
      $region38: #{yolo_pafpn_forward.56} parent=31 // pred_check_branch
        %747 = sbr.rel (%p745) target = $region40
      $region39: #{yolo_pafpn_forward.56} parent=31 // pred_region
        %v748 = vld [vmem:[#allocation2] sm:$0xff]
        %v749 = vld [vmem:[#allocation2 + $0x8] sm:$0xff]
        %v750 = vld [vmem:[#allocation2 + $0x10] sm:$0xff]
        %v751 = vld [vmem:[#allocation2 + $0x18] sm:$0xff]
        %v752 = vld [vmem:[#allocation2 + $0x20] sm:$0xff]
        %v753 = vld [vmem:[#allocation2 + $0x28] sm:$0xff]
        %v754 = vld [vmem:[#allocation2 + $0x30] sm:$0xff]
        %v755 = vld [vmem:[#allocation2 + $0x38] sm:$0xff]
        %v756 = vld [vmem:[#allocation2 + $0x40] sm:$0xff]
        %v757 = vld [vmem:[#allocation2 + $0x48] sm:$0xff]
        %v758 = vld [vmem:[#allocation2 + $0x50] sm:$0xff]
        %v759 = vld [vmem:[#allocation2 + $0x58] sm:$0xff]
        %v760 = vld [vmem:[#allocation2 + $0x60] sm:$0xff]
        %v761 = vld [vmem:[#allocation2 + $0x68] sm:$0xff]
        %v762 = vld [vmem:[#allocation2 + $0x70] sm:$0xff]
        %v763 = vld [vmem:[#allocation2 + $0x78] sm:$0xff]
        %v764 = vld [vmem:[#allocation2 + $0x80] sm:$0xff]
        %v765 = vld [vmem:[#allocation2 + $0x88] sm:$0xff]
        %v766 = vld [vmem:[#allocation2 + $0x90] sm:$0xff]
        %v767 = vld [vmem:[#allocation2 + $0x98] sm:$0xff]
        %v768 = vld [vmem:[#allocation2 + $0xa0] sm:$0xff]
        %v769 = vld [vmem:[#allocation2 + $0xa8] sm:$0xff]
        %v770 = vld [vmem:[#allocation2 + $0xb0] sm:$0xff]
        %v771 = vld [vmem:[#allocation2 + $0xb8] sm:$0xff]
        %v772 = vld [vmem:[#allocation2 + $0xc0] sm:$0xff]
        %v773 = vld [vmem:[#allocation2 + $0xc8] sm:$0xff]
        %v774 = vld [vmem:[#allocation2 + $0xd0] sm:$0xff]
        %v775 = vld [vmem:[#allocation2 + $0xd8] sm:$0xff]
        %v776 = vld [vmem:[#allocation2 + $0xe0] sm:$0xff]
        %v777 = vld [vmem:[#allocation2 + $0xe8] sm:$0xff]
        %v778 = vld [vmem:[#allocation2 + $0xf0] sm:$0xff]
        %v779 = vld [vmem:[#allocation2 + $0xf8] sm:$0xff]
        %v780 = vld [vmem:[%s249] sm:$0x1]
        %v782 = vlaneseq
        %v783 = vshrl.u32 %v782, 7
        %v784 = vsub.s32 0, %v783
        %v785 = vrot.slane %v780, %v784
        %v787 = vadd.f32 %v748, %v785
        %v788 = vadd.f32 %v749, %v785
        %v789 = vadd.f32 %v750, %v785
        %v790 = vadd.f32 %v751, %v785
        %v791 = vadd.f32 %v752, %v785
        %v792 = vadd.f32 %v753, %v785
        %v793 = vadd.f32 %v754, %v785
        %v794 = vadd.f32 %v755, %v785
        %v795 = vadd.f32 %v756, %v785
        %v796 = vadd.f32 %v757, %v785
        %v797 = vadd.f32 %v758, %v785
        %v798 = vadd.f32 %v759, %v785
        %v799 = vadd.f32 %v760, %v785
        %v800 = vadd.f32 %v761, %v785
        %v801 = vadd.f32 %v762, %v785
        %v802 = vadd.f32 %v763, %v785
        %v803 = vadd.f32 %v764, %v785
        %v804 = vadd.f32 %v765, %v785
        %v805 = vadd.f32 %v766, %v785
        %v806 = vadd.f32 %v767, %v785
        %v807 = vadd.f32 %v768, %v785
        %v808 = vadd.f32 %v769, %v785
        %v809 = vadd.f32 %v770, %v785
        %v810 = vadd.f32 %v771, %v785
        %v811 = vadd.f32 %v772, %v785
        %v812 = vadd.f32 %v773, %v785
        %v813 = vadd.f32 %v774, %v785
        %v814 = vadd.f32 %v775, %v785
        %v815 = vadd.f32 %v776, %v785
        %v816 = vadd.f32 %v777, %v785
        %v817 = vadd.f32 %v778, %v785
        %v818 = vadd.f32 %v779, %v785
        %v819 = vand.u32 2147483647, %v787
        %v820 = vand.u32 2147483647, %v788
        %v821 = vand.u32 2147483647, %v789
        %v822 = vand.u32 2147483647, %v790
        %v823 = vand.u32 2147483647, %v791
        %v824 = vand.u32 2147483647, %v792
        %v825 = vand.u32 2147483647, %v793
        %v826 = vand.u32 2147483647, %v794
        %v827 = vand.u32 2147483647, %v795
        %v828 = vand.u32 2147483647, %v796
        %v829 = vand.u32 2147483647, %v797
        %v830 = vand.u32 2147483647, %v798
        %v831 = vand.u32 2147483647, %v799
        %v832 = vand.u32 2147483647, %v800
        %v833 = vand.u32 2147483647, %v801
        %v834 = vand.u32 2147483647, %v802
        %v835 = vand.u32 2147483647, %v803
        %v836 = vand.u32 2147483647, %v804
        %v837 = vand.u32 2147483647, %v805
        %v838 = vand.u32 2147483647, %v806
        %v839 = vand.u32 2147483647, %v807
        %v840 = vand.u32 2147483647, %v808
        %v841 = vand.u32 2147483647, %v809
        %v842 = vand.u32 2147483647, %v810
        %v843 = vand.u32 2147483647, %v811
        %v844 = vand.u32 2147483647, %v812
        %v845 = vand.u32 2147483647, %v813
        %v846 = vand.u32 2147483647, %v814
        %v847 = vand.u32 2147483647, %v815
        %v848 = vand.u32 2147483647, %v816
        %v849 = vand.u32 2147483647, %v817
        %v850 = vand.u32 2147483647, %v818
        %v851 = vsub.f32 0.0, %v819
        %v852 = vsub.f32 0.0, %v820
        %v853 = vsub.f32 0.0, %v821
        %v854 = vsub.f32 0.0, %v822
        %v855 = vsub.f32 0.0, %v823
        %v856 = vsub.f32 0.0, %v824
        %v857 = vsub.f32 0.0, %v825
        %v858 = vsub.f32 0.0, %v826
        %v859 = vsub.f32 0.0, %v827
        %v860 = vsub.f32 0.0, %v828
        %v861 = vsub.f32 0.0, %v829
        %v862 = vsub.f32 0.0, %v830
        %v863 = vsub.f32 0.0, %v831
        %v864 = vsub.f32 0.0, %v832
        %v865 = vsub.f32 0.0, %v833
        %v866 = vsub.f32 0.0, %v834
        %v867 = vsub.f32 0.0, %v835
        %v868 = vsub.f32 0.0, %v836
        %v869 = vsub.f32 0.0, %v837
        %v870 = vsub.f32 0.0, %v838
        %v871 = vsub.f32 0.0, %v839
        %v872 = vsub.f32 0.0, %v840
        %v873 = vsub.f32 0.0, %v841
        %v874 = vsub.f32 0.0, %v842
        %v875 = vsub.f32 0.0, %v843
        %v876 = vsub.f32 0.0, %v844
        %v877 = vsub.f32 0.0, %v845
        %v878 = vsub.f32 0.0, %v846
        %v879 = vsub.f32 0.0, %v847
        %v880 = vsub.f32 0.0, %v848
        %v881 = vsub.f32 0.0, %v849
        %v882 = vsub.f32 0.0, %v850
        %v883 = vmul.f32 %v851, 1.442695
        %v884 = vpow.pop %v883
        %v885 = vmul.f32 %v852, 1.442695
        %v886 = vpow.pop %v885
        %v887 = vmul.f32 %v853, 1.442695
        %v888 = vpow.pop %v887
        %v889 = vmul.f32 %v854, 1.442695
        %v890 = vpow.pop %v889
        %v891 = vmul.f32 %v855, 1.442695
        %v892 = vpow.pop %v891
        %v893 = vmul.f32 %v856, 1.442695
        %v894 = vpow.pop %v893
        %v895 = vmul.f32 %v857, 1.442695
        %v896 = vpow.pop %v895
        %v897 = vmul.f32 %v858, 1.442695
        %v898 = vpow.pop %v897
        %v899 = vmul.f32 %v859, 1.442695
        %v900 = vpow.pop %v899
        %v901 = vmul.f32 %v860, 1.442695
        %v902 = vpow.pop %v901
        %v903 = vmul.f32 %v861, 1.442695
        %v904 = vpow.pop %v903
        %v905 = vmul.f32 %v862, 1.442695
        %v906 = vpow.pop %v905
        %v907 = vmul.f32 %v863, 1.442695
        %v908 = vpow.pop %v907
        %v909 = vmul.f32 %v864, 1.442695
        %v910 = vpow.pop %v909
        %v911 = vmul.f32 %v865, 1.442695
        %v912 = vpow.pop %v911
        %v913 = vmul.f32 %v866, 1.442695
        %v914 = vpow.pop %v913
        %v915 = vmul.f32 %v867, 1.442695
        %v916 = vpow.pop %v915
        %v917 = vmul.f32 %v868, 1.442695
        %v918 = vpow.pop %v917
        %v919 = vmul.f32 %v869, 1.442695
        %v920 = vpow.pop %v919
        %v921 = vmul.f32 %v870, 1.442695
        %v922 = vpow.pop %v921
        %v923 = vmul.f32 %v871, 1.442695
        %v924 = vpow.pop %v923
        %v925 = vmul.f32 %v872, 1.442695
        %v926 = vpow.pop %v925
        %v927 = vmul.f32 %v873, 1.442695
        %v928 = vpow.pop %v927
        %v929 = vmul.f32 %v874, 1.442695
        %v930 = vpow.pop %v929
        %v931 = vmul.f32 %v875, 1.442695
        %v932 = vpow.pop %v931
        %v933 = vmul.f32 %v876, 1.442695
        %v934 = vpow.pop %v933
        %v935 = vmul.f32 %v877, 1.442695
        %v936 = vpow.pop %v935
        %v937 = vmul.f32 %v878, 1.442695
        %v938 = vpow.pop %v937
        %v939 = vmul.f32 %v879, 1.442695
        %v940 = vpow.pop %v939
        %v941 = vmul.f32 %v880, 1.442695
        %v942 = vpow.pop %v941
        %v943 = vmul.f32 %v881, 1.442695
        %v944 = vpow.pop %v943
        %v945 = vmul.f32 %v882, 1.442695
        %v946 = vpow.pop %v945
        %v947 = vadd.f32 %v884, 1.0
        %v948 = vadd.f32 %v886, 1.0
        %v949 = vadd.f32 %v888, 1.0
        %v950 = vadd.f32 %v890, 1.0
        %v951 = vadd.f32 %v892, 1.0
        %v952 = vadd.f32 %v894, 1.0
        %v953 = vadd.f32 %v896, 1.0
        %v954 = vadd.f32 %v898, 1.0
        %v955 = vadd.f32 %v900, 1.0
        %v956 = vadd.f32 %v902, 1.0
        %v957 = vadd.f32 %v904, 1.0
        %v958 = vadd.f32 %v906, 1.0
        %v959 = vadd.f32 %v908, 1.0
        %v960 = vadd.f32 %v910, 1.0
        %v961 = vadd.f32 %v912, 1.0
        %v962 = vadd.f32 %v914, 1.0
        %v963 = vadd.f32 %v916, 1.0
        %v964 = vadd.f32 %v918, 1.0
        %v965 = vadd.f32 %v920, 1.0
        %v966 = vadd.f32 %v922, 1.0
        %v967 = vadd.f32 %v924, 1.0
        %v968 = vadd.f32 %v926, 1.0
        %v969 = vadd.f32 %v928, 1.0
        %v970 = vadd.f32 %v930, 1.0
        %v971 = vadd.f32 %v932, 1.0
        %v972 = vadd.f32 %v934, 1.0
        %v973 = vadd.f32 %v936, 1.0
        %v974 = vadd.f32 %v938, 1.0
        %v975 = vadd.f32 %v940, 1.0
        %v976 = vadd.f32 %v942, 1.0
        %v977 = vadd.f32 %v944, 1.0
        %v978 = vadd.f32 %v946, 1.0
        %v979 = vrcp.pop %v947
        %v980 = vrcp.pop %v948
        %v981 = vrcp.pop %v949
        %v982 = vrcp.pop %v950
        %v983 = vrcp.pop %v951
        %v984 = vrcp.pop %v952
        %v985 = vrcp.pop %v953
        %v986 = vrcp.pop %v954
        %v987 = vrcp.pop %v955
        %v988 = vrcp.pop %v956
        %v989 = vrcp.pop %v957
        %v990 = vrcp.pop %v958
        %v991 = vrcp.pop %v959
        %v992 = vrcp.pop %v960
        %v993 = vrcp.pop %v961
        %v994 = vrcp.pop %v962
        %v995 = vrcp.pop %v963
        %v996 = vrcp.pop %v964
        %v997 = vrcp.pop %v965
        %v998 = vrcp.pop %v966
        %v999 = vrcp.pop %v967
        %v1000 = vrcp.pop %v968
        %v1001 = vrcp.pop %v969
        %v1002 = vrcp.pop %v970
        %v1003 = vrcp.pop %v971
        %v1004 = vrcp.pop %v972
        %v1005 = vrcp.pop %v973
        %v1006 = vrcp.pop %v974
        %v1007 = vrcp.pop %v975
        %v1008 = vrcp.pop %v976
        %v1009 = vrcp.pop %v977
        %v1010 = vrcp.pop %v978
        %vm1011 = vcmp.ge.f32.partialorder %v787, 0.0
        %vm1012 = vcmp.ge.f32.partialorder %v788, 0.0
        %vm1013 = vcmp.ge.f32.partialorder %v789, 0.0
        %vm1014 = vcmp.ge.f32.partialorder %v790, 0.0
        %vm1015 = vcmp.ge.f32.partialorder %v791, 0.0
        %vm1016 = vcmp.ge.f32.partialorder %v792, 0.0
        %vm1017 = vcmp.ge.f32.partialorder %v793, 0.0
        %vm1018 = vcmp.ge.f32.partialorder %v794, 0.0
        %vm1019 = vcmp.ge.f32.partialorder %v795, 0.0
        %vm1020 = vcmp.ge.f32.partialorder %v796, 0.0
        %vm1021 = vcmp.ge.f32.partialorder %v797, 0.0
        %vm1022 = vcmp.ge.f32.partialorder %v798, 0.0
        %vm1023 = vcmp.ge.f32.partialorder %v799, 0.0
        %vm1024 = vcmp.ge.f32.partialorder %v800, 0.0
        %vm1025 = vcmp.ge.f32.partialorder %v801, 0.0
        %vm1026 = vcmp.ge.f32.partialorder %v802, 0.0
        %vm1027 = vcmp.ge.f32.partialorder %v803, 0.0
        %vm1028 = vcmp.ge.f32.partialorder %v804, 0.0
        %vm1029 = vcmp.ge.f32.partialorder %v805, 0.0
        %vm1030 = vcmp.ge.f32.partialorder %v806, 0.0
        %vm1031 = vcmp.ge.f32.partialorder %v807, 0.0
        %vm1032 = vcmp.ge.f32.partialorder %v808, 0.0
        %vm1033 = vcmp.ge.f32.partialorder %v809, 0.0
        %vm1034 = vcmp.ge.f32.partialorder %v810, 0.0
        %vm1035 = vcmp.ge.f32.partialorder %v811, 0.0
        %vm1036 = vcmp.ge.f32.partialorder %v812, 0.0
        %vm1037 = vcmp.ge.f32.partialorder %v813, 0.0
        %vm1038 = vcmp.ge.f32.partialorder %v814, 0.0
        %vm1039 = vcmp.ge.f32.partialorder %v815, 0.0
        %vm1040 = vcmp.ge.f32.partialorder %v816, 0.0
        %vm1041 = vcmp.ge.f32.partialorder %v817, 0.0
        %vm1042 = vcmp.ge.f32.partialorder %v818, 0.0
        %v1043 = vsub.f32 1.0, %v979
        %v1044 = vsub.f32 1.0, %v980
        %v1045 = vsub.f32 1.0, %v981
        %v1046 = vsub.f32 1.0, %v982
        %v1047 = vsub.f32 1.0, %v983
        %v1048 = vsub.f32 1.0, %v984
        %v1049 = vsub.f32 1.0, %v985
        %v1050 = vsub.f32 1.0, %v986
        %v1051 = vsub.f32 1.0, %v987
        %v1052 = vsub.f32 1.0, %v988
        %v1053 = vsub.f32 1.0, %v989
        %v1054 = vsub.f32 1.0, %v990
        %v1055 = vsub.f32 1.0, %v991
        %v1056 = vsub.f32 1.0, %v992
        %v1057 = vsub.f32 1.0, %v993
        %v1058 = vsub.f32 1.0, %v994
        %v1059 = vsub.f32 1.0, %v995
        %v1060 = vsub.f32 1.0, %v996
        %v1061 = vsub.f32 1.0, %v997
        %v1062 = vsub.f32 1.0, %v998
        %v1063 = vsub.f32 1.0, %v999
        %v1064 = vsub.f32 1.0, %v1000
        %v1065 = vsub.f32 1.0, %v1001
        %v1066 = vsub.f32 1.0, %v1002
        %v1067 = vsub.f32 1.0, %v1003
        %v1068 = vsub.f32 1.0, %v1004
        %v1069 = vsub.f32 1.0, %v1005
        %v1070 = vsub.f32 1.0, %v1006
        %v1071 = vsub.f32 1.0, %v1007
        %v1072 = vsub.f32 1.0, %v1008
        %v1073 = vsub.f32 1.0, %v1009
        %v1074 = vsub.f32 1.0, %v1010
        %v1075 = vsel %vm1011, %v979, %v1043
        %v1076 = vsel %vm1012, %v980, %v1044
        %v1077 = vsel %vm1013, %v981, %v1045
        %v1078 = vsel %vm1014, %v982, %v1046
        %v1079 = vsel %vm1015, %v983, %v1047
        %v1080 = vsel %vm1016, %v984, %v1048
        %v1081 = vsel %vm1017, %v985, %v1049
        %v1082 = vsel %vm1018, %v986, %v1050
        %v1083 = vsel %vm1019, %v987, %v1051
        %v1084 = vsel %vm1020, %v988, %v1052
        %v1085 = vsel %vm1021, %v989, %v1053
        %v1086 = vsel %vm1022, %v990, %v1054
        %v1087 = vsel %vm1023, %v991, %v1055
        %v1088 = vsel %vm1024, %v992, %v1056
        %v1089 = vsel %vm1025, %v993, %v1057
        %v1090 = vsel %vm1026, %v994, %v1058
        %v1091 = vsel %vm1027, %v995, %v1059
        %v1092 = vsel %vm1028, %v996, %v1060
        %v1093 = vsel %vm1029, %v997, %v1061
        %v1094 = vsel %vm1030, %v998, %v1062
        %v1095 = vsel %vm1031, %v999, %v1063
        %v1096 = vsel %vm1032, %v1000, %v1064
        %v1097 = vsel %vm1033, %v1001, %v1065
        %v1098 = vsel %vm1034, %v1002, %v1066
        %v1099 = vsel %vm1035, %v1003, %v1067
        %v1100 = vsel %vm1036, %v1004, %v1068
        %v1101 = vsel %vm1037, %v1005, %v1069
        %v1102 = vsel %vm1038, %v1006, %v1070
        %v1103 = vsel %vm1039, %v1007, %v1071
        %v1104 = vsel %vm1040, %v1008, %v1072
        %v1105 = vsel %vm1041, %v1009, %v1073
        %v1106 = vsel %vm1042, %v1010, %v1074
        %v1107 = vmul.f32 %v787, %v1075
        %v1108 = vmul.f32 %v788, %v1076
        %v1109 = vmul.f32 %v789, %v1077
        %v1110 = vmul.f32 %v790, %v1078
        %v1111 = vmul.f32 %v791, %v1079
        %v1112 = vmul.f32 %v792, %v1080
        %v1113 = vmul.f32 %v793, %v1081
        %v1114 = vmul.f32 %v794, %v1082
        %v1115 = vmul.f32 %v795, %v1083
        %v1116 = vmul.f32 %v796, %v1084
        %v1117 = vmul.f32 %v797, %v1085
        %v1118 = vmul.f32 %v798, %v1086
        %v1119 = vmul.f32 %v799, %v1087
        %v1120 = vmul.f32 %v800, %v1088
        %v1121 = vmul.f32 %v801, %v1089
        %v1122 = vmul.f32 %v802, %v1090
        %v1123 = vmul.f32 %v803, %v1091
        %v1124 = vmul.f32 %v804, %v1092
        %v1125 = vmul.f32 %v805, %v1093
        %v1126 = vmul.f32 %v806, %v1094
        %v1127 = vmul.f32 %v807, %v1095
        %v1128 = vmul.f32 %v808, %v1096
        %v1129 = vmul.f32 %v809, %v1097
        %v1130 = vmul.f32 %v810, %v1098
        %v1131 = vmul.f32 %v811, %v1099
        %v1132 = vmul.f32 %v812, %v1100
        %v1133 = vmul.f32 %v813, %v1101
        %v1134 = vmul.f32 %v814, %v1102
        %v1135 = vmul.f32 %v815, %v1103
        %v1136 = vmul.f32 %v816, %v1104
        %v1137 = vmul.f32 %v817, %v1105
        %v1138 = vmul.f32 %v818, %v1106
        %v1139 = vpack.c.bf16 %v1108, %v1107
        %v1140 = vpack.c.bf16 %v1110, %v1109
        %v1141 = vpack.c.bf16 %v1112, %v1111
        %v1142 = vpack.c.bf16 %v1114, %v1113
        %v1143 = vpack.c.bf16 %v1116, %v1115
        %v1144 = vpack.c.bf16 %v1118, %v1117
        %v1145 = vpack.c.bf16 %v1120, %v1119
        %v1146 = vpack.c.bf16 %v1122, %v1121
        %v1147 = vpack.c.bf16 %v1124, %v1123
        %v1148 = vpack.c.bf16 %v1126, %v1125
        %v1149 = vpack.c.bf16 %v1128, %v1127
        %v1150 = vpack.c.bf16 %v1130, %v1129
        %v1151 = vpack.c.bf16 %v1132, %v1131
        %v1152 = vpack.c.bf16 %v1134, %v1133
        %v1153 = vpack.c.bf16 %v1136, %v1135
        %v1154 = vpack.c.bf16 %v1138, %v1137
        %v1171 = vunpack.c.l.b16 %v1139
        %v1172 = vunpack.c.h.b16 %v1139
        %v1173 = vunpack.c.l.b16 %v1140
        %v1174 = vunpack.c.h.b16 %v1140
        %v1175 = vunpack.c.l.b16 %v1141
        %v1176 = vunpack.c.h.b16 %v1141
        %v1177 = vunpack.c.l.b16 %v1142
        %v1178 = vunpack.c.h.b16 %v1142
        %v1179 = vunpack.c.l.b16 %v1143
        %v1180 = vunpack.c.h.b16 %v1143
        %v1181 = vunpack.c.l.b16 %v1144
        %v1182 = vunpack.c.h.b16 %v1144
        %v1183 = vunpack.c.l.b16 %v1145
        %v1184 = vunpack.c.h.b16 %v1145
        %v1185 = vunpack.c.l.b16 %v1146
        %v1186 = vunpack.c.h.b16 %v1146
        %v1187 = vunpack.c.l.b16 %v1147
        %v1188 = vunpack.c.h.b16 %v1147
        %v1189 = vunpack.c.l.b16 %v1148
        %v1190 = vunpack.c.h.b16 %v1148
        %v1191 = vunpack.c.l.b16 %v1149
        %v1192 = vunpack.c.h.b16 %v1149
        %v1193 = vunpack.c.l.b16 %v1150
        %v1194 = vunpack.c.h.b16 %v1150
        %v1195 = vunpack.c.l.b16 %v1151
        %v1196 = vunpack.c.h.b16 %v1151
        %v1197 = vunpack.c.l.b16 %v1152
        %v1198 = vunpack.c.h.b16 %v1152
        %v1199 = vunpack.c.l.b16 %v1153
        %v1200 = vunpack.c.h.b16 %v1153
        %v1201 = vunpack.c.l.b16 %v1154
        %v1202 = vunpack.c.h.b16 %v1154
        %v1203 = vpack.c.b16 %v1171, %v1171
        %v1204 = vpack.c.b16 %v1172, %v1172
        %v1205 = vpack.c.b16 %v1173, %v1173
        %v1206 = vpack.c.b16 %v1174, %v1174
        %v1207 = vpack.c.b16 %v1175, %v1175
        %v1208 = vpack.c.b16 %v1176, %v1176
        %v1209 = vpack.c.b16 %v1177, %v1177
        %v1210 = vpack.c.b16 %v1178, %v1178
        %v1211 = vpack.c.b16 %v1179, %v1179
        %v1212 = vpack.c.b16 %v1180, %v1180
        %v1213 = vpack.c.b16 %v1181, %v1181
        %v1214 = vpack.c.b16 %v1182, %v1182
        %v1215 = vpack.c.b16 %v1183, %v1183
        %v1216 = vpack.c.b16 %v1184, %v1184
        %v1217 = vpack.c.b16 %v1185, %v1185
        %v1218 = vpack.c.b16 %v1186, %v1186
        %v1219 = vpack.c.b16 %v1187, %v1187
        %v1220 = vpack.c.b16 %v1188, %v1188
        %v1221 = vpack.c.b16 %v1189, %v1189
        %v1222 = vpack.c.b16 %v1190, %v1190
        %v1223 = vpack.c.b16 %v1191, %v1191
        %v1224 = vpack.c.b16 %v1192, %v1192
        %v1225 = vpack.c.b16 %v1193, %v1193
        %v1226 = vpack.c.b16 %v1194, %v1194
        %v1227 = vpack.c.b16 %v1195, %v1195
        %v1228 = vpack.c.b16 %v1196, %v1196
        %v1229 = vpack.c.b16 %v1197, %v1197
        %v1230 = vpack.c.b16 %v1198, %v1198
        %v1231 = vpack.c.b16 %v1199, %v1199
        %v1232 = vpack.c.b16 %v1200, %v1200
        %v1233 = vpack.c.b16 %v1201, %v1201
        %v1234 = vpack.c.b16 %v1202, %v1202
        %1267 = vst [vmem:[%s257] sm:$0xf] %v1203
        %1268 = vst [vmem:[%s257 + $0x4] sm:$0xf] %v1204
        %1269 = vst [vmem:[%s257 + $0x8] sm:$0xf] %v1205
        %1270 = vst [vmem:[%s257 + $0xc] sm:$0xf] %v1206
        %1271 = vst [vmem:[%s257 + $0x10] sm:$0xf] %v1207
        %1272 = vst [vmem:[%s257 + $0x14] sm:$0xf] %v1208
        %1273 = vst [vmem:[%s257 + $0x18] sm:$0xf] %v1209
        %1274 = vst [vmem:[%s257 + $0x1c] sm:$0xf] %v1210
        %1275 = vst [vmem:[%s257 + $0x20] sm:$0xf] %v1211
        %1276 = vst [vmem:[%s257 + $0x24] sm:$0xf] %v1212
        %1277 = vst [vmem:[%s257 + $0x28] sm:$0xf] %v1213
        %1278 = vst [vmem:[%s257 + $0x2c] sm:$0xf] %v1214
        %1279 = vst [vmem:[%s257 + $0x30] sm:$0xf] %v1215
        %1280 = vst [vmem:[%s257 + $0x34] sm:$0xf] %v1216
        %1281 = vst [vmem:[%s257 + $0x38] sm:$0xf] %v1217
        %1282 = vst [vmem:[%s257 + $0x3c] sm:$0xf] %v1218
        %1283 = vst [vmem:[%s257 + $0x40] sm:$0xf] %v1219
        %1284 = vst [vmem:[%s257 + $0x44] sm:$0xf] %v1220
        %1285 = vst [vmem:[%s257 + $0x48] sm:$0xf] %v1221
        %1286 = vst [vmem:[%s257 + $0x4c] sm:$0xf] %v1222
        %1287 = vst [vmem:[%s257 + $0x50] sm:$0xf] %v1223
        %1288 = vst [vmem:[%s257 + $0x54] sm:$0xf] %v1224
        %1289 = vst [vmem:[%s257 + $0x58] sm:$0xf] %v1225
        %1290 = vst [vmem:[%s257 + $0x5c] sm:$0xf] %v1226
        %1291 = vst [vmem:[%s257 + $0x60] sm:$0xf] %v1227
        %1292 = vst [vmem:[%s257 + $0x64] sm:$0xf] %v1228
        %1293 = vst [vmem:[%s257 + $0x68] sm:$0xf] %v1229
        %1294 = vst [vmem:[%s257 + $0x6c] sm:$0xf] %v1230
        %1295 = vst [vmem:[%s257 + $0x70] sm:$0xf] %v1231
        %1296 = vst [vmem:[%s257 + $0x74] sm:$0xf] %v1232
        %1297 = vst [vmem:[%s257 + $0x78] sm:$0xf] %v1233
        %1298 = vst [vmem:[%s257 + $0x7c] sm:$0xf] %v1234
      $region40: #{yolo_pafpn_forward.56} parent=31 // pred_fallthru
        _
      %s1299 = smul.u32 32, %s19
      %p1300 = scmp.lt.s32.totalorder %s1299, 63
      %s1301 = scalar_select %p1300, %s1299, 63
      %p1302 = scmp.lt.s32.totalorder %s20, 0
      %s1303 = scalar_select %p1302, %s20, 0
      %s1304 = sadd.s32 %s1303, %s1301
      %s1305 = smul.addr %s1304, 4
      %s1306 = scalar_lea.vmem %s3, %s1305
      // Predicated region
      $region41: #{yolo_pafpn_forward.56} parent=31 // pred_check
        %p1307 = pneg %p135
      $region42: #{yolo_pafpn_forward.56} parent=31 // pred_check_branch
        %1309 = sbr.rel (%p1307) target = $region44
      $region43: #{yolo_pafpn_forward.56} parent=31 // pred_region
        %s1310 = smul.u32 32, %s19
      $region44: #{yolo_pafpn_forward.56} parent=31 // pred_fallthru
        _
    $region32: #{yolo_pafpn_forward.56} parent=5 // pred_fallthru
      _
    %p1311 = scmp.le.s32.totalorder 2, %s9
    // Predicated region
    $region45: #{yolo_pafpn_forward.56} parent=5 // pred_check
      %p1312 = pneg %p1311
    $region46: #{yolo_pafpn_forward.56} parent=5 // pred_check_branch
      %1314 = sbr.rel (%p1312) target = $region48
    $region47: #{yolo_pafpn_forward.56} parent=5 // pred_region
      %s1315 = ssub.s32 %s9, 2
      // Predicated region
      $region49: #{yolo_pafpn_forward.56} parent=47 // pred_check
        %p1316 = pneg %p141
      $region50: #{yolo_pafpn_forward.56} parent=47 // pred_check_branch
        %1318 = sbr.rel (%p1316) target = $region52
      $region51: #{yolo_pafpn_forward.56} parent=47 // pred_region
        %s1319 = smul.u32 32, %s22
        %p1320 = scmp.lt.s32.totalorder %s1319, 63
        %s1321 = scalar_select %p1320, %s1319, 63
        %p1322 = scmp.lt.s32.totalorder %s23, 0
        %s1323 = scalar_select %p1322, %s23, 0
        %s1324 = sadd.s32 %s1323, %s1321
        %s1325 = smul.addr %s1324, 4
        %s1326 = scalar_lea.vmem %s3, %s1325
      $region52: #{yolo_pafpn_forward.56} parent=47 // pred_fallthru
        _
    $region48: #{yolo_pafpn_forward.56} parent=5 // pred_fallthru
      _
  $region6: #{yolo_pafpn_forward.56} parent=0 // loop_footer
    %s13 = sadd.s32 1, %s9
  $region7: #{yolo_pafpn_forward.56} parent=0 // loop_footer_branch
    %8 = sbr.rel target = $region3
  $region8: #{yolo_pafpn_forward.56} parent=0 // loop_exit
    _

// kernel: yolo_pafpn_forward.55
$region0: #{yolo_pafpn_forward.55}
  #allocation0 [shape = 'u32[]', space=smem, size = 0x4, offset = 0x4, fixed_abs, tag = 'smem constant byte address 0x4 - core index']
  #allocation1 [shape = 'u32[144,128]{1,0:T(1,128)}', space=vmem, size = 0x12000, scoped, tag = 'internal scratch']
  #allocation2 [shape = 'f32[256,128]{1,0:T(8,128)}', space=vmem, size = 0x20000, scoped, tag = 'scratch operand']
  %s0 = inlined_call_operand.vmem [shape: bf16[512,256], index: 0, kind: input, shape index: {}]
  %s1 = inlined_call_operand.vmem [shape: bf16[256,128], index: 1, kind: input, shape index: {}]
  %s2 = inlined_call_operand.vmem [shape: f32[1,128], index: 2, kind: input, shape index: {}]
  %s3 = inlined_call_operand.vmem [shape: bf16[512,128], index: 3, kind: output, shape index: {}]
  %s4 = sld [smem:[#allocation0]]
  $region53: #{yolo_pafpn_forward.55} parent=0
    _
  %s6 = ssub.s32 1, %s4
  %s7 = scalar_select 0, %s6, %s4
  loop: start=0, step=1, limit=4
  $region2: #{yolo_pafpn_forward.55} parent=0 // loop_pre_header
    _
  $region3: #{yolo_pafpn_forward.55} parent=0 // loop_header
    %s9 = sphi 0, %s13
    %p10 = scmp.ge.s32.totalorder %s9, 4
    %s16 = sphi 0, %s35
    %s17 = sphi 0, %s31
    %s18 = sphi 0, %s27
    %s19 = sphi 0, %s16
    %s20 = sphi 0, %s17
    %s21 = sphi 0, %s18
    %s22 = sphi 0, %s19
    %s23 = sphi 0, %s20
    %s24 = sphi 0, %s21
    %s40 = sphi 0, %s42
    %s43 = sphi 0, %s40
    %s44 = sphi 0, %s43
    %s60 = sphi 0, %s44
    %s68 = sphi 0, %s70
    %s71 = sphi 0, %s68
    %s72 = sphi 0, %s71
    %s88 = sphi 0, %s72
    %s94 = sphi 0, %s96
    %s97 = sphi 0, %s94
    %s98 = sphi 0, %s97
    %s114 = sphi 0, %s98
    %s122 = sphi 0, %s124
    %s125 = sphi 0, %s122
    %s126 = sphi 0, %s125
    %s142 = sphi 0, %s126
  $region4: #{yolo_pafpn_forward.55} parent=0 // loop_header_branch
    %12 = sbr.rel (%p10) target = $region8
  $region5: #{yolo_pafpn_forward.55} parent=0 // loop_body
    %s14 = ssub.s32 %s9, 1
    %s15 = ssub.s32 %s9, 2
    %s25 = sadd.s32 1, %s18
    %p26 = scmp.ge.s32.totalorder %s25, 1
    %s27 = scalar_select %p26, 0, %s25
    %s28 = sadd.s32 1, %s17
    %s29 = scalar_select %p26, %s28, %s17
    %p30 = scmp.ge.s32.totalorder %s29, 1
    %s31 = scalar_select %p30, 0, %s29
    %s32 = sadd.s32 1, %s16
    %s33 = scalar_select %p30, %s32, %s16
    %p34 = scmp.ge.s32.totalorder %s33, 2
    %s35 = scalar_select %p34, 0, %s33
    %s36 = ssub.s32 %s16, %s35
    %s37 = ssub.s32 %s18, %s27
    %s38 = sor.u32 %s36, %s37
    %p39 = scmp.eq.s32.totalorder %s38, 0
    %s41 = sadd.s32 %s40, 1
    %s42 = scalar_select %p39, %s40, %s41
    %p45 = pneg %p39
    %p46 = scmp.eq.s32.totalorder %s9, 1
    %p47 = por %p45, %p46
    %p48 = scmp.ne.s32.totalorder %s40, %s43
    %p49 = scmp.eq.s32.totalorder %s9, 0
    %p50 = por %p48, %p49
    %p51 = scmp.ne.s32.totalorder %s40, %s43
    %p52 = scmp.eq.s32.totalorder %s14, 1
    %p53 = por %p51, %p52
    %p54 = scmp.ne.s32.totalorder %s43, %s44
    %p55 = scmp.eq.s32.totalorder %s14, 0
    %p56 = por %p54, %p55
    %p57 = scmp.ne.s32.totalorder %s43, %s44
    %p58 = scmp.eq.s32.totalorder %s15, 1
    %p59 = por %p57, %p58
    %p61 = scmp.ne.s32.totalorder %s44, %s60
    %p62 = scmp.eq.s32.totalorder %s15, 0
    %p63 = por %p61, %p62
    %s64 = ssub.s32 %s18, %s27
    %s65 = ssub.s32 %s17, %s31
    %s66 = sor.u32 %s64, %s65
    %p67 = scmp.eq.s32.totalorder %s66, 0
    %s69 = sadd.s32 %s68, 1
    %s70 = scalar_select %p67, %s68, %s69
    %p73 = pneg %p67
    %p74 = scmp.eq.s32.totalorder %s9, 1
    %p75 = por %p73, %p74
    %p76 = scmp.ne.s32.totalorder %s68, %s71
    %p77 = scmp.eq.s32.totalorder %s9, 0
    %p78 = por %p76, %p77
    %p79 = scmp.ne.s32.totalorder %s68, %s71
    %p80 = scmp.eq.s32.totalorder %s14, 1
    %p81 = por %p79, %p80
    %p82 = scmp.ne.s32.totalorder %s71, %s72
    %p83 = scmp.eq.s32.totalorder %s14, 0
    %p84 = por %p82, %p83
    %p85 = scmp.ne.s32.totalorder %s71, %s72
    %p86 = scmp.eq.s32.totalorder %s15, 1
    %p87 = por %p85, %p86
    %p89 = scmp.ne.s32.totalorder %s72, %s88
    %p90 = scmp.eq.s32.totalorder %s15, 0
    %p91 = por %p89, %p90
    %s92 = ssub.s32 %s17, %s31
    %p93 = scmp.eq.s32.totalorder %s92, 0
    %s95 = sadd.s32 %s94, 1
    %s96 = scalar_select %p93, %s94, %s95
    %p99 = pneg %p93
    %p100 = scmp.eq.s32.totalorder %s9, 1
    %p101 = por %p99, %p100
    %p102 = scmp.ne.s32.totalorder %s94, %s97
    %p103 = scmp.eq.s32.totalorder %s9, 0
    %p104 = por %p102, %p103
    %p105 = scmp.ne.s32.totalorder %s94, %s97
    %p106 = scmp.eq.s32.totalorder %s14, 1
    %p107 = por %p105, %p106
    %p108 = scmp.ne.s32.totalorder %s97, %s98
    %p109 = scmp.eq.s32.totalorder %s14, 0
    %p110 = por %p108, %p109
    %p111 = scmp.ne.s32.totalorder %s97, %s98
    %p112 = scmp.eq.s32.totalorder %s15, 1
    %p113 = por %p111, %p112
    %p115 = scmp.ne.s32.totalorder %s98, %s114
    %p116 = scmp.eq.s32.totalorder %s15, 0
    %p117 = por %p115, %p116
    %s118 = ssub.s32 %s16, %s35
    %s119 = ssub.s32 %s17, %s31
    %s120 = sor.u32 %s118, %s119
    %p121 = scmp.eq.s32.totalorder %s120, 0
    %s123 = sadd.s32 %s122, 1
    %s124 = scalar_select %p121, %s122, %s123
    %p127 = pneg %p121
    %p128 = scmp.eq.s32.totalorder %s9, 1
    %p129 = por %p127, %p128
    %p130 = scmp.ne.s32.totalorder %s122, %s125
    %p131 = scmp.eq.s32.totalorder %s9, 0
    %p132 = por %p130, %p131
    %p133 = scmp.ne.s32.totalorder %s122, %s125
    %p134 = scmp.eq.s32.totalorder %s14, 1
    %p135 = por %p133, %p134
    %p136 = scmp.ne.s32.totalorder %s125, %s126
    %p137 = scmp.eq.s32.totalorder %s14, 0
    %p138 = por %p136, %p137
    %p139 = scmp.ne.s32.totalorder %s125, %s126
    %p140 = scmp.eq.s32.totalorder %s15, 1
    %p141 = por %p139, %p140
    %p143 = scmp.ne.s32.totalorder %s126, %s142
    %p144 = scmp.eq.s32.totalorder %s15, 0
    %p145 = por %p143, %p144
    %p146 = scmp.le.s32.totalorder 1, %s9
    %p147 = scmp.lt.s32.totalorder %s9, 3
    %p148 = pnand %p146, %p147
    %p149 = pneg %p148
    // Predicated region
    $region9: #{yolo_pafpn_forward.55} parent=5 // pred_check
      _
    $region10: #{yolo_pafpn_forward.55} parent=5 // pred_check_branch
      %151 = sbr.rel (%p148) target = $region12
    $region11: #{yolo_pafpn_forward.55} parent=5 // pred_region
      %s152 = ssub.s32 %s9, 1
      // Predicated region
      $region13: #{yolo_pafpn_forward.55} parent=11 // pred_check
        %p153 = pneg %p84
      $region14: #{yolo_pafpn_forward.55} parent=11 // pred_check_branch
        %155 = sbr.rel (%p153) target = $region16
      $region15: #{yolo_pafpn_forward.55} parent=11 // pred_region
        %s156 = smul.u32 32, %s21
        %p157 = scmp.lt.s32.totalorder %s156, 31
        %s158 = scalar_select %p157, %s156, 31
        %p159 = scmp.lt.s32.totalorder %s20, 0
        %s160 = scalar_select %p159, %s20, 0
        %s161 = sadd.s32 %s160, %s158
        %s162 = smul.addr %s161, 4
        %s163 = scalar_lea.vmem %s1, %s162
        %s164 = smul.u32 32, %s21
      $region16: #{yolo_pafpn_forward.55} parent=11 // pred_fallthru
        _
      // Predicated region
      $region17: #{yolo_pafpn_forward.55} parent=11 // pred_check
        %p165 = pneg %p110
      $region18: #{yolo_pafpn_forward.55} parent=11 // pred_check_branch
        %167 = sbr.rel (%p165) target = $region20
      $region19: #{yolo_pafpn_forward.55} parent=11 // pred_region
        %p168 = scmp.lt.s32.totalorder %s20, 0
        %s169 = scalar_select %p168, %s20, 0
        %s170 = scalar_lea.vmem %s2, %s169
      $region20: #{yolo_pafpn_forward.55} parent=11 // pred_fallthru
        _
    $region12: #{yolo_pafpn_forward.55} parent=5 // pred_fallthru
      _
    %p171 = scmp.lt.s32.totalorder %s9, 2
    // Predicated region
    $region21: #{yolo_pafpn_forward.55} parent=5 // pred_check
      %p172 = pneg %p171
    $region22: #{yolo_pafpn_forward.55} parent=5 // pred_check_branch
      %174 = sbr.rel (%p172) target = $region24
    $region23: #{yolo_pafpn_forward.55} parent=5 // pred_region
      // Predicated region
      $region25: #{yolo_pafpn_forward.55} parent=23 // pred_check
        %p175 = pneg %p50
      $region26: #{yolo_pafpn_forward.55} parent=23 // pred_check_branch
        %177 = sbr.rel (%p175) target = $region28
      $region27: #{yolo_pafpn_forward.55} parent=23 // pred_region
        %s178 = smul.u32 32, %s16
        %s179 = smul.u32 2, %s18
        %p180 = scmp.lt.s32.totalorder %s178, 63
        %s181 = scalar_select %p180, %s178, 63
        %p182 = scmp.lt.s32.totalorder %s179, 1
        %s183 = scalar_select %p182, %s179, 1
        %s184 = smul.addr %s181, 2
        %s185 = sadd.s32 %s183, %s184
        %s186 = smul.addr %s185, 4
        %s187 = scalar_lea.vmem %s0, %s186
        %s188 = smul.u32 32, %s16
        %s189 = smul.u32 2, %s18
      $region28: #{yolo_pafpn_forward.55} parent=23 // pred_fallthru
        _
    $region24: #{yolo_pafpn_forward.55} parent=5 // pred_fallthru
      _
    %p190 = scmp.le.s32.totalorder 1, %s9
    %p191 = scmp.lt.s32.totalorder %s9, 3
    %p192 = pnand %p190, %p191
    %p193 = pneg %p192
    // Predicated region
    $region29: #{yolo_pafpn_forward.55} parent=5 // pred_check
      _
    $region30: #{yolo_pafpn_forward.55} parent=5 // pred_check_branch
      %195 = sbr.rel (%p192) target = $region32
    $region31: #{yolo_pafpn_forward.55} parent=5 // pred_region
      %s196 = ssub.s32 %s9, 1
      %s197 = smul.u32 32, %s19
      %s198 = smul.u32 2, %s21
      %p199 = scmp.lt.s32.totalorder %s197, 63
      %s200 = scalar_select %p199, %s197, 63
      %p201 = scmp.lt.s32.totalorder %s198, 1
      %s202 = scalar_select %p201, %s198, 1
      %s203 = smul.addr %s200, 2
      %s204 = sadd.s32 %s202, %s203
      %s205 = smul.addr %s204, 4
      %s206 = scalar_lea.vmem %s0, %s205
      %p207 = pneg %p56
      %p208 = pneg %p53
      %s209 = smul.u32 32, %s21
      %p210 = scmp.lt.s32.totalorder %s209, 31
      %s211 = scalar_select %p210, %s209, 31
      %p212 = scmp.lt.s32.totalorder %s20, 0
      %s213 = scalar_select %p212, %s20, 0
      %s214 = sadd.s32 %s213, %s211
      %s215 = smul.addr %s214, 4
      %s216 = scalar_lea.vmem %s1, %s215
      %p217 = pneg %p84
      %p218 = pneg %p81
      %p219 = scmp.lt.s32.totalorder %s20, 0
      %s220 = scalar_select %p219, %s20, 0
      %s221 = scalar_lea.vmem %s2, %s220
      %p222 = pneg %p110
      %p223 = pneg %p107
      %p224 = pneg %p138
      %p225 = pneg %p135
      %s226 = smul.u32 32, %s19
      %p227 = scmp.lt.s32.totalorder %s226, 63
      %s228 = scalar_select %p227, %s226, 63
      %p229 = scmp.lt.s32.totalorder %s20, 0
      %s230 = scalar_select %p229, %s20, 0
      %s231 = sadd.s32 %s230, %s228
      %s232 = smul.addr %s231, 4
      %s233 = scalar_lea.vmem %s3, %s232
      %s234 = smul.u32 32, %s19
      %s235 = smul.u32 2, %s21
      %p236 = scmp.lt.s32.totalorder %s234, 63
      %s237 = scalar_select %p236, %s234, 63
      %p238 = scmp.lt.s32.totalorder %s235, 1
      %s239 = scalar_select %p238, %s235, 1
      %s240 = smul.addr %s237, 2
      %s241 = sadd.s32 %s239, %s240
      %s242 = smul.addr %s241, 4
      %s243 = scalar_lea.vmem %s0, %s242
      %s244 = smul.u32 32, %s19
      %s245 = smul.u32 2, %s21
      %s246 = smul.u32 32, %s21
      %p247 = scmp.lt.s32.totalorder %s246, 31
      %s248 = scalar_select %p247, %s246, 31
      %p249 = scmp.lt.s32.totalorder %s20, 0
      %s250 = scalar_select %p249, %s20, 0
      %s251 = sadd.s32 %s250, %s248
      %s252 = smul.addr %s251, 4
      %s253 = scalar_lea.vmem %s1, %s252
      %s254 = smul.u32 32, %s21
      %p255 = scmp.lt.s32.totalorder %s20, 0
      %s256 = scalar_select %p255, %s20, 0
      %s257 = scalar_lea.vmem %s2, %s256
      %s258 = smul.u32 32, %s19
      %p259 = scmp.lt.s32.totalorder %s258, 63
      %s260 = scalar_select %p259, %s258, 63
      %p261 = scmp.lt.s32.totalorder %s20, 0
      %s262 = scalar_select %p261, %s20, 0
      %s263 = sadd.s32 %s262, %s260
      %s264 = smul.addr %s263, 4
      %s265 = scalar_lea.vmem %s3, %s264
      %s266 = smul.u32 32, %s19
      %p268 = scmp.eq.s32.totalorder %s21, 0
      // Predicated region
      $region33: #{yolo_pafpn_forward.55} parent=31 // pred_check
        %p269 = pneg %p268
      $region34: #{yolo_pafpn_forward.55} parent=31 // pred_check_branch
        %271 = sbr.rel (%p269) target = $region36
      $region35: #{yolo_pafpn_forward.55} parent=31 // pred_region
        %272 = vst [vmem:[#allocation2] sm:$0xff] 0.0
        %273 = vst [vmem:[#allocation2 + $0x8] sm:$0xff] 0.0
        %274 = vst [vmem:[#allocation2 + $0x10] sm:$0xff] 0.0
        %275 = vst [vmem:[#allocation2 + $0x18] sm:$0xff] 0.0
        %276 = vst [vmem:[#allocation2 + $0x20] sm:$0xff] 0.0
        %277 = vst [vmem:[#allocation2 + $0x28] sm:$0xff] 0.0
        %278 = vst [vmem:[#allocation2 + $0x30] sm:$0xff] 0.0
        %279 = vst [vmem:[#allocation2 + $0x38] sm:$0xff] 0.0
        %280 = vst [vmem:[#allocation2 + $0x40] sm:$0xff] 0.0
        %281 = vst [vmem:[#allocation2 + $0x48] sm:$0xff] 0.0
        %282 = vst [vmem:[#allocation2 + $0x50] sm:$0xff] 0.0
        %283 = vst [vmem:[#allocation2 + $0x58] sm:$0xff] 0.0
        %284 = vst [vmem:[#allocation2 + $0x60] sm:$0xff] 0.0
        %285 = vst [vmem:[#allocation2 + $0x68] sm:$0xff] 0.0
        %286 = vst [vmem:[#allocation2 + $0x70] sm:$0xff] 0.0
        %287 = vst [vmem:[#allocation2 + $0x78] sm:$0xff] 0.0
        %288 = vst [vmem:[#allocation2 + $0x80] sm:$0xff] 0.0
        %289 = vst [vmem:[#allocation2 + $0x88] sm:$0xff] 0.0
        %290 = vst [vmem:[#allocation2 + $0x90] sm:$0xff] 0.0
        %291 = vst [vmem:[#allocation2 + $0x98] sm:$0xff] 0.0
        %292 = vst [vmem:[#allocation2 + $0xa0] sm:$0xff] 0.0
        %293 = vst [vmem:[#allocation2 + $0xa8] sm:$0xff] 0.0
        %294 = vst [vmem:[#allocation2 + $0xb0] sm:$0xff] 0.0
        %295 = vst [vmem:[#allocation2 + $0xb8] sm:$0xff] 0.0
        %296 = vst [vmem:[#allocation2 + $0xc0] sm:$0xff] 0.0
        %297 = vst [vmem:[#allocation2 + $0xc8] sm:$0xff] 0.0
        %298 = vst [vmem:[#allocation2 + $0xd0] sm:$0xff] 0.0
        %299 = vst [vmem:[#allocation2 + $0xd8] sm:$0xff] 0.0
        %300 = vst [vmem:[#allocation2 + $0xe0] sm:$0xff] 0.0
        %301 = vst [vmem:[#allocation2 + $0xe8] sm:$0xff] 0.0
        %302 = vst [vmem:[#allocation2 + $0xf0] sm:$0xff] 0.0
        %303 = vst [vmem:[#allocation2 + $0xf8] sm:$0xff] 0.0
      $region36: #{yolo_pafpn_forward.55} parent=31 // pred_fallthru
        _
      %v304 = vld [vmem:[#allocation2] sm:$0xff]
      %v305 = vld [vmem:[#allocation2 + $0x8] sm:$0xff]
      %v306 = vld [vmem:[#allocation2 + $0x10] sm:$0xff]
      %v307 = vld [vmem:[#allocation2 + $0x18] sm:$0xff]
      %v308 = vld [vmem:[#allocation2 + $0x20] sm:$0xff]
      %v309 = vld [vmem:[#allocation2 + $0x28] sm:$0xff]
      %v310 = vld [vmem:[#allocation2 + $0x30] sm:$0xff]
      %v311 = vld [vmem:[#allocation2 + $0x38] sm:$0xff]
      %v312 = vld [vmem:[#allocation2 + $0x40] sm:$0xff]
      %v313 = vld [vmem:[#allocation2 + $0x48] sm:$0xff]
      %v314 = vld [vmem:[#allocation2 + $0x50] sm:$0xff]
      %v315 = vld [vmem:[#allocation2 + $0x58] sm:$0xff]
      %v316 = vld [vmem:[#allocation2 + $0x60] sm:$0xff]
      %v317 = vld [vmem:[#allocation2 + $0x68] sm:$0xff]
      %v318 = vld [vmem:[#allocation2 + $0x70] sm:$0xff]
      %v319 = vld [vmem:[#allocation2 + $0x78] sm:$0xff]
      %v320 = vld [vmem:[#allocation2 + $0x80] sm:$0xff]
      %v321 = vld [vmem:[#allocation2 + $0x88] sm:$0xff]
      %v322 = vld [vmem:[#allocation2 + $0x90] sm:$0xff]
      %v323 = vld [vmem:[#allocation2 + $0x98] sm:$0xff]
      %v324 = vld [vmem:[#allocation2 + $0xa0] sm:$0xff]
      %v325 = vld [vmem:[#allocation2 + $0xa8] sm:$0xff]
      %v326 = vld [vmem:[#allocation2 + $0xb0] sm:$0xff]
      %v327 = vld [vmem:[#allocation2 + $0xb8] sm:$0xff]
      %v328 = vld [vmem:[#allocation2 + $0xc0] sm:$0xff]
      %v329 = vld [vmem:[#allocation2 + $0xc8] sm:$0xff]
      %v330 = vld [vmem:[#allocation2 + $0xd0] sm:$0xff]
      %v331 = vld [vmem:[#allocation2 + $0xd8] sm:$0xff]
      %v332 = vld [vmem:[#allocation2 + $0xe0] sm:$0xff]
      %v333 = vld [vmem:[#allocation2 + $0xe8] sm:$0xff]
      %v334 = vld [vmem:[#allocation2 + $0xf0] sm:$0xff]
      %v335 = vld [vmem:[#allocation2 + $0xf8] sm:$0xff]
      %v336 = vld [vmem:[%s243] sm:$0xff]
      %v337 = vld [vmem:[%s243 + $0x8] sm:$0xff]
      %v338 = vld [vmem:[%s243 + $0x10] sm:$0xff]
      %v339 = vld [vmem:[%s243 + $0x18] sm:$0xff]
      %v340 = vld [vmem:[%s243 + $0x20] sm:$0xff]
      %v341 = vld [vmem:[%s243 + $0x28] sm:$0xff]
      %v342 = vld [vmem:[%s243 + $0x30] sm:$0xff]
      %v343 = vld [vmem:[%s243 + $0x38] sm:$0xff]
      %v344 = vld [vmem:[%s243 + $0x40] sm:$0xff]
      %v345 = vld [vmem:[%s243 + $0x48] sm:$0xff]
      %v346 = vld [vmem:[%s243 + $0x50] sm:$0xff]
      %v347 = vld [vmem:[%s243 + $0x58] sm:$0xff]
      %v348 = vld [vmem:[%s243 + $0x60] sm:$0xff]
      %v349 = vld [vmem:[%s243 + $0x68] sm:$0xff]
      %v350 = vld [vmem:[%s243 + $0x70] sm:$0xff]
      %v351 = vld [vmem:[%s243 + $0x78] sm:$0xff]
      %v352 = vld [vmem:[%s243 + $0x80] sm:$0xff]
      %v353 = vld [vmem:[%s243 + $0x88] sm:$0xff]
      %v354 = vld [vmem:[%s243 + $0x90] sm:$0xff]
      %v355 = vld [vmem:[%s243 + $0x98] sm:$0xff]
      %v356 = vld [vmem:[%s243 + $0xa0] sm:$0xff]
      %v357 = vld [vmem:[%s243 + $0xa8] sm:$0xff]
      %v358 = vld [vmem:[%s243 + $0xb0] sm:$0xff]
      %v359 = vld [vmem:[%s243 + $0xb8] sm:$0xff]
      %v360 = vld [vmem:[%s243 + $0xc0] sm:$0xff]
      %v361 = vld [vmem:[%s243 + $0xc8] sm:$0xff]
      %v362 = vld [vmem:[%s243 + $0xd0] sm:$0xff]
      %v363 = vld [vmem:[%s243 + $0xd8] sm:$0xff]
      %v364 = vld [vmem:[%s243 + $0xe0] sm:$0xff]
      %v365 = vld [vmem:[%s243 + $0xe8] sm:$0xff]
      %v366 = vld [vmem:[%s243 + $0xf0] sm:$0xff]
      %v367 = vld [vmem:[%s243 + $0xf8] sm:$0xff]
      %v368 = vld [vmem:[%s253] sm:$0xf]
      %v369 = vld [vmem:[%s253 + $0x4] sm:$0xf]
      %v370 = vld [vmem:[%s253 + $0x8] sm:$0xf]
      %v371 = vld [vmem:[%s253 + $0xc] sm:$0xf]
      %v372 = vld [vmem:[%s253 + $0x10] sm:$0xf]
      %v373 = vld [vmem:[%s253 + $0x14] sm:$0xf]
      %v374 = vld [vmem:[%s253 + $0x18] sm:$0xf]
      %v375 = vld [vmem:[%s253 + $0x1c] sm:$0xf]
      %v376 = vld [vmem:[%s253 + $0x20] sm:$0xf]
      %v377 = vld [vmem:[%s253 + $0x24] sm:$0xf]
      %v378 = vld [vmem:[%s253 + $0x28] sm:$0xf]
      %v379 = vld [vmem:[%s253 + $0x2c] sm:$0xf]
      %v380 = vld [vmem:[%s253 + $0x30] sm:$0xf]
      %v381 = vld [vmem:[%s253 + $0x34] sm:$0xf]
      %v382 = vld [vmem:[%s253 + $0x38] sm:$0xf]
      %v383 = vld [vmem:[%s253 + $0x3c] sm:$0xf]
      %v384 = vld [vmem:[%s253 + $0x40] sm:$0xf]
      %v385 = vld [vmem:[%s253 + $0x44] sm:$0xf]
      %v386 = vld [vmem:[%s253 + $0x48] sm:$0xf]
      %v387 = vld [vmem:[%s253 + $0x4c] sm:$0xf]
      %v388 = vld [vmem:[%s253 + $0x50] sm:$0xf]
      %v389 = vld [vmem:[%s253 + $0x54] sm:$0xf]
      %v390 = vld [vmem:[%s253 + $0x58] sm:$0xf]
      %v391 = vld [vmem:[%s253 + $0x5c] sm:$0xf]
      %v392 = vld [vmem:[%s253 + $0x60] sm:$0xf]
      %v393 = vld [vmem:[%s253 + $0x64] sm:$0xf]
      %v394 = vld [vmem:[%s253 + $0x68] sm:$0xf]
      %v395 = vld [vmem:[%s253 + $0x6c] sm:$0xf]
      %v396 = vld [vmem:[%s253 + $0x70] sm:$0xf]
      %v397 = vld [vmem:[%s253 + $0x74] sm:$0xf]
      %v398 = vld [vmem:[%s253 + $0x78] sm:$0xf]
      %v399 = vld [vmem:[%s253 + $0x7c] sm:$0xf]
      %v432 = vunpack.c.l.b16 %v336
      %v433 = vunpack.c.h.b16 %v336
      %v434 = vunpack.c.l.b16 %v337
      %v435 = vunpack.c.h.b16 %v337
      %v436 = vunpack.c.l.b16 %v338
      %v437 = vunpack.c.h.b16 %v338
      %v438 = vunpack.c.l.b16 %v339
      %v439 = vunpack.c.h.b16 %v339
      %v440 = vunpack.c.l.b16 %v340
      %v441 = vunpack.c.h.b16 %v340
      %v442 = vunpack.c.l.b16 %v341
      %v443 = vunpack.c.h.b16 %v341
      %v444 = vunpack.c.l.b16 %v342
      %v445 = vunpack.c.h.b16 %v342
      %v446 = vunpack.c.l.b16 %v343
      %v447 = vunpack.c.h.b16 %v343
      %v448 = vunpack.c.l.b16 %v344
      %v449 = vunpack.c.h.b16 %v344
      %v450 = vunpack.c.l.b16 %v345
      %v451 = vunpack.c.h.b16 %v345
      %v452 = vunpack.c.l.b16 %v346
      %v453 = vunpack.c.h.b16 %v346
      %v454 = vunpack.c.l.b16 %v347
      %v455 = vunpack.c.h.b16 %v347
      %v456 = vunpack.c.l.b16 %v348
      %v457 = vunpack.c.h.b16 %v348
      %v458 = vunpack.c.l.b16 %v349
      %v459 = vunpack.c.h.b16 %v349
      %v460 = vunpack.c.l.b16 %v350
      %v461 = vunpack.c.h.b16 %v350
      %v462 = vunpack.c.l.b16 %v351
      %v463 = vunpack.c.h.b16 %v351
      %v464 = vunpack.c.l.b16 %v352
      %v465 = vunpack.c.h.b16 %v352
      %v466 = vunpack.c.l.b16 %v353
      %v467 = vunpack.c.h.b16 %v353
      %v468 = vunpack.c.l.b16 %v354
      %v469 = vunpack.c.h.b16 %v354
      %v470 = vunpack.c.l.b16 %v355
      %v471 = vunpack.c.h.b16 %v355
      %v472 = vunpack.c.l.b16 %v356
      %v473 = vunpack.c.h.b16 %v356
      %v474 = vunpack.c.l.b16 %v357
      %v475 = vunpack.c.h.b16 %v357
      %v476 = vunpack.c.l.b16 %v358
      %v477 = vunpack.c.h.b16 %v358
      %v478 = vunpack.c.l.b16 %v359
      %v479 = vunpack.c.h.b16 %v359
      %v480 = vunpack.c.l.b16 %v360
      %v481 = vunpack.c.h.b16 %v360
      %v482 = vunpack.c.l.b16 %v361
      %v483 = vunpack.c.h.b16 %v361
      %v484 = vunpack.c.l.b16 %v362
      %v485 = vunpack.c.h.b16 %v362
      %v486 = vunpack.c.l.b16 %v363
      %v487 = vunpack.c.h.b16 %v363
      %v488 = vunpack.c.l.b16 %v364
      %v489 = vunpack.c.h.b16 %v364
      %v490 = vunpack.c.l.b16 %v365
      %v491 = vunpack.c.h.b16 %v365
      %v492 = vunpack.c.l.b16 %v366
      %v493 = vunpack.c.h.b16 %v366
      %v494 = vunpack.c.l.b16 %v367
      %v495 = vunpack.c.h.b16 %v367
      %v496 = vpack.c.b16 %v434, %v432
      %v497 = vpack.c.b16 %v435, %v433
      %v498 = vpack.c.b16 %v438, %v436
      %v499 = vpack.c.b16 %v439, %v437
      %v500 = vpack.c.b16 %v442, %v440
      %v501 = vpack.c.b16 %v443, %v441
      %v502 = vpack.c.b16 %v446, %v444
      %v503 = vpack.c.b16 %v447, %v445
      %v504 = vpack.c.b16 %v450, %v448
      %v505 = vpack.c.b16 %v451, %v449
      %v506 = vpack.c.b16 %v454, %v452
      %v507 = vpack.c.b16 %v455, %v453
      %v508 = vpack.c.b16 %v458, %v456
      %v509 = vpack.c.b16 %v459, %v457
      %v510 = vpack.c.b16 %v462, %v460
      %v511 = vpack.c.b16 %v463, %v461
      %v512 = vpack.c.b16 %v466, %v464
      %v513 = vpack.c.b16 %v467, %v465
      %v514 = vpack.c.b16 %v470, %v468
      %v515 = vpack.c.b16 %v471, %v469
      %v516 = vpack.c.b16 %v474, %v472
      %v517 = vpack.c.b16 %v475, %v473
      %v518 = vpack.c.b16 %v478, %v476
      %v519 = vpack.c.b16 %v479, %v477
      %v520 = vpack.c.b16 %v482, %v480
      %v521 = vpack.c.b16 %v483, %v481
      %v522 = vpack.c.b16 %v486, %v484
      %v523 = vpack.c.b16 %v487, %v485
      %v524 = vpack.c.b16 %v490, %v488
      %v525 = vpack.c.b16 %v491, %v489
      %v526 = vpack.c.b16 %v494, %v492
      %v527 = vpack.c.b16 %v495, %v493
      %v592 = vunpack.c.l.b16 %v368
      %v593 = vunpack.c.l.b16 %v369
      %v594 = vunpack.c.l.b16 %v370
      %v595 = vunpack.c.l.b16 %v371
      %v596 = vunpack.c.l.b16 %v372
      %v597 = vunpack.c.l.b16 %v373
      %v598 = vunpack.c.l.b16 %v374
      %v599 = vunpack.c.l.b16 %v375
      %v600 = vunpack.c.l.b16 %v376
      %v601 = vunpack.c.l.b16 %v377
      %v602 = vunpack.c.l.b16 %v378
      %v603 = vunpack.c.l.b16 %v379
      %v604 = vunpack.c.l.b16 %v380
      %v605 = vunpack.c.l.b16 %v381
      %v606 = vunpack.c.l.b16 %v382
      %v607 = vunpack.c.l.b16 %v383
      %v608 = vunpack.c.l.b16 %v384
      %v609 = vunpack.c.l.b16 %v385
      %v610 = vunpack.c.l.b16 %v386
      %v611 = vunpack.c.l.b16 %v387
      %v612 = vunpack.c.l.b16 %v388
      %v613 = vunpack.c.l.b16 %v389
      %v614 = vunpack.c.l.b16 %v390
      %v615 = vunpack.c.l.b16 %v391
      %v616 = vunpack.c.l.b16 %v392
      %v617 = vunpack.c.l.b16 %v393
      %v618 = vunpack.c.l.b16 %v394
      %v619 = vunpack.c.l.b16 %v395
      %v620 = vunpack.c.l.b16 %v396
      %v621 = vunpack.c.l.b16 %v397
      %v622 = vunpack.c.l.b16 %v398
      %v623 = vunpack.c.l.b16 %v399
      %v624 = vpack.c.b16 %v593, %v592
      %v625 = vpack.c.b16 %v595, %v594
      %v626 = vpack.c.b16 %v597, %v596
      %v627 = vpack.c.b16 %v599, %v598
      %v628 = vpack.c.b16 %v601, %v600
      %v629 = vpack.c.b16 %v603, %v602
      %v630 = vpack.c.b16 %v605, %v604
      %v631 = vpack.c.b16 %v607, %v606
      %v632 = vpack.c.b16 %v609, %v608
      %v633 = vpack.c.b16 %v611, %v610
      %v634 = vpack.c.b16 %v613, %v612
      %v635 = vpack.c.b16 %v615, %v614
      %v636 = vpack.c.b16 %v617, %v616
      %v637 = vpack.c.b16 %v619, %v618
      %v638 = vpack.c.b16 %v621, %v620
      %v639 = vpack.c.b16 %v623, %v622
      %656 = vmatprep.subr.bf16.mxu0 0
      %657 = vmatpush1.bf16.msra.mxu0 %v624
      %658 = vmatprep.subr.bf16.mxu0 0
      %659 = vmatpush1.bf16.msra.mxu0 %v625
      %660 = vmatprep.subr.bf16.mxu0 0
      %661 = vmatpush1.bf16.msra.mxu0 %v626
      %662 = vmatprep.subr.bf16.mxu0 0
      %663 = vmatpush1.bf16.msra.mxu0 %v627
      %664 = vmatprep.subr.bf16.mxu0 0
      %665 = vmatpush1.bf16.msra.mxu0 %v628
      %666 = vmatprep.subr.bf16.mxu0 0
      %667 = vmatpush1.bf16.msra.mxu0 %v629
      %668 = vmatprep.subr.bf16.mxu0 0
      %669 = vmatpush1.bf16.msra.mxu0 %v630
      %670 = vmatprep.subr.bf16.mxu0 0
      %671 = vmatpush1.bf16.msra.mxu0 %v631
      %672 = vmatprep.subr.bf16.mxu0 0
      %673 = vmatpush1.bf16.msra.mxu0 %v632
      %674 = vmatprep.subr.bf16.mxu0 0
      %675 = vmatpush1.bf16.msra.mxu0 %v633
      %676 = vmatprep.subr.bf16.mxu0 0
      %677 = vmatpush1.bf16.msra.mxu0 %v634
      %678 = vmatprep.subr.bf16.mxu0 0
      %679 = vmatpush1.bf16.msra.mxu0 %v635
      %680 = vmatprep.subr.bf16.mxu0 0
      %681 = vmatpush1.bf16.msra.mxu0 %v636
      %682 = vmatprep.subr.bf16.mxu0 0
      %683 = vmatpush1.bf16.msra.mxu0 %v637
      %684 = vmatprep.subr.bf16.mxu0 0
      %685 = vmatpush1.bf16.msra.mxu0 %v638
      %686 = vmatprep.subr.bf16.mxu0 0
      %687 = vmatpush1.bf16.msra.mxu0 %v639
      %688 = vmatprep.mubr.bf16.mxu0 %v497
      %689 = vmatmul.mubr.bf16.gmra.mrb[0].mxu0 %v496
      %v690 = vpop.f32.mrb[0].mxu0
      %v691 = vadd.f32 0.0, %v690
      %v692 = vpop.f32.mrb[0].mxu0
      %v693 = vpop.f32.mrb[0].mxu0
      %v694 = vadd.f32 0.0, %v693
      %v695 = vpop.f32.mrb[0].mxu0
      %696 = vmatprep.mubr.bf16.mxu0 %v499
      %697 = vmatmul.mubr.bf16.gmra.mrb[0].mxu0 %v498
      %v698 = vpop.f32.mrb[0].mxu0
      %v699 = vadd.f32 0.0, %v698
      %v700 = vpop.f32.mrb[0].mxu0
      %v701 = vpop.f32.mrb[0].mxu0
      %v702 = vadd.f32 0.0, %v701
      %v703 = vpop.f32.mrb[0].mxu0
      %704 = vmatprep.mubr.bf16.mxu0 %v501
      %705 = vmatmul.mubr.bf16.gmra.mrb[0].mxu0 %v500
      %v706 = vpop.f32.mrb[0].mxu0
      %v707 = vadd.f32 0.0, %v706
      %v708 = vpop.f32.mrb[0].mxu0
      %v709 = vpop.f32.mrb[0].mxu0
      %v710 = vadd.f32 0.0, %v709
      %v711 = vpop.f32.mrb[0].mxu0
      %712 = vmatprep.mubr.bf16.mxu0 %v503
      %713 = vmatmul.mubr.bf16.gmra.mrb[0].mxu0 %v502
      %v714 = vpop.f32.mrb[0].mxu0
      %v715 = vadd.f32 0.0, %v714
      %v716 = vpop.f32.mrb[0].mxu0
      %v717 = vpop.f32.mrb[0].mxu0
      %v718 = vadd.f32 0.0, %v717
      %v719 = vpop.f32.mrb[0].mxu0
      %720 = vmatprep.mubr.bf16.mxu0 %v505
      %721 = vmatmul.mubr.bf16.gmra.mrb[0].mxu0 %v504
      %v722 = vpop.f32.mrb[0].mxu0
      %v723 = vadd.f32 0.0, %v722
      %v724 = vpop.f32.mrb[0].mxu0
      %v725 = vpop.f32.mrb[0].mxu0
      %v726 = vadd.f32 0.0, %v725
      %v727 = vpop.f32.mrb[0].mxu0
      %728 = vmatprep.mubr.bf16.mxu0 %v507
      %729 = vmatmul.mubr.bf16.gmra.mrb[0].mxu0 %v506
      %v730 = vpop.f32.mrb[0].mxu0
      %v731 = vadd.f32 0.0, %v730
      %v732 = vpop.f32.mrb[0].mxu0
      %v733 = vpop.f32.mrb[0].mxu0
      %v734 = vadd.f32 0.0, %v733
      %v735 = vpop.f32.mrb[0].mxu0
      %736 = vmatprep.mubr.bf16.mxu0 %v509
      %737 = vmatmul.mubr.bf16.gmra.mrb[0].mxu0 %v508
      %v738 = vpop.f32.mrb[0].mxu0
      %v739 = vadd.f32 0.0, %v738
      %v740 = vpop.f32.mrb[0].mxu0
      %v741 = vpop.f32.mrb[0].mxu0
      %v742 = vadd.f32 0.0, %v741
      %v743 = vpop.f32.mrb[0].mxu0
      %744 = vmatprep.mubr.bf16.mxu0 %v511
      %745 = vmatmul.mubr.bf16.gmra.mrb[0].mxu0 %v510
      %v746 = vpop.f32.mrb[0].mxu0
      %v747 = vadd.f32 0.0, %v746
      %v748 = vpop.f32.mrb[0].mxu0
      %v749 = vpop.f32.mrb[0].mxu0
      %v750 = vadd.f32 0.0, %v749
      %v751 = vpop.f32.mrb[0].mxu0
      %752 = vmatprep.mubr.bf16.mxu0 %v513
      %753 = vmatmul.mubr.bf16.gmra.mrb[0].mxu0 %v512
      %v754 = vpop.f32.mrb[0].mxu0
      %v755 = vadd.f32 0.0, %v754
      %v756 = vpop.f32.mrb[0].mxu0
      %v757 = vpop.f32.mrb[0].mxu0
      %v758 = vadd.f32 0.0, %v757
      %v759 = vpop.f32.mrb[0].mxu0
      %760 = vmatprep.mubr.bf16.mxu0 %v515
      %761 = vmatmul.mubr.bf16.gmra.mrb[0].mxu0 %v514
      %v762 = vpop.f32.mrb[0].mxu0
      %v763 = vadd.f32 0.0, %v762
      %v764 = vpop.f32.mrb[0].mxu0
      %v765 = vpop.f32.mrb[0].mxu0
      %v766 = vadd.f32 0.0, %v765
      %v767 = vpop.f32.mrb[0].mxu0
      %768 = vmatprep.mubr.bf16.mxu0 %v517
      %769 = vmatmul.mubr.bf16.gmra.mrb[0].mxu0 %v516
      %v770 = vpop.f32.mrb[0].mxu0
      %v771 = vadd.f32 0.0, %v770
      %v772 = vpop.f32.mrb[0].mxu0
      %v773 = vpop.f32.mrb[0].mxu0
      %v774 = vadd.f32 0.0, %v773
      %v775 = vpop.f32.mrb[0].mxu0
      %776 = vmatprep.mubr.bf16.mxu0 %v519
      %777 = vmatmul.mubr.bf16.gmra.mrb[0].mxu0 %v518
      %v778 = vpop.f32.mrb[0].mxu0
      %v779 = vadd.f32 0.0, %v778
      %v780 = vpop.f32.mrb[0].mxu0
      %v781 = vpop.f32.mrb[0].mxu0
      %v782 = vadd.f32 0.0, %v781
      %v783 = vpop.f32.mrb[0].mxu0
      %784 = vmatprep.mubr.bf16.mxu0 %v521
      %785 = vmatmul.mubr.bf16.gmra.mrb[0].mxu0 %v520
      %v786 = vpop.f32.mrb[0].mxu0
      %v787 = vadd.f32 0.0, %v786
      %v788 = vpop.f32.mrb[0].mxu0
      %v789 = vpop.f32.mrb[0].mxu0
      %v790 = vadd.f32 0.0, %v789
      %v791 = vpop.f32.mrb[0].mxu0
      %792 = vmatprep.mubr.bf16.mxu0 %v523
      %793 = vmatmul.mubr.bf16.gmra.mrb[0].mxu0 %v522
      %v794 = vpop.f32.mrb[0].mxu0
      %v795 = vadd.f32 0.0, %v794
      %v796 = vpop.f32.mrb[0].mxu0
      %v797 = vpop.f32.mrb[0].mxu0
      %v798 = vadd.f32 0.0, %v797
      %v799 = vpop.f32.mrb[0].mxu0
      %800 = vmatprep.mubr.bf16.mxu0 %v525
      %801 = vmatmul.mubr.bf16.gmra.mrb[0].mxu0 %v524
      %v802 = vpop.f32.mrb[0].mxu0
      %v803 = vadd.f32 0.0, %v802
      %v804 = vpop.f32.mrb[0].mxu0
      %v805 = vpop.f32.mrb[0].mxu0
      %v806 = vadd.f32 0.0, %v805
      %v807 = vpop.f32.mrb[0].mxu0
      %808 = vmatprep.mubr.bf16.mxu0 %v527
      %809 = vmatmul.mubr.bf16.gmra.mrb[0].mxu0 %v526
      %v810 = vpop.f32.mrb[0].mxu0
      %v811 = vadd.f32 0.0, %v810
      %v812 = vpop.f32.mrb[0].mxu0
      %v813 = vpop.f32.mrb[0].mxu0
      %v814 = vadd.f32 0.0, %v813
      %v815 = vpop.f32.mrb[0].mxu0
      %816 = vdwg.mxu0
      %v817 = vadd.f32 %v304, %v691
      %v818 = vadd.f32 %v305, %v694
      %v819 = vadd.f32 %v306, %v699
      %v820 = vadd.f32 %v307, %v702
      %v821 = vadd.f32 %v308, %v707
      %v822 = vadd.f32 %v309, %v710
      %v823 = vadd.f32 %v310, %v715
      %v824 = vadd.f32 %v311, %v718
      %v825 = vadd.f32 %v312, %v723
      %v826 = vadd.f32 %v313, %v726
      %v827 = vadd.f32 %v314, %v731
      %v828 = vadd.f32 %v315, %v734
      %v829 = vadd.f32 %v316, %v739
      %v830 = vadd.f32 %v317, %v742
      %v831 = vadd.f32 %v318, %v747
      %v832 = vadd.f32 %v319, %v750
      %v833 = vadd.f32 %v320, %v755
      %v834 = vadd.f32 %v321, %v758
      %v835 = vadd.f32 %v322, %v763
      %v836 = vadd.f32 %v323, %v766
      %v837 = vadd.f32 %v324, %v771
      %v838 = vadd.f32 %v325, %v774
      %v839 = vadd.f32 %v326, %v779
      %v840 = vadd.f32 %v327, %v782
      %v841 = vadd.f32 %v328, %v787
      %v842 = vadd.f32 %v329, %v790
      %v843 = vadd.f32 %v330, %v795
      %v844 = vadd.f32 %v331, %v798
      %v845 = vadd.f32 %v332, %v803
      %v846 = vadd.f32 %v333, %v806
      %v847 = vadd.f32 %v334, %v811
      %v848 = vadd.f32 %v335, %v814
      %849 = vst [vmem:[#allocation2] sm:$0xff] %v817
      %850 = vst [vmem:[#allocation2 + $0x8] sm:$0xff] %v818
      %851 = vst [vmem:[#allocation2 + $0x10] sm:$0xff] %v819
      %852 = vst [vmem:[#allocation2 + $0x18] sm:$0xff] %v820
      %853 = vst [vmem:[#allocation2 + $0x20] sm:$0xff] %v821
      %854 = vst [vmem:[#allocation2 + $0x28] sm:$0xff] %v822
      %855 = vst [vmem:[#allocation2 + $0x30] sm:$0xff] %v823
      %856 = vst [vmem:[#allocation2 + $0x38] sm:$0xff] %v824
      %857 = vst [vmem:[#allocation2 + $0x40] sm:$0xff] %v825
      %858 = vst [vmem:[#allocation2 + $0x48] sm:$0xff] %v826
      %859 = vst [vmem:[#allocation2 + $0x50] sm:$0xff] %v827
      %860 = vst [vmem:[#allocation2 + $0x58] sm:$0xff] %v828
      %861 = vst [vmem:[#allocation2 + $0x60] sm:$0xff] %v829
      %862 = vst [vmem:[#allocation2 + $0x68] sm:$0xff] %v830
      %863 = vst [vmem:[#allocation2 + $0x70] sm:$0xff] %v831
      %864 = vst [vmem:[#allocation2 + $0x78] sm:$0xff] %v832
      %865 = vst [vmem:[#allocation2 + $0x80] sm:$0xff] %v833
      %866 = vst [vmem:[#allocation2 + $0x88] sm:$0xff] %v834
      %867 = vst [vmem:[#allocation2 + $0x90] sm:$0xff] %v835
      %868 = vst [vmem:[#allocation2 + $0x98] sm:$0xff] %v836
      %869 = vst [vmem:[#allocation2 + $0xa0] sm:$0xff] %v837
      %870 = vst [vmem:[#allocation2 + $0xa8] sm:$0xff] %v838
      %871 = vst [vmem:[#allocation2 + $0xb0] sm:$0xff] %v839
      %872 = vst [vmem:[#allocation2 + $0xb8] sm:$0xff] %v840
      %873 = vst [vmem:[#allocation2 + $0xc0] sm:$0xff] %v841
      %874 = vst [vmem:[#allocation2 + $0xc8] sm:$0xff] %v842
      %875 = vst [vmem:[#allocation2 + $0xd0] sm:$0xff] %v843
      %876 = vst [vmem:[#allocation2 + $0xd8] sm:$0xff] %v844
      %877 = vst [vmem:[#allocation2 + $0xe0] sm:$0xff] %v845
      %878 = vst [vmem:[#allocation2 + $0xe8] sm:$0xff] %v846
      %879 = vst [vmem:[#allocation2 + $0xf0] sm:$0xff] %v847
      %880 = vst [vmem:[#allocation2 + $0xf8] sm:$0xff] %v848
      // Predicated region
      $region37: #{yolo_pafpn_forward.55} parent=31 // pred_check
        %p881 = pneg %p268
      $region38: #{yolo_pafpn_forward.55} parent=31 // pred_check_branch
        %883 = sbr.rel (%p881) target = $region40
      $region39: #{yolo_pafpn_forward.55} parent=31 // pred_region
        %v884 = vld [vmem:[#allocation2] sm:$0xff]
        %v885 = vld [vmem:[#allocation2 + $0x8] sm:$0xff]
        %v886 = vld [vmem:[#allocation2 + $0x10] sm:$0xff]
        %v887 = vld [vmem:[#allocation2 + $0x18] sm:$0xff]
        %v888 = vld [vmem:[#allocation2 + $0x20] sm:$0xff]
        %v889 = vld [vmem:[#allocation2 + $0x28] sm:$0xff]
        %v890 = vld [vmem:[#allocation2 + $0x30] sm:$0xff]
        %v891 = vld [vmem:[#allocation2 + $0x38] sm:$0xff]
        %v892 = vld [vmem:[#allocation2 + $0x40] sm:$0xff]
        %v893 = vld [vmem:[#allocation2 + $0x48] sm:$0xff]
        %v894 = vld [vmem:[#allocation2 + $0x50] sm:$0xff]
        %v895 = vld [vmem:[#allocation2 + $0x58] sm:$0xff]
        %v896 = vld [vmem:[#allocation2 + $0x60] sm:$0xff]
        %v897 = vld [vmem:[#allocation2 + $0x68] sm:$0xff]
        %v898 = vld [vmem:[#allocation2 + $0x70] sm:$0xff]
        %v899 = vld [vmem:[#allocation2 + $0x78] sm:$0xff]
        %v900 = vld [vmem:[#allocation2 + $0x80] sm:$0xff]
        %v901 = vld [vmem:[#allocation2 + $0x88] sm:$0xff]
        %v902 = vld [vmem:[#allocation2 + $0x90] sm:$0xff]
        %v903 = vld [vmem:[#allocation2 + $0x98] sm:$0xff]
        %v904 = vld [vmem:[#allocation2 + $0xa0] sm:$0xff]
        %v905 = vld [vmem:[#allocation2 + $0xa8] sm:$0xff]
        %v906 = vld [vmem:[#allocation2 + $0xb0] sm:$0xff]
        %v907 = vld [vmem:[#allocation2 + $0xb8] sm:$0xff]
        %v908 = vld [vmem:[#allocation2 + $0xc0] sm:$0xff]
        %v909 = vld [vmem:[#allocation2 + $0xc8] sm:$0xff]
        %v910 = vld [vmem:[#allocation2 + $0xd0] sm:$0xff]
        %v911 = vld [vmem:[#allocation2 + $0xd8] sm:$0xff]
        %v912 = vld [vmem:[#allocation2 + $0xe0] sm:$0xff]
        %v913 = vld [vmem:[#allocation2 + $0xe8] sm:$0xff]
        %v914 = vld [vmem:[#allocation2 + $0xf0] sm:$0xff]
        %v915 = vld [vmem:[#allocation2 + $0xf8] sm:$0xff]
        %v916 = vld [vmem:[%s257] sm:$0x1]
        %v918 = vlaneseq
        %v919 = vshrl.u32 %v918, 7
        %v920 = vsub.s32 0, %v919
        %v921 = vrot.slane %v916, %v920
        %v923 = vadd.f32 %v884, %v921
        %v924 = vadd.f32 %v885, %v921
        %v925 = vadd.f32 %v886, %v921
        %v926 = vadd.f32 %v887, %v921
        %v927 = vadd.f32 %v888, %v921
        %v928 = vadd.f32 %v889, %v921
        %v929 = vadd.f32 %v890, %v921
        %v930 = vadd.f32 %v891, %v921
        %v931 = vadd.f32 %v892, %v921
        %v932 = vadd.f32 %v893, %v921
        %v933 = vadd.f32 %v894, %v921
        %v934 = vadd.f32 %v895, %v921
        %v935 = vadd.f32 %v896, %v921
        %v936 = vadd.f32 %v897, %v921
        %v937 = vadd.f32 %v898, %v921
        %v938 = vadd.f32 %v899, %v921
        %v939 = vadd.f32 %v900, %v921
        %v940 = vadd.f32 %v901, %v921
        %v941 = vadd.f32 %v902, %v921
        %v942 = vadd.f32 %v903, %v921
        %v943 = vadd.f32 %v904, %v921
        %v944 = vadd.f32 %v905, %v921
        %v945 = vadd.f32 %v906, %v921
        %v946 = vadd.f32 %v907, %v921
        %v947 = vadd.f32 %v908, %v921
        %v948 = vadd.f32 %v909, %v921
        %v949 = vadd.f32 %v910, %v921
        %v950 = vadd.f32 %v911, %v921
        %v951 = vadd.f32 %v912, %v921
        %v952 = vadd.f32 %v913, %v921
        %v953 = vadd.f32 %v914, %v921
        %v954 = vadd.f32 %v915, %v921
        %v955 = vand.u32 2147483647, %v923
        %v956 = vand.u32 2147483647, %v924
        %v957 = vand.u32 2147483647, %v925
        %v958 = vand.u32 2147483647, %v926
        %v959 = vand.u32 2147483647, %v927
        %v960 = vand.u32 2147483647, %v928
        %v961 = vand.u32 2147483647, %v929
        %v962 = vand.u32 2147483647, %v930
        %v963 = vand.u32 2147483647, %v931
        %v964 = vand.u32 2147483647, %v932
        %v965 = vand.u32 2147483647, %v933
        %v966 = vand.u32 2147483647, %v934
        %v967 = vand.u32 2147483647, %v935
        %v968 = vand.u32 2147483647, %v936
        %v969 = vand.u32 2147483647, %v937
        %v970 = vand.u32 2147483647, %v938
        %v971 = vand.u32 2147483647, %v939
        %v972 = vand.u32 2147483647, %v940
        %v973 = vand.u32 2147483647, %v941
        %v974 = vand.u32 2147483647, %v942
        %v975 = vand.u32 2147483647, %v943
        %v976 = vand.u32 2147483647, %v944
        %v977 = vand.u32 2147483647, %v945
        %v978 = vand.u32 2147483647, %v946
        %v979 = vand.u32 2147483647, %v947
        %v980 = vand.u32 2147483647, %v948
        %v981 = vand.u32 2147483647, %v949
        %v982 = vand.u32 2147483647, %v950
        %v983 = vand.u32 2147483647, %v951
        %v984 = vand.u32 2147483647, %v952
        %v985 = vand.u32 2147483647, %v953
        %v986 = vand.u32 2147483647, %v954
        %v987 = vsub.f32 0.0, %v955
        %v988 = vsub.f32 0.0, %v956
        %v989 = vsub.f32 0.0, %v957
        %v990 = vsub.f32 0.0, %v958
        %v991 = vsub.f32 0.0, %v959
        %v992 = vsub.f32 0.0, %v960
        %v993 = vsub.f32 0.0, %v961
        %v994 = vsub.f32 0.0, %v962
        %v995 = vsub.f32 0.0, %v963
        %v996 = vsub.f32 0.0, %v964
        %v997 = vsub.f32 0.0, %v965
        %v998 = vsub.f32 0.0, %v966
        %v999 = vsub.f32 0.0, %v967
        %v1000 = vsub.f32 0.0, %v968
        %v1001 = vsub.f32 0.0, %v969
        %v1002 = vsub.f32 0.0, %v970
        %v1003 = vsub.f32 0.0, %v971
        %v1004 = vsub.f32 0.0, %v972
        %v1005 = vsub.f32 0.0, %v973
        %v1006 = vsub.f32 0.0, %v974
        %v1007 = vsub.f32 0.0, %v975
        %v1008 = vsub.f32 0.0, %v976
        %v1009 = vsub.f32 0.0, %v977
        %v1010 = vsub.f32 0.0, %v978
        %v1011 = vsub.f32 0.0, %v979
        %v1012 = vsub.f32 0.0, %v980
        %v1013 = vsub.f32 0.0, %v981
        %v1014 = vsub.f32 0.0, %v982
        %v1015 = vsub.f32 0.0, %v983
        %v1016 = vsub.f32 0.0, %v984
        %v1017 = vsub.f32 0.0, %v985
        %v1018 = vsub.f32 0.0, %v986
        %v1019 = vmul.f32 %v987, 1.442695
        %v1020 = vpow.pop %v1019
        %v1021 = vmul.f32 %v988, 1.442695
        %v1022 = vpow.pop %v1021
        %v1023 = vmul.f32 %v989, 1.442695
        %v1024 = vpow.pop %v1023
        %v1025 = vmul.f32 %v990, 1.442695
        %v1026 = vpow.pop %v1025
        %v1027 = vmul.f32 %v991, 1.442695
        %v1028 = vpow.pop %v1027
        %v1029 = vmul.f32 %v992, 1.442695
        %v1030 = vpow.pop %v1029
        %v1031 = vmul.f32 %v993, 1.442695
        %v1032 = vpow.pop %v1031
        %v1033 = vmul.f32 %v994, 1.442695
        %v1034 = vpow.pop %v1033
        %v1035 = vmul.f32 %v995, 1.442695
        %v1036 = vpow.pop %v1035
        %v1037 = vmul.f32 %v996, 1.442695
        %v1038 = vpow.pop %v1037
        %v1039 = vmul.f32 %v997, 1.442695
        %v1040 = vpow.pop %v1039
        %v1041 = vmul.f32 %v998, 1.442695
        %v1042 = vpow.pop %v1041
        %v1043 = vmul.f32 %v999, 1.442695
        %v1044 = vpow.pop %v1043
        %v1045 = vmul.f32 %v1000, 1.442695
        %v1046 = vpow.pop %v1045
        %v1047 = vmul.f32 %v1001, 1.442695
        %v1048 = vpow.pop %v1047
        %v1049 = vmul.f32 %v1002, 1.442695
        %v1050 = vpow.pop %v1049
        %v1051 = vmul.f32 %v1003, 1.442695
        %v1052 = vpow.pop %v1051
        %v1053 = vmul.f32 %v1004, 1.442695
        %v1054 = vpow.pop %v1053
        %v1055 = vmul.f32 %v1005, 1.442695
        %v1056 = vpow.pop %v1055
        %v1057 = vmul.f32 %v1006, 1.442695
        %v1058 = vpow.pop %v1057
        %v1059 = vmul.f32 %v1007, 1.442695
        %v1060 = vpow.pop %v1059
        %v1061 = vmul.f32 %v1008, 1.442695
        %v1062 = vpow.pop %v1061
        %v1063 = vmul.f32 %v1009, 1.442695
        %v1064 = vpow.pop %v1063
        %v1065 = vmul.f32 %v1010, 1.442695
        %v1066 = vpow.pop %v1065
        %v1067 = vmul.f32 %v1011, 1.442695
        %v1068 = vpow.pop %v1067
        %v1069 = vmul.f32 %v1012, 1.442695
        %v1070 = vpow.pop %v1069
        %v1071 = vmul.f32 %v1013, 1.442695
        %v1072 = vpow.pop %v1071
        %v1073 = vmul.f32 %v1014, 1.442695
        %v1074 = vpow.pop %v1073
        %v1075 = vmul.f32 %v1015, 1.442695
        %v1076 = vpow.pop %v1075
        %v1077 = vmul.f32 %v1016, 1.442695
        %v1078 = vpow.pop %v1077
        %v1079 = vmul.f32 %v1017, 1.442695
        %v1080 = vpow.pop %v1079
        %v1081 = vmul.f32 %v1018, 1.442695
        %v1082 = vpow.pop %v1081
        %v1083 = vadd.f32 %v1020, 1.0
        %v1084 = vadd.f32 %v1022, 1.0
        %v1085 = vadd.f32 %v1024, 1.0
        %v1086 = vadd.f32 %v1026, 1.0
        %v1087 = vadd.f32 %v1028, 1.0
        %v1088 = vadd.f32 %v1030, 1.0
        %v1089 = vadd.f32 %v1032, 1.0
        %v1090 = vadd.f32 %v1034, 1.0
        %v1091 = vadd.f32 %v1036, 1.0
        %v1092 = vadd.f32 %v1038, 1.0
        %v1093 = vadd.f32 %v1040, 1.0
        %v1094 = vadd.f32 %v1042, 1.0
        %v1095 = vadd.f32 %v1044, 1.0
        %v1096 = vadd.f32 %v1046, 1.0
        %v1097 = vadd.f32 %v1048, 1.0
        %v1098 = vadd.f32 %v1050, 1.0
        %v1099 = vadd.f32 %v1052, 1.0
        %v1100 = vadd.f32 %v1054, 1.0
        %v1101 = vadd.f32 %v1056, 1.0
        %v1102 = vadd.f32 %v1058, 1.0
        %v1103 = vadd.f32 %v1060, 1.0
        %v1104 = vadd.f32 %v1062, 1.0
        %v1105 = vadd.f32 %v1064, 1.0
        %v1106 = vadd.f32 %v1066, 1.0
        %v1107 = vadd.f32 %v1068, 1.0
        %v1108 = vadd.f32 %v1070, 1.0
        %v1109 = vadd.f32 %v1072, 1.0
        %v1110 = vadd.f32 %v1074, 1.0
        %v1111 = vadd.f32 %v1076, 1.0
        %v1112 = vadd.f32 %v1078, 1.0
        %v1113 = vadd.f32 %v1080, 1.0
        %v1114 = vadd.f32 %v1082, 1.0
        %v1115 = vrcp.pop %v1083
        %v1116 = vrcp.pop %v1084
        %v1117 = vrcp.pop %v1085
        %v1118 = vrcp.pop %v1086
        %v1119 = vrcp.pop %v1087
        %v1120 = vrcp.pop %v1088
        %v1121 = vrcp.pop %v1089
        %v1122 = vrcp.pop %v1090
        %v1123 = vrcp.pop %v1091
        %v1124 = vrcp.pop %v1092
        %v1125 = vrcp.pop %v1093
        %v1126 = vrcp.pop %v1094
        %v1127 = vrcp.pop %v1095
        %v1128 = vrcp.pop %v1096
        %v1129 = vrcp.pop %v1097
        %v1130 = vrcp.pop %v1098
        %v1131 = vrcp.pop %v1099
        %v1132 = vrcp.pop %v1100
        %v1133 = vrcp.pop %v1101
        %v1134 = vrcp.pop %v1102
        %v1135 = vrcp.pop %v1103
        %v1136 = vrcp.pop %v1104
        %v1137 = vrcp.pop %v1105
        %v1138 = vrcp.pop %v1106
        %v1139 = vrcp.pop %v1107
        %v1140 = vrcp.pop %v1108
        %v1141 = vrcp.pop %v1109
        %v1142 = vrcp.pop %v1110
        %v1143 = vrcp.pop %v1111
        %v1144 = vrcp.pop %v1112
        %v1145 = vrcp.pop %v1113
        %v1146 = vrcp.pop %v1114
        %vm1147 = vcmp.ge.f32.partialorder %v923, 0.0
        %vm1148 = vcmp.ge.f32.partialorder %v924, 0.0
        %vm1149 = vcmp.ge.f32.partialorder %v925, 0.0
        %vm1150 = vcmp.ge.f32.partialorder %v926, 0.0
        %vm1151 = vcmp.ge.f32.partialorder %v927, 0.0
        %vm1152 = vcmp.ge.f32.partialorder %v928, 0.0
        %vm1153 = vcmp.ge.f32.partialorder %v929, 0.0
        %vm1154 = vcmp.ge.f32.partialorder %v930, 0.0
        %vm1155 = vcmp.ge.f32.partialorder %v931, 0.0
        %vm1156 = vcmp.ge.f32.partialorder %v932, 0.0
        %vm1157 = vcmp.ge.f32.partialorder %v933, 0.0
        %vm1158 = vcmp.ge.f32.partialorder %v934, 0.0
        %vm1159 = vcmp.ge.f32.partialorder %v935, 0.0
        %vm1160 = vcmp.ge.f32.partialorder %v936, 0.0
        %vm1161 = vcmp.ge.f32.partialorder %v937, 0.0
        %vm1162 = vcmp.ge.f32.partialorder %v938, 0.0
        %vm1163 = vcmp.ge.f32.partialorder %v939, 0.0
        %vm1164 = vcmp.ge.f32.partialorder %v940, 0.0
        %vm1165 = vcmp.ge.f32.partialorder %v941, 0.0
        %vm1166 = vcmp.ge.f32.partialorder %v942, 0.0
        %vm1167 = vcmp.ge.f32.partialorder %v943, 0.0
        %vm1168 = vcmp.ge.f32.partialorder %v944, 0.0
        %vm1169 = vcmp.ge.f32.partialorder %v945, 0.0
        %vm1170 = vcmp.ge.f32.partialorder %v946, 0.0
        %vm1171 = vcmp.ge.f32.partialorder %v947, 0.0
        %vm1172 = vcmp.ge.f32.partialorder %v948, 0.0
        %vm1173 = vcmp.ge.f32.partialorder %v949, 0.0
        %vm1174 = vcmp.ge.f32.partialorder %v950, 0.0
        %vm1175 = vcmp.ge.f32.partialorder %v951, 0.0
        %vm1176 = vcmp.ge.f32.partialorder %v952, 0.0
        %vm1177 = vcmp.ge.f32.partialorder %v953, 0.0
        %vm1178 = vcmp.ge.f32.partialorder %v954, 0.0
        %v1179 = vsub.f32 1.0, %v1115
        %v1180 = vsub.f32 1.0, %v1116
        %v1181 = vsub.f32 1.0, %v1117
        %v1182 = vsub.f32 1.0, %v1118
        %v1183 = vsub.f32 1.0, %v1119
        %v1184 = vsub.f32 1.0, %v1120
        %v1185 = vsub.f32 1.0, %v1121
        %v1186 = vsub.f32 1.0, %v1122
        %v1187 = vsub.f32 1.0, %v1123
        %v1188 = vsub.f32 1.0, %v1124
        %v1189 = vsub.f32 1.0, %v1125
        %v1190 = vsub.f32 1.0, %v1126
        %v1191 = vsub.f32 1.0, %v1127
        %v1192 = vsub.f32 1.0, %v1128
        %v1193 = vsub.f32 1.0, %v1129
        %v1194 = vsub.f32 1.0, %v1130
        %v1195 = vsub.f32 1.0, %v1131
        %v1196 = vsub.f32 1.0, %v1132
        %v1197 = vsub.f32 1.0, %v1133
        %v1198 = vsub.f32 1.0, %v1134
        %v1199 = vsub.f32 1.0, %v1135
        %v1200 = vsub.f32 1.0, %v1136
        %v1201 = vsub.f32 1.0, %v1137
        %v1202 = vsub.f32 1.0, %v1138
        %v1203 = vsub.f32 1.0, %v1139
        %v1204 = vsub.f32 1.0, %v1140
        %v1205 = vsub.f32 1.0, %v1141
        %v1206 = vsub.f32 1.0, %v1142
        %v1207 = vsub.f32 1.0, %v1143
        %v1208 = vsub.f32 1.0, %v1144
        %v1209 = vsub.f32 1.0, %v1145
        %v1210 = vsub.f32 1.0, %v1146
        %v1211 = vsel %vm1147, %v1115, %v1179
        %v1212 = vsel %vm1148, %v1116, %v1180
        %v1213 = vsel %vm1149, %v1117, %v1181
        %v1214 = vsel %vm1150, %v1118, %v1182
        %v1215 = vsel %vm1151, %v1119, %v1183
        %v1216 = vsel %vm1152, %v1120, %v1184
        %v1217 = vsel %vm1153, %v1121, %v1185
        %v1218 = vsel %vm1154, %v1122, %v1186
        %v1219 = vsel %vm1155, %v1123, %v1187
        %v1220 = vsel %vm1156, %v1124, %v1188
        %v1221 = vsel %vm1157, %v1125, %v1189
        %v1222 = vsel %vm1158, %v1126, %v1190
        %v1223 = vsel %vm1159, %v1127, %v1191
        %v1224 = vsel %vm1160, %v1128, %v1192
        %v1225 = vsel %vm1161, %v1129, %v1193
        %v1226 = vsel %vm1162, %v1130, %v1194
        %v1227 = vsel %vm1163, %v1131, %v1195
        %v1228 = vsel %vm1164, %v1132, %v1196
        %v1229 = vsel %vm1165, %v1133, %v1197
        %v1230 = vsel %vm1166, %v1134, %v1198
        %v1231 = vsel %vm1167, %v1135, %v1199
        %v1232 = vsel %vm1168, %v1136, %v1200
        %v1233 = vsel %vm1169, %v1137, %v1201
        %v1234 = vsel %vm1170, %v1138, %v1202
        %v1235 = vsel %vm1171, %v1139, %v1203
        %v1236 = vsel %vm1172, %v1140, %v1204
        %v1237 = vsel %vm1173, %v1141, %v1205
        %v1238 = vsel %vm1174, %v1142, %v1206
        %v1239 = vsel %vm1175, %v1143, %v1207
        %v1240 = vsel %vm1176, %v1144, %v1208
        %v1241 = vsel %vm1177, %v1145, %v1209
        %v1242 = vsel %vm1178, %v1146, %v1210
        %v1243 = vmul.f32 %v923, %v1211
        %v1244 = vmul.f32 %v924, %v1212
        %v1245 = vmul.f32 %v925, %v1213
        %v1246 = vmul.f32 %v926, %v1214
        %v1247 = vmul.f32 %v927, %v1215
        %v1248 = vmul.f32 %v928, %v1216
        %v1249 = vmul.f32 %v929, %v1217
        %v1250 = vmul.f32 %v930, %v1218
        %v1251 = vmul.f32 %v931, %v1219
        %v1252 = vmul.f32 %v932, %v1220
        %v1253 = vmul.f32 %v933, %v1221
        %v1254 = vmul.f32 %v934, %v1222
        %v1255 = vmul.f32 %v935, %v1223
        %v1256 = vmul.f32 %v936, %v1224
        %v1257 = vmul.f32 %v937, %v1225
        %v1258 = vmul.f32 %v938, %v1226
        %v1259 = vmul.f32 %v939, %v1227
        %v1260 = vmul.f32 %v940, %v1228
        %v1261 = vmul.f32 %v941, %v1229
        %v1262 = vmul.f32 %v942, %v1230
        %v1263 = vmul.f32 %v943, %v1231
        %v1264 = vmul.f32 %v944, %v1232
        %v1265 = vmul.f32 %v945, %v1233
        %v1266 = vmul.f32 %v946, %v1234
        %v1267 = vmul.f32 %v947, %v1235
        %v1268 = vmul.f32 %v948, %v1236
        %v1269 = vmul.f32 %v949, %v1237
        %v1270 = vmul.f32 %v950, %v1238
        %v1271 = vmul.f32 %v951, %v1239
        %v1272 = vmul.f32 %v952, %v1240
        %v1273 = vmul.f32 %v953, %v1241
        %v1274 = vmul.f32 %v954, %v1242
        %v1275 = vpack.c.bf16 %v1244, %v1243
        %v1276 = vpack.c.bf16 %v1246, %v1245
        %v1277 = vpack.c.bf16 %v1248, %v1247
        %v1278 = vpack.c.bf16 %v1250, %v1249
        %v1279 = vpack.c.bf16 %v1252, %v1251
        %v1280 = vpack.c.bf16 %v1254, %v1253
        %v1281 = vpack.c.bf16 %v1256, %v1255
        %v1282 = vpack.c.bf16 %v1258, %v1257
        %v1283 = vpack.c.bf16 %v1260, %v1259
        %v1284 = vpack.c.bf16 %v1262, %v1261
        %v1285 = vpack.c.bf16 %v1264, %v1263
        %v1286 = vpack.c.bf16 %v1266, %v1265
        %v1287 = vpack.c.bf16 %v1268, %v1267
        %v1288 = vpack.c.bf16 %v1270, %v1269
        %v1289 = vpack.c.bf16 %v1272, %v1271
        %v1290 = vpack.c.bf16 %v1274, %v1273
        %v1307 = vunpack.c.l.b16 %v1275
        %v1308 = vunpack.c.h.b16 %v1275
        %v1309 = vunpack.c.l.b16 %v1276
        %v1310 = vunpack.c.h.b16 %v1276
        %v1311 = vunpack.c.l.b16 %v1277
        %v1312 = vunpack.c.h.b16 %v1277
        %v1313 = vunpack.c.l.b16 %v1278
        %v1314 = vunpack.c.h.b16 %v1278
        %v1315 = vunpack.c.l.b16 %v1279
        %v1316 = vunpack.c.h.b16 %v1279
        %v1317 = vunpack.c.l.b16 %v1280
        %v1318 = vunpack.c.h.b16 %v1280
        %v1319 = vunpack.c.l.b16 %v1281
        %v1320 = vunpack.c.h.b16 %v1281
        %v1321 = vunpack.c.l.b16 %v1282
        %v1322 = vunpack.c.h.b16 %v1282
        %v1323 = vunpack.c.l.b16 %v1283
        %v1324 = vunpack.c.h.b16 %v1283
        %v1325 = vunpack.c.l.b16 %v1284
        %v1326 = vunpack.c.h.b16 %v1284
        %v1327 = vunpack.c.l.b16 %v1285
        %v1328 = vunpack.c.h.b16 %v1285
        %v1329 = vunpack.c.l.b16 %v1286
        %v1330 = vunpack.c.h.b16 %v1286
        %v1331 = vunpack.c.l.b16 %v1287
        %v1332 = vunpack.c.h.b16 %v1287
        %v1333 = vunpack.c.l.b16 %v1288
        %v1334 = vunpack.c.h.b16 %v1288
        %v1335 = vunpack.c.l.b16 %v1289
        %v1336 = vunpack.c.h.b16 %v1289
        %v1337 = vunpack.c.l.b16 %v1290
        %v1338 = vunpack.c.h.b16 %v1290
        %v1339 = vpack.c.b16 %v1307, %v1307
        %v1340 = vpack.c.b16 %v1308, %v1308
        %v1341 = vpack.c.b16 %v1309, %v1309
        %v1342 = vpack.c.b16 %v1310, %v1310
        %v1343 = vpack.c.b16 %v1311, %v1311
        %v1344 = vpack.c.b16 %v1312, %v1312
        %v1345 = vpack.c.b16 %v1313, %v1313
        %v1346 = vpack.c.b16 %v1314, %v1314
        %v1347 = vpack.c.b16 %v1315, %v1315
        %v1348 = vpack.c.b16 %v1316, %v1316
        %v1349 = vpack.c.b16 %v1317, %v1317
        %v1350 = vpack.c.b16 %v1318, %v1318
        %v1351 = vpack.c.b16 %v1319, %v1319
        %v1352 = vpack.c.b16 %v1320, %v1320
        %v1353 = vpack.c.b16 %v1321, %v1321
        %v1354 = vpack.c.b16 %v1322, %v1322
        %v1355 = vpack.c.b16 %v1323, %v1323
        %v1356 = vpack.c.b16 %v1324, %v1324
        %v1357 = vpack.c.b16 %v1325, %v1325
        %v1358 = vpack.c.b16 %v1326, %v1326
        %v1359 = vpack.c.b16 %v1327, %v1327
        %v1360 = vpack.c.b16 %v1328, %v1328
        %v1361 = vpack.c.b16 %v1329, %v1329
        %v1362 = vpack.c.b16 %v1330, %v1330
        %v1363 = vpack.c.b16 %v1331, %v1331
        %v1364 = vpack.c.b16 %v1332, %v1332
        %v1365 = vpack.c.b16 %v1333, %v1333
        %v1366 = vpack.c.b16 %v1334, %v1334
        %v1367 = vpack.c.b16 %v1335, %v1335
        %v1368 = vpack.c.b16 %v1336, %v1336
        %v1369 = vpack.c.b16 %v1337, %v1337
        %v1370 = vpack.c.b16 %v1338, %v1338
        %1403 = vst [vmem:[%s265] sm:$0xf] %v1339
        %1404 = vst [vmem:[%s265 + $0x4] sm:$0xf] %v1340
        %1405 = vst [vmem:[%s265 + $0x8] sm:$0xf] %v1341
        %1406 = vst [vmem:[%s265 + $0xc] sm:$0xf] %v1342
        %1407 = vst [vmem:[%s265 + $0x10] sm:$0xf] %v1343
        %1408 = vst [vmem:[%s265 + $0x14] sm:$0xf] %v1344
        %1409 = vst [vmem:[%s265 + $0x18] sm:$0xf] %v1345
        %1410 = vst [vmem:[%s265 + $0x1c] sm:$0xf] %v1346
        %1411 = vst [vmem:[%s265 + $0x20] sm:$0xf] %v1347
        %1412 = vst [vmem:[%s265 + $0x24] sm:$0xf] %v1348
        %1413 = vst [vmem:[%s265 + $0x28] sm:$0xf] %v1349
        %1414 = vst [vmem:[%s265 + $0x2c] sm:$0xf] %v1350
        %1415 = vst [vmem:[%s265 + $0x30] sm:$0xf] %v1351
        %1416 = vst [vmem:[%s265 + $0x34] sm:$0xf] %v1352
        %1417 = vst [vmem:[%s265 + $0x38] sm:$0xf] %v1353
        %1418 = vst [vmem:[%s265 + $0x3c] sm:$0xf] %v1354
        %1419 = vst [vmem:[%s265 + $0x40] sm:$0xf] %v1355
        %1420 = vst [vmem:[%s265 + $0x44] sm:$0xf] %v1356
        %1421 = vst [vmem:[%s265 + $0x48] sm:$0xf] %v1357
        %1422 = vst [vmem:[%s265 + $0x4c] sm:$0xf] %v1358
        %1423 = vst [vmem:[%s265 + $0x50] sm:$0xf] %v1359
        %1424 = vst [vmem:[%s265 + $0x54] sm:$0xf] %v1360
        %1425 = vst [vmem:[%s265 + $0x58] sm:$0xf] %v1361
        %1426 = vst [vmem:[%s265 + $0x5c] sm:$0xf] %v1362
        %1427 = vst [vmem:[%s265 + $0x60] sm:$0xf] %v1363
        %1428 = vst [vmem:[%s265 + $0x64] sm:$0xf] %v1364
        %1429 = vst [vmem:[%s265 + $0x68] sm:$0xf] %v1365
        %1430 = vst [vmem:[%s265 + $0x6c] sm:$0xf] %v1366
        %1431 = vst [vmem:[%s265 + $0x70] sm:$0xf] %v1367
        %1432 = vst [vmem:[%s265 + $0x74] sm:$0xf] %v1368
        %1433 = vst [vmem:[%s265 + $0x78] sm:$0xf] %v1369
        %1434 = vst [vmem:[%s265 + $0x7c] sm:$0xf] %v1370
      $region40: #{yolo_pafpn_forward.55} parent=31 // pred_fallthru
        _
      %s1435 = smul.u32 32, %s19
      %p1436 = scmp.lt.s32.totalorder %s1435, 63
      %s1437 = scalar_select %p1436, %s1435, 63
      %p1438 = scmp.lt.s32.totalorder %s20, 0
      %s1439 = scalar_select %p1438, %s20, 0
      %s1440 = sadd.s32 %s1439, %s1437
      %s1441 = smul.addr %s1440, 4
      %s1442 = scalar_lea.vmem %s3, %s1441
      // Predicated region
      $region41: #{yolo_pafpn_forward.55} parent=31 // pred_check
        %p1443 = pneg %p135
      $region42: #{yolo_pafpn_forward.55} parent=31 // pred_check_branch
        %1445 = sbr.rel (%p1443) target = $region44
      $region43: #{yolo_pafpn_forward.55} parent=31 // pred_region
        %s1446 = smul.u32 32, %s19
      $region44: #{yolo_pafpn_forward.55} parent=31 // pred_fallthru
        _
    $region32: #{yolo_pafpn_forward.55} parent=5 // pred_fallthru
      _
    %p1447 = scmp.le.s32.totalorder 2, %s9
    // Predicated region
    $region45: #{yolo_pafpn_forward.55} parent=5 // pred_check
      %p1448 = pneg %p1447
    $region46: #{yolo_pafpn_forward.55} parent=5 // pred_check_branch
      %1450 = sbr.rel (%p1448) target = $region48
    $region47: #{yolo_pafpn_forward.55} parent=5 // pred_region
      %s1451 = ssub.s32 %s9, 2
      // Predicated region
      $region49: #{yolo_pafpn_forward.55} parent=47 // pred_check
        %p1452 = pneg %p141
      $region50: #{yolo_pafpn_forward.55} parent=47 // pred_check_branch
        %1454 = sbr.rel (%p1452) target = $region52
      $region51: #{yolo_pafpn_forward.55} parent=47 // pred_region
        %s1455 = smul.u32 32, %s22
        %p1456 = scmp.lt.s32.totalorder %s1455, 63
        %s1457 = scalar_select %p1456, %s1455, 63
        %p1458 = scmp.lt.s32.totalorder %s23, 0
        %s1459 = scalar_select %p1458, %s23, 0
        %s1460 = sadd.s32 %s1459, %s1457
        %s1461 = smul.addr %s1460, 4
        %s1462 = scalar_lea.vmem %s3, %s1461
      $region52: #{yolo_pafpn_forward.55} parent=47 // pred_fallthru
        _
    $region48: #{yolo_pafpn_forward.55} parent=5 // pred_fallthru
      _
  $region6: #{yolo_pafpn_forward.55} parent=0 // loop_footer
    %s13 = sadd.s32 1, %s9
  $region7: #{yolo_pafpn_forward.55} parent=0 // loop_footer_branch
    %8 = sbr.rel target = $region3
  $region8: #{yolo_pafpn_forward.55} parent=0 // loop_exit
    _

// kernel: yolo_pafpn_forward.60
$region0: #{yolo_pafpn_forward.60}
  #allocation0 [shape = 'u32[]', space=smem, size = 0x4, offset = 0x4, fixed_abs, tag = 'smem constant byte address 0x4 - core index']
  #allocation1 [shape = 'u32[144,128]{1,0:T(1,128)}', space=vmem, size = 0x12000, scoped, tag = 'internal scratch']
  #allocation2 [shape = 'f32[128,128]{1,0:T(8,128)}', space=vmem, size = 0x10000, scoped, tag = 'scratch operand']
  %s0 = inlined_call_operand.vmem [shape: bf16[128,384], index: 0, kind: input, shape index: {}]
  %s1 = inlined_call_operand.vmem [shape: bf16[384,128], index: 1, kind: input, shape index: {}]
  %s2 = inlined_call_operand.vmem [shape: f32[1,128], index: 2, kind: input, shape index: {}]
  %s3 = inlined_call_operand.vmem [shape: bf16[128,128], index: 3, kind: output, shape index: {}]
  %s4 = sld [smem:[#allocation0]]
  $region30: #{yolo_pafpn_forward.60} parent=0
    _
  %s6 = ssub.s32 1, %s4
  %s7 = scalar_select 0, %s6, %s4
  // Predicated region
  $region2: #{yolo_pafpn_forward.60} parent=0 // pred_check
    _
  $region3: #{yolo_pafpn_forward.60} parent=0 // pred_check_branch
    %9 = sbr.rel (0) target = $region5
  $region4: #{yolo_pafpn_forward.60} parent=0 // pred_region
    _
  $region5: #{yolo_pafpn_forward.60} parent=0 // pred_fallthru
    _
  // Predicated region
  $region6: #{yolo_pafpn_forward.60} parent=0 // pred_check
    _
  $region7: #{yolo_pafpn_forward.60} parent=0 // pred_check_branch
    %11 = sbr.rel (0) target = $region9
  $region8: #{yolo_pafpn_forward.60} parent=0 // pred_region
    _
  $region9: #{yolo_pafpn_forward.60} parent=0 // pred_fallthru
    _
  // Predicated region
  $region10: #{yolo_pafpn_forward.60} parent=0 // pred_check
    _
  $region11: #{yolo_pafpn_forward.60} parent=0 // pred_check_branch
    %13 = sbr.rel (0) target = $region13
  $region12: #{yolo_pafpn_forward.60} parent=0 // pred_region
    _
  $region13: #{yolo_pafpn_forward.60} parent=0 // pred_fallthru
    _
  %p15 = scmp.eq.s32.totalorder 0, 0
  // Predicated region
  $region14: #{yolo_pafpn_forward.60} parent=0 // pred_check
    %p16 = pneg %p15
  $region15: #{yolo_pafpn_forward.60} parent=0 // pred_check_branch
    %18 = sbr.rel (%p16) target = $region17
  $region16: #{yolo_pafpn_forward.60} parent=0 // pred_region
    %19 = vst [vmem:[#allocation2] sm:$0xff] 0.0
    %20 = vst [vmem:[#allocation2 + $0x8] sm:$0xff] 0.0
    %21 = vst [vmem:[#allocation2 + $0x10] sm:$0xff] 0.0
    %22 = vst [vmem:[#allocation2 + $0x18] sm:$0xff] 0.0
    %23 = vst [vmem:[#allocation2 + $0x20] sm:$0xff] 0.0
    %24 = vst [vmem:[#allocation2 + $0x28] sm:$0xff] 0.0
    %25 = vst [vmem:[#allocation2 + $0x30] sm:$0xff] 0.0
    %26 = vst [vmem:[#allocation2 + $0x38] sm:$0xff] 0.0
    %27 = vst [vmem:[#allocation2 + $0x40] sm:$0xff] 0.0
    %28 = vst [vmem:[#allocation2 + $0x48] sm:$0xff] 0.0
    %29 = vst [vmem:[#allocation2 + $0x50] sm:$0xff] 0.0
    %30 = vst [vmem:[#allocation2 + $0x58] sm:$0xff] 0.0
    %31 = vst [vmem:[#allocation2 + $0x60] sm:$0xff] 0.0
    %32 = vst [vmem:[#allocation2 + $0x68] sm:$0xff] 0.0
    %33 = vst [vmem:[#allocation2 + $0x70] sm:$0xff] 0.0
    %34 = vst [vmem:[#allocation2 + $0x78] sm:$0xff] 0.0
  $region17: #{yolo_pafpn_forward.60} parent=0 // pred_fallthru
    _
  %v35 = vld [vmem:[#allocation2] sm:$0xff]
  %v36 = vld [vmem:[#allocation2 + $0x8] sm:$0xff]
  %v37 = vld [vmem:[#allocation2 + $0x10] sm:$0xff]
  %v38 = vld [vmem:[#allocation2 + $0x18] sm:$0xff]
  %v39 = vld [vmem:[#allocation2 + $0x20] sm:$0xff]
  %v40 = vld [vmem:[#allocation2 + $0x28] sm:$0xff]
  %v41 = vld [vmem:[#allocation2 + $0x30] sm:$0xff]
  %v42 = vld [vmem:[#allocation2 + $0x38] sm:$0xff]
  %v43 = vld [vmem:[#allocation2 + $0x40] sm:$0xff]
  %v44 = vld [vmem:[#allocation2 + $0x48] sm:$0xff]
  %v45 = vld [vmem:[#allocation2 + $0x50] sm:$0xff]
  %v46 = vld [vmem:[#allocation2 + $0x58] sm:$0xff]
  %v47 = vld [vmem:[#allocation2 + $0x60] sm:$0xff]
  %v48 = vld [vmem:[#allocation2 + $0x68] sm:$0xff]
  %v49 = vld [vmem:[#allocation2 + $0x70] sm:$0xff]
  %v50 = vld [vmem:[#allocation2 + $0x78] sm:$0xff]
  %v51 = vld [vmem:[%s0] sm:$0xff]
  %v52 = vld [vmem:[%s0 + $0x8] sm:$0xf]
  %v53 = vld [vmem:[%s0 + $0xc] sm:$0xff]
  %v54 = vld [vmem:[%s0 + $0x14] sm:$0xf]
  %v55 = vld [vmem:[%s0 + $0x18] sm:$0xff]
  %v56 = vld [vmem:[%s0 + $0x20] sm:$0xf]
  %v57 = vld [vmem:[%s0 + $0x24] sm:$0xff]
  %v58 = vld [vmem:[%s0 + $0x2c] sm:$0xf]
  %v59 = vld [vmem:[%s0 + $0x30] sm:$0xff]
  %v60 = vld [vmem:[%s0 + $0x38] sm:$0xf]
  %v61 = vld [vmem:[%s0 + $0x3c] sm:$0xff]
  %v62 = vld [vmem:[%s0 + $0x44] sm:$0xf]
  %v63 = vld [vmem:[%s0 + $0x48] sm:$0xff]
  %v64 = vld [vmem:[%s0 + $0x50] sm:$0xf]
  %v65 = vld [vmem:[%s0 + $0x54] sm:$0xff]
  %v66 = vld [vmem:[%s0 + $0x5c] sm:$0xf]
  %v67 = vld [vmem:[%s0 + $0x60] sm:$0xff]
  %v68 = vld [vmem:[%s0 + $0x68] sm:$0xf]
  %v69 = vld [vmem:[%s0 + $0x6c] sm:$0xff]
  %v70 = vld [vmem:[%s0 + $0x74] sm:$0xf]
  %v71 = vld [vmem:[%s0 + $0x78] sm:$0xff]
  %v72 = vld [vmem:[%s0 + $0x80] sm:$0xf]
  %v73 = vld [vmem:[%s0 + $0x84] sm:$0xff]
  %v74 = vld [vmem:[%s0 + $0x8c] sm:$0xf]
  %v75 = vld [vmem:[%s0 + $0x90] sm:$0xff]
  %v76 = vld [vmem:[%s0 + $0x98] sm:$0xf]
  %v77 = vld [vmem:[%s0 + $0x9c] sm:$0xff]
  %v78 = vld [vmem:[%s0 + $0xa4] sm:$0xf]
  %v79 = vld [vmem:[%s0 + $0xa8] sm:$0xff]
  %v80 = vld [vmem:[%s0 + $0xb0] sm:$0xf]
  %v81 = vld [vmem:[%s0 + $0xb4] sm:$0xff]
  %v82 = vld [vmem:[%s0 + $0xbc] sm:$0xf]
  %v83 = vld [vmem:[%s1] sm:$0xf]
  %v84 = vld [vmem:[%s1 + $0x4] sm:$0xf]
  %v85 = vld [vmem:[%s1 + $0x8] sm:$0xf]
  %v86 = vld [vmem:[%s1 + $0xc] sm:$0xf]
  %v87 = vld [vmem:[%s1 + $0x10] sm:$0xf]
  %v88 = vld [vmem:[%s1 + $0x14] sm:$0xf]
  %v89 = vld [vmem:[%s1 + $0x18] sm:$0xf]
  %v90 = vld [vmem:[%s1 + $0x1c] sm:$0xf]
  %v91 = vld [vmem:[%s1 + $0x20] sm:$0xf]
  %v92 = vld [vmem:[%s1 + $0x24] sm:$0xf]
  %v93 = vld [vmem:[%s1 + $0x28] sm:$0xf]
  %v94 = vld [vmem:[%s1 + $0x2c] sm:$0xf]
  %v95 = vld [vmem:[%s1 + $0x30] sm:$0xf]
  %v96 = vld [vmem:[%s1 + $0x34] sm:$0xf]
  %v97 = vld [vmem:[%s1 + $0x38] sm:$0xf]
  %v98 = vld [vmem:[%s1 + $0x3c] sm:$0xf]
  %v99 = vld [vmem:[%s1 + $0x40] sm:$0xf]
  %v100 = vld [vmem:[%s1 + $0x44] sm:$0xf]
  %v101 = vld [vmem:[%s1 + $0x48] sm:$0xf]
  %v102 = vld [vmem:[%s1 + $0x4c] sm:$0xf]
  %v103 = vld [vmem:[%s1 + $0x50] sm:$0xf]
  %v104 = vld [vmem:[%s1 + $0x54] sm:$0xf]
  %v105 = vld [vmem:[%s1 + $0x58] sm:$0xf]
  %v106 = vld [vmem:[%s1 + $0x5c] sm:$0xf]
  %v107 = vld [vmem:[%s1 + $0x60] sm:$0xf]
  %v108 = vld [vmem:[%s1 + $0x64] sm:$0xf]
  %v109 = vld [vmem:[%s1 + $0x68] sm:$0xf]
  %v110 = vld [vmem:[%s1 + $0x6c] sm:$0xf]
  %v111 = vld [vmem:[%s1 + $0x70] sm:$0xf]
  %v112 = vld [vmem:[%s1 + $0x74] sm:$0xf]
  %v113 = vld [vmem:[%s1 + $0x78] sm:$0xf]
  %v114 = vld [vmem:[%s1 + $0x7c] sm:$0xf]
  %v115 = vld [vmem:[%s1 + $0x80] sm:$0xf]
  %v116 = vld [vmem:[%s1 + $0x84] sm:$0xf]
  %v117 = vld [vmem:[%s1 + $0x88] sm:$0xf]
  %v118 = vld [vmem:[%s1 + $0x8c] sm:$0xf]
  %v119 = vld [vmem:[%s1 + $0x90] sm:$0xf]
  %v120 = vld [vmem:[%s1 + $0x94] sm:$0xf]
  %v121 = vld [vmem:[%s1 + $0x98] sm:$0xf]
  %v122 = vld [vmem:[%s1 + $0x9c] sm:$0xf]
  %v123 = vld [vmem:[%s1 + $0xa0] sm:$0xf]
  %v124 = vld [vmem:[%s1 + $0xa4] sm:$0xf]
  %v125 = vld [vmem:[%s1 + $0xa8] sm:$0xf]
  %v126 = vld [vmem:[%s1 + $0xac] sm:$0xf]
  %v127 = vld [vmem:[%s1 + $0xb0] sm:$0xf]
  %v128 = vld [vmem:[%s1 + $0xb4] sm:$0xf]
  %v129 = vld [vmem:[%s1 + $0xb8] sm:$0xf]
  %v130 = vld [vmem:[%s1 + $0xbc] sm:$0xf]
  %v163 = vunpack.c.l.b16 %v51
  %v164 = vunpack.c.h.b16 %v51
  %v165 = vunpack.c.l.b16 %v52
  %v166 = vunpack.c.l.b16 %v53
  %v167 = vunpack.c.h.b16 %v53
  %v168 = vunpack.c.l.b16 %v54
  %v169 = vunpack.c.l.b16 %v55
  %v170 = vunpack.c.h.b16 %v55
  %v171 = vunpack.c.l.b16 %v56
  %v172 = vunpack.c.l.b16 %v57
  %v173 = vunpack.c.h.b16 %v57
  %v174 = vunpack.c.l.b16 %v58
  %v175 = vunpack.c.l.b16 %v59
  %v176 = vunpack.c.h.b16 %v59
  %v177 = vunpack.c.l.b16 %v60
  %v178 = vunpack.c.l.b16 %v61
  %v179 = vunpack.c.h.b16 %v61
  %v180 = vunpack.c.l.b16 %v62
  %v181 = vunpack.c.l.b16 %v63
  %v182 = vunpack.c.h.b16 %v63
  %v183 = vunpack.c.l.b16 %v64
  %v184 = vunpack.c.l.b16 %v65
  %v185 = vunpack.c.h.b16 %v65
  %v186 = vunpack.c.l.b16 %v66
  %v187 = vunpack.c.l.b16 %v67
  %v188 = vunpack.c.h.b16 %v67
  %v189 = vunpack.c.l.b16 %v68
  %v190 = vunpack.c.l.b16 %v69
  %v191 = vunpack.c.h.b16 %v69
  %v192 = vunpack.c.l.b16 %v70
  %v193 = vunpack.c.l.b16 %v71
  %v194 = vunpack.c.h.b16 %v71
  %v195 = vunpack.c.l.b16 %v72
  %v196 = vunpack.c.l.b16 %v73
  %v197 = vunpack.c.h.b16 %v73
  %v198 = vunpack.c.l.b16 %v74
  %v199 = vunpack.c.l.b16 %v75
  %v200 = vunpack.c.h.b16 %v75
  %v201 = vunpack.c.l.b16 %v76
  %v202 = vunpack.c.l.b16 %v77
  %v203 = vunpack.c.h.b16 %v77
  %v204 = vunpack.c.l.b16 %v78
  %v205 = vunpack.c.l.b16 %v79
  %v206 = vunpack.c.h.b16 %v79
  %v207 = vunpack.c.l.b16 %v80
  %v208 = vunpack.c.l.b16 %v81
  %v209 = vunpack.c.h.b16 %v81
  %v210 = vunpack.c.l.b16 %v82
  %v211 = vpack.c.b16 %v166, %v163
  %v212 = vpack.c.b16 %v167, %v164
  %v213 = vpack.c.b16 %v168, %v165
  %v214 = vpack.c.b16 %v172, %v169
  %v215 = vpack.c.b16 %v173, %v170
  %v216 = vpack.c.b16 %v174, %v171
  %v217 = vpack.c.b16 %v178, %v175
  %v218 = vpack.c.b16 %v179, %v176
  %v219 = vpack.c.b16 %v180, %v177
  %v220 = vpack.c.b16 %v184, %v181
  %v221 = vpack.c.b16 %v185, %v182
  %v222 = vpack.c.b16 %v186, %v183
  %v223 = vpack.c.b16 %v190, %v187
  %v224 = vpack.c.b16 %v191, %v188
  %v225 = vpack.c.b16 %v192, %v189
  %v226 = vpack.c.b16 %v196, %v193
  %v227 = vpack.c.b16 %v197, %v194
  %v228 = vpack.c.b16 %v198, %v195
  %v229 = vpack.c.b16 %v202, %v199
  %v230 = vpack.c.b16 %v203, %v200
  %v231 = vpack.c.b16 %v204, %v201
  %v232 = vpack.c.b16 %v208, %v205
  %v233 = vpack.c.b16 %v209, %v206
  %v234 = vpack.c.b16 %v210, %v207
  %v307 = vunpack.c.l.b16 %v83
  %v308 = vunpack.c.l.b16 %v84
  %v309 = vunpack.c.l.b16 %v85
  %v310 = vunpack.c.l.b16 %v86
  %v311 = vunpack.c.l.b16 %v87
  %v312 = vunpack.c.l.b16 %v88
  %v313 = vunpack.c.l.b16 %v89
  %v314 = vunpack.c.l.b16 %v90
  %v315 = vunpack.c.l.b16 %v91
  %v316 = vunpack.c.l.b16 %v92
  %v317 = vunpack.c.l.b16 %v93
  %v318 = vunpack.c.l.b16 %v94
  %v319 = vunpack.c.l.b16 %v95
  %v320 = vunpack.c.l.b16 %v96
  %v321 = vunpack.c.l.b16 %v97
  %v322 = vunpack.c.l.b16 %v98
  %v323 = vunpack.c.l.b16 %v99
  %v324 = vunpack.c.l.b16 %v100
  %v325 = vunpack.c.l.b16 %v101
  %v326 = vunpack.c.l.b16 %v102
  %v327 = vunpack.c.l.b16 %v103
  %v328 = vunpack.c.l.b16 %v104
  %v329 = vunpack.c.l.b16 %v105
  %v330 = vunpack.c.l.b16 %v106
  %v331 = vunpack.c.l.b16 %v107
  %v332 = vunpack.c.l.b16 %v108
  %v333 = vunpack.c.l.b16 %v109
  %v334 = vunpack.c.l.b16 %v110
  %v335 = vunpack.c.l.b16 %v111
  %v336 = vunpack.c.l.b16 %v112
  %v337 = vunpack.c.l.b16 %v113
  %v338 = vunpack.c.l.b16 %v114
  %v339 = vunpack.c.l.b16 %v115
  %v340 = vunpack.c.l.b16 %v116
  %v341 = vunpack.c.l.b16 %v117
  %v342 = vunpack.c.l.b16 %v118
  %v343 = vunpack.c.l.b16 %v119
  %v344 = vunpack.c.l.b16 %v120
  %v345 = vunpack.c.l.b16 %v121
  %v346 = vunpack.c.l.b16 %v122
  %v347 = vunpack.c.l.b16 %v123
  %v348 = vunpack.c.l.b16 %v124
  %v349 = vunpack.c.l.b16 %v125
  %v350 = vunpack.c.l.b16 %v126
  %v351 = vunpack.c.l.b16 %v127
  %v352 = vunpack.c.l.b16 %v128
  %v353 = vunpack.c.l.b16 %v129
  %v354 = vunpack.c.l.b16 %v130
  %v355 = vpack.c.b16 %v308, %v307
  %v356 = vpack.c.b16 %v310, %v309
  %v357 = vpack.c.b16 %v312, %v311
  %v358 = vpack.c.b16 %v314, %v313
  %v359 = vpack.c.b16 %v316, %v315
  %v360 = vpack.c.b16 %v318, %v317
  %v361 = vpack.c.b16 %v320, %v319
  %v362 = vpack.c.b16 %v322, %v321
  %v363 = vpack.c.b16 %v324, %v323
  %v364 = vpack.c.b16 %v326, %v325
  %v365 = vpack.c.b16 %v328, %v327
  %v366 = vpack.c.b16 %v330, %v329
  %v367 = vpack.c.b16 %v332, %v331
  %v368 = vpack.c.b16 %v334, %v333
  %v369 = vpack.c.b16 %v336, %v335
  %v370 = vpack.c.b16 %v338, %v337
  %v371 = vpack.c.b16 %v340, %v339
  %v372 = vpack.c.b16 %v342, %v341
  %v373 = vpack.c.b16 %v344, %v343
  %v374 = vpack.c.b16 %v346, %v345
  %v375 = vpack.c.b16 %v348, %v347
  %v376 = vpack.c.b16 %v350, %v349
  %v377 = vpack.c.b16 %v352, %v351
  %v378 = vpack.c.b16 %v354, %v353
  %403 = vmatprep.subr.bf16.mxu0 0
  %404 = vmatpush1.bf16.msra.mxu0 %v355
  %405 = vmatprep.subr.bf16.mxu0 0
  %406 = vmatpush1.bf16.msra.mxu0 %v356
  %407 = vmatprep.subr.bf16.mxu0 0
  %408 = vmatpush1.bf16.msra.mxu0 %v357
  %409 = vmatprep.subr.bf16.mxu0 0
  %410 = vmatpush1.bf16.msra.mxu0 %v358
  %411 = vmatprep.subr.bf16.mxu0 0
  %412 = vmatpush1.bf16.msra.mxu0 %v359
  %413 = vmatprep.subr.bf16.mxu0 0
  %414 = vmatpush1.bf16.msra.mxu0 %v360
  %415 = vmatprep.subr.bf16.mxu0 0
  %416 = vmatpush1.bf16.msra.mxu0 %v361
  %417 = vmatprep.subr.bf16.mxu0 0
  %418 = vmatpush1.bf16.msra.mxu0 %v362
  %419 = vmatprep.subr.bf16.mxu0 0
  %420 = vmatpush1.bf16.msra.mxu0 %v363
  %421 = vmatprep.subr.bf16.mxu0 0
  %422 = vmatpush1.bf16.msra.mxu0 %v364
  %423 = vmatprep.subr.bf16.mxu0 0
  %424 = vmatpush1.bf16.msra.mxu0 %v365
  %425 = vmatprep.subr.bf16.mxu0 0
  %426 = vmatpush1.bf16.msra.mxu0 %v366
  %427 = vmatprep.subr.bf16.mxu0 0
  %428 = vmatpush1.bf16.msra.mxu0 %v367
  %429 = vmatprep.subr.bf16.mxu0 0
  %430 = vmatpush1.bf16.msra.mxu0 %v368
  %431 = vmatprep.subr.bf16.mxu0 0
  %432 = vmatpush1.bf16.msra.mxu0 %v369
  %433 = vmatprep.subr.bf16.mxu0 0
  %434 = vmatpush1.bf16.msra.mxu0 %v370
  %435 = vmatprep.mubr.bf16.mxu0 %v212
  %436 = vmatmul.mubr.bf16.gmra.mrb[0].mxu0 %v211
  %v437 = vpop.f32.mrb[0].mxu0
  %v438 = vadd.f32 0.0, %v437
  %v439 = vpop.f32.mrb[0].mxu0
  %v440 = vpop.f32.mrb[0].mxu0
  %v441 = vadd.f32 0.0, %v440
  %v442 = vpop.f32.mrb[0].mxu0
  %443 = vmatprep.mubr.bf16.mxu0 %v215
  %444 = vmatmul.mubr.bf16.gmra.mrb[0].mxu0 %v214
  %v445 = vpop.f32.mrb[0].mxu0
  %v446 = vadd.f32 0.0, %v445
  %v447 = vpop.f32.mrb[0].mxu0
  %v448 = vpop.f32.mrb[0].mxu0
  %v449 = vadd.f32 0.0, %v448
  %v450 = vpop.f32.mrb[0].mxu0
  %451 = vmatprep.mubr.bf16.mxu0 %v218
  %452 = vmatmul.mubr.bf16.gmra.mrb[0].mxu0 %v217
  %v453 = vpop.f32.mrb[0].mxu0
  %v454 = vadd.f32 0.0, %v453
  %v455 = vpop.f32.mrb[0].mxu0
  %v456 = vpop.f32.mrb[0].mxu0
  %v457 = vadd.f32 0.0, %v456
  %v458 = vpop.f32.mrb[0].mxu0
  %459 = vmatprep.mubr.bf16.mxu0 %v221
  %460 = vmatmul.mubr.bf16.gmra.mrb[0].mxu0 %v220
  %v461 = vpop.f32.mrb[0].mxu0
  %v462 = vadd.f32 0.0, %v461
  %v463 = vpop.f32.mrb[0].mxu0
  %v464 = vpop.f32.mrb[0].mxu0
  %v465 = vadd.f32 0.0, %v464
  %v466 = vpop.f32.mrb[0].mxu0
  %467 = vmatprep.mubr.bf16.mxu0 %v224
  %468 = vmatmul.mubr.bf16.gmra.mrb[0].mxu0 %v223
  %v469 = vpop.f32.mrb[0].mxu0
  %v470 = vadd.f32 0.0, %v469
  %v471 = vpop.f32.mrb[0].mxu0
  %v472 = vpop.f32.mrb[0].mxu0
  %v473 = vadd.f32 0.0, %v472
  %v474 = vpop.f32.mrb[0].mxu0
  %475 = vmatprep.mubr.bf16.mxu0 %v227
  %476 = vmatmul.mubr.bf16.gmra.mrb[0].mxu0 %v226
  %v477 = vpop.f32.mrb[0].mxu0
  %v478 = vadd.f32 0.0, %v477
  %v479 = vpop.f32.mrb[0].mxu0
  %v480 = vpop.f32.mrb[0].mxu0
  %v481 = vadd.f32 0.0, %v480
  %v482 = vpop.f32.mrb[0].mxu0
  %483 = vmatprep.mubr.bf16.mxu0 %v230
  %484 = vmatmul.mubr.bf16.gmra.mrb[0].mxu0 %v229
  %v485 = vpop.f32.mrb[0].mxu0
  %v486 = vadd.f32 0.0, %v485
  %v487 = vpop.f32.mrb[0].mxu0
  %v488 = vpop.f32.mrb[0].mxu0
  %v489 = vadd.f32 0.0, %v488
  %v490 = vpop.f32.mrb[0].mxu0
  %491 = vmatprep.mubr.bf16.mxu0 %v233
  %492 = vmatmul.mubr.bf16.gmra.mrb[0].mxu0 %v232
  %v493 = vpop.f32.mrb[0].mxu0
  %v494 = vadd.f32 0.0, %v493
  %v495 = vpop.f32.mrb[0].mxu0
  %v496 = vpop.f32.mrb[0].mxu0
  %v497 = vadd.f32 0.0, %v496
  %v498 = vpop.f32.mrb[0].mxu0
  %499 = vdwg.mxu0
  %500 = vmatprep.subr.bf16.mxu0 0
  %501 = vmatpush1.bf16.msra.mxu0 %v371
  %502 = vmatprep.subr.bf16.mxu0 0
  %503 = vmatpush1.bf16.msra.mxu0 %v372
  %504 = vmatprep.subr.bf16.mxu0 0
  %505 = vmatpush1.bf16.msra.mxu0 %v373
  %506 = vmatprep.subr.bf16.mxu0 0
  %507 = vmatpush1.bf16.msra.mxu0 %v374
  %508 = vmatprep.subr.bf16.mxu0 0
  %509 = vmatpush1.bf16.msra.mxu0 %v375
  %510 = vmatprep.subr.bf16.mxu0 0
  %511 = vmatpush1.bf16.msra.mxu0 %v376
  %512 = vmatprep.subr.bf16.mxu0 0
  %513 = vmatpush1.bf16.msra.mxu0 %v377
  %514 = vmatprep.subr.bf16.mxu0 0
  %515 = vmatpush1.bf16.msra.mxu0 %v378
  %516 = vmatprep.subr.bf16.mxu0 0
  %517 = vmatpush1.bf16.msra.mxu0 0
  %518 = vmatprep.subr.bf16.mxu0 0
  %519 = vmatpush1.bf16.msra.mxu0 0
  %520 = vmatprep.subr.bf16.mxu0 0
  %521 = vmatpush1.bf16.msra.mxu0 0
  %522 = vmatprep.subr.bf16.mxu0 0
  %523 = vmatpush1.bf16.msra.mxu0 0
  %524 = vmatprep.subr.bf16.mxu0 0
  %525 = vmatpush1.bf16.msra.mxu0 0
  %526 = vmatprep.subr.bf16.mxu0 0
  %527 = vmatpush1.bf16.msra.mxu0 0
  %528 = vmatprep.subr.bf16.mxu0 0
  %529 = vmatpush1.bf16.msra.mxu0 0
  %530 = vmatprep.subr.bf16.mxu0 0
  %531 = vmatpush1.bf16.msra.mxu0 0
  %532 = vmatprep.mubr.bf16.mxu0 0
  %533 = vmatmul.mubr.bf16.gmra.mrb[0].mxu0 %v213
  %v534 = vpop.f32.mrb[0].mxu0
  %v535 = vadd.f32 %v438, %v534
  %v536 = vpop.f32.mrb[0].mxu0
  %v537 = vpop.f32.mrb[0].mxu0
  %v538 = vadd.f32 %v441, %v537
  %v539 = vpop.f32.mrb[0].mxu0
  %540 = vmatprep.mubr.bf16.mxu0 0
  %541 = vmatmul.mubr.bf16.gmra.mrb[0].mxu0 %v216
  %v542 = vpop.f32.mrb[0].mxu0
  %v543 = vadd.f32 %v446, %v542
  %v544 = vpop.f32.mrb[0].mxu0
  %v545 = vpop.f32.mrb[0].mxu0
  %v546 = vadd.f32 %v449, %v545
  %v547 = vpop.f32.mrb[0].mxu0
  %548 = vmatprep.mubr.bf16.mxu0 0
  %549 = vmatmul.mubr.bf16.gmra.mrb[0].mxu0 %v219
  %v550 = vpop.f32.mrb[0].mxu0
  %v551 = vadd.f32 %v454, %v550
  %v552 = vpop.f32.mrb[0].mxu0
  %v553 = vpop.f32.mrb[0].mxu0
  %v554 = vadd.f32 %v457, %v553
  %v555 = vpop.f32.mrb[0].mxu0
  %556 = vmatprep.mubr.bf16.mxu0 0
  %557 = vmatmul.mubr.bf16.gmra.mrb[0].mxu0 %v222
  %v558 = vpop.f32.mrb[0].mxu0
  %v559 = vadd.f32 %v462, %v558
  %v560 = vpop.f32.mrb[0].mxu0
  %v561 = vpop.f32.mrb[0].mxu0
  %v562 = vadd.f32 %v465, %v561
  %v563 = vpop.f32.mrb[0].mxu0
  %564 = vmatprep.mubr.bf16.mxu0 0
  %565 = vmatmul.mubr.bf16.gmra.mrb[0].mxu0 %v225
  %v566 = vpop.f32.mrb[0].mxu0
  %v567 = vadd.f32 %v470, %v566
  %v568 = vpop.f32.mrb[0].mxu0
  %v569 = vpop.f32.mrb[0].mxu0
  %v570 = vadd.f32 %v473, %v569
  %v571 = vpop.f32.mrb[0].mxu0
  %572 = vmatprep.mubr.bf16.mxu0 0
  %573 = vmatmul.mubr.bf16.gmra.mrb[0].mxu0 %v228
  %v574 = vpop.f32.mrb[0].mxu0
  %v575 = vadd.f32 %v478, %v574
  %v576 = vpop.f32.mrb[0].mxu0
  %v577 = vpop.f32.mrb[0].mxu0
  %v578 = vadd.f32 %v481, %v577
  %v579 = vpop.f32.mrb[0].mxu0
  %580 = vmatprep.mubr.bf16.mxu0 0
  %581 = vmatmul.mubr.bf16.gmra.mrb[0].mxu0 %v231
  %v582 = vpop.f32.mrb[0].mxu0
  %v583 = vadd.f32 %v486, %v582
  %v584 = vpop.f32.mrb[0].mxu0
  %v585 = vpop.f32.mrb[0].mxu0
  %v586 = vadd.f32 %v489, %v585
  %v587 = vpop.f32.mrb[0].mxu0
  %588 = vmatprep.mubr.bf16.mxu0 0
  %589 = vmatmul.mubr.bf16.gmra.mrb[0].mxu0 %v234
  %v590 = vpop.f32.mrb[0].mxu0
  %v591 = vadd.f32 %v494, %v590
  %v592 = vpop.f32.mrb[0].mxu0
  %v593 = vpop.f32.mrb[0].mxu0
  %v594 = vadd.f32 %v497, %v593
  %v595 = vpop.f32.mrb[0].mxu0
  %596 = vdwg.mxu0
  %v597 = vadd.f32 %v35, %v535
  %v598 = vadd.f32 %v36, %v538
  %v599 = vadd.f32 %v37, %v543
  %v600 = vadd.f32 %v38, %v546
  %v601 = vadd.f32 %v39, %v551
  %v602 = vadd.f32 %v40, %v554
  %v603 = vadd.f32 %v41, %v559
  %v604 = vadd.f32 %v42, %v562
  %v605 = vadd.f32 %v43, %v567
  %v606 = vadd.f32 %v44, %v570
  %v607 = vadd.f32 %v45, %v575
  %v608 = vadd.f32 %v46, %v578
  %v609 = vadd.f32 %v47, %v583
  %v610 = vadd.f32 %v48, %v586
  %v611 = vadd.f32 %v49, %v591
  %v612 = vadd.f32 %v50, %v594
  %613 = vst [vmem:[#allocation2] sm:$0xff] %v597
  %614 = vst [vmem:[#allocation2 + $0x8] sm:$0xff] %v598
  %615 = vst [vmem:[#allocation2 + $0x10] sm:$0xff] %v599
  %616 = vst [vmem:[#allocation2 + $0x18] sm:$0xff] %v600
  %617 = vst [vmem:[#allocation2 + $0x20] sm:$0xff] %v601
  %618 = vst [vmem:[#allocation2 + $0x28] sm:$0xff] %v602
  %619 = vst [vmem:[#allocation2 + $0x30] sm:$0xff] %v603
  %620 = vst [vmem:[#allocation2 + $0x38] sm:$0xff] %v604
  %621 = vst [vmem:[#allocation2 + $0x40] sm:$0xff] %v605
  %622 = vst [vmem:[#allocation2 + $0x48] sm:$0xff] %v606
  %623 = vst [vmem:[#allocation2 + $0x50] sm:$0xff] %v607
  %624 = vst [vmem:[#allocation2 + $0x58] sm:$0xff] %v608
  %625 = vst [vmem:[#allocation2 + $0x60] sm:$0xff] %v609
  %626 = vst [vmem:[#allocation2 + $0x68] sm:$0xff] %v610
  %627 = vst [vmem:[#allocation2 + $0x70] sm:$0xff] %v611
  %628 = vst [vmem:[#allocation2 + $0x78] sm:$0xff] %v612
  // Predicated region
  $region18: #{yolo_pafpn_forward.60} parent=0 // pred_check
    %p629 = pneg %p15
  $region19: #{yolo_pafpn_forward.60} parent=0 // pred_check_branch
    %631 = sbr.rel (%p629) target = $region21
  $region20: #{yolo_pafpn_forward.60} parent=0 // pred_region
    %v632 = vld [vmem:[#allocation2] sm:$0xff]
    %v633 = vld [vmem:[#allocation2 + $0x8] sm:$0xff]
    %v634 = vld [vmem:[#allocation2 + $0x10] sm:$0xff]
    %v635 = vld [vmem:[#allocation2 + $0x18] sm:$0xff]
    %v636 = vld [vmem:[#allocation2 + $0x20] sm:$0xff]
    %v637 = vld [vmem:[#allocation2 + $0x28] sm:$0xff]
    %v638 = vld [vmem:[#allocation2 + $0x30] sm:$0xff]
    %v639 = vld [vmem:[#allocation2 + $0x38] sm:$0xff]
    %v640 = vld [vmem:[#allocation2 + $0x40] sm:$0xff]
    %v641 = vld [vmem:[#allocation2 + $0x48] sm:$0xff]
    %v642 = vld [vmem:[#allocation2 + $0x50] sm:$0xff]
    %v643 = vld [vmem:[#allocation2 + $0x58] sm:$0xff]
    %v644 = vld [vmem:[#allocation2 + $0x60] sm:$0xff]
    %v645 = vld [vmem:[#allocation2 + $0x68] sm:$0xff]
    %v646 = vld [vmem:[#allocation2 + $0x70] sm:$0xff]
    %v647 = vld [vmem:[#allocation2 + $0x78] sm:$0xff]
    %v648 = vld [vmem:[%s2] sm:$0x1]
    %v650 = vlaneseq
    %v651 = vshrl.u32 %v650, 7
    %v652 = vsub.s32 0, %v651
    %v653 = vrot.slane %v648, %v652
    %v655 = vadd.f32 %v632, %v653
    %v656 = vadd.f32 %v633, %v653
    %v657 = vadd.f32 %v634, %v653
    %v658 = vadd.f32 %v635, %v653
    %v659 = vadd.f32 %v636, %v653
    %v660 = vadd.f32 %v637, %v653
    %v661 = vadd.f32 %v638, %v653
    %v662 = vadd.f32 %v639, %v653
    %v663 = vadd.f32 %v640, %v653
    %v664 = vadd.f32 %v641, %v653
    %v665 = vadd.f32 %v642, %v653
    %v666 = vadd.f32 %v643, %v653
    %v667 = vadd.f32 %v644, %v653
    %v668 = vadd.f32 %v645, %v653
    %v669 = vadd.f32 %v646, %v653
    %v670 = vadd.f32 %v647, %v653
    %v671 = vand.u32 2147483647, %v655
    %v672 = vand.u32 2147483647, %v656
    %v673 = vand.u32 2147483647, %v657
    %v674 = vand.u32 2147483647, %v658
    %v675 = vand.u32 2147483647, %v659
    %v676 = vand.u32 2147483647, %v660
    %v677 = vand.u32 2147483647, %v661
    %v678 = vand.u32 2147483647, %v662
    %v679 = vand.u32 2147483647, %v663
    %v680 = vand.u32 2147483647, %v664
    %v681 = vand.u32 2147483647, %v665
    %v682 = vand.u32 2147483647, %v666
    %v683 = vand.u32 2147483647, %v667
    %v684 = vand.u32 2147483647, %v668
    %v685 = vand.u32 2147483647, %v669
    %v686 = vand.u32 2147483647, %v670
    %v687 = vsub.f32 0.0, %v671
    %v688 = vsub.f32 0.0, %v672
    %v689 = vsub.f32 0.0, %v673
    %v690 = vsub.f32 0.0, %v674
    %v691 = vsub.f32 0.0, %v675
    %v692 = vsub.f32 0.0, %v676
    %v693 = vsub.f32 0.0, %v677
    %v694 = vsub.f32 0.0, %v678
    %v695 = vsub.f32 0.0, %v679
    %v696 = vsub.f32 0.0, %v680
    %v697 = vsub.f32 0.0, %v681
    %v698 = vsub.f32 0.0, %v682
    %v699 = vsub.f32 0.0, %v683
    %v700 = vsub.f32 0.0, %v684
    %v701 = vsub.f32 0.0, %v685
    %v702 = vsub.f32 0.0, %v686
    %v703 = vmul.f32 %v687, 1.442695
    %v704 = vpow.pop %v703
    %v705 = vmul.f32 %v688, 1.442695
    %v706 = vpow.pop %v705
    %v707 = vmul.f32 %v689, 1.442695
    %v708 = vpow.pop %v707
    %v709 = vmul.f32 %v690, 1.442695
    %v710 = vpow.pop %v709
    %v711 = vmul.f32 %v691, 1.442695
    %v712 = vpow.pop %v711
    %v713 = vmul.f32 %v692, 1.442695
    %v714 = vpow.pop %v713
    %v715 = vmul.f32 %v693, 1.442695
    %v716 = vpow.pop %v715
    %v717 = vmul.f32 %v694, 1.442695
    %v718 = vpow.pop %v717
    %v719 = vmul.f32 %v695, 1.442695
    %v720 = vpow.pop %v719
    %v721 = vmul.f32 %v696, 1.442695
    %v722 = vpow.pop %v721
    %v723 = vmul.f32 %v697, 1.442695
    %v724 = vpow.pop %v723
    %v725 = vmul.f32 %v698, 1.442695
    %v726 = vpow.pop %v725
    %v727 = vmul.f32 %v699, 1.442695
    %v728 = vpow.pop %v727
    %v729 = vmul.f32 %v700, 1.442695
    %v730 = vpow.pop %v729
    %v731 = vmul.f32 %v701, 1.442695
    %v732 = vpow.pop %v731
    %v733 = vmul.f32 %v702, 1.442695
    %v734 = vpow.pop %v733
    %v735 = vadd.f32 %v704, 1.0
    %v736 = vadd.f32 %v706, 1.0
    %v737 = vadd.f32 %v708, 1.0
    %v738 = vadd.f32 %v710, 1.0
    %v739 = vadd.f32 %v712, 1.0
    %v740 = vadd.f32 %v714, 1.0
    %v741 = vadd.f32 %v716, 1.0
    %v742 = vadd.f32 %v718, 1.0
    %v743 = vadd.f32 %v720, 1.0
    %v744 = vadd.f32 %v722, 1.0
    %v745 = vadd.f32 %v724, 1.0
    %v746 = vadd.f32 %v726, 1.0
    %v747 = vadd.f32 %v728, 1.0
    %v748 = vadd.f32 %v730, 1.0
    %v749 = vadd.f32 %v732, 1.0
    %v750 = vadd.f32 %v734, 1.0
    %v751 = vrcp.pop %v735
    %v752 = vrcp.pop %v736
    %v753 = vrcp.pop %v737
    %v754 = vrcp.pop %v738
    %v755 = vrcp.pop %v739
    %v756 = vrcp.pop %v740
    %v757 = vrcp.pop %v741
    %v758 = vrcp.pop %v742
    %v759 = vrcp.pop %v743
    %v760 = vrcp.pop %v744
    %v761 = vrcp.pop %v745
    %v762 = vrcp.pop %v746
    %v763 = vrcp.pop %v747
    %v764 = vrcp.pop %v748
    %v765 = vrcp.pop %v749
    %v766 = vrcp.pop %v750
    %vm767 = vcmp.ge.f32.partialorder %v655, 0.0
    %vm768 = vcmp.ge.f32.partialorder %v656, 0.0
    %vm769 = vcmp.ge.f32.partialorder %v657, 0.0
    %vm770 = vcmp.ge.f32.partialorder %v658, 0.0
    %vm771 = vcmp.ge.f32.partialorder %v659, 0.0
    %vm772 = vcmp.ge.f32.partialorder %v660, 0.0
    %vm773 = vcmp.ge.f32.partialorder %v661, 0.0
    %vm774 = vcmp.ge.f32.partialorder %v662, 0.0
    %vm775 = vcmp.ge.f32.partialorder %v663, 0.0
    %vm776 = vcmp.ge.f32.partialorder %v664, 0.0
    %vm777 = vcmp.ge.f32.partialorder %v665, 0.0
    %vm778 = vcmp.ge.f32.partialorder %v666, 0.0
    %vm779 = vcmp.ge.f32.partialorder %v667, 0.0
    %vm780 = vcmp.ge.f32.partialorder %v668, 0.0
    %vm781 = vcmp.ge.f32.partialorder %v669, 0.0
    %vm782 = vcmp.ge.f32.partialorder %v670, 0.0
    %v783 = vsub.f32 1.0, %v751
    %v784 = vsub.f32 1.0, %v752
    %v785 = vsub.f32 1.0, %v753
    %v786 = vsub.f32 1.0, %v754
    %v787 = vsub.f32 1.0, %v755
    %v788 = vsub.f32 1.0, %v756
    %v789 = vsub.f32 1.0, %v757
    %v790 = vsub.f32 1.0, %v758
    %v791 = vsub.f32 1.0, %v759
    %v792 = vsub.f32 1.0, %v760
    %v793 = vsub.f32 1.0, %v761
    %v794 = vsub.f32 1.0, %v762
    %v795 = vsub.f32 1.0, %v763
    %v796 = vsub.f32 1.0, %v764
    %v797 = vsub.f32 1.0, %v765
    %v798 = vsub.f32 1.0, %v766
    %v799 = vsel %vm767, %v751, %v783
    %v800 = vsel %vm768, %v752, %v784
    %v801 = vsel %vm769, %v753, %v785
    %v802 = vsel %vm770, %v754, %v786
    %v803 = vsel %vm771, %v755, %v787
    %v804 = vsel %vm772, %v756, %v788
    %v805 = vsel %vm773, %v757, %v789
    %v806 = vsel %vm774, %v758, %v790
    %v807 = vsel %vm775, %v759, %v791
    %v808 = vsel %vm776, %v760, %v792
    %v809 = vsel %vm777, %v761, %v793
    %v810 = vsel %vm778, %v762, %v794
    %v811 = vsel %vm779, %v763, %v795
    %v812 = vsel %vm780, %v764, %v796
    %v813 = vsel %vm781, %v765, %v797
    %v814 = vsel %vm782, %v766, %v798
    %v815 = vmul.f32 %v655, %v799
    %v816 = vmul.f32 %v656, %v800
    %v817 = vmul.f32 %v657, %v801
    %v818 = vmul.f32 %v658, %v802
    %v819 = vmul.f32 %v659, %v803
    %v820 = vmul.f32 %v660, %v804
    %v821 = vmul.f32 %v661, %v805
    %v822 = vmul.f32 %v662, %v806
    %v823 = vmul.f32 %v663, %v807
    %v824 = vmul.f32 %v664, %v808
    %v825 = vmul.f32 %v665, %v809
    %v826 = vmul.f32 %v666, %v810
    %v827 = vmul.f32 %v667, %v811
    %v828 = vmul.f32 %v668, %v812
    %v829 = vmul.f32 %v669, %v813
    %v830 = vmul.f32 %v670, %v814
    %v831 = vpack.c.bf16 %v816, %v815
    %v832 = vpack.c.bf16 %v818, %v817
    %v833 = vpack.c.bf16 %v820, %v819
    %v834 = vpack.c.bf16 %v822, %v821
    %v835 = vpack.c.bf16 %v824, %v823
    %v836 = vpack.c.bf16 %v826, %v825
    %v837 = vpack.c.bf16 %v828, %v827
    %v838 = vpack.c.bf16 %v830, %v829
    %v847 = vunpack.c.l.b16 %v831
    %v848 = vunpack.c.h.b16 %v831
    %v849 = vunpack.c.l.b16 %v832
    %v850 = vunpack.c.h.b16 %v832
    %v851 = vunpack.c.l.b16 %v833
    %v852 = vunpack.c.h.b16 %v833
    %v853 = vunpack.c.l.b16 %v834
    %v854 = vunpack.c.h.b16 %v834
    %v855 = vunpack.c.l.b16 %v835
    %v856 = vunpack.c.h.b16 %v835
    %v857 = vunpack.c.l.b16 %v836
    %v858 = vunpack.c.h.b16 %v836
    %v859 = vunpack.c.l.b16 %v837
    %v860 = vunpack.c.h.b16 %v837
    %v861 = vunpack.c.l.b16 %v838
    %v862 = vunpack.c.h.b16 %v838
    %v863 = vpack.c.b16 %v847, %v847
    %v864 = vpack.c.b16 %v848, %v848
    %v865 = vpack.c.b16 %v849, %v849
    %v866 = vpack.c.b16 %v850, %v850
    %v867 = vpack.c.b16 %v851, %v851
    %v868 = vpack.c.b16 %v852, %v852
    %v869 = vpack.c.b16 %v853, %v853
    %v870 = vpack.c.b16 %v854, %v854
    %v871 = vpack.c.b16 %v855, %v855
    %v872 = vpack.c.b16 %v856, %v856
    %v873 = vpack.c.b16 %v857, %v857
    %v874 = vpack.c.b16 %v858, %v858
    %v875 = vpack.c.b16 %v859, %v859
    %v876 = vpack.c.b16 %v860, %v860
    %v877 = vpack.c.b16 %v861, %v861
    %v878 = vpack.c.b16 %v862, %v862
    %895 = vst [vmem:[%s3] sm:$0xf] %v863
    %896 = vst [vmem:[%s3 + $0x4] sm:$0xf] %v864
    %897 = vst [vmem:[%s3 + $0x8] sm:$0xf] %v865
    %898 = vst [vmem:[%s3 + $0xc] sm:$0xf] %v866
    %899 = vst [vmem:[%s3 + $0x10] sm:$0xf] %v867
    %900 = vst [vmem:[%s3 + $0x14] sm:$0xf] %v868
    %901 = vst [vmem:[%s3 + $0x18] sm:$0xf] %v869
    %902 = vst [vmem:[%s3 + $0x1c] sm:$0xf] %v870
    %903 = vst [vmem:[%s3 + $0x20] sm:$0xf] %v871
    %904 = vst [vmem:[%s3 + $0x24] sm:$0xf] %v872
    %905 = vst [vmem:[%s3 + $0x28] sm:$0xf] %v873
    %906 = vst [vmem:[%s3 + $0x2c] sm:$0xf] %v874
    %907 = vst [vmem:[%s3 + $0x30] sm:$0xf] %v875
    %908 = vst [vmem:[%s3 + $0x34] sm:$0xf] %v876
    %909 = vst [vmem:[%s3 + $0x38] sm:$0xf] %v877
    %910 = vst [vmem:[%s3 + $0x3c] sm:$0xf] %v878
  $region21: #{yolo_pafpn_forward.60} parent=0 // pred_fallthru
    _
  // Predicated region
  $region22: #{yolo_pafpn_forward.60} parent=0 // pred_check
    _
  $region23: #{yolo_pafpn_forward.60} parent=0 // pred_check_branch
    %912 = sbr.rel (0) target = $region25
  $region24: #{yolo_pafpn_forward.60} parent=0 // pred_region
    _
  $region25: #{yolo_pafpn_forward.60} parent=0 // pred_fallthru
    _
  // Predicated region
  $region26: #{yolo_pafpn_forward.60} parent=0 // pred_check
    _
  $region27: #{yolo_pafpn_forward.60} parent=0 // pred_check_branch
    %914 = sbr.rel (0) target = $region29
  $region28: #{yolo_pafpn_forward.60} parent=0 // pred_region
    _
  $region29: #{yolo_pafpn_forward.60} parent=0 // pred_fallthru
    _

// kernel: yolo_pafpn_forward.61
$region0: #{yolo_pafpn_forward.61}
  #allocation0 [shape = 'u32[]', space=smem, size = 0x4, offset = 0x4, fixed_abs, tag = 'smem constant byte address 0x4 - core index']
  #allocation1 [shape = 'u32[144,128]{1,0:T(1,128)}', space=vmem, size = 0x12000, scoped, tag = 'internal scratch']
  #allocation2 [shape = 'f32[128,128]{1,0:T(8,128)}', space=vmem, size = 0x10000, scoped, tag = 'scratch operand']
  %s0 = inlined_call_operand.vmem [shape: bf16[128,128], index: 0, kind: input, shape index: {}]
  %s1 = inlined_call_operand.vmem [shape: bf16[128,128], index: 1, kind: input, shape index: {}]
  %s2 = inlined_call_operand.vmem [shape: f32[1,128], index: 2, kind: input, shape index: {}]
  %s3 = inlined_call_operand.vmem [shape: bf16[128,128], index: 3, kind: output, shape index: {}]
  %s4 = sld [smem:[#allocation0]]
  $region30: #{yolo_pafpn_forward.61} parent=0
    _
  %s6 = ssub.s32 1, %s4
  %s7 = scalar_select 0, %s6, %s4
  // Predicated region
  $region2: #{yolo_pafpn_forward.61} parent=0 // pred_check
    _
  $region3: #{yolo_pafpn_forward.61} parent=0 // pred_check_branch
    %9 = sbr.rel (0) target = $region5
  $region4: #{yolo_pafpn_forward.61} parent=0 // pred_region
    _
  $region5: #{yolo_pafpn_forward.61} parent=0 // pred_fallthru
    _
  // Predicated region
  $region6: #{yolo_pafpn_forward.61} parent=0 // pred_check
    _
  $region7: #{yolo_pafpn_forward.61} parent=0 // pred_check_branch
    %11 = sbr.rel (0) target = $region9
  $region8: #{yolo_pafpn_forward.61} parent=0 // pred_region
    _
  $region9: #{yolo_pafpn_forward.61} parent=0 // pred_fallthru
    _
  // Predicated region
  $region10: #{yolo_pafpn_forward.61} parent=0 // pred_check
    _
  $region11: #{yolo_pafpn_forward.61} parent=0 // pred_check_branch
    %13 = sbr.rel (0) target = $region13
  $region12: #{yolo_pafpn_forward.61} parent=0 // pred_region
    _
  $region13: #{yolo_pafpn_forward.61} parent=0 // pred_fallthru
    _
  %p15 = scmp.eq.s32.totalorder 0, 0
  // Predicated region
  $region14: #{yolo_pafpn_forward.61} parent=0 // pred_check
    %p16 = pneg %p15
  $region15: #{yolo_pafpn_forward.61} parent=0 // pred_check_branch
    %18 = sbr.rel (%p16) target = $region17
  $region16: #{yolo_pafpn_forward.61} parent=0 // pred_region
    %19 = vst [vmem:[#allocation2] sm:$0xff] 0.0
    %20 = vst [vmem:[#allocation2 + $0x8] sm:$0xff] 0.0
    %21 = vst [vmem:[#allocation2 + $0x10] sm:$0xff] 0.0
    %22 = vst [vmem:[#allocation2 + $0x18] sm:$0xff] 0.0
    %23 = vst [vmem:[#allocation2 + $0x20] sm:$0xff] 0.0
    %24 = vst [vmem:[#allocation2 + $0x28] sm:$0xff] 0.0
    %25 = vst [vmem:[#allocation2 + $0x30] sm:$0xff] 0.0
    %26 = vst [vmem:[#allocation2 + $0x38] sm:$0xff] 0.0
    %27 = vst [vmem:[#allocation2 + $0x40] sm:$0xff] 0.0
    %28 = vst [vmem:[#allocation2 + $0x48] sm:$0xff] 0.0
    %29 = vst [vmem:[#allocation2 + $0x50] sm:$0xff] 0.0
    %30 = vst [vmem:[#allocation2 + $0x58] sm:$0xff] 0.0
    %31 = vst [vmem:[#allocation2 + $0x60] sm:$0xff] 0.0
    %32 = vst [vmem:[#allocation2 + $0x68] sm:$0xff] 0.0
    %33 = vst [vmem:[#allocation2 + $0x70] sm:$0xff] 0.0
    %34 = vst [vmem:[#allocation2 + $0x78] sm:$0xff] 0.0
  $region17: #{yolo_pafpn_forward.61} parent=0 // pred_fallthru
    _
  %v35 = vld [vmem:[#allocation2] sm:$0xff]
  %v36 = vld [vmem:[#allocation2 + $0x8] sm:$0xff]
  %v37 = vld [vmem:[#allocation2 + $0x10] sm:$0xff]
  %v38 = vld [vmem:[#allocation2 + $0x18] sm:$0xff]
  %v39 = vld [vmem:[#allocation2 + $0x20] sm:$0xff]
  %v40 = vld [vmem:[#allocation2 + $0x28] sm:$0xff]
  %v41 = vld [vmem:[#allocation2 + $0x30] sm:$0xff]
  %v42 = vld [vmem:[#allocation2 + $0x38] sm:$0xff]
  %v43 = vld [vmem:[#allocation2 + $0x40] sm:$0xff]
  %v44 = vld [vmem:[#allocation2 + $0x48] sm:$0xff]
  %v45 = vld [vmem:[#allocation2 + $0x50] sm:$0xff]
  %v46 = vld [vmem:[#allocation2 + $0x58] sm:$0xff]
  %v47 = vld [vmem:[#allocation2 + $0x60] sm:$0xff]
  %v48 = vld [vmem:[#allocation2 + $0x68] sm:$0xff]
  %v49 = vld [vmem:[#allocation2 + $0x70] sm:$0xff]
  %v50 = vld [vmem:[#allocation2 + $0x78] sm:$0xff]
  %v51 = vld [vmem:[%s0] sm:$0xf]
  %v52 = vld [vmem:[%s0 + $0x4] sm:$0xf]
  %v53 = vld [vmem:[%s0 + $0x8] sm:$0xf]
  %v54 = vld [vmem:[%s0 + $0xc] sm:$0xf]
  %v55 = vld [vmem:[%s0 + $0x10] sm:$0xf]
  %v56 = vld [vmem:[%s0 + $0x14] sm:$0xf]
  %v57 = vld [vmem:[%s0 + $0x18] sm:$0xf]
  %v58 = vld [vmem:[%s0 + $0x1c] sm:$0xf]
  %v59 = vld [vmem:[%s0 + $0x20] sm:$0xf]
  %v60 = vld [vmem:[%s0 + $0x24] sm:$0xf]
  %v61 = vld [vmem:[%s0 + $0x28] sm:$0xf]
  %v62 = vld [vmem:[%s0 + $0x2c] sm:$0xf]
  %v63 = vld [vmem:[%s0 + $0x30] sm:$0xf]
  %v64 = vld [vmem:[%s0 + $0x34] sm:$0xf]
  %v65 = vld [vmem:[%s0 + $0x38] sm:$0xf]
  %v66 = vld [vmem:[%s0 + $0x3c] sm:$0xf]
  %v67 = vld [vmem:[%s1] sm:$0xf]
  %v68 = vld [vmem:[%s1 + $0x4] sm:$0xf]
  %v69 = vld [vmem:[%s1 + $0x8] sm:$0xf]
  %v70 = vld [vmem:[%s1 + $0xc] sm:$0xf]
  %v71 = vld [vmem:[%s1 + $0x10] sm:$0xf]
  %v72 = vld [vmem:[%s1 + $0x14] sm:$0xf]
  %v73 = vld [vmem:[%s1 + $0x18] sm:$0xf]
  %v74 = vld [vmem:[%s1 + $0x1c] sm:$0xf]
  %v75 = vld [vmem:[%s1 + $0x20] sm:$0xf]
  %v76 = vld [vmem:[%s1 + $0x24] sm:$0xf]
  %v77 = vld [vmem:[%s1 + $0x28] sm:$0xf]
  %v78 = vld [vmem:[%s1 + $0x2c] sm:$0xf]
  %v79 = vld [vmem:[%s1 + $0x30] sm:$0xf]
  %v80 = vld [vmem:[%s1 + $0x34] sm:$0xf]
  %v81 = vld [vmem:[%s1 + $0x38] sm:$0xf]
  %v82 = vld [vmem:[%s1 + $0x3c] sm:$0xf]
  %v99 = vunpack.c.l.b16 %v51
  %v100 = vunpack.c.l.b16 %v52
  %v101 = vunpack.c.l.b16 %v53
  %v102 = vunpack.c.l.b16 %v54
  %v103 = vunpack.c.l.b16 %v55
  %v104 = vunpack.c.l.b16 %v56
  %v105 = vunpack.c.l.b16 %v57
  %v106 = vunpack.c.l.b16 %v58
  %v107 = vunpack.c.l.b16 %v59
  %v108 = vunpack.c.l.b16 %v60
  %v109 = vunpack.c.l.b16 %v61
  %v110 = vunpack.c.l.b16 %v62
  %v111 = vunpack.c.l.b16 %v63
  %v112 = vunpack.c.l.b16 %v64
  %v113 = vunpack.c.l.b16 %v65
  %v114 = vunpack.c.l.b16 %v66
  %v115 = vpack.c.b16 %v100, %v99
  %v116 = vpack.c.b16 %v102, %v101
  %v117 = vpack.c.b16 %v104, %v103
  %v118 = vpack.c.b16 %v106, %v105
  %v119 = vpack.c.b16 %v108, %v107
  %v120 = vpack.c.b16 %v110, %v109
  %v121 = vpack.c.b16 %v112, %v111
  %v122 = vpack.c.b16 %v114, %v113
  %v147 = vunpack.c.l.b16 %v67
  %v148 = vunpack.c.l.b16 %v68
  %v149 = vunpack.c.l.b16 %v69
  %v150 = vunpack.c.l.b16 %v70
  %v151 = vunpack.c.l.b16 %v71
  %v152 = vunpack.c.l.b16 %v72
  %v153 = vunpack.c.l.b16 %v73
  %v154 = vunpack.c.l.b16 %v74
  %v155 = vunpack.c.l.b16 %v75
  %v156 = vunpack.c.l.b16 %v76
  %v157 = vunpack.c.l.b16 %v77
  %v158 = vunpack.c.l.b16 %v78
  %v159 = vunpack.c.l.b16 %v79
  %v160 = vunpack.c.l.b16 %v80
  %v161 = vunpack.c.l.b16 %v81
  %v162 = vunpack.c.l.b16 %v82
  %v163 = vpack.c.b16 %v148, %v147
  %v164 = vpack.c.b16 %v150, %v149
  %v165 = vpack.c.b16 %v152, %v151
  %v166 = vpack.c.b16 %v154, %v153
  %v167 = vpack.c.b16 %v156, %v155
  %v168 = vpack.c.b16 %v158, %v157
  %v169 = vpack.c.b16 %v160, %v159
  %v170 = vpack.c.b16 %v162, %v161
  %179 = vmatprep.subr.bf16.mxu0 0
  %180 = vmatpush1.bf16.msra.mxu0 %v163
  %181 = vmatprep.subr.bf16.mxu0 0
  %182 = vmatpush1.bf16.msra.mxu0 %v164
  %183 = vmatprep.subr.bf16.mxu0 0
  %184 = vmatpush1.bf16.msra.mxu0 %v165
  %185 = vmatprep.subr.bf16.mxu0 0
  %186 = vmatpush1.bf16.msra.mxu0 %v166
  %187 = vmatprep.subr.bf16.mxu0 0
  %188 = vmatpush1.bf16.msra.mxu0 %v167
  %189 = vmatprep.subr.bf16.mxu0 0
  %190 = vmatpush1.bf16.msra.mxu0 %v168
  %191 = vmatprep.subr.bf16.mxu0 0
  %192 = vmatpush1.bf16.msra.mxu0 %v169
  %193 = vmatprep.subr.bf16.mxu0 0
  %194 = vmatpush1.bf16.msra.mxu0 %v170
  %195 = vmatprep.subr.bf16.mxu0 0
  %196 = vmatpush1.bf16.msra.mxu0 0
  %197 = vmatprep.subr.bf16.mxu0 0
  %198 = vmatpush1.bf16.msra.mxu0 0
  %199 = vmatprep.subr.bf16.mxu0 0
  %200 = vmatpush1.bf16.msra.mxu0 0
  %201 = vmatprep.subr.bf16.mxu0 0
  %202 = vmatpush1.bf16.msra.mxu0 0
  %203 = vmatprep.subr.bf16.mxu0 0
  %204 = vmatpush1.bf16.msra.mxu0 0
  %205 = vmatprep.subr.bf16.mxu0 0
  %206 = vmatpush1.bf16.msra.mxu0 0
  %207 = vmatprep.subr.bf16.mxu0 0
  %208 = vmatpush1.bf16.msra.mxu0 0
  %209 = vmatprep.subr.bf16.mxu0 0
  %210 = vmatpush1.bf16.msra.mxu0 0
  %211 = vmatprep.mubr.bf16.mxu0 0
  %212 = vmatmul.mubr.bf16.gmra.mrb[0].mxu0 %v115
  %v213 = vpop.f32.mrb[0].mxu0
  %v214 = vadd.f32 0.0, %v213
  %v215 = vpop.f32.mrb[0].mxu0
  %v216 = vpop.f32.mrb[0].mxu0
  %v217 = vadd.f32 0.0, %v216
  %v218 = vpop.f32.mrb[0].mxu0
  %219 = vmatprep.mubr.bf16.mxu0 0
  %220 = vmatmul.mubr.bf16.gmra.mrb[0].mxu0 %v116
  %v221 = vpop.f32.mrb[0].mxu0
  %v222 = vadd.f32 0.0, %v221
  %v223 = vpop.f32.mrb[0].mxu0
  %v224 = vpop.f32.mrb[0].mxu0
  %v225 = vadd.f32 0.0, %v224
  %v226 = vpop.f32.mrb[0].mxu0
  %227 = vmatprep.mubr.bf16.mxu0 0
  %228 = vmatmul.mubr.bf16.gmra.mrb[0].mxu0 %v117
  %v229 = vpop.f32.mrb[0].mxu0
  %v230 = vadd.f32 0.0, %v229
  %v231 = vpop.f32.mrb[0].mxu0
  %v232 = vpop.f32.mrb[0].mxu0
  %v233 = vadd.f32 0.0, %v232
  %v234 = vpop.f32.mrb[0].mxu0
  %235 = vmatprep.mubr.bf16.mxu0 0
  %236 = vmatmul.mubr.bf16.gmra.mrb[0].mxu0 %v118
  %v237 = vpop.f32.mrb[0].mxu0
  %v238 = vadd.f32 0.0, %v237
  %v239 = vpop.f32.mrb[0].mxu0
  %v240 = vpop.f32.mrb[0].mxu0
  %v241 = vadd.f32 0.0, %v240
  %v242 = vpop.f32.mrb[0].mxu0
  %243 = vmatprep.mubr.bf16.mxu0 0
  %244 = vmatmul.mubr.bf16.gmra.mrb[0].mxu0 %v119
  %v245 = vpop.f32.mrb[0].mxu0
  %v246 = vadd.f32 0.0, %v245
  %v247 = vpop.f32.mrb[0].mxu0
  %v248 = vpop.f32.mrb[0].mxu0
  %v249 = vadd.f32 0.0, %v248
  %v250 = vpop.f32.mrb[0].mxu0
  %251 = vmatprep.mubr.bf16.mxu0 0
  %252 = vmatmul.mubr.bf16.gmra.mrb[0].mxu0 %v120
  %v253 = vpop.f32.mrb[0].mxu0
  %v254 = vadd.f32 0.0, %v253
  %v255 = vpop.f32.mrb[0].mxu0
  %v256 = vpop.f32.mrb[0].mxu0
  %v257 = vadd.f32 0.0, %v256
  %v258 = vpop.f32.mrb[0].mxu0
  %259 = vmatprep.mubr.bf16.mxu0 0
  %260 = vmatmul.mubr.bf16.gmra.mrb[0].mxu0 %v121
  %v261 = vpop.f32.mrb[0].mxu0
  %v262 = vadd.f32 0.0, %v261
  %v263 = vpop.f32.mrb[0].mxu0
  %v264 = vpop.f32.mrb[0].mxu0
  %v265 = vadd.f32 0.0, %v264
  %v266 = vpop.f32.mrb[0].mxu0
  %267 = vmatprep.mubr.bf16.mxu0 0
  %268 = vmatmul.mubr.bf16.gmra.mrb[0].mxu0 %v122
  %v269 = vpop.f32.mrb[0].mxu0
  %v270 = vadd.f32 0.0, %v269
  %v271 = vpop.f32.mrb[0].mxu0
  %v272 = vpop.f32.mrb[0].mxu0
  %v273 = vadd.f32 0.0, %v272
  %v274 = vpop.f32.mrb[0].mxu0
  %275 = vdwg.mxu0
  %v276 = vadd.f32 %v35, %v214
  %v277 = vadd.f32 %v36, %v217
  %v278 = vadd.f32 %v37, %v222
  %v279 = vadd.f32 %v38, %v225
  %v280 = vadd.f32 %v39, %v230
  %v281 = vadd.f32 %v40, %v233
  %v282 = vadd.f32 %v41, %v238
  %v283 = vadd.f32 %v42, %v241
  %v284 = vadd.f32 %v43, %v246
  %v285 = vadd.f32 %v44, %v249
  %v286 = vadd.f32 %v45, %v254
  %v287 = vadd.f32 %v46, %v257
  %v288 = vadd.f32 %v47, %v262
  %v289 = vadd.f32 %v48, %v265
  %v290 = vadd.f32 %v49, %v270
  %v291 = vadd.f32 %v50, %v273
  %292 = vst [vmem:[#allocation2] sm:$0xff] %v276
  %293 = vst [vmem:[#allocation2 + $0x8] sm:$0xff] %v277
  %294 = vst [vmem:[#allocation2 + $0x10] sm:$0xff] %v278
  %295 = vst [vmem:[#allocation2 + $0x18] sm:$0xff] %v279
  %296 = vst [vmem:[#allocation2 + $0x20] sm:$0xff] %v280
  %297 = vst [vmem:[#allocation2 + $0x28] sm:$0xff] %v281
  %298 = vst [vmem:[#allocation2 + $0x30] sm:$0xff] %v282
  %299 = vst [vmem:[#allocation2 + $0x38] sm:$0xff] %v283
  %300 = vst [vmem:[#allocation2 + $0x40] sm:$0xff] %v284
  %301 = vst [vmem:[#allocation2 + $0x48] sm:$0xff] %v285
  %302 = vst [vmem:[#allocation2 + $0x50] sm:$0xff] %v286
  %303 = vst [vmem:[#allocation2 + $0x58] sm:$0xff] %v287
  %304 = vst [vmem:[#allocation2 + $0x60] sm:$0xff] %v288
  %305 = vst [vmem:[#allocation2 + $0x68] sm:$0xff] %v289
  %306 = vst [vmem:[#allocation2 + $0x70] sm:$0xff] %v290
  %307 = vst [vmem:[#allocation2 + $0x78] sm:$0xff] %v291
  // Predicated region
  $region18: #{yolo_pafpn_forward.61} parent=0 // pred_check
    %p308 = pneg %p15
  $region19: #{yolo_pafpn_forward.61} parent=0 // pred_check_branch
    %310 = sbr.rel (%p308) target = $region21
  $region20: #{yolo_pafpn_forward.61} parent=0 // pred_region
    %v311 = vld [vmem:[#allocation2] sm:$0xff]
    %v312 = vld [vmem:[#allocation2 + $0x8] sm:$0xff]
    %v313 = vld [vmem:[#allocation2 + $0x10] sm:$0xff]
    %v314 = vld [vmem:[#allocation2 + $0x18] sm:$0xff]
    %v315 = vld [vmem:[#allocation2 + $0x20] sm:$0xff]
    %v316 = vld [vmem:[#allocation2 + $0x28] sm:$0xff]
    %v317 = vld [vmem:[#allocation2 + $0x30] sm:$0xff]
    %v318 = vld [vmem:[#allocation2 + $0x38] sm:$0xff]
    %v319 = vld [vmem:[#allocation2 + $0x40] sm:$0xff]
    %v320 = vld [vmem:[#allocation2 + $0x48] sm:$0xff]
    %v321 = vld [vmem:[#allocation2 + $0x50] sm:$0xff]
    %v322 = vld [vmem:[#allocation2 + $0x58] sm:$0xff]
    %v323 = vld [vmem:[#allocation2 + $0x60] sm:$0xff]
    %v324 = vld [vmem:[#allocation2 + $0x68] sm:$0xff]
    %v325 = vld [vmem:[#allocation2 + $0x70] sm:$0xff]
    %v326 = vld [vmem:[#allocation2 + $0x78] sm:$0xff]
    %v327 = vld [vmem:[%s2] sm:$0x1]
    %v329 = vlaneseq
    %v330 = vshrl.u32 %v329, 7
    %v331 = vsub.s32 0, %v330
    %v332 = vrot.slane %v327, %v331
    %v334 = vadd.f32 %v311, %v332
    %v335 = vadd.f32 %v312, %v332
    %v336 = vadd.f32 %v313, %v332
    %v337 = vadd.f32 %v314, %v332
    %v338 = vadd.f32 %v315, %v332
    %v339 = vadd.f32 %v316, %v332
    %v340 = vadd.f32 %v317, %v332
    %v341 = vadd.f32 %v318, %v332
    %v342 = vadd.f32 %v319, %v332
    %v343 = vadd.f32 %v320, %v332
    %v344 = vadd.f32 %v321, %v332
    %v345 = vadd.f32 %v322, %v332
    %v346 = vadd.f32 %v323, %v332
    %v347 = vadd.f32 %v324, %v332
    %v348 = vadd.f32 %v325, %v332
    %v349 = vadd.f32 %v326, %v332
    %v350 = vand.u32 2147483647, %v334
    %v351 = vand.u32 2147483647, %v335
    %v352 = vand.u32 2147483647, %v336
    %v353 = vand.u32 2147483647, %v337
    %v354 = vand.u32 2147483647, %v338
    %v355 = vand.u32 2147483647, %v339
    %v356 = vand.u32 2147483647, %v340
    %v357 = vand.u32 2147483647, %v341
    %v358 = vand.u32 2147483647, %v342
    %v359 = vand.u32 2147483647, %v343
    %v360 = vand.u32 2147483647, %v344
    %v361 = vand.u32 2147483647, %v345
    %v362 = vand.u32 2147483647, %v346
    %v363 = vand.u32 2147483647, %v347
    %v364 = vand.u32 2147483647, %v348
    %v365 = vand.u32 2147483647, %v349
    %v366 = vsub.f32 0.0, %v350
    %v367 = vsub.f32 0.0, %v351
    %v368 = vsub.f32 0.0, %v352
    %v369 = vsub.f32 0.0, %v353
    %v370 = vsub.f32 0.0, %v354
    %v371 = vsub.f32 0.0, %v355
    %v372 = vsub.f32 0.0, %v356
    %v373 = vsub.f32 0.0, %v357
    %v374 = vsub.f32 0.0, %v358
    %v375 = vsub.f32 0.0, %v359
    %v376 = vsub.f32 0.0, %v360
    %v377 = vsub.f32 0.0, %v361
    %v378 = vsub.f32 0.0, %v362
    %v379 = vsub.f32 0.0, %v363
    %v380 = vsub.f32 0.0, %v364
    %v381 = vsub.f32 0.0, %v365
    %v382 = vmul.f32 %v366, 1.442695
    %v383 = vpow.pop %v382
    %v384 = vmul.f32 %v367, 1.442695
    %v385 = vpow.pop %v384
    %v386 = vmul.f32 %v368, 1.442695
    %v387 = vpow.pop %v386
    %v388 = vmul.f32 %v369, 1.442695
    %v389 = vpow.pop %v388
    %v390 = vmul.f32 %v370, 1.442695
    %v391 = vpow.pop %v390
    %v392 = vmul.f32 %v371, 1.442695
    %v393 = vpow.pop %v392
    %v394 = vmul.f32 %v372, 1.442695
    %v395 = vpow.pop %v394
    %v396 = vmul.f32 %v373, 1.442695
    %v397 = vpow.pop %v396
    %v398 = vmul.f32 %v374, 1.442695
    %v399 = vpow.pop %v398
    %v400 = vmul.f32 %v375, 1.442695
    %v401 = vpow.pop %v400
    %v402 = vmul.f32 %v376, 1.442695
    %v403 = vpow.pop %v402
    %v404 = vmul.f32 %v377, 1.442695
    %v405 = vpow.pop %v404
    %v406 = vmul.f32 %v378, 1.442695
    %v407 = vpow.pop %v406
    %v408 = vmul.f32 %v379, 1.442695
    %v409 = vpow.pop %v408
    %v410 = vmul.f32 %v380, 1.442695
    %v411 = vpow.pop %v410
    %v412 = vmul.f32 %v381, 1.442695
    %v413 = vpow.pop %v412
    %v414 = vadd.f32 %v383, 1.0
    %v415 = vadd.f32 %v385, 1.0
    %v416 = vadd.f32 %v387, 1.0
    %v417 = vadd.f32 %v389, 1.0
    %v418 = vadd.f32 %v391, 1.0
    %v419 = vadd.f32 %v393, 1.0
    %v420 = vadd.f32 %v395, 1.0
    %v421 = vadd.f32 %v397, 1.0
    %v422 = vadd.f32 %v399, 1.0
    %v423 = vadd.f32 %v401, 1.0
    %v424 = vadd.f32 %v403, 1.0
    %v425 = vadd.f32 %v405, 1.0
    %v426 = vadd.f32 %v407, 1.0
    %v427 = vadd.f32 %v409, 1.0
    %v428 = vadd.f32 %v411, 1.0
    %v429 = vadd.f32 %v413, 1.0
    %v430 = vrcp.pop %v414
    %v431 = vrcp.pop %v415
    %v432 = vrcp.pop %v416
    %v433 = vrcp.pop %v417
    %v434 = vrcp.pop %v418
    %v435 = vrcp.pop %v419
    %v436 = vrcp.pop %v420
    %v437 = vrcp.pop %v421
    %v438 = vrcp.pop %v422
    %v439 = vrcp.pop %v423
    %v440 = vrcp.pop %v424
    %v441 = vrcp.pop %v425
    %v442 = vrcp.pop %v426
    %v443 = vrcp.pop %v427
    %v444 = vrcp.pop %v428
    %v445 = vrcp.pop %v429
    %vm446 = vcmp.ge.f32.partialorder %v334, 0.0
    %vm447 = vcmp.ge.f32.partialorder %v335, 0.0
    %vm448 = vcmp.ge.f32.partialorder %v336, 0.0
    %vm449 = vcmp.ge.f32.partialorder %v337, 0.0
    %vm450 = vcmp.ge.f32.partialorder %v338, 0.0
    %vm451 = vcmp.ge.f32.partialorder %v339, 0.0
    %vm452 = vcmp.ge.f32.partialorder %v340, 0.0
    %vm453 = vcmp.ge.f32.partialorder %v341, 0.0
    %vm454 = vcmp.ge.f32.partialorder %v342, 0.0
    %vm455 = vcmp.ge.f32.partialorder %v343, 0.0
    %vm456 = vcmp.ge.f32.partialorder %v344, 0.0
    %vm457 = vcmp.ge.f32.partialorder %v345, 0.0
    %vm458 = vcmp.ge.f32.partialorder %v346, 0.0
    %vm459 = vcmp.ge.f32.partialorder %v347, 0.0
    %vm460 = vcmp.ge.f32.partialorder %v348, 0.0
    %vm461 = vcmp.ge.f32.partialorder %v349, 0.0
    %v462 = vsub.f32 1.0, %v430
    %v463 = vsub.f32 1.0, %v431
    %v464 = vsub.f32 1.0, %v432
    %v465 = vsub.f32 1.0, %v433
    %v466 = vsub.f32 1.0, %v434
    %v467 = vsub.f32 1.0, %v435
    %v468 = vsub.f32 1.0, %v436
    %v469 = vsub.f32 1.0, %v437
    %v470 = vsub.f32 1.0, %v438
    %v471 = vsub.f32 1.0, %v439
    %v472 = vsub.f32 1.0, %v440
    %v473 = vsub.f32 1.0, %v441
    %v474 = vsub.f32 1.0, %v442
    %v475 = vsub.f32 1.0, %v443
    %v476 = vsub.f32 1.0, %v444
    %v477 = vsub.f32 1.0, %v445
    %v478 = vsel %vm446, %v430, %v462
    %v479 = vsel %vm447, %v431, %v463
    %v480 = vsel %vm448, %v432, %v464
    %v481 = vsel %vm449, %v433, %v465
    %v482 = vsel %vm450, %v434, %v466
    %v483 = vsel %vm451, %v435, %v467
    %v484 = vsel %vm452, %v436, %v468
    %v485 = vsel %vm453, %v437, %v469
    %v486 = vsel %vm454, %v438, %v470
    %v487 = vsel %vm455, %v439, %v471
    %v488 = vsel %vm456, %v440, %v472
    %v489 = vsel %vm457, %v441, %v473
    %v490 = vsel %vm458, %v442, %v474
    %v491 = vsel %vm459, %v443, %v475
    %v492 = vsel %vm460, %v444, %v476
    %v493 = vsel %vm461, %v445, %v477
    %v494 = vmul.f32 %v334, %v478
    %v495 = vmul.f32 %v335, %v479
    %v496 = vmul.f32 %v336, %v480
    %v497 = vmul.f32 %v337, %v481
    %v498 = vmul.f32 %v338, %v482
    %v499 = vmul.f32 %v339, %v483
    %v500 = vmul.f32 %v340, %v484
    %v501 = vmul.f32 %v341, %v485
    %v502 = vmul.f32 %v342, %v486
    %v503 = vmul.f32 %v343, %v487
    %v504 = vmul.f32 %v344, %v488
    %v505 = vmul.f32 %v345, %v489
    %v506 = vmul.f32 %v346, %v490
    %v507 = vmul.f32 %v347, %v491
    %v508 = vmul.f32 %v348, %v492
    %v509 = vmul.f32 %v349, %v493
    %v510 = vpack.c.bf16 %v495, %v494
    %v511 = vpack.c.bf16 %v497, %v496
    %v512 = vpack.c.bf16 %v499, %v498
    %v513 = vpack.c.bf16 %v501, %v500
    %v514 = vpack.c.bf16 %v503, %v502
    %v515 = vpack.c.bf16 %v505, %v504
    %v516 = vpack.c.bf16 %v507, %v506
    %v517 = vpack.c.bf16 %v509, %v508
    %v526 = vunpack.c.l.b16 %v510
    %v527 = vunpack.c.h.b16 %v510
    %v528 = vunpack.c.l.b16 %v511
    %v529 = vunpack.c.h.b16 %v511
    %v530 = vunpack.c.l.b16 %v512
    %v531 = vunpack.c.h.b16 %v512
    %v532 = vunpack.c.l.b16 %v513
    %v533 = vunpack.c.h.b16 %v513
    %v534 = vunpack.c.l.b16 %v514
    %v535 = vunpack.c.h.b16 %v514
    %v536 = vunpack.c.l.b16 %v515
    %v537 = vunpack.c.h.b16 %v515
    %v538 = vunpack.c.l.b16 %v516
    %v539 = vunpack.c.h.b16 %v516
    %v540 = vunpack.c.l.b16 %v517
    %v541 = vunpack.c.h.b16 %v517
    %v542 = vpack.c.b16 %v526, %v526
    %v543 = vpack.c.b16 %v527, %v527
    %v544 = vpack.c.b16 %v528, %v528
    %v545 = vpack.c.b16 %v529, %v529
    %v546 = vpack.c.b16 %v530, %v530
    %v547 = vpack.c.b16 %v531, %v531
    %v548 = vpack.c.b16 %v532, %v532
    %v549 = vpack.c.b16 %v533, %v533
    %v550 = vpack.c.b16 %v534, %v534
    %v551 = vpack.c.b16 %v535, %v535
    %v552 = vpack.c.b16 %v536, %v536
    %v553 = vpack.c.b16 %v537, %v537
    %v554 = vpack.c.b16 %v538, %v538
    %v555 = vpack.c.b16 %v539, %v539
    %v556 = vpack.c.b16 %v540, %v540
    %v557 = vpack.c.b16 %v541, %v541
    %574 = vst [vmem:[%s3] sm:$0xf] %v542
    %575 = vst [vmem:[%s3 + $0x4] sm:$0xf] %v543
    %576 = vst [vmem:[%s3 + $0x8] sm:$0xf] %v544
    %577 = vst [vmem:[%s3 + $0xc] sm:$0xf] %v545
    %578 = vst [vmem:[%s3 + $0x10] sm:$0xf] %v546
    %579 = vst [vmem:[%s3 + $0x14] sm:$0xf] %v547
    %580 = vst [vmem:[%s3 + $0x18] sm:$0xf] %v548
    %581 = vst [vmem:[%s3 + $0x1c] sm:$0xf] %v549
    %582 = vst [vmem:[%s3 + $0x20] sm:$0xf] %v550
    %583 = vst [vmem:[%s3 + $0x24] sm:$0xf] %v551
    %584 = vst [vmem:[%s3 + $0x28] sm:$0xf] %v552
    %585 = vst [vmem:[%s3 + $0x2c] sm:$0xf] %v553
    %586 = vst [vmem:[%s3 + $0x30] sm:$0xf] %v554
    %587 = vst [vmem:[%s3 + $0x34] sm:$0xf] %v555
    %588 = vst [vmem:[%s3 + $0x38] sm:$0xf] %v556
    %589 = vst [vmem:[%s3 + $0x3c] sm:$0xf] %v557
  $region21: #{yolo_pafpn_forward.61} parent=0 // pred_fallthru
    _
  // Predicated region
  $region22: #{yolo_pafpn_forward.61} parent=0 // pred_check
    _
  $region23: #{yolo_pafpn_forward.61} parent=0 // pred_check_branch
    %591 = sbr.rel (0) target = $region25
  $region24: #{yolo_pafpn_forward.61} parent=0 // pred_region
    _
  $region25: #{yolo_pafpn_forward.61} parent=0 // pred_fallthru
    _
  // Predicated region
  $region26: #{yolo_pafpn_forward.61} parent=0 // pred_check
    _
  $region27: #{yolo_pafpn_forward.61} parent=0 // pred_check_branch
    %593 = sbr.rel (0) target = $region29
  $region28: #{yolo_pafpn_forward.61} parent=0 // pred_region
    _
  $region29: #{yolo_pafpn_forward.61} parent=0 // pred_fallthru
    _

// kernel: yolo_pafpn_forward.70
$region0: #{yolo_pafpn_forward.70}
  #allocation0 [shape = 'u32[]', space=smem, size = 0x4, offset = 0x4, fixed_abs, tag = 'smem constant byte address 0x4 - core index']
  #allocation1 [shape = 'u32[144,128]{1,0:T(1,128)}', space=vmem, size = 0x12000, scoped, tag = 'internal scratch']
  #allocation2 [shape = 'f32[32,128]{1,0:T(8,128)}', space=vmem, size = 0x4000, scoped, tag = 'scratch operand']
  %s0 = inlined_call_operand.vmem [shape: bf16[32,128], index: 0, kind: input, shape index: {}]
  %s1 = inlined_call_operand.vmem [shape: bf16[128,128], index: 1, kind: input, shape index: {}]
  %s2 = inlined_call_operand.vmem [shape: f32[1,128], index: 2, kind: input, shape index: {}]
  %s3 = inlined_call_operand.vmem [shape: bf16[32,128], index: 3, kind: output, shape index: {}]
  %s4 = sld [smem:[#allocation0]]
  $region30: #{yolo_pafpn_forward.70} parent=0
    _
  %s6 = ssub.s32 1, %s4
  %s7 = scalar_select 0, %s6, %s4
  // Predicated region
  $region2: #{yolo_pafpn_forward.70} parent=0 // pred_check
    _
  $region3: #{yolo_pafpn_forward.70} parent=0 // pred_check_branch
    %9 = sbr.rel (0) target = $region5
  $region4: #{yolo_pafpn_forward.70} parent=0 // pred_region
    _
  $region5: #{yolo_pafpn_forward.70} parent=0 // pred_fallthru
    _
  // Predicated region
  $region6: #{yolo_pafpn_forward.70} parent=0 // pred_check
    _
  $region7: #{yolo_pafpn_forward.70} parent=0 // pred_check_branch
    %11 = sbr.rel (0) target = $region9
  $region8: #{yolo_pafpn_forward.70} parent=0 // pred_region
    _
  $region9: #{yolo_pafpn_forward.70} parent=0 // pred_fallthru
    _
  // Predicated region
  $region10: #{yolo_pafpn_forward.70} parent=0 // pred_check
    _
  $region11: #{yolo_pafpn_forward.70} parent=0 // pred_check_branch
    %13 = sbr.rel (0) target = $region13
  $region12: #{yolo_pafpn_forward.70} parent=0 // pred_region
    _
  $region13: #{yolo_pafpn_forward.70} parent=0 // pred_fallthru
    _
  %p15 = scmp.eq.s32.totalorder 0, 0
  // Predicated region
  $region14: #{yolo_pafpn_forward.70} parent=0 // pred_check
    %p16 = pneg %p15
  $region15: #{yolo_pafpn_forward.70} parent=0 // pred_check_branch
    %18 = sbr.rel (%p16) target = $region17
  $region16: #{yolo_pafpn_forward.70} parent=0 // pred_region
    %19 = vst [vmem:[#allocation2] sm:$0xff] 0.0
    %20 = vst [vmem:[#allocation2 + $0x8] sm:$0xff] 0.0
    %21 = vst [vmem:[#allocation2 + $0x10] sm:$0xff] 0.0
    %22 = vst [vmem:[#allocation2 + $0x18] sm:$0xff] 0.0
  $region17: #{yolo_pafpn_forward.70} parent=0 // pred_fallthru
    _
  %v23 = vld [vmem:[#allocation2] sm:$0xff]
  %v24 = vld [vmem:[#allocation2 + $0x8] sm:$0xff]
  %v25 = vld [vmem:[#allocation2 + $0x10] sm:$0xff]
  %v26 = vld [vmem:[#allocation2 + $0x18] sm:$0xff]
  %v27 = vld [vmem:[%s0] sm:$0xf]
  %v28 = vld [vmem:[%s0 + $0x4] sm:$0xf]
  %v29 = vld [vmem:[%s0 + $0x8] sm:$0xf]
  %v30 = vld [vmem:[%s0 + $0xc] sm:$0xf]
  %v31 = vld [vmem:[%s1] sm:$0xf]
  %v32 = vld [vmem:[%s1 + $0x4] sm:$0xf]
  %v33 = vld [vmem:[%s1 + $0x8] sm:$0xf]
  %v34 = vld [vmem:[%s1 + $0xc] sm:$0xf]
  %v35 = vld [vmem:[%s1 + $0x10] sm:$0xf]
  %v36 = vld [vmem:[%s1 + $0x14] sm:$0xf]
  %v37 = vld [vmem:[%s1 + $0x18] sm:$0xf]
  %v38 = vld [vmem:[%s1 + $0x1c] sm:$0xf]
  %v39 = vld [vmem:[%s1 + $0x20] sm:$0xf]
  %v40 = vld [vmem:[%s1 + $0x24] sm:$0xf]
  %v41 = vld [vmem:[%s1 + $0x28] sm:$0xf]
  %v42 = vld [vmem:[%s1 + $0x2c] sm:$0xf]
  %v43 = vld [vmem:[%s1 + $0x30] sm:$0xf]
  %v44 = vld [vmem:[%s1 + $0x34] sm:$0xf]
  %v45 = vld [vmem:[%s1 + $0x38] sm:$0xf]
  %v46 = vld [vmem:[%s1 + $0x3c] sm:$0xf]
  %v51 = vunpack.c.l.b16 %v27
  %v52 = vunpack.c.l.b16 %v28
  %v53 = vunpack.c.l.b16 %v29
  %v54 = vunpack.c.l.b16 %v30
  %v55 = vpack.c.b16 %v52, %v51
  %v56 = vpack.c.b16 %v54, %v53
  %v75 = vunpack.c.l.b16 %v31
  %v76 = vunpack.c.l.b16 %v32
  %v77 = vunpack.c.l.b16 %v33
  %v78 = vunpack.c.l.b16 %v34
  %v79 = vunpack.c.l.b16 %v35
  %v80 = vunpack.c.l.b16 %v36
  %v81 = vunpack.c.l.b16 %v37
  %v82 = vunpack.c.l.b16 %v38
  %v83 = vunpack.c.l.b16 %v39
  %v84 = vunpack.c.l.b16 %v40
  %v85 = vunpack.c.l.b16 %v41
  %v86 = vunpack.c.l.b16 %v42
  %v87 = vunpack.c.l.b16 %v43
  %v88 = vunpack.c.l.b16 %v44
  %v89 = vunpack.c.l.b16 %v45
  %v90 = vunpack.c.l.b16 %v46
  %v91 = vpack.c.b16 %v76, %v75
  %v92 = vpack.c.b16 %v78, %v77
  %v93 = vpack.c.b16 %v80, %v79
  %v94 = vpack.c.b16 %v82, %v81
  %v95 = vpack.c.b16 %v84, %v83
  %v96 = vpack.c.b16 %v86, %v85
  %v97 = vpack.c.b16 %v88, %v87
  %v98 = vpack.c.b16 %v90, %v89
  %107 = vmatprep.subr.bf16.mxu0 0
  %108 = vmatpush1.bf16.msra.mxu0 %v91
  %109 = vmatprep.subr.bf16.mxu0 0
  %110 = vmatpush1.bf16.msra.mxu0 %v92
  %111 = vmatprep.subr.bf16.mxu0 0
  %112 = vmatpush1.bf16.msra.mxu0 %v93
  %113 = vmatprep.subr.bf16.mxu0 0
  %114 = vmatpush1.bf16.msra.mxu0 %v94
  %115 = vmatprep.subr.bf16.mxu0 0
  %116 = vmatpush1.bf16.msra.mxu0 %v95
  %117 = vmatprep.subr.bf16.mxu0 0
  %118 = vmatpush1.bf16.msra.mxu0 %v96
  %119 = vmatprep.subr.bf16.mxu0 0
  %120 = vmatpush1.bf16.msra.mxu0 %v97
  %121 = vmatprep.subr.bf16.mxu0 0
  %122 = vmatpush1.bf16.msra.mxu0 %v98
  %123 = vmatprep.subr.bf16.mxu0 0
  %124 = vmatpush1.bf16.msra.mxu0 0
  %125 = vmatprep.subr.bf16.mxu0 0
  %126 = vmatpush1.bf16.msra.mxu0 0
  %127 = vmatprep.subr.bf16.mxu0 0
  %128 = vmatpush1.bf16.msra.mxu0 0
  %129 = vmatprep.subr.bf16.mxu0 0
  %130 = vmatpush1.bf16.msra.mxu0 0
  %131 = vmatprep.subr.bf16.mxu0 0
  %132 = vmatpush1.bf16.msra.mxu0 0
  %133 = vmatprep.subr.bf16.mxu0 0
  %134 = vmatpush1.bf16.msra.mxu0 0
  %135 = vmatprep.subr.bf16.mxu0 0
  %136 = vmatpush1.bf16.msra.mxu0 0
  %137 = vmatprep.subr.bf16.mxu0 0
  %138 = vmatpush1.bf16.msra.mxu0 0
  %139 = vmatprep.mubr.bf16.mxu0 0
  %140 = vmatmul.mubr.bf16.gmra.mrb[0].mxu0 %v55
  %v141 = vpop.f32.mrb[0].mxu0
  %v142 = vadd.f32 0.0, %v141
  %v143 = vpop.f32.mrb[0].mxu0
  %v144 = vpop.f32.mrb[0].mxu0
  %v145 = vadd.f32 0.0, %v144
  %v146 = vpop.f32.mrb[0].mxu0
  %147 = vmatprep.mubr.bf16.mxu0 0
  %148 = vmatmul.mubr.bf16.gmra.mrb[0].mxu0 %v56
  %v149 = vpop.f32.mrb[0].mxu0
  %v150 = vadd.f32 0.0, %v149
  %v151 = vpop.f32.mrb[0].mxu0
  %v152 = vpop.f32.mrb[0].mxu0
  %v153 = vadd.f32 0.0, %v152
  %v154 = vpop.f32.mrb[0].mxu0
  %155 = vdwg.mxu0
  %v156 = vadd.f32 %v23, %v142
  %v157 = vadd.f32 %v24, %v145
  %v158 = vadd.f32 %v25, %v150
  %v159 = vadd.f32 %v26, %v153
  %160 = vst [vmem:[#allocation2] sm:$0xff] %v156
  %161 = vst [vmem:[#allocation2 + $0x8] sm:$0xff] %v157
  %162 = vst [vmem:[#allocation2 + $0x10] sm:$0xff] %v158
  %163 = vst [vmem:[#allocation2 + $0x18] sm:$0xff] %v159
  // Predicated region
  $region18: #{yolo_pafpn_forward.70} parent=0 // pred_check
    %p164 = pneg %p15
  $region19: #{yolo_pafpn_forward.70} parent=0 // pred_check_branch
    %166 = sbr.rel (%p164) target = $region21
  $region20: #{yolo_pafpn_forward.70} parent=0 // pred_region
    %v167 = vld [vmem:[#allocation2] sm:$0xff]
    %v168 = vld [vmem:[#allocation2 + $0x8] sm:$0xff]
    %v169 = vld [vmem:[#allocation2 + $0x10] sm:$0xff]
    %v170 = vld [vmem:[#allocation2 + $0x18] sm:$0xff]
    %v171 = vld [vmem:[%s2] sm:$0x1]
    %v173 = vlaneseq
    %v174 = vshrl.u32 %v173, 7
    %v175 = vsub.s32 0, %v174
    %v176 = vrot.slane %v171, %v175
    %v178 = vadd.f32 %v167, %v176
    %v179 = vadd.f32 %v168, %v176
    %v180 = vadd.f32 %v169, %v176
    %v181 = vadd.f32 %v170, %v176
    %v182 = vand.u32 2147483647, %v178
    %v183 = vand.u32 2147483647, %v179
    %v184 = vand.u32 2147483647, %v180
    %v185 = vand.u32 2147483647, %v181
    %v186 = vsub.f32 0.0, %v182
    %v187 = vsub.f32 0.0, %v183
    %v188 = vsub.f32 0.0, %v184
    %v189 = vsub.f32 0.0, %v185
    %v190 = vmul.f32 %v186, 1.442695
    %v191 = vpow.pop %v190
    %v192 = vmul.f32 %v187, 1.442695
    %v193 = vpow.pop %v192
    %v194 = vmul.f32 %v188, 1.442695
    %v195 = vpow.pop %v194
    %v196 = vmul.f32 %v189, 1.442695
    %v197 = vpow.pop %v196
    %v198 = vadd.f32 %v191, 1.0
    %v199 = vadd.f32 %v193, 1.0
    %v200 = vadd.f32 %v195, 1.0
    %v201 = vadd.f32 %v197, 1.0
    %v202 = vrcp.pop %v198
    %v203 = vrcp.pop %v199
    %v204 = vrcp.pop %v200
    %v205 = vrcp.pop %v201
    %vm206 = vcmp.ge.f32.partialorder %v178, 0.0
    %vm207 = vcmp.ge.f32.partialorder %v179, 0.0
    %vm208 = vcmp.ge.f32.partialorder %v180, 0.0
    %vm209 = vcmp.ge.f32.partialorder %v181, 0.0
    %v210 = vsub.f32 1.0, %v202
    %v211 = vsub.f32 1.0, %v203
    %v212 = vsub.f32 1.0, %v204
    %v213 = vsub.f32 1.0, %v205
    %v214 = vsel %vm206, %v202, %v210
    %v215 = vsel %vm207, %v203, %v211
    %v216 = vsel %vm208, %v204, %v212
    %v217 = vsel %vm209, %v205, %v213
    %v218 = vmul.f32 %v178, %v214
    %v219 = vmul.f32 %v179, %v215
    %v220 = vmul.f32 %v180, %v216
    %v221 = vmul.f32 %v181, %v217
    %v222 = vpack.c.bf16 %v219, %v218
    %v223 = vpack.c.bf16 %v221, %v220
    %v226 = vunpack.c.l.b16 %v222
    %v227 = vunpack.c.h.b16 %v222
    %v228 = vunpack.c.l.b16 %v223
    %v229 = vunpack.c.h.b16 %v223
    %v230 = vpack.c.b16 %v226, %v226
    %v231 = vpack.c.b16 %v227, %v227
    %v232 = vpack.c.b16 %v228, %v228
    %v233 = vpack.c.b16 %v229, %v229
    %238 = vst [vmem:[%s3] sm:$0xf] %v230
    %239 = vst [vmem:[%s3 + $0x4] sm:$0xf] %v231
    %240 = vst [vmem:[%s3 + $0x8] sm:$0xf] %v232
    %241 = vst [vmem:[%s3 + $0xc] sm:$0xf] %v233
  $region21: #{yolo_pafpn_forward.70} parent=0 // pred_fallthru
    _
  // Predicated region
  $region22: #{yolo_pafpn_forward.70} parent=0 // pred_check
    _
  $region23: #{yolo_pafpn_forward.70} parent=0 // pred_check_branch
    %243 = sbr.rel (0) target = $region25
  $region24: #{yolo_pafpn_forward.70} parent=0 // pred_region
    _
  $region25: #{yolo_pafpn_forward.70} parent=0 // pred_fallthru
    _
  // Predicated region
  $region26: #{yolo_pafpn_forward.70} parent=0 // pred_check
    _
  $region27: #{yolo_pafpn_forward.70} parent=0 // pred_check_branch
    %245 = sbr.rel (0) target = $region29
  $region28: #{yolo_pafpn_forward.70} parent=0 // pred_region
    _
  $region29: #{yolo_pafpn_forward.70} parent=0 // pred_fallthru
    _

// kernel: yolo_pafpn_forward.69
$region0: #{yolo_pafpn_forward.69}
  #allocation0 [shape = 'u32[]', space=smem, size = 0x4, offset = 0x4, fixed_abs, tag = 'smem constant byte address 0x4 - core index']
  #allocation1 [shape = 'u32[144,128]{1,0:T(1,128)}', space=vmem, size = 0x12000, scoped, tag = 'internal scratch']
  #allocation2 [shape = 'f32[32,128]{1,0:T(8,128)}', space=vmem, size = 0x4000, scoped, tag = 'scratch operand']
  %s0 = inlined_call_operand.vmem [shape: bf16[32,640], index: 0, kind: input, shape index: {}]
  %s1 = inlined_call_operand.vmem [shape: bf16[640,128], index: 1, kind: input, shape index: {}]
  %s2 = inlined_call_operand.vmem [shape: f32[1,128], index: 2, kind: input, shape index: {}]
  %s3 = inlined_call_operand.vmem [shape: bf16[32,128], index: 3, kind: output, shape index: {}]
  %s4 = sld [smem:[#allocation0]]
  $region94: #{yolo_pafpn_forward.69} parent=0
    _
  %s6 = ssub.s32 1, %s4
  %s7 = scalar_select 0, %s6, %s4
  $region1: #{yolo_pafpn_forward.69} parent=0
    #allocation3 [shape = 'u8[16384]{0}', space=vmem, size = 0x4000, scoped, tag = 'input window, operand 0']
    loop: start=0, step=1, limit=7
    $region2: #{yolo_pafpn_forward.69} parent=1 // loop_pre_header
      _
    $region3: #{yolo_pafpn_forward.69} parent=1 // loop_header
      %s9 = sphi 0, %s13
      %p10 = scmp.ge.s32.totalorder %s9, 7
      %s16 = sphi 0, %s35
      %s17 = sphi 0, %s31
      %s18 = sphi 0, %s27
      %s19 = sphi 0, %s16
      %s20 = sphi 0, %s17
      %s21 = sphi 0, %s18
      %s22 = sphi 0, %s19
      %s23 = sphi 0, %s20
      %s24 = sphi 0, %s21
      %s40 = sphi 0, %s42
      %s43 = sphi 0, %s40
      %s44 = sphi 0, %s43
      %s60 = sphi 0, %s44
      %s68 = sphi 0, %s70
      %s71 = sphi 0, %s68
      %s72 = sphi 0, %s71
      %s88 = sphi 0, %s72
      %s94 = sphi 0, %s96
      %s97 = sphi 0, %s94
      %s98 = sphi 0, %s97
      %s114 = sphi 0, %s98
      %s122 = sphi 0, %s124
      %s125 = sphi 0, %s122
      %s126 = sphi 0, %s125
      %s142 = sphi 0, %s126
    $region4: #{yolo_pafpn_forward.69} parent=1 // loop_header_branch
      %12 = sbr.rel (%p10) target = $region8
    $region5: #{yolo_pafpn_forward.69} parent=1 // loop_body
      %s14 = ssub.s32 %s9, 1
      %s15 = ssub.s32 %s9, 2
      %s25 = sadd.s32 1, %s18
      %p26 = scmp.ge.s32.totalorder %s25, 5
      %s27 = scalar_select %p26, 0, %s25
      %s28 = sadd.s32 1, %s17
      %s29 = scalar_select %p26, %s28, %s17
      %p30 = scmp.ge.s32.totalorder %s29, 1
      %s31 = scalar_select %p30, 0, %s29
      %s32 = sadd.s32 1, %s16
      %s33 = scalar_select %p30, %s32, %s16
      %p34 = scmp.ge.s32.totalorder %s33, 1
      %s35 = scalar_select %p34, 0, %s33
      %s36 = ssub.s32 %s16, %s35
      %s37 = ssub.s32 %s18, %s27
      %s38 = sor.u32 %s36, %s37
      %p39 = scmp.eq.s32.totalorder %s38, 0
      %s41 = sadd.s32 %s40, 1
      %s42 = scalar_select %p39, %s40, %s41
      %p45 = pneg %p39
      %p46 = scmp.eq.s32.totalorder %s9, 4
      %p47 = por %p45, %p46
      %p48 = scmp.ne.s32.totalorder %s40, %s43
      %p49 = scmp.eq.s32.totalorder %s9, 0
      %p50 = por %p48, %p49
      %p51 = scmp.ne.s32.totalorder %s40, %s43
      %p52 = scmp.eq.s32.totalorder %s14, 4
      %p53 = por %p51, %p52
      %p54 = scmp.ne.s32.totalorder %s43, %s44
      %p55 = scmp.eq.s32.totalorder %s14, 0
      %p56 = por %p54, %p55
      %p57 = scmp.ne.s32.totalorder %s43, %s44
      %p58 = scmp.eq.s32.totalorder %s15, 4
      %p59 = por %p57, %p58
      %p61 = scmp.ne.s32.totalorder %s44, %s60
      %p62 = scmp.eq.s32.totalorder %s15, 0
      %p63 = por %p61, %p62
      %s64 = ssub.s32 %s18, %s27
      %s65 = ssub.s32 %s17, %s31
      %s66 = sor.u32 %s64, %s65
      %p67 = scmp.eq.s32.totalorder %s66, 0
      %s69 = sadd.s32 %s68, 1
      %s70 = scalar_select %p67, %s68, %s69
      %p73 = pneg %p67
      %p74 = scmp.eq.s32.totalorder %s9, 4
      %p75 = por %p73, %p74
      %p76 = scmp.ne.s32.totalorder %s68, %s71
      %p77 = scmp.eq.s32.totalorder %s9, 0
      %p78 = por %p76, %p77
      %p79 = scmp.ne.s32.totalorder %s68, %s71
      %p80 = scmp.eq.s32.totalorder %s14, 4
      %p81 = por %p79, %p80
      %p82 = scmp.ne.s32.totalorder %s71, %s72
      %p83 = scmp.eq.s32.totalorder %s14, 0
      %p84 = por %p82, %p83
      %p85 = scmp.ne.s32.totalorder %s71, %s72
      %p86 = scmp.eq.s32.totalorder %s15, 4
      %p87 = por %p85, %p86
      %p89 = scmp.ne.s32.totalorder %s72, %s88
      %p90 = scmp.eq.s32.totalorder %s15, 0
      %p91 = por %p89, %p90
      %s92 = ssub.s32 %s17, %s31
      %p93 = scmp.eq.s32.totalorder %s92, 0
      %s95 = sadd.s32 %s94, 1
      %s96 = scalar_select %p93, %s94, %s95
      %p99 = pneg %p93
      %p100 = scmp.eq.s32.totalorder %s9, 4
      %p101 = por %p99, %p100
      %p102 = scmp.ne.s32.totalorder %s94, %s97
      %p103 = scmp.eq.s32.totalorder %s9, 0
      %p104 = por %p102, %p103
      %p105 = scmp.ne.s32.totalorder %s94, %s97
      %p106 = scmp.eq.s32.totalorder %s14, 4
      %p107 = por %p105, %p106
      %p108 = scmp.ne.s32.totalorder %s97, %s98
      %p109 = scmp.eq.s32.totalorder %s14, 0
      %p110 = por %p108, %p109
      %p111 = scmp.ne.s32.totalorder %s97, %s98
      %p112 = scmp.eq.s32.totalorder %s15, 4
      %p113 = por %p111, %p112
      %p115 = scmp.ne.s32.totalorder %s98, %s114
      %p116 = scmp.eq.s32.totalorder %s15, 0
      %p117 = por %p115, %p116
      %s118 = ssub.s32 %s16, %s35
      %s119 = ssub.s32 %s17, %s31
      %s120 = sor.u32 %s118, %s119
      %p121 = scmp.eq.s32.totalorder %s120, 0
      %s123 = sadd.s32 %s122, 1
      %s124 = scalar_select %p121, %s122, %s123
      %p127 = pneg %p121
      %p128 = scmp.eq.s32.totalorder %s9, 4
      %p129 = por %p127, %p128
      %p130 = scmp.ne.s32.totalorder %s122, %s125
      %p131 = scmp.eq.s32.totalorder %s9, 0
      %p132 = por %p130, %p131
      %p133 = scmp.ne.s32.totalorder %s122, %s125
      %p134 = scmp.eq.s32.totalorder %s14, 4
      %p135 = por %p133, %p134
      %p136 = scmp.ne.s32.totalorder %s125, %s126
      %p137 = scmp.eq.s32.totalorder %s14, 0
      %p138 = por %p136, %p137
      %p139 = scmp.ne.s32.totalorder %s125, %s126
      %p140 = scmp.eq.s32.totalorder %s15, 4
      %p141 = por %p139, %p140
      %p143 = scmp.ne.s32.totalorder %s126, %s142
      %p144 = scmp.eq.s32.totalorder %s15, 0
      %p145 = por %p143, %p144
      %p146 = scmp.le.s32.totalorder 1, %s9
      %p147 = scmp.lt.s32.totalorder %s9, 6
      %p148 = pnand %p146, %p147
      %p149 = pneg %p148
      // Predicated region
      $region9: #{yolo_pafpn_forward.69} parent=5 // pred_check
        _
      $region10: #{yolo_pafpn_forward.69} parent=5 // pred_check_branch
        %151 = sbr.rel (%p148) target = $region12
      $region11: #{yolo_pafpn_forward.69} parent=5 // pred_region
        %s152 = ssub.s32 %s9, 1
        // Predicated region
        $region13: #{yolo_pafpn_forward.69} parent=11 // pred_check
          %p153 = pneg %p110
        $region14: #{yolo_pafpn_forward.69} parent=11 // pred_check_branch
          %155 = sbr.rel (%p153) target = $region16
        $region15: #{yolo_pafpn_forward.69} parent=11 // pred_region
          %p156 = scmp.lt.s32.totalorder %s20, 0
          %s157 = scalar_select %p156, %s20, 0
          %s158 = scalar_lea.vmem %s2, %s157
        $region16: #{yolo_pafpn_forward.69} parent=11 // pred_fallthru
          _
      $region12: #{yolo_pafpn_forward.69} parent=5 // pred_fallthru
        _
      %p159 = scmp.lt.s32.totalorder %s9, 5
      // Predicated region
      $region17: #{yolo_pafpn_forward.69} parent=5 // pred_check
        %p160 = pneg %p159
      $region18: #{yolo_pafpn_forward.69} parent=5 // pred_check_branch
        %162 = sbr.rel (%p160) target = $region20
      $region19: #{yolo_pafpn_forward.69} parent=5 // pred_region
        // Predicated region
        $region21: #{yolo_pafpn_forward.69} parent=19 // pred_check
          %p163 = pneg %p50
        $region22: #{yolo_pafpn_forward.69} parent=19 // pred_check_branch
          %165 = sbr.rel (%p163) target = $region24
        $region23: #{yolo_pafpn_forward.69} parent=19 // pred_region
          %s166 = sand.u32 %s40, 1
          %s167 = sand.u32 %s40, 1
          %s168 = smul.addr %s167, 16
          %s169 = scalar_lea.vmem [#allocation3], %s168
          %s170 = smul.u32 4, %s16
          %s171 = smul.addr %s170, 5
          %s172 = sadd.s32 %s18, %s171
          %s173 = smul.addr %s172, 4
          %s174 = scalar_lea.vmem %s0, %s173
          // Predicated region
          $region25: #{yolo_pafpn_forward.69} parent=23 // pred_check
            _
          $region26: #{yolo_pafpn_forward.69} parent=23 // pred_check_branch
            %176 = sbr.rel (0) target = $region28
          $region27: #{yolo_pafpn_forward.69} parent=23 // pred_region
            // Predicated region
            $region29: #{yolo_pafpn_forward.69} parent=27 // pred_check
              _
            $region30: #{yolo_pafpn_forward.69} parent=27 // pred_check_branch
              %178 = sbr.rel target = $region32
            $region31: #{yolo_pafpn_forward.69} parent=27 // pred_region
              // Predicated region
              $region44: #{yolo_pafpn_forward.69} parent=31 // pred_check
                _
              $region45: #{yolo_pafpn_forward.69} parent=31 // pred_check_branch
                %199 = sbr.rel (0) target = $region47
              $region46: #{yolo_pafpn_forward.69} parent=31 // pred_region
                loop: start=0, step=1, limit=1
                $region48: #{yolo_pafpn_forward.69} parent=46 // loop_pre_header
                  _
                $region49: #{yolo_pafpn_forward.69} parent=46 // loop_header
                  %s201 = sphi 0, %s205
                  %p202 = scmp.ge.s32.totalorder %s201, 1
                  %s206 = sphi %s174, %s174
                  %s207 = sphi %s169, %s169
                $region50: #{yolo_pafpn_forward.69} parent=46 // loop_header_branch
                  %204 = sbr.rel (%p202) target = $region54
                $region51: #{yolo_pafpn_forward.69} parent=46 // loop_body
                  _
                $region52: #{yolo_pafpn_forward.69} parent=46 // loop_footer
                  %s205 = sadd.s32 1, %s201
                $region53: #{yolo_pafpn_forward.69} parent=46 // loop_footer_branch
                  %200 = sbr.rel target = $region49
                $region54: #{yolo_pafpn_forward.69} parent=46 // loop_exit
                  _
                loop: start=0, step=1, limit=1
                $region55: #{yolo_pafpn_forward.69} parent=46 // loop_pre_header
                  _
                $region56: #{yolo_pafpn_forward.69} parent=46 // loop_header
                  %s210 = sphi 0, %s214
                  %p211 = scmp.ge.s32.totalorder %s210, 1
                  %s215 = sphi %s174, %s174
                  %s216 = sphi %s169, %s169
                $region57: #{yolo_pafpn_forward.69} parent=46 // loop_header_branch
                  %213 = sbr.rel (%p211) target = $region61
                $region58: #{yolo_pafpn_forward.69} parent=46 // loop_body
                  %v217 = vld [vmem:[%s215] sm:$0xf]
                  %218 = vst [vmem:[%s216] sm:$0xf] %v217
                  %v219 = vld [vmem:[%s215 + $0x14] sm:$0xf]
                  %220 = vst [vmem:[%s216 + $0x4] sm:$0xf] %v219
                  %v221 = vld [vmem:[%s215 + $0x28] sm:$0xf]
                  %222 = vst [vmem:[%s216 + $0x8] sm:$0xf] %v221
                  %v223 = vld [vmem:[%s215 + $0x3c] sm:$0xf]
                  %224 = vst [vmem:[%s216 + $0xc] sm:$0xf] %v223
                $region59: #{yolo_pafpn_forward.69} parent=46 // loop_footer
                  %s214 = sadd.s32 1, %s210
                $region60: #{yolo_pafpn_forward.69} parent=46 // loop_footer_branch
                  %209 = sbr.rel target = $region56
                $region61: #{yolo_pafpn_forward.69} parent=46 // loop_exit
                  _
              $region47: #{yolo_pafpn_forward.69} parent=31 // pred_fallthru
                _
            $region32: #{yolo_pafpn_forward.69} parent=27 // pred_fallthru
              _
            // Predicated region
            $region33: #{yolo_pafpn_forward.69} parent=27 // pred_check
              _
            $region34: #{yolo_pafpn_forward.69} parent=27 // pred_check_branch
              %180 = sbr.rel (0) target = $region36
            $region35: #{yolo_pafpn_forward.69} parent=27 // pred_region
              loop: start=0, step=1, limit=1
              $region37: #{yolo_pafpn_forward.69} parent=35 // loop_pre_header
                _
              $region38: #{yolo_pafpn_forward.69} parent=35 // loop_header
                %s183 = sphi 0, %s187
                %p184 = scmp.ge.s32.totalorder %s183, 1
                %s188 = sphi %s174, %s174
                %s189 = sphi %s169, %s169
              $region39: #{yolo_pafpn_forward.69} parent=35 // loop_header_branch
                %186 = sbr.rel (%p184) target = $region43
              $region40: #{yolo_pafpn_forward.69} parent=35 // loop_body
                %v190 = vld [vmem:[%s188] sm:$0xf]
                %191 = vst [vmem:[%s189] sm:$0xf] %v190
                %v192 = vld [vmem:[%s188 + $0x14] sm:$0xf]
                %193 = vst [vmem:[%s189 + $0x4] sm:$0xf] %v192
                %v194 = vld [vmem:[%s188 + $0x28] sm:$0xf]
                %195 = vst [vmem:[%s189 + $0x8] sm:$0xf] %v194
                %v196 = vld [vmem:[%s188 + $0x3c] sm:$0xf]
                %197 = vst [vmem:[%s189 + $0xc] sm:$0xf] %v196
              $region41: #{yolo_pafpn_forward.69} parent=35 // loop_footer
                %s187 = sadd.s32 1, %s183
              $region42: #{yolo_pafpn_forward.69} parent=35 // loop_footer_branch
                %182 = sbr.rel target = $region38
              $region43: #{yolo_pafpn_forward.69} parent=35 // loop_exit
                _
            $region36: #{yolo_pafpn_forward.69} parent=27 // pred_fallthru
              _
          $region28: #{yolo_pafpn_forward.69} parent=23 // pred_fallthru
            _
          %225 = vnop
        $region24: #{yolo_pafpn_forward.69} parent=19 // pred_fallthru
          _
        // Predicated region
        $region62: #{yolo_pafpn_forward.69} parent=19 // pred_check
          %p226 = pneg %p78
        $region63: #{yolo_pafpn_forward.69} parent=19 // pred_check_branch
          %228 = sbr.rel (%p226) target = $region65
        $region64: #{yolo_pafpn_forward.69} parent=19 // pred_region
          %s229 = smul.u32 16, %s18
          %p230 = scmp.lt.s32.totalorder %s229, 79
          %s231 = scalar_select %p230, %s229, 79
          %p232 = scmp.lt.s32.totalorder %s17, 0
          %s233 = scalar_select %p232, %s17, 0
          %s234 = sadd.s32 %s233, %s231
          %s235 = smul.addr %s234, 4
          %s236 = scalar_lea.vmem %s1, %s235
          %s237 = smul.u32 16, %s18
        $region65: #{yolo_pafpn_forward.69} parent=19 // pred_fallthru
          _
      $region20: #{yolo_pafpn_forward.69} parent=5 // pred_fallthru
        _
      %p238 = scmp.le.s32.totalorder 1, %s9
      %p239 = scmp.lt.s32.totalorder %s9, 6
      %p240 = pnand %p238, %p239
      %p241 = pneg %p240
      // Predicated region
      $region66: #{yolo_pafpn_forward.69} parent=5 // pred_check
        _
      $region67: #{yolo_pafpn_forward.69} parent=5 // pred_check_branch
        %243 = sbr.rel (%p240) target = $region69
      $region68: #{yolo_pafpn_forward.69} parent=5 // pred_region
        %s244 = ssub.s32 %s9, 1
        %s245 = sand.u32 %s43, 1
        %s246 = sand.u32 %s43, 1
        %s247 = smul.addr %s246, 16
        %s248 = scalar_lea.vmem [#allocation3], %s247
        // Predicated region
        $region70: #{yolo_pafpn_forward.69} parent=68 // pred_check
          %p249 = pneg %p56
        $region71: #{yolo_pafpn_forward.69} parent=68 // pred_check_branch
          %251 = sbr.rel (%p249) target = $region73
        $region72: #{yolo_pafpn_forward.69} parent=68 // pred_region
          _
        $region73: #{yolo_pafpn_forward.69} parent=68 // pred_fallthru
          _
        %s252 = sand.u32 %s43, 1
        %s253 = sand.u32 %s43, 1
        %s254 = smul.addr %s253, 16
        %s255 = scalar_lea.vmem [#allocation3], %s254
        %p256 = pneg %p56
        %p257 = pneg %p53
        %s258 = smul.u32 16, %s21
        %p259 = scmp.lt.s32.totalorder %s258, 79
        %s260 = scalar_select %p259, %s258, 79
        %p261 = scmp.lt.s32.totalorder %s20, 0
        %s262 = scalar_select %p261, %s20, 0
        %s263 = sadd.s32 %s262, %s260
        %s264 = smul.addr %s263, 4
        %s265 = scalar_lea.vmem %s1, %s264
        %p266 = pneg %p84
        %p267 = pneg %p81
        %p268 = scmp.lt.s32.totalorder %s20, 0
        %s269 = scalar_select %p268, %s20, 0
        %s270 = scalar_lea.vmem %s2, %s269
        %p271 = pneg %p110
        %p272 = pneg %p107
        %p273 = pneg %p138
        %p274 = pneg %p135
        %s275 = smul.u32 4, %s19
        %p276 = scmp.lt.s32.totalorder %s275, 3
        %s277 = scalar_select %p276, %s275, 3
        %p278 = scmp.lt.s32.totalorder %s20, 0
        %s279 = scalar_select %p278, %s20, 0
        %s280 = sadd.s32 %s279, %s277
        %s281 = smul.addr %s280, 4
        %s282 = scalar_lea.vmem %s3, %s281
        %s283 = smul.u32 4, %s19
        %s284 = smul.u32 16, %s21
        %p285 = scmp.lt.s32.totalorder %s284, 79
        %s286 = scalar_select %p285, %s284, 79
        %p287 = scmp.lt.s32.totalorder %s20, 0
        %s288 = scalar_select %p287, %s20, 0
        %s289 = sadd.s32 %s288, %s286
        %s290 = smul.addr %s289, 4
        %s291 = scalar_lea.vmem %s1, %s290
        %s292 = smul.u32 16, %s21
        %p293 = scmp.lt.s32.totalorder %s20, 0
        %s294 = scalar_select %p293, %s20, 0
        %s295 = scalar_lea.vmem %s2, %s294
        %s296 = smul.u32 4, %s19
        %p297 = scmp.lt.s32.totalorder %s296, 3
        %s298 = scalar_select %p297, %s296, 3
        %p299 = scmp.lt.s32.totalorder %s20, 0
        %s300 = scalar_select %p299, %s20, 0
        %s301 = sadd.s32 %s300, %s298
        %s302 = smul.addr %s301, 4
        %s303 = scalar_lea.vmem %s3, %s302
        %s304 = smul.u32 4, %s19
        %p306 = scmp.eq.s32.totalorder %s21, 0
        // Predicated region
        $region74: #{yolo_pafpn_forward.69} parent=68 // pred_check
          %p307 = pneg %p306
        $region75: #{yolo_pafpn_forward.69} parent=68 // pred_check_branch
          %309 = sbr.rel (%p307) target = $region77
        $region76: #{yolo_pafpn_forward.69} parent=68 // pred_region
          %310 = vst [vmem:[#allocation2] sm:$0xff] 0.0
          %311 = vst [vmem:[#allocation2 + $0x8] sm:$0xff] 0.0
          %312 = vst [vmem:[#allocation2 + $0x10] sm:$0xff] 0.0
          %313 = vst [vmem:[#allocation2 + $0x18] sm:$0xff] 0.0
        $region77: #{yolo_pafpn_forward.69} parent=68 // pred_fallthru
          _
        %v314 = vld [vmem:[#allocation2] sm:$0xff]
        %v315 = vld [vmem:[#allocation2 + $0x8] sm:$0xff]
        %v316 = vld [vmem:[#allocation2 + $0x10] sm:$0xff]
        %v317 = vld [vmem:[#allocation2 + $0x18] sm:$0xff]
        %v318 = vld [vmem:[%s248] sm:$0xf]
        %v319 = vld [vmem:[%s248 + $0x4] sm:$0xf]
        %v320 = vld [vmem:[%s248 + $0x8] sm:$0xf]
        %v321 = vld [vmem:[%s248 + $0xc] sm:$0xf]
        %v322 = vld [vmem:[%s291] sm:$0xf]
        %v323 = vld [vmem:[%s291 + $0x4] sm:$0xf]
        %v324 = vld [vmem:[%s291 + $0x8] sm:$0xf]
        %v325 = vld [vmem:[%s291 + $0xc] sm:$0xf]
        %v326 = vld [vmem:[%s291 + $0x10] sm:$0xf]
        %v327 = vld [vmem:[%s291 + $0x14] sm:$0xf]
        %v328 = vld [vmem:[%s291 + $0x18] sm:$0xf]
        %v329 = vld [vmem:[%s291 + $0x1c] sm:$0xf]
        %v330 = vld [vmem:[%s291 + $0x20] sm:$0xf]
        %v331 = vld [vmem:[%s291 + $0x24] sm:$0xf]
        %v332 = vld [vmem:[%s291 + $0x28] sm:$0xf]
        %v333 = vld [vmem:[%s291 + $0x2c] sm:$0xf]
        %v334 = vld [vmem:[%s291 + $0x30] sm:$0xf]
        %v335 = vld [vmem:[%s291 + $0x34] sm:$0xf]
        %v336 = vld [vmem:[%s291 + $0x38] sm:$0xf]
        %v337 = vld [vmem:[%s291 + $0x3c] sm:$0xf]
        %v342 = vunpack.c.l.b16 %v318
        %v343 = vunpack.c.l.b16 %v319
        %v344 = vunpack.c.l.b16 %v320
        %v345 = vunpack.c.l.b16 %v321
        %v346 = vpack.c.b16 %v343, %v342
        %v347 = vpack.c.b16 %v345, %v344
        %v366 = vunpack.c.l.b16 %v322
        %v367 = vunpack.c.l.b16 %v323
        %v368 = vunpack.c.l.b16 %v324
        %v369 = vunpack.c.l.b16 %v325
        %v370 = vunpack.c.l.b16 %v326
        %v371 = vunpack.c.l.b16 %v327
        %v372 = vunpack.c.l.b16 %v328
        %v373 = vunpack.c.l.b16 %v329
        %v374 = vunpack.c.l.b16 %v330
        %v375 = vunpack.c.l.b16 %v331
        %v376 = vunpack.c.l.b16 %v332
        %v377 = vunpack.c.l.b16 %v333
        %v378 = vunpack.c.l.b16 %v334
        %v379 = vunpack.c.l.b16 %v335
        %v380 = vunpack.c.l.b16 %v336
        %v381 = vunpack.c.l.b16 %v337
        %v382 = vpack.c.b16 %v367, %v366
        %v383 = vpack.c.b16 %v369, %v368
        %v384 = vpack.c.b16 %v371, %v370
        %v385 = vpack.c.b16 %v373, %v372
        %v386 = vpack.c.b16 %v375, %v374
        %v387 = vpack.c.b16 %v377, %v376
        %v388 = vpack.c.b16 %v379, %v378
        %v389 = vpack.c.b16 %v381, %v380
        %398 = vmatprep.subr.bf16.mxu0 0
        %399 = vmatpush1.bf16.msra.mxu0 %v382
        %400 = vmatprep.subr.bf16.mxu0 0
        %401 = vmatpush1.bf16.msra.mxu0 %v383
        %402 = vmatprep.subr.bf16.mxu0 0
        %403 = vmatpush1.bf16.msra.mxu0 %v384
        %404 = vmatprep.subr.bf16.mxu0 0
        %405 = vmatpush1.bf16.msra.mxu0 %v385
        %406 = vmatprep.subr.bf16.mxu0 0
        %407 = vmatpush1.bf16.msra.mxu0 %v386
        %408 = vmatprep.subr.bf16.mxu0 0
        %409 = vmatpush1.bf16.msra.mxu0 %v387
        %410 = vmatprep.subr.bf16.mxu0 0
        %411 = vmatpush1.bf16.msra.mxu0 %v388
        %412 = vmatprep.subr.bf16.mxu0 0
        %413 = vmatpush1.bf16.msra.mxu0 %v389
        %414 = vmatprep.subr.bf16.mxu0 0
        %415 = vmatpush1.bf16.msra.mxu0 0
        %416 = vmatprep.subr.bf16.mxu0 0
        %417 = vmatpush1.bf16.msra.mxu0 0
        %418 = vmatprep.subr.bf16.mxu0 0
        %419 = vmatpush1.bf16.msra.mxu0 0
        %420 = vmatprep.subr.bf16.mxu0 0
        %421 = vmatpush1.bf16.msra.mxu0 0
        %422 = vmatprep.subr.bf16.mxu0 0
        %423 = vmatpush1.bf16.msra.mxu0 0
        %424 = vmatprep.subr.bf16.mxu0 0
        %425 = vmatpush1.bf16.msra.mxu0 0
        %426 = vmatprep.subr.bf16.mxu0 0
        %427 = vmatpush1.bf16.msra.mxu0 0
        %428 = vmatprep.subr.bf16.mxu0 0
        %429 = vmatpush1.bf16.msra.mxu0 0
        %430 = vmatprep.mubr.bf16.mxu0 0
        %431 = vmatmul.mubr.bf16.gmra.mrb[0].mxu0 %v346
        %v432 = vpop.f32.mrb[0].mxu0
        %v433 = vadd.f32 0.0, %v432
        %v434 = vpop.f32.mrb[0].mxu0
        %v435 = vpop.f32.mrb[0].mxu0
        %v436 = vadd.f32 0.0, %v435
        %v437 = vpop.f32.mrb[0].mxu0
        %438 = vmatprep.mubr.bf16.mxu0 0
        %439 = vmatmul.mubr.bf16.gmra.mrb[0].mxu0 %v347
        %v440 = vpop.f32.mrb[0].mxu0
        %v441 = vadd.f32 0.0, %v440
        %v442 = vpop.f32.mrb[0].mxu0
        %v443 = vpop.f32.mrb[0].mxu0
        %v444 = vadd.f32 0.0, %v443
        %v445 = vpop.f32.mrb[0].mxu0
        %446 = vdwg.mxu0
        %v447 = vadd.f32 %v314, %v433
        %v448 = vadd.f32 %v315, %v436
        %v449 = vadd.f32 %v316, %v441
        %v450 = vadd.f32 %v317, %v444
        %451 = vst [vmem:[#allocation2] sm:$0xff] %v447
        %452 = vst [vmem:[#allocation2 + $0x8] sm:$0xff] %v448
        %453 = vst [vmem:[#allocation2 + $0x10] sm:$0xff] %v449
        %454 = vst [vmem:[#allocation2 + $0x18] sm:$0xff] %v450
        %p455 = scmp.eq.s32.totalorder %s21, 4
        // Predicated region
        $region78: #{yolo_pafpn_forward.69} parent=68 // pred_check
          %p456 = pneg %p455
        $region79: #{yolo_pafpn_forward.69} parent=68 // pred_check_branch
          %458 = sbr.rel (%p456) target = $region81
        $region80: #{yolo_pafpn_forward.69} parent=68 // pred_region
          %v459 = vld [vmem:[#allocation2] sm:$0xff]
          %v460 = vld [vmem:[#allocation2 + $0x8] sm:$0xff]
          %v461 = vld [vmem:[#allocation2 + $0x10] sm:$0xff]
          %v462 = vld [vmem:[#allocation2 + $0x18] sm:$0xff]
          %v463 = vld [vmem:[%s295] sm:$0x1]
          %v465 = vlaneseq
          %v466 = vshrl.u32 %v465, 7
          %v467 = vsub.s32 0, %v466
          %v468 = vrot.slane %v463, %v467
          %v470 = vadd.f32 %v459, %v468
          %v471 = vadd.f32 %v460, %v468
          %v472 = vadd.f32 %v461, %v468
          %v473 = vadd.f32 %v462, %v468
          %v474 = vand.u32 2147483647, %v470
          %v475 = vand.u32 2147483647, %v471
          %v476 = vand.u32 2147483647, %v472
          %v477 = vand.u32 2147483647, %v473
          %v478 = vsub.f32 0.0, %v474
          %v479 = vsub.f32 0.0, %v475
          %v480 = vsub.f32 0.0, %v476
          %v481 = vsub.f32 0.0, %v477
          %v482 = vmul.f32 %v478, 1.442695
          %v483 = vpow.pop %v482
          %v484 = vmul.f32 %v479, 1.442695
          %v485 = vpow.pop %v484
          %v486 = vmul.f32 %v480, 1.442695
          %v487 = vpow.pop %v486
          %v488 = vmul.f32 %v481, 1.442695
          %v489 = vpow.pop %v488
          %v490 = vadd.f32 %v483, 1.0
          %v491 = vadd.f32 %v485, 1.0
          %v492 = vadd.f32 %v487, 1.0
          %v493 = vadd.f32 %v489, 1.0
          %v494 = vrcp.pop %v490
          %v495 = vrcp.pop %v491
          %v496 = vrcp.pop %v492
          %v497 = vrcp.pop %v493
          %vm498 = vcmp.ge.f32.partialorder %v470, 0.0
          %vm499 = vcmp.ge.f32.partialorder %v471, 0.0
          %vm500 = vcmp.ge.f32.partialorder %v472, 0.0
          %vm501 = vcmp.ge.f32.partialorder %v473, 0.0
          %v502 = vsub.f32 1.0, %v494
          %v503 = vsub.f32 1.0, %v495
          %v504 = vsub.f32 1.0, %v496
          %v505 = vsub.f32 1.0, %v497
          %v506 = vsel %vm498, %v494, %v502
          %v507 = vsel %vm499, %v495, %v503
          %v508 = vsel %vm500, %v496, %v504
          %v509 = vsel %vm501, %v497, %v505
          %v510 = vmul.f32 %v470, %v506
          %v511 = vmul.f32 %v471, %v507
          %v512 = vmul.f32 %v472, %v508
          %v513 = vmul.f32 %v473, %v509
          %v514 = vpack.c.bf16 %v511, %v510
          %v515 = vpack.c.bf16 %v513, %v512
          %v518 = vunpack.c.l.b16 %v514
          %v519 = vunpack.c.h.b16 %v514
          %v520 = vunpack.c.l.b16 %v515
          %v521 = vunpack.c.h.b16 %v515
          %v522 = vpack.c.b16 %v518, %v518
          %v523 = vpack.c.b16 %v519, %v519
          %v524 = vpack.c.b16 %v520, %v520
          %v525 = vpack.c.b16 %v521, %v521
          %530 = vst [vmem:[%s303] sm:$0xf] %v522
          %531 = vst [vmem:[%s303 + $0x4] sm:$0xf] %v523
          %532 = vst [vmem:[%s303 + $0x8] sm:$0xf] %v524
          %533 = vst [vmem:[%s303 + $0xc] sm:$0xf] %v525
        $region81: #{yolo_pafpn_forward.69} parent=68 // pred_fallthru
          _
        %s534 = smul.u32 4, %s19
        %p535 = scmp.lt.s32.totalorder %s534, 3
        %s536 = scalar_select %p535, %s534, 3
        %p537 = scmp.lt.s32.totalorder %s20, 0
        %s538 = scalar_select %p537, %s20, 0
        %s539 = sadd.s32 %s538, %s536
        %s540 = smul.addr %s539, 4
        %s541 = scalar_lea.vmem %s3, %s540
        // Predicated region
        $region82: #{yolo_pafpn_forward.69} parent=68 // pred_check
          %p542 = pneg %p135
        $region83: #{yolo_pafpn_forward.69} parent=68 // pred_check_branch
          %544 = sbr.rel (%p542) target = $region85
        $region84: #{yolo_pafpn_forward.69} parent=68 // pred_region
          %s545 = smul.u32 4, %s19
        $region85: #{yolo_pafpn_forward.69} parent=68 // pred_fallthru
          _
        // Predicated region
        $region86: #{yolo_pafpn_forward.69} parent=68 // pred_check
          %p546 = pneg %p135
        $region87: #{yolo_pafpn_forward.69} parent=68 // pred_check_branch
          %548 = sbr.rel (%p546) target = $region89
        $region88: #{yolo_pafpn_forward.69} parent=68 // pred_region
          %s549 = smul.u32 4, %s19
          %p550 = scmp.lt.s32.totalorder %s549, 3
          %s551 = scalar_select %p550, %s549, 3
          %p552 = scmp.lt.s32.totalorder %s20, 0
          %s553 = scalar_select %p552, %s20, 0
          %s554 = sadd.s32 %s553, %s551
          %s555 = smul.addr %s554, 4
          %s556 = scalar_lea.vmem %s3, %s555
        $region89: #{yolo_pafpn_forward.69} parent=68 // pred_fallthru
          _
      $region69: #{yolo_pafpn_forward.69} parent=5 // pred_fallthru
        _
      %p557 = scmp.le.s32.totalorder 2, %s9
      // Predicated region
      $region90: #{yolo_pafpn_forward.69} parent=5 // pred_check
        %p558 = pneg %p557
      $region91: #{yolo_pafpn_forward.69} parent=5 // pred_check_branch
        %560 = sbr.rel (%p558) target = $region93
      $region92: #{yolo_pafpn_forward.69} parent=5 // pred_region
        %s561 = ssub.s32 %s9, 2
      $region93: #{yolo_pafpn_forward.69} parent=5 // pred_fallthru
        _
    $region6: #{yolo_pafpn_forward.69} parent=1 // loop_footer
      %s13 = sadd.s32 1, %s9
    $region7: #{yolo_pafpn_forward.69} parent=1 // loop_footer_branch
      %8 = sbr.rel target = $region3
    $region8: #{yolo_pafpn_forward.69} parent=1 // loop_exit
      _

// kernel: yolo_pafpn_forward.78
$region0: #{yolo_pafpn_forward.78}
  #allocation0 [shape = 'u32[]', space=smem, size = 0x4, offset = 0x4, fixed_abs, tag = 'smem constant byte address 0x4 - core index']
  #allocation1 [shape = 'u32[144,128]{1,0:T(1,128)}', space=vmem, size = 0x12000, scoped, tag = 'internal scratch']
  #allocation2 [shape = 'f32[16,256]{1,0:T(8,128)}', space=vmem, size = 0x4000, scoped, tag = 'scratch operand']
  %s0 = inlined_call_operand.vmem [shape: bf16[16,1152], index: 0, kind: input, shape index: {}]
  %s1 = inlined_call_operand.vmem [shape: bf16[1152,256], index: 1, kind: input, shape index: {}]
  %s2 = inlined_call_operand.vmem [shape: f32[1,256], index: 2, kind: input, shape index: {}]
  %s3 = inlined_call_operand.vmem [shape: bf16[16,256], index: 3, kind: output, shape index: {}]
  %s4 = sld [smem:[#allocation0]]
  $region94: #{yolo_pafpn_forward.78} parent=0
    _
  %s6 = ssub.s32 1, %s4
  %s7 = scalar_select 0, %s6, %s4
  $region1: #{yolo_pafpn_forward.78} parent=0
    #allocation3 [shape = 'u8[8192]{0}', space=vmem, size = 0x2000, scoped, tag = 'input window, operand 0']
    loop: start=0, step=1, limit=11
    $region2: #{yolo_pafpn_forward.78} parent=1 // loop_pre_header
      _
    $region3: #{yolo_pafpn_forward.78} parent=1 // loop_header
      %s9 = sphi 0, %s13
      %p10 = scmp.ge.s32.totalorder %s9, 11
      %s16 = sphi 0, %s35
      %s17 = sphi 0, %s31
      %s18 = sphi 0, %s27
      %s19 = sphi 0, %s16
      %s20 = sphi 0, %s17
      %s21 = sphi 0, %s18
      %s22 = sphi 0, %s19
      %s23 = sphi 0, %s20
      %s24 = sphi 0, %s21
      %s40 = sphi 0, %s42
      %s43 = sphi 0, %s40
      %s44 = sphi 0, %s43
      %s60 = sphi 0, %s44
      %s68 = sphi 0, %s70
      %s71 = sphi 0, %s68
      %s72 = sphi 0, %s71
      %s88 = sphi 0, %s72
      %s94 = sphi 0, %s96
      %s97 = sphi 0, %s94
      %s98 = sphi 0, %s97
      %s114 = sphi 0, %s98
      %s122 = sphi 0, %s124
      %s125 = sphi 0, %s122
      %s126 = sphi 0, %s125
      %s142 = sphi 0, %s126
    $region4: #{yolo_pafpn_forward.78} parent=1 // loop_header_branch
      %12 = sbr.rel (%p10) target = $region8
    $region5: #{yolo_pafpn_forward.78} parent=1 // loop_body
      %s14 = ssub.s32 %s9, 1
      %s15 = ssub.s32 %s9, 2
      %s25 = sadd.s32 1, %s18
      %p26 = scmp.ge.s32.totalorder %s25, 9
      %s27 = scalar_select %p26, 0, %s25
      %s28 = sadd.s32 1, %s17
      %s29 = scalar_select %p26, %s28, %s17
      %p30 = scmp.ge.s32.totalorder %s29, 1
      %s31 = scalar_select %p30, 0, %s29
      %s32 = sadd.s32 1, %s16
      %s33 = scalar_select %p30, %s32, %s16
      %p34 = scmp.ge.s32.totalorder %s33, 1
      %s35 = scalar_select %p34, 0, %s33
      %s36 = ssub.s32 %s16, %s35
      %s37 = ssub.s32 %s18, %s27
      %s38 = sor.u32 %s36, %s37
      %p39 = scmp.eq.s32.totalorder %s38, 0
      %s41 = sadd.s32 %s40, 1
      %s42 = scalar_select %p39, %s40, %s41
      %p45 = pneg %p39
      %p46 = scmp.eq.s32.totalorder %s9, 8
      %p47 = por %p45, %p46
      %p48 = scmp.ne.s32.totalorder %s40, %s43
      %p49 = scmp.eq.s32.totalorder %s9, 0
      %p50 = por %p48, %p49
      %p51 = scmp.ne.s32.totalorder %s40, %s43
      %p52 = scmp.eq.s32.totalorder %s14, 8
      %p53 = por %p51, %p52
      %p54 = scmp.ne.s32.totalorder %s43, %s44
      %p55 = scmp.eq.s32.totalorder %s14, 0
      %p56 = por %p54, %p55
      %p57 = scmp.ne.s32.totalorder %s43, %s44
      %p58 = scmp.eq.s32.totalorder %s15, 8
      %p59 = por %p57, %p58
      %p61 = scmp.ne.s32.totalorder %s44, %s60
      %p62 = scmp.eq.s32.totalorder %s15, 0
      %p63 = por %p61, %p62
      %s64 = ssub.s32 %s18, %s27
      %s65 = ssub.s32 %s17, %s31
      %s66 = sor.u32 %s64, %s65
      %p67 = scmp.eq.s32.totalorder %s66, 0
      %s69 = sadd.s32 %s68, 1
      %s70 = scalar_select %p67, %s68, %s69
      %p73 = pneg %p67
      %p74 = scmp.eq.s32.totalorder %s9, 8
      %p75 = por %p73, %p74
      %p76 = scmp.ne.s32.totalorder %s68, %s71
      %p77 = scmp.eq.s32.totalorder %s9, 0
      %p78 = por %p76, %p77
      %p79 = scmp.ne.s32.totalorder %s68, %s71
      %p80 = scmp.eq.s32.totalorder %s14, 8
      %p81 = por %p79, %p80
      %p82 = scmp.ne.s32.totalorder %s71, %s72
      %p83 = scmp.eq.s32.totalorder %s14, 0
      %p84 = por %p82, %p83
      %p85 = scmp.ne.s32.totalorder %s71, %s72
      %p86 = scmp.eq.s32.totalorder %s15, 8
      %p87 = por %p85, %p86
      %p89 = scmp.ne.s32.totalorder %s72, %s88
      %p90 = scmp.eq.s32.totalorder %s15, 0
      %p91 = por %p89, %p90
      %s92 = ssub.s32 %s17, %s31
      %p93 = scmp.eq.s32.totalorder %s92, 0
      %s95 = sadd.s32 %s94, 1
      %s96 = scalar_select %p93, %s94, %s95
      %p99 = pneg %p93
      %p100 = scmp.eq.s32.totalorder %s9, 8
      %p101 = por %p99, %p100
      %p102 = scmp.ne.s32.totalorder %s94, %s97
      %p103 = scmp.eq.s32.totalorder %s9, 0
      %p104 = por %p102, %p103
      %p105 = scmp.ne.s32.totalorder %s94, %s97
      %p106 = scmp.eq.s32.totalorder %s14, 8
      %p107 = por %p105, %p106
      %p108 = scmp.ne.s32.totalorder %s97, %s98
      %p109 = scmp.eq.s32.totalorder %s14, 0
      %p110 = por %p108, %p109
      %p111 = scmp.ne.s32.totalorder %s97, %s98
      %p112 = scmp.eq.s32.totalorder %s15, 8
      %p113 = por %p111, %p112
      %p115 = scmp.ne.s32.totalorder %s98, %s114
      %p116 = scmp.eq.s32.totalorder %s15, 0
      %p117 = por %p115, %p116
      %s118 = ssub.s32 %s16, %s35
      %s119 = ssub.s32 %s17, %s31
      %s120 = sor.u32 %s118, %s119
      %p121 = scmp.eq.s32.totalorder %s120, 0
      %s123 = sadd.s32 %s122, 1
      %s124 = scalar_select %p121, %s122, %s123
      %p127 = pneg %p121
      %p128 = scmp.eq.s32.totalorder %s9, 8
      %p129 = por %p127, %p128
      %p130 = scmp.ne.s32.totalorder %s122, %s125
      %p131 = scmp.eq.s32.totalorder %s9, 0
      %p132 = por %p130, %p131
      %p133 = scmp.ne.s32.totalorder %s122, %s125
      %p134 = scmp.eq.s32.totalorder %s14, 8
      %p135 = por %p133, %p134
      %p136 = scmp.ne.s32.totalorder %s125, %s126
      %p137 = scmp.eq.s32.totalorder %s14, 0
      %p138 = por %p136, %p137
      %p139 = scmp.ne.s32.totalorder %s125, %s126
      %p140 = scmp.eq.s32.totalorder %s15, 8
      %p141 = por %p139, %p140
      %p143 = scmp.ne.s32.totalorder %s126, %s142
      %p144 = scmp.eq.s32.totalorder %s15, 0
      %p145 = por %p143, %p144
      %p146 = scmp.le.s32.totalorder 1, %s9
      %p147 = scmp.lt.s32.totalorder %s9, 10
      %p148 = pnand %p146, %p147
      %p149 = pneg %p148
      // Predicated region
      $region9: #{yolo_pafpn_forward.78} parent=5 // pred_check
        _
      $region10: #{yolo_pafpn_forward.78} parent=5 // pred_check_branch
        %151 = sbr.rel (%p148) target = $region12
      $region11: #{yolo_pafpn_forward.78} parent=5 // pred_region
        %s152 = ssub.s32 %s9, 1
        // Predicated region
        $region13: #{yolo_pafpn_forward.78} parent=11 // pred_check
          %p153 = pneg %p110
        $region14: #{yolo_pafpn_forward.78} parent=11 // pred_check_branch
          %155 = sbr.rel (%p153) target = $region16
        $region15: #{yolo_pafpn_forward.78} parent=11 // pred_region
          %s156 = smul.u32 2, %s20
          %p157 = scmp.lt.s32.totalorder %s156, 1
          %s158 = scalar_select %p157, %s156, 1
          %s159 = scalar_lea.vmem %s2, %s158
          %s160 = smul.u32 2, %s20
        $region16: #{yolo_pafpn_forward.78} parent=11 // pred_fallthru
          _
      $region12: #{yolo_pafpn_forward.78} parent=5 // pred_fallthru
        _
      %p161 = scmp.lt.s32.totalorder %s9, 9
      // Predicated region
      $region17: #{yolo_pafpn_forward.78} parent=5 // pred_check
        %p162 = pneg %p161
      $region18: #{yolo_pafpn_forward.78} parent=5 // pred_check_branch
        %164 = sbr.rel (%p162) target = $region20
      $region19: #{yolo_pafpn_forward.78} parent=5 // pred_region
        // Predicated region
        $region21: #{yolo_pafpn_forward.78} parent=19 // pred_check
          %p165 = pneg %p50
        $region22: #{yolo_pafpn_forward.78} parent=19 // pred_check_branch
          %167 = sbr.rel (%p165) target = $region24
        $region23: #{yolo_pafpn_forward.78} parent=19 // pred_region
          %s168 = sand.u32 %s40, 1
          %s169 = sand.u32 %s40, 1
          %s170 = smul.addr %s169, 8
          %s171 = scalar_lea.vmem [#allocation3], %s170
          %s172 = smul.u32 2, %s16
          %s173 = smul.addr %s172, 9
          %s174 = sadd.s32 %s18, %s173
          %s175 = smul.addr %s174, 4
          %s176 = scalar_lea.vmem %s0, %s175
          // Predicated region
          $region25: #{yolo_pafpn_forward.78} parent=23 // pred_check
            _
          $region26: #{yolo_pafpn_forward.78} parent=23 // pred_check_branch
            %178 = sbr.rel (0) target = $region28
          $region27: #{yolo_pafpn_forward.78} parent=23 // pred_region
            // Predicated region
            $region29: #{yolo_pafpn_forward.78} parent=27 // pred_check
              _
            $region30: #{yolo_pafpn_forward.78} parent=27 // pred_check_branch
              %180 = sbr.rel target = $region32
            $region31: #{yolo_pafpn_forward.78} parent=27 // pred_region
              // Predicated region
              $region44: #{yolo_pafpn_forward.78} parent=31 // pred_check
                _
              $region45: #{yolo_pafpn_forward.78} parent=31 // pred_check_branch
                %197 = sbr.rel (0) target = $region47
              $region46: #{yolo_pafpn_forward.78} parent=31 // pred_region
                loop: start=0, step=1, limit=1
                $region48: #{yolo_pafpn_forward.78} parent=46 // loop_pre_header
                  _
                $region49: #{yolo_pafpn_forward.78} parent=46 // loop_header
                  %s199 = sphi 0, %s203
                  %p200 = scmp.ge.s32.totalorder %s199, 1
                  %s204 = sphi %s176, %s176
                  %s205 = sphi %s171, %s171
                $region50: #{yolo_pafpn_forward.78} parent=46 // loop_header_branch
                  %202 = sbr.rel (%p200) target = $region54
                $region51: #{yolo_pafpn_forward.78} parent=46 // loop_body
                  _
                $region52: #{yolo_pafpn_forward.78} parent=46 // loop_footer
                  %s203 = sadd.s32 1, %s199
                $region53: #{yolo_pafpn_forward.78} parent=46 // loop_footer_branch
                  %198 = sbr.rel target = $region49
                $region54: #{yolo_pafpn_forward.78} parent=46 // loop_exit
                  _
                loop: start=0, step=1, limit=1
                $region55: #{yolo_pafpn_forward.78} parent=46 // loop_pre_header
                  _
                $region56: #{yolo_pafpn_forward.78} parent=46 // loop_header
                  %s208 = sphi 0, %s212
                  %p209 = scmp.ge.s32.totalorder %s208, 1
                  %s213 = sphi %s176, %s176
                  %s214 = sphi %s171, %s171
                $region57: #{yolo_pafpn_forward.78} parent=46 // loop_header_branch
                  %211 = sbr.rel (%p209) target = $region61
                $region58: #{yolo_pafpn_forward.78} parent=46 // loop_body
                  %v215 = vld [vmem:[%s213] sm:$0xf]
                  %216 = vst [vmem:[%s214] sm:$0xf] %v215
                  %v217 = vld [vmem:[%s213 + $0x24] sm:$0xf]
                  %218 = vst [vmem:[%s214 + $0x4] sm:$0xf] %v217
                $region59: #{yolo_pafpn_forward.78} parent=46 // loop_footer
                  %s212 = sadd.s32 1, %s208
                $region60: #{yolo_pafpn_forward.78} parent=46 // loop_footer_branch
                  %207 = sbr.rel target = $region56
                $region61: #{yolo_pafpn_forward.78} parent=46 // loop_exit
                  _
              $region47: #{yolo_pafpn_forward.78} parent=31 // pred_fallthru
                _
            $region32: #{yolo_pafpn_forward.78} parent=27 // pred_fallthru
              _
            // Predicated region
            $region33: #{yolo_pafpn_forward.78} parent=27 // pred_check
              _
            $region34: #{yolo_pafpn_forward.78} parent=27 // pred_check_branch
              %182 = sbr.rel (0) target = $region36
            $region35: #{yolo_pafpn_forward.78} parent=27 // pred_region
              loop: start=0, step=1, limit=1
              $region37: #{yolo_pafpn_forward.78} parent=35 // loop_pre_header
                _
              $region38: #{yolo_pafpn_forward.78} parent=35 // loop_header
                %s185 = sphi 0, %s189
                %p186 = scmp.ge.s32.totalorder %s185, 1
                %s190 = sphi %s176, %s176
                %s191 = sphi %s171, %s171
              $region39: #{yolo_pafpn_forward.78} parent=35 // loop_header_branch
                %188 = sbr.rel (%p186) target = $region43
              $region40: #{yolo_pafpn_forward.78} parent=35 // loop_body
                %v192 = vld [vmem:[%s190] sm:$0xf]
                %193 = vst [vmem:[%s191] sm:$0xf] %v192
                %v194 = vld [vmem:[%s190 + $0x24] sm:$0xf]
                %195 = vst [vmem:[%s191 + $0x4] sm:$0xf] %v194
              $region41: #{yolo_pafpn_forward.78} parent=35 // loop_footer
                %s189 = sadd.s32 1, %s185
              $region42: #{yolo_pafpn_forward.78} parent=35 // loop_footer_branch
                %184 = sbr.rel target = $region38
              $region43: #{yolo_pafpn_forward.78} parent=35 // loop_exit
                _
            $region36: #{yolo_pafpn_forward.78} parent=27 // pred_fallthru
              _
          $region28: #{yolo_pafpn_forward.78} parent=23 // pred_fallthru
            _
          %219 = vnop
        $region24: #{yolo_pafpn_forward.78} parent=19 // pred_fallthru
          _
        // Predicated region
        $region62: #{yolo_pafpn_forward.78} parent=19 // pred_check
          %p220 = pneg %p78
        $region63: #{yolo_pafpn_forward.78} parent=19 // pred_check_branch
          %222 = sbr.rel (%p220) target = $region65
        $region64: #{yolo_pafpn_forward.78} parent=19 // pred_region
          %s223 = smul.u32 16, %s18
          %s224 = smul.u32 2, %s17
          %p225 = scmp.lt.s32.totalorder %s223, 143
          %s226 = scalar_select %p225, %s223, 143
          %p227 = scmp.lt.s32.totalorder %s224, 1
          %s228 = scalar_select %p227, %s224, 1
          %s229 = smul.addr %s226, 2
          %s230 = sadd.s32 %s228, %s229
          %s231 = smul.addr %s230, 4
          %s232 = scalar_lea.vmem %s1, %s231
          %s233 = smul.u32 16, %s18
          %s234 = smul.u32 2, %s17
        $region65: #{yolo_pafpn_forward.78} parent=19 // pred_fallthru
          _
      $region20: #{yolo_pafpn_forward.78} parent=5 // pred_fallthru
        _
      %p235 = scmp.le.s32.totalorder 1, %s9
      %p236 = scmp.lt.s32.totalorder %s9, 10
      %p237 = pnand %p235, %p236
      %p238 = pneg %p237
      // Predicated region
      $region66: #{yolo_pafpn_forward.78} parent=5 // pred_check
        _
      $region67: #{yolo_pafpn_forward.78} parent=5 // pred_check_branch
        %240 = sbr.rel (%p237) target = $region69
      $region68: #{yolo_pafpn_forward.78} parent=5 // pred_region
        %s241 = ssub.s32 %s9, 1
        %s242 = sand.u32 %s43, 1
        %s243 = sand.u32 %s43, 1
        %s244 = smul.addr %s243, 8
        %s245 = scalar_lea.vmem [#allocation3], %s244
        // Predicated region
        $region70: #{yolo_pafpn_forward.78} parent=68 // pred_check
          %p246 = pneg %p56
        $region71: #{yolo_pafpn_forward.78} parent=68 // pred_check_branch
          %248 = sbr.rel (%p246) target = $region73
        $region72: #{yolo_pafpn_forward.78} parent=68 // pred_region
          _
        $region73: #{yolo_pafpn_forward.78} parent=68 // pred_fallthru
          _
        %s249 = sand.u32 %s43, 1
        %s250 = sand.u32 %s43, 1
        %s251 = smul.addr %s250, 8
        %s252 = scalar_lea.vmem [#allocation3], %s251
        %p253 = pneg %p56
        %p254 = pneg %p53
        %s255 = smul.u32 16, %s21
        %s256 = smul.u32 2, %s20
        %p257 = scmp.lt.s32.totalorder %s255, 143
        %s258 = scalar_select %p257, %s255, 143
        %p259 = scmp.lt.s32.totalorder %s256, 1
        %s260 = scalar_select %p259, %s256, 1
        %s261 = smul.addr %s258, 2
        %s262 = sadd.s32 %s260, %s261
        %s263 = smul.addr %s262, 4
        %s264 = scalar_lea.vmem %s1, %s263
        %p265 = pneg %p84
        %p266 = pneg %p81
        %s267 = smul.u32 2, %s20
        %p268 = scmp.lt.s32.totalorder %s267, 1
        %s269 = scalar_select %p268, %s267, 1
        %s270 = scalar_lea.vmem %s2, %s269
        %p271 = pneg %p110
        %p272 = pneg %p107
        %p273 = pneg %p138
        %p274 = pneg %p135
        %s275 = smul.u32 2, %s19
        %s276 = smul.u32 2, %s20
        %p277 = scmp.lt.s32.totalorder %s275, 1
        %s278 = scalar_select %p277, %s275, 1
        %p279 = scmp.lt.s32.totalorder %s276, 1
        %s280 = scalar_select %p279, %s276, 1
        %s281 = smul.addr %s278, 2
        %s282 = sadd.s32 %s280, %s281
        %s283 = smul.addr %s282, 4
        %s284 = scalar_lea.vmem %s3, %s283
        %s285 = smul.u32 2, %s19
        %s286 = smul.u32 16, %s21
        %s287 = smul.u32 2, %s20
        %p288 = scmp.lt.s32.totalorder %s286, 143
        %s289 = scalar_select %p288, %s286, 143
        %p290 = scmp.lt.s32.totalorder %s287, 1
        %s291 = scalar_select %p290, %s287, 1
        %s292 = smul.addr %s289, 2
        %s293 = sadd.s32 %s291, %s292
        %s294 = smul.addr %s293, 4
        %s295 = scalar_lea.vmem %s1, %s294
        %s296 = smul.u32 16, %s21
        %s297 = smul.u32 2, %s20
        %s298 = smul.u32 2, %s20
        %p299 = scmp.lt.s32.totalorder %s298, 1
        %s300 = scalar_select %p299, %s298, 1
        %s301 = scalar_lea.vmem %s2, %s300
        %s302 = smul.u32 2, %s20
        %s303 = smul.u32 2, %s19
        %s304 = smul.u32 2, %s20
        %p305 = scmp.lt.s32.totalorder %s303, 1
        %s306 = scalar_select %p305, %s303, 1
        %p307 = scmp.lt.s32.totalorder %s304, 1
        %s308 = scalar_select %p307, %s304, 1
        %s309 = smul.addr %s306, 2
        %s310 = sadd.s32 %s308, %s309
        %s311 = smul.addr %s310, 4
        %s312 = scalar_lea.vmem %s3, %s311
        %s313 = smul.u32 2, %s19
        %s314 = smul.u32 2, %s20
        %p316 = scmp.eq.s32.totalorder %s21, 0
        // Predicated region
        $region74: #{yolo_pafpn_forward.78} parent=68 // pred_check
          %p317 = pneg %p316
        $region75: #{yolo_pafpn_forward.78} parent=68 // pred_check_branch
          %319 = sbr.rel (%p317) target = $region77
        $region76: #{yolo_pafpn_forward.78} parent=68 // pred_region
          %320 = vst [vmem:[#allocation2] sm:$0xff] 0.0
          %321 = vst [vmem:[#allocation2 + $0x8] sm:$0xff] 0.0
          %322 = vst [vmem:[#allocation2 + $0x10] sm:$0xff] 0.0
          %323 = vst [vmem:[#allocation2 + $0x18] sm:$0xff] 0.0
        $region77: #{yolo_pafpn_forward.78} parent=68 // pred_fallthru
          _
        %v324 = vld [vmem:[#allocation2] sm:$0xff]
        %v325 = vld [vmem:[#allocation2 + $0x8] sm:$0xff]
        %v326 = vld [vmem:[#allocation2 + $0x10] sm:$0xff]
        %v327 = vld [vmem:[#allocation2 + $0x18] sm:$0xff]
        %v328 = vld [vmem:[%s245] sm:$0xf]
        %v329 = vld [vmem:[%s245 + $0x4] sm:$0xf]
        %v330 = vld [vmem:[%s295] sm:$0xff]
        %v331 = vld [vmem:[%s295 + $0x8] sm:$0xff]
        %v332 = vld [vmem:[%s295 + $0x10] sm:$0xff]
        %v333 = vld [vmem:[%s295 + $0x18] sm:$0xff]
        %v334 = vld [vmem:[%s295 + $0x20] sm:$0xff]
        %v335 = vld [vmem:[%s295 + $0x28] sm:$0xff]
        %v336 = vld [vmem:[%s295 + $0x30] sm:$0xff]
        %v337 = vld [vmem:[%s295 + $0x38] sm:$0xff]
        %v338 = vld [vmem:[%s295 + $0x40] sm:$0xff]
        %v339 = vld [vmem:[%s295 + $0x48] sm:$0xff]
        %v340 = vld [vmem:[%s295 + $0x50] sm:$0xff]
        %v341 = vld [vmem:[%s295 + $0x58] sm:$0xff]
        %v342 = vld [vmem:[%s295 + $0x60] sm:$0xff]
        %v343 = vld [vmem:[%s295 + $0x68] sm:$0xff]
        %v344 = vld [vmem:[%s295 + $0x70] sm:$0xff]
        %v345 = vld [vmem:[%s295 + $0x78] sm:$0xff]
        %v348 = vunpack.c.l.b16 %v328
        %v349 = vunpack.c.l.b16 %v329
        %v350 = vpack.c.b16 %v349, %v348
        %v368 = vunpack.c.l.b16 %v330
        %v369 = vunpack.c.h.b16 %v330
        %v370 = vunpack.c.l.b16 %v331
        %v371 = vunpack.c.h.b16 %v331
        %v372 = vunpack.c.l.b16 %v332
        %v373 = vunpack.c.h.b16 %v332
        %v374 = vunpack.c.l.b16 %v333
        %v375 = vunpack.c.h.b16 %v333
        %v376 = vunpack.c.l.b16 %v334
        %v377 = vunpack.c.h.b16 %v334
        %v378 = vunpack.c.l.b16 %v335
        %v379 = vunpack.c.h.b16 %v335
        %v380 = vunpack.c.l.b16 %v336
        %v381 = vunpack.c.h.b16 %v336
        %v382 = vunpack.c.l.b16 %v337
        %v383 = vunpack.c.h.b16 %v337
        %v384 = vunpack.c.l.b16 %v338
        %v385 = vunpack.c.h.b16 %v338
        %v386 = vunpack.c.l.b16 %v339
        %v387 = vunpack.c.h.b16 %v339
        %v388 = vunpack.c.l.b16 %v340
        %v389 = vunpack.c.h.b16 %v340
        %v390 = vunpack.c.l.b16 %v341
        %v391 = vunpack.c.h.b16 %v341
        %v392 = vunpack.c.l.b16 %v342
        %v393 = vunpack.c.h.b16 %v342
        %v394 = vunpack.c.l.b16 %v343
        %v395 = vunpack.c.h.b16 %v343
        %v396 = vunpack.c.l.b16 %v344
        %v397 = vunpack.c.h.b16 %v344
        %v398 = vunpack.c.l.b16 %v345
        %v399 = vunpack.c.h.b16 %v345
        %v400 = vpack.c.b16 %v370, %v368
        %v401 = vpack.c.b16 %v371, %v369
        %v402 = vpack.c.b16 %v374, %v372
        %v403 = vpack.c.b16 %v375, %v373
        %v404 = vpack.c.b16 %v378, %v376
        %v405 = vpack.c.b16 %v379, %v377
        %v406 = vpack.c.b16 %v382, %v380
        %v407 = vpack.c.b16 %v383, %v381
        %v408 = vpack.c.b16 %v386, %v384
        %v409 = vpack.c.b16 %v387, %v385
        %v410 = vpack.c.b16 %v390, %v388
        %v411 = vpack.c.b16 %v391, %v389
        %v412 = vpack.c.b16 %v394, %v392
        %v413 = vpack.c.b16 %v395, %v393
        %v414 = vpack.c.b16 %v398, %v396
        %v415 = vpack.c.b16 %v399, %v397
        %432 = vmatprep.subr.bf16.mxu0 %v401
        %433 = vmatpush1.bf16.msra.mxu0 %v400
        %434 = vmatprep.subr.bf16.mxu0 %v403
        %435 = vmatpush1.bf16.msra.mxu0 %v402
        %436 = vmatprep.subr.bf16.mxu0 %v405
        %437 = vmatpush1.bf16.msra.mxu0 %v404
        %438 = vmatprep.subr.bf16.mxu0 %v407
        %439 = vmatpush1.bf16.msra.mxu0 %v406
        %440 = vmatprep.subr.bf16.mxu0 %v409
        %441 = vmatpush1.bf16.msra.mxu0 %v408
        %442 = vmatprep.subr.bf16.mxu0 %v411
        %443 = vmatpush1.bf16.msra.mxu0 %v410
        %444 = vmatprep.subr.bf16.mxu0 %v413
        %445 = vmatpush1.bf16.msra.mxu0 %v412
        %446 = vmatprep.subr.bf16.mxu0 %v415
        %447 = vmatpush1.bf16.msra.mxu0 %v414
        %448 = vmatprep.subr.bf16.mxu0 0
        %449 = vmatpush1.bf16.msra.mxu0 0
        %450 = vmatprep.subr.bf16.mxu0 0
        %451 = vmatpush1.bf16.msra.mxu0 0
        %452 = vmatprep.subr.bf16.mxu0 0
        %453 = vmatpush1.bf16.msra.mxu0 0
        %454 = vmatprep.subr.bf16.mxu0 0
        %455 = vmatpush1.bf16.msra.mxu0 0
        %456 = vmatprep.subr.bf16.mxu0 0
        %457 = vmatpush1.bf16.msra.mxu0 0
        %458 = vmatprep.subr.bf16.mxu0 0
        %459 = vmatpush1.bf16.msra.mxu0 0
        %460 = vmatprep.subr.bf16.mxu0 0
        %461 = vmatpush1.bf16.msra.mxu0 0
        %462 = vmatprep.subr.bf16.mxu0 0
        %463 = vmatpush1.bf16.msra.mxu0 0
        %464 = vmatprep.mubr.bf16.mxu0 0
        %465 = vmatmul.mubr.bf16.gmra.mrb[0].mxu0 %v350
        %v466 = vpop.f32.mrb[0].mxu0
        %v467 = vadd.f32 0.0, %v466
        %v468 = vpop.f32.mrb[0].mxu0
        %v469 = vadd.f32 0.0, %v468
        %v470 = vpop.f32.mrb[0].mxu0
        %v471 = vadd.f32 0.0, %v470
        %v472 = vpop.f32.mrb[0].mxu0
        %v473 = vadd.f32 0.0, %v472
        %474 = vdwg.mxu0
        %v475 = vadd.f32 %v324, %v467
        %v476 = vadd.f32 %v325, %v469
        %v477 = vadd.f32 %v326, %v471
        %v478 = vadd.f32 %v327, %v473
        %479 = vst [vmem:[#allocation2] sm:$0xff] %v475
        %480 = vst [vmem:[#allocation2 + $0x8] sm:$0xff] %v476
        %481 = vst [vmem:[#allocation2 + $0x10] sm:$0xff] %v477
        %482 = vst [vmem:[#allocation2 + $0x18] sm:$0xff] %v478
        %p483 = scmp.eq.s32.totalorder %s21, 8
        // Predicated region
        $region78: #{yolo_pafpn_forward.78} parent=68 // pred_check
          %p484 = pneg %p483
        $region79: #{yolo_pafpn_forward.78} parent=68 // pred_check_branch
          %486 = sbr.rel (%p484) target = $region81
        $region80: #{yolo_pafpn_forward.78} parent=68 // pred_region
          %v487 = vld [vmem:[#allocation2] sm:$0xff]
          %v488 = vld [vmem:[#allocation2 + $0x8] sm:$0xff]
          %v489 = vld [vmem:[#allocation2 + $0x10] sm:$0xff]
          %v490 = vld [vmem:[#allocation2 + $0x18] sm:$0xff]
          %v491 = vld [vmem:[%s301] sm:$0x3]
          %v493 = vlaneseq
          %v494 = vshrl.u32 %v493, 7
          %v495 = vsub.s32 0, %v494
          %v496 = vrot.slane %v491, %v495
          %v497 = vlaneseq
          %v498 = vshrl.u32 %v497, 7
          %v499 = vsub.s32 1, %v498
          %v500 = vrot.slane %v491, %v499
          %v503 = vadd.f32 %v487, %v496
          %v504 = vadd.f32 %v488, %v500
          %v505 = vadd.f32 %v489, %v496
          %v506 = vadd.f32 %v490, %v500
          %v507 = vand.u32 2147483647, %v503
          %v508 = vand.u32 2147483647, %v504
          %v509 = vand.u32 2147483647, %v505
          %v510 = vand.u32 2147483647, %v506
          %v511 = vsub.f32 0.0, %v507
          %v512 = vsub.f32 0.0, %v508
          %v513 = vsub.f32 0.0, %v509
          %v514 = vsub.f32 0.0, %v510
          %v515 = vmul.f32 %v511, 1.442695
          %v516 = vpow.pop %v515
          %v517 = vmul.f32 %v512, 1.442695
          %v518 = vpow.pop %v517
          %v519 = vmul.f32 %v513, 1.442695
          %v520 = vpow.pop %v519
          %v521 = vmul.f32 %v514, 1.442695
          %v522 = vpow.pop %v521
          %v523 = vadd.f32 %v516, 1.0
          %v524 = vadd.f32 %v518, 1.0
          %v525 = vadd.f32 %v520, 1.0
          %v526 = vadd.f32 %v522, 1.0
          %v527 = vrcp.pop %v523
          %v528 = vrcp.pop %v524
          %v529 = vrcp.pop %v525
          %v530 = vrcp.pop %v526
          %vm531 = vcmp.ge.f32.partialorder %v503, 0.0
          %vm532 = vcmp.ge.f32.partialorder %v504, 0.0
          %vm533 = vcmp.ge.f32.partialorder %v505, 0.0
          %vm534 = vcmp.ge.f32.partialorder %v506, 0.0
          %v535 = vsub.f32 1.0, %v527
          %v536 = vsub.f32 1.0, %v528
          %v537 = vsub.f32 1.0, %v529
          %v538 = vsub.f32 1.0, %v530
          %v539 = vsel %vm531, %v527, %v535
          %v540 = vsel %vm532, %v528, %v536
          %v541 = vsel %vm533, %v529, %v537
          %v542 = vsel %vm534, %v530, %v538
          %v543 = vmul.f32 %v503, %v539
          %v544 = vmul.f32 %v504, %v540
          %v545 = vmul.f32 %v505, %v541
          %v546 = vmul.f32 %v506, %v542
          %v547 = vpack.c.bf16 %v545, %v543
          %v548 = vpack.c.bf16 %v546, %v544
          %v551 = vunpack.c.l.b16 %v547
          %v552 = vunpack.c.l.b16 %v548
          %v553 = vunpack.c.h.b16 %v547
          %v554 = vunpack.c.h.b16 %v548
          %v555 = vpack.c.b16 %v552, %v551
          %v556 = vpack.c.b16 %v554, %v553
          %559 = vst [vmem:[%s312] sm:$0xff] %v555
          %560 = vst [vmem:[%s312 + $0x8] sm:$0xff] %v556
        $region81: #{yolo_pafpn_forward.78} parent=68 // pred_fallthru
          _
        %s561 = smul.u32 2, %s19
        %s562 = smul.u32 2, %s20
        %p563 = scmp.lt.s32.totalorder %s561, 1
        %s564 = scalar_select %p563, %s561, 1
        %p565 = scmp.lt.s32.totalorder %s562, 1
        %s566 = scalar_select %p565, %s562, 1
        %s567 = smul.addr %s564, 2
        %s568 = sadd.s32 %s566, %s567
        %s569 = smul.addr %s568, 4
        %s570 = scalar_lea.vmem %s3, %s569
        // Predicated region
        $region82: #{yolo_pafpn_forward.78} parent=68 // pred_check
          %p571 = pneg %p135
        $region83: #{yolo_pafpn_forward.78} parent=68 // pred_check_branch
          %573 = sbr.rel (%p571) target = $region85
        $region84: #{yolo_pafpn_forward.78} parent=68 // pred_region
          %s574 = smul.u32 2, %s19
          %s575 = smul.u32 2, %s20
        $region85: #{yolo_pafpn_forward.78} parent=68 // pred_fallthru
          _
        // Predicated region
        $region86: #{yolo_pafpn_forward.78} parent=68 // pred_check
          %p576 = pneg %p135
        $region87: #{yolo_pafpn_forward.78} parent=68 // pred_check_branch
          %578 = sbr.rel (%p576) target = $region89
        $region88: #{yolo_pafpn_forward.78} parent=68 // pred_region
          %s579 = smul.u32 2, %s19
          %s580 = smul.u32 2, %s20
          %p581 = scmp.lt.s32.totalorder %s579, 1
          %s582 = scalar_select %p581, %s579, 1
          %p583 = scmp.lt.s32.totalorder %s580, 1
          %s584 = scalar_select %p583, %s580, 1
          %s585 = smul.addr %s582, 2
          %s586 = sadd.s32 %s584, %s585
          %s587 = smul.addr %s586, 4
          %s588 = scalar_lea.vmem %s3, %s587
        $region89: #{yolo_pafpn_forward.78} parent=68 // pred_fallthru
          _
      $region69: #{yolo_pafpn_forward.78} parent=5 // pred_fallthru
        _
      %p589 = scmp.le.s32.totalorder 2, %s9
      // Predicated region
      $region90: #{yolo_pafpn_forward.78} parent=5 // pred_check
        %p590 = pneg %p589
      $region91: #{yolo_pafpn_forward.78} parent=5 // pred_check_branch
        %592 = sbr.rel (%p590) target = $region93
      $region92: #{yolo_pafpn_forward.78} parent=5 // pred_region
        %s593 = ssub.s32 %s9, 2
      $region93: #{yolo_pafpn_forward.78} parent=5 // pred_fallthru
        _
    $region6: #{yolo_pafpn_forward.78} parent=1 // loop_footer
      %s13 = sadd.s32 1, %s9
    $region7: #{yolo_pafpn_forward.78} parent=1 // loop_footer_branch
      %8 = sbr.rel target = $region3
    $region8: #{yolo_pafpn_forward.78} parent=1 // loop_exit
      _

// kernel: yolo_pafpn_forward.80
$region0: #{yolo_pafpn_forward.80}
  #allocation0 [shape = 'u32[]', space=smem, size = 0x4, offset = 0x4, fixed_abs, tag = 'smem constant byte address 0x4 - core index']
  #allocation1 [shape = 'u32[144,128]{1,0:T(1,128)}', space=vmem, size = 0x12000, scoped, tag = 'internal scratch']
  %s0 = inlined_call_operand.vmem [shape: bf16[2,6,6,128], index: 0, kind: input, shape index: {}]
  %s1 = inlined_call_operand.vmem [shape: bf16[2,2,2,128], index: 1, kind: output, shape index: {}]
  %s2 = sld [smem:[#allocation0]]
  $region37: #{yolo_pafpn_forward.80} parent=0
    _
  %s4 = ssub.s32 1, %s2
  %s5 = scalar_select 0, %s4, %s2
  loop: start=0, step=1, limit=4
  $region2: #{yolo_pafpn_forward.80} parent=0 // loop_pre_header
    _
  $region3: #{yolo_pafpn_forward.80} parent=0 // loop_header
    %s7 = sphi 0, %s11
    %p8 = scmp.ge.s32.totalorder %s7, 4
    %s14 = sphi 0, %s26
    %s15 = sphi 0, %s22
    %s16 = sphi 0, %s14
    %s17 = sphi 0, %s15
    %s18 = sphi 0, %s16
    %s19 = sphi 0, %s17
    %s31 = sphi 0, %s33
    %s34 = sphi 0, %s31
    %s35 = sphi 0, %s34
    %s51 = sphi 0, %s35
    %s59 = sphi 0, %s61
    %s62 = sphi 0, %s59
    %s63 = sphi 0, %s62
    %s79 = sphi 0, %s63
  $region4: #{yolo_pafpn_forward.80} parent=0 // loop_header_branch
    %10 = sbr.rel (%p8) target = $region8
  $region5: #{yolo_pafpn_forward.80} parent=0 // loop_body
    %s12 = ssub.s32 %s7, 1
    %s13 = ssub.s32 %s7, 2
    %s20 = sadd.s32 1, %s15
    %p21 = scmp.ge.s32.totalorder %s20, 1
    %s22 = scalar_select %p21, 0, %s20
    %s23 = sadd.s32 1, %s14
    %s24 = scalar_select %p21, %s23, %s14
    %p25 = scmp.ge.s32.totalorder %s24, 2
    %s26 = scalar_select %p25, 0, %s24
    %s27 = ssub.s32 %s14, %s26
    %s28 = ssub.s32 %s15, %s22
    %s29 = sor.u32 %s27, %s28
    %p30 = scmp.eq.s32.totalorder %s29, 0
    %s32 = sadd.s32 %s31, 1
    %s33 = scalar_select %p30, %s31, %s32
    %p36 = pneg %p30
    %p37 = scmp.eq.s32.totalorder %s7, 1
    %p38 = por %p36, %p37
    %p39 = scmp.ne.s32.totalorder %s31, %s34
    %p40 = scmp.eq.s32.totalorder %s7, 0
    %p41 = por %p39, %p40
    %p42 = scmp.ne.s32.totalorder %s31, %s34
    %p43 = scmp.eq.s32.totalorder %s12, 1
    %p44 = por %p42, %p43
    %p45 = scmp.ne.s32.totalorder %s34, %s35
    %p46 = scmp.eq.s32.totalorder %s12, 0
    %p47 = por %p45, %p46
    %p48 = scmp.ne.s32.totalorder %s34, %s35
    %p49 = scmp.eq.s32.totalorder %s13, 1
    %p50 = por %p48, %p49
    %p52 = scmp.ne.s32.totalorder %s35, %s51
    %p53 = scmp.eq.s32.totalorder %s13, 0
    %p54 = por %p52, %p53
    %s55 = ssub.s32 %s14, %s26
    %s56 = ssub.s32 %s15, %s22
    %s57 = sor.u32 %s55, %s56
    %p58 = scmp.eq.s32.totalorder %s57, 0
    %s60 = sadd.s32 %s59, 1
    %s61 = scalar_select %p58, %s59, %s60
    %p64 = pneg %p58
    %p65 = scmp.eq.s32.totalorder %s7, 1
    %p66 = por %p64, %p65
    %p67 = scmp.ne.s32.totalorder %s59, %s62
    %p68 = scmp.eq.s32.totalorder %s7, 0
    %p69 = por %p67, %p68
    %p70 = scmp.ne.s32.totalorder %s59, %s62
    %p71 = scmp.eq.s32.totalorder %s12, 1
    %p72 = por %p70, %p71
    %p73 = scmp.ne.s32.totalorder %s62, %s63
    %p74 = scmp.eq.s32.totalorder %s12, 0
    %p75 = por %p73, %p74
    %p76 = scmp.ne.s32.totalorder %s62, %s63
    %p77 = scmp.eq.s32.totalorder %s13, 1
    %p78 = por %p76, %p77
    %p80 = scmp.ne.s32.totalorder %s63, %s79
    %p81 = scmp.eq.s32.totalorder %s13, 0
    %p82 = por %p80, %p81
    %p83 = scmp.le.s32.totalorder 1, %s7
    %p84 = scmp.lt.s32.totalorder %s7, 3
    %p85 = pnand %p83, %p84
    %p86 = pneg %p85
    // Predicated region
    $region9: #{yolo_pafpn_forward.80} parent=5 // pred_check
      _
    $region10: #{yolo_pafpn_forward.80} parent=5 // pred_check_branch
      %88 = sbr.rel (%p85) target = $region12
    $region11: #{yolo_pafpn_forward.80} parent=5 // pred_region
      %s89 = ssub.s32 %s7, 1
    $region12: #{yolo_pafpn_forward.80} parent=5 // pred_fallthru
      _
    %p90 = scmp.lt.s32.totalorder %s7, 2
    // Predicated region
    $region13: #{yolo_pafpn_forward.80} parent=5 // pred_check
      %p91 = pneg %p90
    $region14: #{yolo_pafpn_forward.80} parent=5 // pred_check_branch
      %93 = sbr.rel (%p91) target = $region16
    $region15: #{yolo_pafpn_forward.80} parent=5 // pred_region
      // Predicated region
      $region17: #{yolo_pafpn_forward.80} parent=15 // pred_check
        %p94 = pneg %p41
      $region18: #{yolo_pafpn_forward.80} parent=15 // pred_check_branch
        %96 = sbr.rel (%p94) target = $region20
      $region19: #{yolo_pafpn_forward.80} parent=15 // pred_region
        %p97 = scmp.lt.s32.totalorder %s14, 1
        %s98 = scalar_select %p97, %s14, 1
        %p99 = scmp.lt.s32.totalorder %s15, 0
        %s100 = scalar_select %p99, %s15, 0
        %s101 = smul.addr %s98, 6
        %s102 = sadd.s32 %s100, %s101
        %s103 = smul.addr %s102, 4
        %s104 = scalar_lea.vmem %s0, %s103
      $region20: #{yolo_pafpn_forward.80} parent=15 // pred_fallthru
        _
    $region16: #{yolo_pafpn_forward.80} parent=5 // pred_fallthru
      _
    %p105 = scmp.le.s32.totalorder 1, %s7
    %p106 = scmp.lt.s32.totalorder %s7, 3
    %p107 = pnand %p105, %p106
    %p108 = pneg %p107
    // Predicated region
    $region21: #{yolo_pafpn_forward.80} parent=5 // pred_check
      _
    $region22: #{yolo_pafpn_forward.80} parent=5 // pred_check_branch
      %110 = sbr.rel (%p107) target = $region24
    $region23: #{yolo_pafpn_forward.80} parent=5 // pred_region
      %s111 = ssub.s32 %s7, 1
      %p112 = scmp.lt.s32.totalorder %s16, 1
      %s113 = scalar_select %p112, %s16, 1
      %p114 = scmp.lt.s32.totalorder %s17, 0
      %s115 = scalar_select %p114, %s17, 0
      %s116 = smul.addr %s113, 6
      %s117 = sadd.s32 %s115, %s116
      %s118 = smul.addr %s117, 4
      %s119 = scalar_lea.vmem %s0, %s118
      %p120 = pneg %p47
      %p121 = pneg %p44
      %p122 = pneg %p75
      %p123 = pneg %p72
      %p124 = scmp.lt.s32.totalorder %s16, 1
      %s125 = scalar_select %p124, %s16, 1
      %p126 = scmp.lt.s32.totalorder %s17, 0
      %s127 = scalar_select %p126, %s17, 0
      %s128 = smul.addr %s125, 2
      %s129 = sadd.s32 %s127, %s128
      %s130 = scalar_lea.vmem %s1, %s129
      %p131 = scmp.lt.s32.totalorder %s16, 1
      %s132 = scalar_select %p131, %s16, 1
      %p133 = scmp.lt.s32.totalorder %s17, 0
      %s134 = scalar_select %p133, %s17, 0
      %s135 = smul.addr %s132, 6
      %s136 = sadd.s32 %s134, %s135
      %s137 = smul.addr %s136, 4
      %s138 = scalar_lea.vmem %s0, %s137
      %p139 = scmp.lt.s32.totalorder %s16, 1
      %s140 = scalar_select %p139, %s16, 1
      %p141 = scmp.lt.s32.totalorder %s17, 0
      %s142 = scalar_select %p141, %s17, 0
      %s143 = smul.addr %s140, 2
      %s144 = sadd.s32 %s142, %s143
      %s145 = scalar_lea.vmem %s1, %s144
      %v146 = vld [vmem:[%s138] sm:$0x7]
      %v147 = vld [vmem:[%s138 + $0x4] sm:$0x7]
      %v148 = vld [vmem:[%s138 + $0x8] sm:$0x7]
      %v149 = vld [vmem:[%s138 + $0xc] sm:$0x7]
      %v150 = vld [vmem:[%s138 + $0x10] sm:$0x7]
      %v151 = vld [vmem:[%s138 + $0x14] sm:$0x7]
      %v152 = vmax.bf16 %v146, %v147
      %v153 = vmax.bf16 %v147, %v148
      %v154 = vmax.bf16 %v152, %v148
      %v155 = vmax.bf16 %v153, %v149
      %v156 = vmax.bf16 %v154, %v149
      %v157 = vmax.bf16 %v155, %v150
      %v158 = vmax.bf16 %v156, %v150
      %v159 = vmax.bf16 %v157, %v151
      %v161 = vshrl.u32 %v158, 16
      %v163 = vrot.slane %v161, 4
      %v164 = vshll.u32 %v158, 16
      %v166 = vrot.slane %v164, 5
      %v167 = vor.u32 %v163, %v166
      %v168 = vrot.slane %v167, 4
      %v170 = vshrl.u32 %v159, 16
      %v172 = vrot.slane %v170, 4
      %v173 = vshll.u32 %v159, 16
      %v175 = vrot.slane %v173, 5
      %v176 = vor.u32 %v172, %v175
      %v177 = vrot.slane %v176, 4
      %v180 = vmax.bf16 %v158, %v168
      %v181 = vmax.bf16 %v159, %v177
      %v184 = vrot.slane %v158, 5
      %v185 = vrot.slane %v184, 4
      %v186 = vrot.slane %v159, 5
      %v187 = vrot.slane %v186, 4
      %v190 = vmax.bf16 %v180, %v185
      %v191 = vmax.bf16 %v181, %v187
      %v192 = vrot.slane %v161, 5
      %v193 = vrot.slane %v164, 6
      %v194 = vor.u32 %v192, %v193
      %v195 = vrot.slane %v194, 4
      %v196 = vrot.slane %v170, 5
      %v197 = vrot.slane %v173, 6
      %v198 = vor.u32 %v196, %v197
      %v199 = vrot.slane %v198, 4
      %v202 = vmax.bf16 %v190, %v195
      %v203 = vmax.bf16 %v191, %v199
      %v204 = vrot.slane %v158, 6
      %v205 = vrot.slane %v204, 4
      %v206 = vrot.slane %v159, 6
      %v207 = vrot.slane %v206, 4
      %v210 = vmax.bf16 %v202, %v205
      %v211 = vmax.bf16 %v203, %v207
      %212 = vst [vmem:[%s145] sm:$0x1] %v210
      %213 = vst [vmem:[%s145 + $0x1] sm:$0x1] %v211
      %p214 = scmp.lt.s32.totalorder %s16, 1
      %s215 = scalar_select %p214, %s16, 1
      %p216 = scmp.lt.s32.totalorder %s17, 0
      %s217 = scalar_select %p216, %s17, 0
      %s218 = smul.addr %s215, 2
      %s219 = sadd.s32 %s217, %s218
      %s220 = scalar_lea.vmem %s1, %s219
      // Predicated region
      $region25: #{yolo_pafpn_forward.80} parent=23 // pred_check
        %p221 = pneg %p72
      $region26: #{yolo_pafpn_forward.80} parent=23 // pred_check_branch
        %223 = sbr.rel (%p221) target = $region28
      $region27: #{yolo_pafpn_forward.80} parent=23 // pred_region
        _
      $region28: #{yolo_pafpn_forward.80} parent=23 // pred_fallthru
        _
    $region24: #{yolo_pafpn_forward.80} parent=5 // pred_fallthru
      _
    %p224 = scmp.le.s32.totalorder 2, %s7
    // Predicated region
    $region29: #{yolo_pafpn_forward.80} parent=5 // pred_check
      %p225 = pneg %p224
    $region30: #{yolo_pafpn_forward.80} parent=5 // pred_check_branch
      %227 = sbr.rel (%p225) target = $region32
    $region31: #{yolo_pafpn_forward.80} parent=5 // pred_region
      %s228 = ssub.s32 %s7, 2
      // Predicated region
      $region33: #{yolo_pafpn_forward.80} parent=31 // pred_check
        %p229 = pneg %p78
      $region34: #{yolo_pafpn_forward.80} parent=31 // pred_check_branch
        %231 = sbr.rel (%p229) target = $region36
      $region35: #{yolo_pafpn_forward.80} parent=31 // pred_region
        %p232 = scmp.lt.s32.totalorder %s18, 1
        %s233 = scalar_select %p232, %s18, 1
        %p234 = scmp.lt.s32.totalorder %s19, 0
        %s235 = scalar_select %p234, %s19, 0
        %s236 = smul.addr %s233, 2
        %s237 = sadd.s32 %s235, %s236
        %s238 = scalar_lea.vmem %s1, %s237
      $region36: #{yolo_pafpn_forward.80} parent=31 // pred_fallthru
        _
    $region32: #{yolo_pafpn_forward.80} parent=5 // pred_fallthru
      _
  $region6: #{yolo_pafpn_forward.80} parent=0 // loop_footer
    %s11 = sadd.s32 1, %s7
  $region7: #{yolo_pafpn_forward.80} parent=0 // loop_footer_branch
    %6 = sbr.rel target = $region3
  $region8: #{yolo_pafpn_forward.80} parent=0 // loop_exit
    _

// kernel: yolo_pafpn_forward.79
$region0: #{yolo_pafpn_forward.79}
  #allocation0 [shape = 'u32[]', space=smem, size = 0x4, offset = 0x4, fixed_abs, tag = 'smem constant byte address 0x4 - core index']
  #allocation1 [shape = 'u32[144,128]{1,0:T(1,128)}', space=vmem, size = 0x12000, scoped, tag = 'internal scratch']
  #allocation2 [shape = 'f32[16,128]{1,0:T(8,128)}', space=vmem, size = 0x2000, scoped, tag = 'scratch operand']
  %s0 = inlined_call_operand.vmem [shape: bf16[16,256], index: 0, kind: input, shape index: {}]
  %s1 = inlined_call_operand.vmem [shape: bf16[256,128], index: 1, kind: input, shape index: {}]
  %s2 = inlined_call_operand.vmem [shape: f32[1,128], index: 2, kind: input, shape index: {}]
  %s3 = inlined_call_operand.vmem [shape: bf16[16,128], index: 3, kind: output, shape index: {}]
  %s4 = sld [smem:[#allocation0]]
  $region30: #{yolo_pafpn_forward.79} parent=0
    _
  %s6 = ssub.s32 1, %s4
  %s7 = scalar_select 0, %s6, %s4
  // Predicated region
  $region2: #{yolo_pafpn_forward.79} parent=0 // pred_check
    _
  $region3: #{yolo_pafpn_forward.79} parent=0 // pred_check_branch
    %9 = sbr.rel (0) target = $region5
  $region4: #{yolo_pafpn_forward.79} parent=0 // pred_region
    _
  $region5: #{yolo_pafpn_forward.79} parent=0 // pred_fallthru
    _
  // Predicated region
  $region6: #{yolo_pafpn_forward.79} parent=0 // pred_check
    _
  $region7: #{yolo_pafpn_forward.79} parent=0 // pred_check_branch
    %11 = sbr.rel (0) target = $region9
  $region8: #{yolo_pafpn_forward.79} parent=0 // pred_region
    _
  $region9: #{yolo_pafpn_forward.79} parent=0 // pred_fallthru
    _
  // Predicated region
  $region10: #{yolo_pafpn_forward.79} parent=0 // pred_check
    _
  $region11: #{yolo_pafpn_forward.79} parent=0 // pred_check_branch
    %13 = sbr.rel (0) target = $region13
  $region12: #{yolo_pafpn_forward.79} parent=0 // pred_region
    _
  $region13: #{yolo_pafpn_forward.79} parent=0 // pred_fallthru
    _
  %p15 = scmp.eq.s32.totalorder 0, 0
  // Predicated region
  $region14: #{yolo_pafpn_forward.79} parent=0 // pred_check
    %p16 = pneg %p15
  $region15: #{yolo_pafpn_forward.79} parent=0 // pred_check_branch
    %18 = sbr.rel (%p16) target = $region17
  $region16: #{yolo_pafpn_forward.79} parent=0 // pred_region
    %19 = vst [vmem:[#allocation2] sm:$0xff] 0.0
    %20 = vst [vmem:[#allocation2 + $0x8] sm:$0xff] 0.0
  $region17: #{yolo_pafpn_forward.79} parent=0 // pred_fallthru
    _
  %v21 = vld [vmem:[#allocation2] sm:$0xff]
  %v22 = vld [vmem:[#allocation2 + $0x8] sm:$0xff]
  %v23 = vld [vmem:[%s0] sm:$0xff]
  %v24 = vld [vmem:[%s0 + $0x8] sm:$0xff]
  %v25 = vld [vmem:[%s1] sm:$0xf]
  %v26 = vld [vmem:[%s1 + $0x4] sm:$0xf]
  %v27 = vld [vmem:[%s1 + $0x8] sm:$0xf]
  %v28 = vld [vmem:[%s1 + $0xc] sm:$0xf]
  %v29 = vld [vmem:[%s1 + $0x10] sm:$0xf]
  %v30 = vld [vmem:[%s1 + $0x14] sm:$0xf]
  %v31 = vld [vmem:[%s1 + $0x18] sm:$0xf]
  %v32 = vld [vmem:[%s1 + $0x1c] sm:$0xf]
  %v33 = vld [vmem:[%s1 + $0x20] sm:$0xf]
  %v34 = vld [vmem:[%s1 + $0x24] sm:$0xf]
  %v35 = vld [vmem:[%s1 + $0x28] sm:$0xf]
  %v36 = vld [vmem:[%s1 + $0x2c] sm:$0xf]
  %v37 = vld [vmem:[%s1 + $0x30] sm:$0xf]
  %v38 = vld [vmem:[%s1 + $0x34] sm:$0xf]
  %v39 = vld [vmem:[%s1 + $0x38] sm:$0xf]
  %v40 = vld [vmem:[%s1 + $0x3c] sm:$0xf]
  %v41 = vld [vmem:[%s1 + $0x40] sm:$0xf]
  %v42 = vld [vmem:[%s1 + $0x44] sm:$0xf]
  %v43 = vld [vmem:[%s1 + $0x48] sm:$0xf]
  %v44 = vld [vmem:[%s1 + $0x4c] sm:$0xf]
  %v45 = vld [vmem:[%s1 + $0x50] sm:$0xf]
  %v46 = vld [vmem:[%s1 + $0x54] sm:$0xf]
  %v47 = vld [vmem:[%s1 + $0x58] sm:$0xf]
  %v48 = vld [vmem:[%s1 + $0x5c] sm:$0xf]
  %v49 = vld [vmem:[%s1 + $0x60] sm:$0xf]
  %v50 = vld [vmem:[%s1 + $0x64] sm:$0xf]
  %v51 = vld [vmem:[%s1 + $0x68] sm:$0xf]
  %v52 = vld [vmem:[%s1 + $0x6c] sm:$0xf]
  %v53 = vld [vmem:[%s1 + $0x70] sm:$0xf]
  %v54 = vld [vmem:[%s1 + $0x74] sm:$0xf]
  %v55 = vld [vmem:[%s1 + $0x78] sm:$0xf]
  %v56 = vld [vmem:[%s1 + $0x7c] sm:$0xf]
  %v59 = vunpack.c.l.b16 %v23
  %v60 = vunpack.c.h.b16 %v23
  %v61 = vunpack.c.l.b16 %v24
  %v62 = vunpack.c.h.b16 %v24
  %v63 = vpack.c.b16 %v61, %v59
  %v64 = vpack.c.b16 %v62, %v60
  %v99 = vunpack.c.l.b16 %v25
  %v100 = vunpack.c.l.b16 %v26
  %v101 = vunpack.c.l.b16 %v27
  %v102 = vunpack.c.l.b16 %v28
  %v103 = vunpack.c.l.b16 %v29
  %v104 = vunpack.c.l.b16 %v30
  %v105 = vunpack.c.l.b16 %v31
  %v106 = vunpack.c.l.b16 %v32
  %v107 = vunpack.c.l.b16 %v33
  %v108 = vunpack.c.l.b16 %v34
  %v109 = vunpack.c.l.b16 %v35
  %v110 = vunpack.c.l.b16 %v36
  %v111 = vunpack.c.l.b16 %v37
  %v112 = vunpack.c.l.b16 %v38
  %v113 = vunpack.c.l.b16 %v39
  %v114 = vunpack.c.l.b16 %v40
  %v115 = vunpack.c.l.b16 %v41
  %v116 = vunpack.c.l.b16 %v42
  %v117 = vunpack.c.l.b16 %v43
  %v118 = vunpack.c.l.b16 %v44
  %v119 = vunpack.c.l.b16 %v45
  %v120 = vunpack.c.l.b16 %v46
  %v121 = vunpack.c.l.b16 %v47
  %v122 = vunpack.c.l.b16 %v48
  %v123 = vunpack.c.l.b16 %v49
  %v124 = vunpack.c.l.b16 %v50
  %v125 = vunpack.c.l.b16 %v51
  %v126 = vunpack.c.l.b16 %v52
  %v127 = vunpack.c.l.b16 %v53
  %v128 = vunpack.c.l.b16 %v54
  %v129 = vunpack.c.l.b16 %v55
  %v130 = vunpack.c.l.b16 %v56
  %v131 = vpack.c.b16 %v100, %v99
  %v132 = vpack.c.b16 %v102, %v101
  %v133 = vpack.c.b16 %v104, %v103
  %v134 = vpack.c.b16 %v106, %v105
  %v135 = vpack.c.b16 %v108, %v107
  %v136 = vpack.c.b16 %v110, %v109
  %v137 = vpack.c.b16 %v112, %v111
  %v138 = vpack.c.b16 %v114, %v113
  %v139 = vpack.c.b16 %v116, %v115
  %v140 = vpack.c.b16 %v118, %v117
  %v141 = vpack.c.b16 %v120, %v119
  %v142 = vpack.c.b16 %v122, %v121
  %v143 = vpack.c.b16 %v124, %v123
  %v144 = vpack.c.b16 %v126, %v125
  %v145 = vpack.c.b16 %v128, %v127
  %v146 = vpack.c.b16 %v130, %v129
  %163 = vmatprep.subr.bf16.mxu0 0
  %164 = vmatpush1.bf16.msra.mxu0 %v131
  %165 = vmatprep.subr.bf16.mxu0 0
  %166 = vmatpush1.bf16.msra.mxu0 %v132
  %167 = vmatprep.subr.bf16.mxu0 0
  %168 = vmatpush1.bf16.msra.mxu0 %v133
  %169 = vmatprep.subr.bf16.mxu0 0
  %170 = vmatpush1.bf16.msra.mxu0 %v134
  %171 = vmatprep.subr.bf16.mxu0 0
  %172 = vmatpush1.bf16.msra.mxu0 %v135
  %173 = vmatprep.subr.bf16.mxu0 0
  %174 = vmatpush1.bf16.msra.mxu0 %v136
  %175 = vmatprep.subr.bf16.mxu0 0
  %176 = vmatpush1.bf16.msra.mxu0 %v137
  %177 = vmatprep.subr.bf16.mxu0 0
  %178 = vmatpush1.bf16.msra.mxu0 %v138
  %179 = vmatprep.subr.bf16.mxu0 0
  %180 = vmatpush1.bf16.msra.mxu0 %v139
  %181 = vmatprep.subr.bf16.mxu0 0
  %182 = vmatpush1.bf16.msra.mxu0 %v140
  %183 = vmatprep.subr.bf16.mxu0 0
  %184 = vmatpush1.bf16.msra.mxu0 %v141
  %185 = vmatprep.subr.bf16.mxu0 0
  %186 = vmatpush1.bf16.msra.mxu0 %v142
  %187 = vmatprep.subr.bf16.mxu0 0
  %188 = vmatpush1.bf16.msra.mxu0 %v143
  %189 = vmatprep.subr.bf16.mxu0 0
  %190 = vmatpush1.bf16.msra.mxu0 %v144
  %191 = vmatprep.subr.bf16.mxu0 0
  %192 = vmatpush1.bf16.msra.mxu0 %v145
  %193 = vmatprep.subr.bf16.mxu0 0
  %194 = vmatpush1.bf16.msra.mxu0 %v146
  %195 = vmatprep.mubr.bf16.mxu0 %v64
  %196 = vmatmul.mubr.bf16.gmra.mrb[0].mxu0 %v63
  %v197 = vpop.f32.mrb[0].mxu0
  %v198 = vadd.f32 0.0, %v197
  %v199 = vpop.f32.mrb[0].mxu0
  %v200 = vpop.f32.mrb[0].mxu0
  %v201 = vadd.f32 0.0, %v200
  %v202 = vpop.f32.mrb[0].mxu0
  %203 = vdwg.mxu0
  %v204 = vadd.f32 %v21, %v198
  %v205 = vadd.f32 %v22, %v201
  %206 = vst [vmem:[#allocation2] sm:$0xff] %v204
  %207 = vst [vmem:[#allocation2 + $0x8] sm:$0xff] %v205
  // Predicated region
  $region18: #{yolo_pafpn_forward.79} parent=0 // pred_check
    %p208 = pneg %p15
  $region19: #{yolo_pafpn_forward.79} parent=0 // pred_check_branch
    %210 = sbr.rel (%p208) target = $region21
  $region20: #{yolo_pafpn_forward.79} parent=0 // pred_region
    %v211 = vld [vmem:[#allocation2] sm:$0xff]
    %v212 = vld [vmem:[#allocation2 + $0x8] sm:$0xff]
    %v213 = vld [vmem:[%s2] sm:$0x1]
    %v215 = vlaneseq
    %v216 = vshrl.u32 %v215, 7
    %v217 = vsub.s32 0, %v216
    %v218 = vrot.slane %v213, %v217
    %v220 = vadd.f32 %v211, %v218
    %v221 = vadd.f32 %v212, %v218
    %v222 = vand.u32 2147483647, %v220
    %v223 = vand.u32 2147483647, %v221
    %v224 = vsub.f32 0.0, %v222
    %v225 = vsub.f32 0.0, %v223
    %v226 = vmul.f32 %v224, 1.442695
    %v227 = vpow.pop %v226
    %v228 = vmul.f32 %v225, 1.442695
    %v229 = vpow.pop %v228
    %v230 = vadd.f32 %v227, 1.0
    %v231 = vadd.f32 %v229, 1.0
    %v232 = vrcp.pop %v230
    %v233 = vrcp.pop %v231
    %vm234 = vcmp.ge.f32.partialorder %v220, 0.0
    %vm235 = vcmp.ge.f32.partialorder %v221, 0.0
    %v236 = vsub.f32 1.0, %v232
    %v237 = vsub.f32 1.0, %v233
    %v238 = vsel %vm234, %v232, %v236
    %v239 = vsel %vm235, %v233, %v237
    %v240 = vmul.f32 %v220, %v238
    %v241 = vmul.f32 %v221, %v239
    %v242 = vpack.c.bf16 %v241, %v240
    %v244 = vunpack.c.l.b16 %v242
    %v245 = vunpack.c.h.b16 %v242
    %v246 = vpack.c.b16 %v244, %v244
    %v247 = vpack.c.b16 %v245, %v245
    %250 = vst [vmem:[%s3] sm:$0xf] %v246
    %251 = vst [vmem:[%s3 + $0x4] sm:$0xf] %v247
  $region21: #{yolo_pafpn_forward.79} parent=0 // pred_fallthru
    _
  // Predicated region
  $region22: #{yolo_pafpn_forward.79} parent=0 // pred_check
    _
  $region23: #{yolo_pafpn_forward.79} parent=0 // pred_check_branch
    %253 = sbr.rel (0) target = $region25
  $region24: #{yolo_pafpn_forward.79} parent=0 // pred_region
    _
  $region25: #{yolo_pafpn_forward.79} parent=0 // pred_fallthru
    _
  // Predicated region
  $region26: #{yolo_pafpn_forward.79} parent=0 // pred_check
    _
  $region27: #{yolo_pafpn_forward.79} parent=0 // pred_check_branch
    %255 = sbr.rel (0) target = $region29
  $region28: #{yolo_pafpn_forward.79} parent=0 // pred_region
    _
  $region29: #{yolo_pafpn_forward.79} parent=0 // pred_fallthru
    _

// kernel: yolo_pafpn_forward.84
$region0: #{yolo_pafpn_forward.84}
  #allocation0 [shape = 'u32[]', space=smem, size = 0x4, offset = 0x4, fixed_abs, tag = 'smem constant byte address 0x4 - core index']
  #allocation1 [shape = 'u32[144,128]{1,0:T(1,128)}', space=vmem, size = 0x12000, scoped, tag = 'internal scratch']
  #allocation2 [shape = 'f32[16,256]{1,0:T(8,128)}', space=vmem, size = 0x4000, scoped, tag = 'scratch operand']
  %s0 = inlined_call_operand.vmem [shape: bf16[16,256], index: 0, kind: input, shape index: {}]
  %s1 = inlined_call_operand.vmem [shape: bf16[256,256], index: 1, kind: input, shape index: {}]
  %s2 = inlined_call_operand.vmem [shape: f32[1,256], index: 2, kind: input, shape index: {}]
  %s3 = inlined_call_operand.vmem [shape: bf16[16,256], index: 3, kind: output, shape index: {}]
  %s4 = sld [smem:[#allocation0]]
  $region30: #{yolo_pafpn_forward.84} parent=0
    _
  %s6 = ssub.s32 1, %s4
  %s7 = scalar_select 0, %s6, %s4
  // Predicated region
  $region2: #{yolo_pafpn_forward.84} parent=0 // pred_check
    _
  $region3: #{yolo_pafpn_forward.84} parent=0 // pred_check_branch
    %9 = sbr.rel (0) target = $region5
  $region4: #{yolo_pafpn_forward.84} parent=0 // pred_region
    _
  $region5: #{yolo_pafpn_forward.84} parent=0 // pred_fallthru
    _
  // Predicated region
  $region6: #{yolo_pafpn_forward.84} parent=0 // pred_check
    _
  $region7: #{yolo_pafpn_forward.84} parent=0 // pred_check_branch
    %11 = sbr.rel (0) target = $region9
  $region8: #{yolo_pafpn_forward.84} parent=0 // pred_region
    _
  $region9: #{yolo_pafpn_forward.84} parent=0 // pred_fallthru
    _
  // Predicated region
  $region10: #{yolo_pafpn_forward.84} parent=0 // pred_check
    _
  $region11: #{yolo_pafpn_forward.84} parent=0 // pred_check_branch
    %13 = sbr.rel (0) target = $region13
  $region12: #{yolo_pafpn_forward.84} parent=0 // pred_region
    _
  $region13: #{yolo_pafpn_forward.84} parent=0 // pred_fallthru
    _
  %p14 = scmp.eq.s32.totalorder 0, 0
  // Predicated region
  $region14: #{yolo_pafpn_forward.84} parent=0 // pred_check
    %p15 = pneg %p14
  $region15: #{yolo_pafpn_forward.84} parent=0 // pred_check_branch
    %17 = sbr.rel (%p15) target = $region17
  $region16: #{yolo_pafpn_forward.84} parent=0 // pred_region
    %18 = vst [vmem:[#allocation2] sm:$0xff] 0.0
    %19 = vst [vmem:[#allocation2 + $0x8] sm:$0xff] 0.0
    %20 = vst [vmem:[#allocation2 + $0x10] sm:$0xff] 0.0
    %21 = vst [vmem:[#allocation2 + $0x18] sm:$0xff] 0.0
  $region17: #{yolo_pafpn_forward.84} parent=0 // pred_fallthru
    _
  %v22 = vld [vmem:[#allocation2] sm:$0xff]
  %v23 = vld [vmem:[#allocation2 + $0x8] sm:$0xff]
  %v24 = vld [vmem:[#allocation2 + $0x10] sm:$0xff]
  %v25 = vld [vmem:[#allocation2 + $0x18] sm:$0xff]
  %v26 = vld [vmem:[%s0] sm:$0xff]
  %v27 = vld [vmem:[%s0 + $0x8] sm:$0xff]
  %v28 = vld [vmem:[%s1] sm:$0xff]
  %v29 = vld [vmem:[%s1 + $0x8] sm:$0xff]
  %v30 = vld [vmem:[%s1 + $0x10] sm:$0xff]
  %v31 = vld [vmem:[%s1 + $0x18] sm:$0xff]
  %v32 = vld [vmem:[%s1 + $0x20] sm:$0xff]
  %v33 = vld [vmem:[%s1 + $0x28] sm:$0xff]
  %v34 = vld [vmem:[%s1 + $0x30] sm:$0xff]
  %v35 = vld [vmem:[%s1 + $0x38] sm:$0xff]
  %v36 = vld [vmem:[%s1 + $0x40] sm:$0xff]
  %v37 = vld [vmem:[%s1 + $0x48] sm:$0xff]
  %v38 = vld [vmem:[%s1 + $0x50] sm:$0xff]
  %v39 = vld [vmem:[%s1 + $0x58] sm:$0xff]
  %v40 = vld [vmem:[%s1 + $0x60] sm:$0xff]
  %v41 = vld [vmem:[%s1 + $0x68] sm:$0xff]
  %v42 = vld [vmem:[%s1 + $0x70] sm:$0xff]
  %v43 = vld [vmem:[%s1 + $0x78] sm:$0xff]
  %v44 = vld [vmem:[%s1 + $0x80] sm:$0xff]
  %v45 = vld [vmem:[%s1 + $0x88] sm:$0xff]
  %v46 = vld [vmem:[%s1 + $0x90] sm:$0xff]
  %v47 = vld [vmem:[%s1 + $0x98] sm:$0xff]
  %v48 = vld [vmem:[%s1 + $0xa0] sm:$0xff]
  %v49 = vld [vmem:[%s1 + $0xa8] sm:$0xff]
  %v50 = vld [vmem:[%s1 + $0xb0] sm:$0xff]
  %v51 = vld [vmem:[%s1 + $0xb8] sm:$0xff]
  %v52 = vld [vmem:[%s1 + $0xc0] sm:$0xff]
  %v53 = vld [vmem:[%s1 + $0xc8] sm:$0xff]
  %v54 = vld [vmem:[%s1 + $0xd0] sm:$0xff]
  %v55 = vld [vmem:[%s1 + $0xd8] sm:$0xff]
  %v56 = vld [vmem:[%s1 + $0xe0] sm:$0xff]
  %v57 = vld [vmem:[%s1 + $0xe8] sm:$0xff]
  %v58 = vld [vmem:[%s1 + $0xf0] sm:$0xff]
  %v59 = vld [vmem:[%s1 + $0xf8] sm:$0xff]
  %v62 = vunpack.c.l.b16 %v26
  %v63 = vunpack.c.h.b16 %v26
  %v64 = vunpack.c.l.b16 %v27
  %v65 = vunpack.c.h.b16 %v27
  %v66 = vpack.c.b16 %v64, %v62
  %v67 = vpack.c.b16 %v65, %v63
  %v102 = vunpack.c.l.b16 %v28
  %v103 = vunpack.c.h.b16 %v28
  %v104 = vunpack.c.l.b16 %v29
  %v105 = vunpack.c.h.b16 %v29
  %v106 = vunpack.c.l.b16 %v30
  %v107 = vunpack.c.h.b16 %v30
  %v108 = vunpack.c.l.b16 %v31
  %v109 = vunpack.c.h.b16 %v31
  %v110 = vunpack.c.l.b16 %v32
  %v111 = vunpack.c.h.b16 %v32
  %v112 = vunpack.c.l.b16 %v33
  %v113 = vunpack.c.h.b16 %v33
  %v114 = vunpack.c.l.b16 %v34
  %v115 = vunpack.c.h.b16 %v34
  %v116 = vunpack.c.l.b16 %v35
  %v117 = vunpack.c.h.b16 %v35
  %v118 = vunpack.c.l.b16 %v36
  %v119 = vunpack.c.h.b16 %v36
  %v120 = vunpack.c.l.b16 %v37
  %v121 = vunpack.c.h.b16 %v37
  %v122 = vunpack.c.l.b16 %v38
  %v123 = vunpack.c.h.b16 %v38
  %v124 = vunpack.c.l.b16 %v39
  %v125 = vunpack.c.h.b16 %v39
  %v126 = vunpack.c.l.b16 %v40
  %v127 = vunpack.c.h.b16 %v40
  %v128 = vunpack.c.l.b16 %v41
  %v129 = vunpack.c.h.b16 %v41
  %v130 = vunpack.c.l.b16 %v42
  %v131 = vunpack.c.h.b16 %v42
  %v132 = vunpack.c.l.b16 %v43
  %v133 = vunpack.c.h.b16 %v43
  %v134 = vunpack.c.l.b16 %v44
  %v135 = vunpack.c.h.b16 %v44
  %v136 = vunpack.c.l.b16 %v45
  %v137 = vunpack.c.h.b16 %v45
  %v138 = vunpack.c.l.b16 %v46
  %v139 = vunpack.c.h.b16 %v46
  %v140 = vunpack.c.l.b16 %v47
  %v141 = vunpack.c.h.b16 %v47
  %v142 = vunpack.c.l.b16 %v48
  %v143 = vunpack.c.h.b16 %v48
  %v144 = vunpack.c.l.b16 %v49
  %v145 = vunpack.c.h.b16 %v49
  %v146 = vunpack.c.l.b16 %v50
  %v147 = vunpack.c.h.b16 %v50
  %v148 = vunpack.c.l.b16 %v51
  %v149 = vunpack.c.h.b16 %v51
  %v150 = vunpack.c.l.b16 %v52
  %v151 = vunpack.c.h.b16 %v52
  %v152 = vunpack.c.l.b16 %v53
  %v153 = vunpack.c.h.b16 %v53
  %v154 = vunpack.c.l.b16 %v54
  %v155 = vunpack.c.h.b16 %v54
  %v156 = vunpack.c.l.b16 %v55
  %v157 = vunpack.c.h.b16 %v55
  %v158 = vunpack.c.l.b16 %v56
  %v159 = vunpack.c.h.b16 %v56
  %v160 = vunpack.c.l.b16 %v57
  %v161 = vunpack.c.h.b16 %v57
  %v162 = vunpack.c.l.b16 %v58
  %v163 = vunpack.c.h.b16 %v58
  %v164 = vunpack.c.l.b16 %v59
  %v165 = vunpack.c.h.b16 %v59
  %v166 = vpack.c.b16 %v104, %v102
  %v167 = vpack.c.b16 %v105, %v103
  %v168 = vpack.c.b16 %v108, %v106
  %v169 = vpack.c.b16 %v109, %v107
  %v170 = vpack.c.b16 %v112, %v110
  %v171 = vpack.c.b16 %v113, %v111
  %v172 = vpack.c.b16 %v116, %v114
  %v173 = vpack.c.b16 %v117, %v115
  %v174 = vpack.c.b16 %v120, %v118
  %v175 = vpack.c.b16 %v121, %v119
  %v176 = vpack.c.b16 %v124, %v122
  %v177 = vpack.c.b16 %v125, %v123
  %v178 = vpack.c.b16 %v128, %v126
  %v179 = vpack.c.b16 %v129, %v127
  %v180 = vpack.c.b16 %v132, %v130
  %v181 = vpack.c.b16 %v133, %v131
  %v182 = vpack.c.b16 %v136, %v134
  %v183 = vpack.c.b16 %v137, %v135
  %v184 = vpack.c.b16 %v140, %v138
  %v185 = vpack.c.b16 %v141, %v139
  %v186 = vpack.c.b16 %v144, %v142
  %v187 = vpack.c.b16 %v145, %v143
  %v188 = vpack.c.b16 %v148, %v146
  %v189 = vpack.c.b16 %v149, %v147
  %v190 = vpack.c.b16 %v152, %v150
  %v191 = vpack.c.b16 %v153, %v151
  %v192 = vpack.c.b16 %v156, %v154
  %v193 = vpack.c.b16 %v157, %v155
  %v194 = vpack.c.b16 %v160, %v158
  %v195 = vpack.c.b16 %v161, %v159
  %v196 = vpack.c.b16 %v164, %v162
  %v197 = vpack.c.b16 %v165, %v163
  %230 = vmatprep.subr.bf16.mxu0 %v167
  %231 = vmatpush1.bf16.msra.mxu0 %v166
  %232 = vmatprep.subr.bf16.mxu0 %v169
  %233 = vmatpush1.bf16.msra.mxu0 %v168
  %234 = vmatprep.subr.bf16.mxu0 %v171
  %235 = vmatpush1.bf16.msra.mxu0 %v170
  %236 = vmatprep.subr.bf16.mxu0 %v173
  %237 = vmatpush1.bf16.msra.mxu0 %v172
  %238 = vmatprep.subr.bf16.mxu0 %v175
  %239 = vmatpush1.bf16.msra.mxu0 %v174
  %240 = vmatprep.subr.bf16.mxu0 %v177
  %241 = vmatpush1.bf16.msra.mxu0 %v176
  %242 = vmatprep.subr.bf16.mxu0 %v179
  %243 = vmatpush1.bf16.msra.mxu0 %v178
  %244 = vmatprep.subr.bf16.mxu0 %v181
  %245 = vmatpush1.bf16.msra.mxu0 %v180
  %246 = vmatprep.subr.bf16.mxu0 %v183
  %247 = vmatpush1.bf16.msra.mxu0 %v182
  %248 = vmatprep.subr.bf16.mxu0 %v185
  %249 = vmatpush1.bf16.msra.mxu0 %v184
  %250 = vmatprep.subr.bf16.mxu0 %v187
  %251 = vmatpush1.bf16.msra.mxu0 %v186
  %252 = vmatprep.subr.bf16.mxu0 %v189
  %253 = vmatpush1.bf16.msra.mxu0 %v188
  %254 = vmatprep.subr.bf16.mxu0 %v191
  %255 = vmatpush1.bf16.msra.mxu0 %v190
  %256 = vmatprep.subr.bf16.mxu0 %v193
  %257 = vmatpush1.bf16.msra.mxu0 %v192
  %258 = vmatprep.subr.bf16.mxu0 %v195
  %259 = vmatpush1.bf16.msra.mxu0 %v194
  %260 = vmatprep.subr.bf16.mxu0 %v197
  %261 = vmatpush1.bf16.msra.mxu0 %v196
  %262 = vmatprep.mubr.bf16.mxu0 %v67
  %263 = vmatmul.mubr.bf16.gmra.mrb[0].mxu0 %v66
  %v264 = vpop.f32.mrb[0].mxu0
  %v265 = vadd.f32 0.0, %v264
  %v266 = vpop.f32.mrb[0].mxu0
  %v267 = vadd.f32 0.0, %v266
  %v268 = vpop.f32.mrb[0].mxu0
  %v269 = vadd.f32 0.0, %v268
  %v270 = vpop.f32.mrb[0].mxu0
  %v271 = vadd.f32 0.0, %v270
  %272 = vdwg.mxu0
  %v273 = vadd.f32 %v22, %v265
  %v274 = vadd.f32 %v23, %v267
  %v275 = vadd.f32 %v24, %v269
  %v276 = vadd.f32 %v25, %v271
  %277 = vst [vmem:[#allocation2] sm:$0xff] %v273
  %278 = vst [vmem:[#allocation2 + $0x8] sm:$0xff] %v274
  %279 = vst [vmem:[#allocation2 + $0x10] sm:$0xff] %v275
  %280 = vst [vmem:[#allocation2 + $0x18] sm:$0xff] %v276
  // Predicated region
  $region18: #{yolo_pafpn_forward.84} parent=0 // pred_check
    %p281 = pneg %p14
  $region19: #{yolo_pafpn_forward.84} parent=0 // pred_check_branch
    %283 = sbr.rel (%p281) target = $region21
  $region20: #{yolo_pafpn_forward.84} parent=0 // pred_region
    %v284 = vld [vmem:[#allocation2] sm:$0xff]
    %v285 = vld [vmem:[#allocation2 + $0x8] sm:$0xff]
    %v286 = vld [vmem:[#allocation2 + $0x10] sm:$0xff]
    %v287 = vld [vmem:[#allocation2 + $0x18] sm:$0xff]
    %v288 = vld [vmem:[%s2] sm:$0x3]
    %v290 = vlaneseq
    %v291 = vshrl.u32 %v290, 7
    %v292 = vsub.s32 0, %v291
    %v293 = vrot.slane %v288, %v292
    %v294 = vlaneseq
    %v295 = vshrl.u32 %v294, 7
    %v296 = vsub.s32 1, %v295
    %v297 = vrot.slane %v288, %v296
    %v300 = vadd.f32 %v284, %v293
    %v301 = vadd.f32 %v285, %v297
    %v302 = vadd.f32 %v286, %v293
    %v303 = vadd.f32 %v287, %v297
    %v304 = vand.u32 2147483647, %v300
    %v305 = vand.u32 2147483647, %v301
    %v306 = vand.u32 2147483647, %v302
    %v307 = vand.u32 2147483647, %v303
    %v308 = vsub.f32 0.0, %v304
    %v309 = vsub.f32 0.0, %v305
    %v310 = vsub.f32 0.0, %v306
    %v311 = vsub.f32 0.0, %v307
    %v312 = vmul.f32 %v308, 1.442695
    %v313 = vpow.pop %v312
    %v314 = vmul.f32 %v309, 1.442695
    %v315 = vpow.pop %v314
    %v316 = vmul.f32 %v310, 1.442695
    %v317 = vpow.pop %v316
    %v318 = vmul.f32 %v311, 1.442695
    %v319 = vpow.pop %v318
    %v320 = vadd.f32 %v313, 1.0
    %v321 = vadd.f32 %v315, 1.0
    %v322 = vadd.f32 %v317, 1.0
    %v323 = vadd.f32 %v319, 1.0
    %v324 = vrcp.pop %v320
    %v325 = vrcp.pop %v321
    %v326 = vrcp.pop %v322
    %v327 = vrcp.pop %v323
    %vm328 = vcmp.ge.f32.partialorder %v300, 0.0
    %vm329 = vcmp.ge.f32.partialorder %v301, 0.0
    %vm330 = vcmp.ge.f32.partialorder %v302, 0.0
    %vm331 = vcmp.ge.f32.partialorder %v303, 0.0
    %v332 = vsub.f32 1.0, %v324
    %v333 = vsub.f32 1.0, %v325
    %v334 = vsub.f32 1.0, %v326
    %v335 = vsub.f32 1.0, %v327
    %v336 = vsel %vm328, %v324, %v332
    %v337 = vsel %vm329, %v325, %v333
    %v338 = vsel %vm330, %v326, %v334
    %v339 = vsel %vm331, %v327, %v335
    %v340 = vmul.f32 %v300, %v336
    %v341 = vmul.f32 %v301, %v337
    %v342 = vmul.f32 %v302, %v338
    %v343 = vmul.f32 %v303, %v339
    %v344 = vpack.c.bf16 %v342, %v340
    %v345 = vpack.c.bf16 %v343, %v341
    %v348 = vunpack.c.l.b16 %v344
    %v349 = vunpack.c.l.b16 %v345
    %v350 = vunpack.c.h.b16 %v344
    %v351 = vunpack.c.h.b16 %v345
    %v352 = vpack.c.b16 %v349, %v348
    %v353 = vpack.c.b16 %v351, %v350
    %356 = vst [vmem:[%s3] sm:$0xff] %v352
    %357 = vst [vmem:[%s3 + $0x8] sm:$0xff] %v353
  $region21: #{yolo_pafpn_forward.84} parent=0 // pred_fallthru
    _
  // Predicated region
  $region22: #{yolo_pafpn_forward.84} parent=0 // pred_check
    _
  $region23: #{yolo_pafpn_forward.84} parent=0 // pred_check_branch
    %359 = sbr.rel (0) target = $region25
  $region24: #{yolo_pafpn_forward.84} parent=0 // pred_region
    _
  $region25: #{yolo_pafpn_forward.84} parent=0 // pred_fallthru
    _
  // Predicated region
  $region26: #{yolo_pafpn_forward.84} parent=0 // pred_check
    _
  $region27: #{yolo_pafpn_forward.84} parent=0 // pred_check_branch
    %361 = sbr.rel (0) target = $region29
  $region28: #{yolo_pafpn_forward.84} parent=0 // pred_region
    _
  $region29: #{yolo_pafpn_forward.84} parent=0 // pred_fallthru
    _

// kernel: yolo_pafpn_forward.85
$region0: #{yolo_pafpn_forward.85}
  #allocation0 [shape = 'u32[]', space=smem, size = 0x4, offset = 0x4, fixed_abs, tag = 'smem constant byte address 0x4 - core index']
  #allocation1 [shape = 'u32[144,128]{1,0:T(1,128)}', space=vmem, size = 0x12000, scoped, tag = 'internal scratch']
  #allocation2 [shape = 'f32[16,128]{1,0:T(8,128)}', space=vmem, size = 0x2000, scoped, tag = 'scratch operand']
  %s0 = inlined_call_operand.vmem [shape: bf16[16,128], index: 0, kind: input, shape index: {}]
  %s1 = inlined_call_operand.vmem [shape: bf16[128,128], index: 1, kind: input, shape index: {}]
  %s2 = inlined_call_operand.vmem [shape: f32[1,128], index: 2, kind: input, shape index: {}]
  %s3 = inlined_call_operand.vmem [shape: bf16[16,128], index: 3, kind: output, shape index: {}]
  %s4 = sld [smem:[#allocation0]]
  $region30: #{yolo_pafpn_forward.85} parent=0
    _
  %s6 = ssub.s32 1, %s4
  %s7 = scalar_select 0, %s6, %s4
  // Predicated region
  $region2: #{yolo_pafpn_forward.85} parent=0 // pred_check
    _
  $region3: #{yolo_pafpn_forward.85} parent=0 // pred_check_branch
    %9 = sbr.rel (0) target = $region5
  $region4: #{yolo_pafpn_forward.85} parent=0 // pred_region
    _
  $region5: #{yolo_pafpn_forward.85} parent=0 // pred_fallthru
    _
  // Predicated region
  $region6: #{yolo_pafpn_forward.85} parent=0 // pred_check
    _
  $region7: #{yolo_pafpn_forward.85} parent=0 // pred_check_branch
    %11 = sbr.rel (0) target = $region9
  $region8: #{yolo_pafpn_forward.85} parent=0 // pred_region
    _
  $region9: #{yolo_pafpn_forward.85} parent=0 // pred_fallthru
    _
  // Predicated region
  $region10: #{yolo_pafpn_forward.85} parent=0 // pred_check
    _
  $region11: #{yolo_pafpn_forward.85} parent=0 // pred_check_branch
    %13 = sbr.rel (0) target = $region13
  $region12: #{yolo_pafpn_forward.85} parent=0 // pred_region
    _
  $region13: #{yolo_pafpn_forward.85} parent=0 // pred_fallthru
    _
  %p15 = scmp.eq.s32.totalorder 0, 0
  // Predicated region
  $region14: #{yolo_pafpn_forward.85} parent=0 // pred_check
    %p16 = pneg %p15
  $region15: #{yolo_pafpn_forward.85} parent=0 // pred_check_branch
    %18 = sbr.rel (%p16) target = $region17
  $region16: #{yolo_pafpn_forward.85} parent=0 // pred_region
    %19 = vst [vmem:[#allocation2] sm:$0xff] 0.0
    %20 = vst [vmem:[#allocation2 + $0x8] sm:$0xff] 0.0
  $region17: #{yolo_pafpn_forward.85} parent=0 // pred_fallthru
    _
  %v21 = vld [vmem:[#allocation2] sm:$0xff]
  %v22 = vld [vmem:[#allocation2 + $0x8] sm:$0xff]
  %v23 = vld [vmem:[%s0] sm:$0xf]
  %v24 = vld [vmem:[%s0 + $0x4] sm:$0xf]
  %v25 = vld [vmem:[%s1] sm:$0xf]
  %v26 = vld [vmem:[%s1 + $0x4] sm:$0xf]
  %v27 = vld [vmem:[%s1 + $0x8] sm:$0xf]
  %v28 = vld [vmem:[%s1 + $0xc] sm:$0xf]
  %v29 = vld [vmem:[%s1 + $0x10] sm:$0xf]
  %v30 = vld [vmem:[%s1 + $0x14] sm:$0xf]
  %v31 = vld [vmem:[%s1 + $0x18] sm:$0xf]
  %v32 = vld [vmem:[%s1 + $0x1c] sm:$0xf]
  %v33 = vld [vmem:[%s1 + $0x20] sm:$0xf]
  %v34 = vld [vmem:[%s1 + $0x24] sm:$0xf]
  %v35 = vld [vmem:[%s1 + $0x28] sm:$0xf]
  %v36 = vld [vmem:[%s1 + $0x2c] sm:$0xf]
  %v37 = vld [vmem:[%s1 + $0x30] sm:$0xf]
  %v38 = vld [vmem:[%s1 + $0x34] sm:$0xf]
  %v39 = vld [vmem:[%s1 + $0x38] sm:$0xf]
  %v40 = vld [vmem:[%s1 + $0x3c] sm:$0xf]
  %v43 = vunpack.c.l.b16 %v23
  %v44 = vunpack.c.l.b16 %v24
  %v45 = vpack.c.b16 %v44, %v43
  %v63 = vunpack.c.l.b16 %v25
  %v64 = vunpack.c.l.b16 %v26
  %v65 = vunpack.c.l.b16 %v27
  %v66 = vunpack.c.l.b16 %v28
  %v67 = vunpack.c.l.b16 %v29
  %v68 = vunpack.c.l.b16 %v30
  %v69 = vunpack.c.l.b16 %v31
  %v70 = vunpack.c.l.b16 %v32
  %v71 = vunpack.c.l.b16 %v33
  %v72 = vunpack.c.l.b16 %v34
  %v73 = vunpack.c.l.b16 %v35
  %v74 = vunpack.c.l.b16 %v36
  %v75 = vunpack.c.l.b16 %v37
  %v76 = vunpack.c.l.b16 %v38
  %v77 = vunpack.c.l.b16 %v39
  %v78 = vunpack.c.l.b16 %v40
  %v79 = vpack.c.b16 %v64, %v63
  %v80 = vpack.c.b16 %v66, %v65
  %v81 = vpack.c.b16 %v68, %v67
  %v82 = vpack.c.b16 %v70, %v69
  %v83 = vpack.c.b16 %v72, %v71
  %v84 = vpack.c.b16 %v74, %v73
  %v85 = vpack.c.b16 %v76, %v75
  %v86 = vpack.c.b16 %v78, %v77
  %95 = vmatprep.subr.bf16.mxu0 0
  %96 = vmatpush1.bf16.msra.mxu0 %v79
  %97 = vmatprep.subr.bf16.mxu0 0
  %98 = vmatpush1.bf16.msra.mxu0 %v80
  %99 = vmatprep.subr.bf16.mxu0 0
  %100 = vmatpush1.bf16.msra.mxu0 %v81
  %101 = vmatprep.subr.bf16.mxu0 0
  %102 = vmatpush1.bf16.msra.mxu0 %v82
  %103 = vmatprep.subr.bf16.mxu0 0
  %104 = vmatpush1.bf16.msra.mxu0 %v83
  %105 = vmatprep.subr.bf16.mxu0 0
  %106 = vmatpush1.bf16.msra.mxu0 %v84
  %107 = vmatprep.subr.bf16.mxu0 0
  %108 = vmatpush1.bf16.msra.mxu0 %v85
  %109 = vmatprep.subr.bf16.mxu0 0
  %110 = vmatpush1.bf16.msra.mxu0 %v86
  %111 = vmatprep.subr.bf16.mxu0 0
  %112 = vmatpush1.bf16.msra.mxu0 0
  %113 = vmatprep.subr.bf16.mxu0 0
  %114 = vmatpush1.bf16.msra.mxu0 0
  %115 = vmatprep.subr.bf16.mxu0 0
  %116 = vmatpush1.bf16.msra.mxu0 0
  %117 = vmatprep.subr.bf16.mxu0 0
  %118 = vmatpush1.bf16.msra.mxu0 0
  %119 = vmatprep.subr.bf16.mxu0 0
  %120 = vmatpush1.bf16.msra.mxu0 0
  %121 = vmatprep.subr.bf16.mxu0 0
  %122 = vmatpush1.bf16.msra.mxu0 0
  %123 = vmatprep.subr.bf16.mxu0 0
  %124 = vmatpush1.bf16.msra.mxu0 0
  %125 = vmatprep.subr.bf16.mxu0 0
  %126 = vmatpush1.bf16.msra.mxu0 0
  %127 = vmatprep.mubr.bf16.mxu0 0
  %128 = vmatmul.mubr.bf16.gmra.mrb[0].mxu0 %v45
  %v129 = vpop.f32.mrb[0].mxu0
  %v130 = vadd.f32 0.0, %v129
  %v131 = vpop.f32.mrb[0].mxu0
  %v132 = vpop.f32.mrb[0].mxu0
  %v133 = vadd.f32 0.0, %v132
  %v134 = vpop.f32.mrb[0].mxu0
  %135 = vdwg.mxu0
  %v136 = vadd.f32 %v21, %v130
  %v137 = vadd.f32 %v22, %v133
  %138 = vst [vmem:[#allocation2] sm:$0xff] %v136
  %139 = vst [vmem:[#allocation2 + $0x8] sm:$0xff] %v137
  // Predicated region
  $region18: #{yolo_pafpn_forward.85} parent=0 // pred_check
    %p140 = pneg %p15
  $region19: #{yolo_pafpn_forward.85} parent=0 // pred_check_branch
    %142 = sbr.rel (%p140) target = $region21
  $region20: #{yolo_pafpn_forward.85} parent=0 // pred_region
    %v143 = vld [vmem:[#allocation2] sm:$0xff]
    %v144 = vld [vmem:[#allocation2 + $0x8] sm:$0xff]
    %v145 = vld [vmem:[%s2] sm:$0x1]
    %v147 = vlaneseq
    %v148 = vshrl.u32 %v147, 7
    %v149 = vsub.s32 0, %v148
    %v150 = vrot.slane %v145, %v149
    %v152 = vadd.f32 %v143, %v150
    %v153 = vadd.f32 %v144, %v150
    %v154 = vand.u32 2147483647, %v152
    %v155 = vand.u32 2147483647, %v153
    %v156 = vsub.f32 0.0, %v154
    %v157 = vsub.f32 0.0, %v155
    %v158 = vmul.f32 %v156, 1.442695
    %v159 = vpow.pop %v158
    %v160 = vmul.f32 %v157, 1.442695
    %v161 = vpow.pop %v160
    %v162 = vadd.f32 %v159, 1.0
    %v163 = vadd.f32 %v161, 1.0
    %v164 = vrcp.pop %v162
    %v165 = vrcp.pop %v163
    %vm166 = vcmp.ge.f32.partialorder %v152, 0.0
    %vm167 = vcmp.ge.f32.partialorder %v153, 0.0
    %v168 = vsub.f32 1.0, %v164
    %v169 = vsub.f32 1.0, %v165
    %v170 = vsel %vm166, %v164, %v168
    %v171 = vsel %vm167, %v165, %v169
    %v172 = vmul.f32 %v152, %v170
    %v173 = vmul.f32 %v153, %v171
    %v174 = vpack.c.bf16 %v173, %v172
    %v176 = vunpack.c.l.b16 %v174
    %v177 = vunpack.c.h.b16 %v174
    %v178 = vpack.c.b16 %v176, %v176
    %v179 = vpack.c.b16 %v177, %v177
    %182 = vst [vmem:[%s3] sm:$0xf] %v178
    %183 = vst [vmem:[%s3 + $0x4] sm:$0xf] %v179
  $region21: #{yolo_pafpn_forward.85} parent=0 // pred_fallthru
    _
  // Predicated region
  $region22: #{yolo_pafpn_forward.85} parent=0 // pred_check
    _
  $region23: #{yolo_pafpn_forward.85} parent=0 // pred_check_branch
    %185 = sbr.rel (0) target = $region25
  $region24: #{yolo_pafpn_forward.85} parent=0 // pred_region
    _
  $region25: #{yolo_pafpn_forward.85} parent=0 // pred_fallthru
    _
  // Predicated region
  $region26: #{yolo_pafpn_forward.85} parent=0 // pred_check
    _
  $region27: #{yolo_pafpn_forward.85} parent=0 // pred_check_branch
    %187 = sbr.rel (0) target = $region29
  $region28: #{yolo_pafpn_forward.85} parent=0 // pred_region
    _
  $region29: #{yolo_pafpn_forward.85} parent=0 // pred_fallthru
    _

// kernel: yolo_pafpn_forward.83
$region0: #{yolo_pafpn_forward.83}
  #allocation0 [shape = 'u32[]', space=smem, size = 0x4, offset = 0x4, fixed_abs, tag = 'smem constant byte address 0x4 - core index']
  #allocation1 [shape = 'u32[144,128]{1,0:T(1,128)}', space=vmem, size = 0x12000, scoped, tag = 'internal scratch']
  #allocation2 [shape = 'f32[16,256]{1,0:T(8,128)}', space=vmem, size = 0x4000, scoped, tag = 'scratch operand']
  %s0 = inlined_call_operand.vmem [shape: bf16[16,512], index: 0, kind: input, shape index: {}]
  %s1 = inlined_call_operand.vmem [shape: bf16[512,256], index: 1, kind: input, shape index: {}]
  %s2 = inlined_call_operand.vmem [shape: f32[1,256], index: 2, kind: input, shape index: {}]
  %s3 = inlined_call_operand.vmem [shape: bf16[16,256], index: 3, kind: output, shape index: {}]
  %s4 = sld [smem:[#allocation0]]
  $region30: #{yolo_pafpn_forward.83} parent=0
    _
  %s6 = ssub.s32 1, %s4
  %s7 = scalar_select 0, %s6, %s4
  // Predicated region
  $region2: #{yolo_pafpn_forward.83} parent=0 // pred_check
    _
  $region3: #{yolo_pafpn_forward.83} parent=0 // pred_check_branch
    %9 = sbr.rel (0) target = $region5
  $region4: #{yolo_pafpn_forward.83} parent=0 // pred_region
    _
  $region5: #{yolo_pafpn_forward.83} parent=0 // pred_fallthru
    _
  // Predicated region
  $region6: #{yolo_pafpn_forward.83} parent=0 // pred_check
    _
  $region7: #{yolo_pafpn_forward.83} parent=0 // pred_check_branch
    %11 = sbr.rel (0) target = $region9
  $region8: #{yolo_pafpn_forward.83} parent=0 // pred_region
    _
  $region9: #{yolo_pafpn_forward.83} parent=0 // pred_fallthru
    _
  // Predicated region
  $region10: #{yolo_pafpn_forward.83} parent=0 // pred_check
    _
  $region11: #{yolo_pafpn_forward.83} parent=0 // pred_check_branch
    %13 = sbr.rel (0) target = $region13
  $region12: #{yolo_pafpn_forward.83} parent=0 // pred_region
    _
  $region13: #{yolo_pafpn_forward.83} parent=0 // pred_fallthru
    _
  %p14 = scmp.eq.s32.totalorder 0, 0
  // Predicated region
  $region14: #{yolo_pafpn_forward.83} parent=0 // pred_check
    %p15 = pneg %p14
  $region15: #{yolo_pafpn_forward.83} parent=0 // pred_check_branch
    %17 = sbr.rel (%p15) target = $region17
  $region16: #{yolo_pafpn_forward.83} parent=0 // pred_region
    %18 = vst [vmem:[#allocation2] sm:$0xff] 0.0
    %19 = vst [vmem:[#allocation2 + $0x8] sm:$0xff] 0.0
    %20 = vst [vmem:[#allocation2 + $0x10] sm:$0xff] 0.0
    %21 = vst [vmem:[#allocation2 + $0x18] sm:$0xff] 0.0
  $region17: #{yolo_pafpn_forward.83} parent=0 // pred_fallthru
    _
  %v22 = vld [vmem:[#allocation2] sm:$0xff]
  %v23 = vld [vmem:[#allocation2 + $0x8] sm:$0xff]
  %v24 = vld [vmem:[#allocation2 + $0x10] sm:$0xff]
  %v25 = vld [vmem:[#allocation2 + $0x18] sm:$0xff]
  %v26 = vld [vmem:[%s0] sm:$0xff]
  %v27 = vld [vmem:[%s0 + $0x8] sm:$0xff]
  %v28 = vld [vmem:[%s0 + $0x10] sm:$0xff]
  %v29 = vld [vmem:[%s0 + $0x18] sm:$0xff]
  %v30 = vld [vmem:[%s1] sm:$0xff]
  %v31 = vld [vmem:[%s1 + $0x8] sm:$0xff]
  %v32 = vld [vmem:[%s1 + $0x10] sm:$0xff]
  %v33 = vld [vmem:[%s1 + $0x18] sm:$0xff]
  %v34 = vld [vmem:[%s1 + $0x20] sm:$0xff]
  %v35 = vld [vmem:[%s1 + $0x28] sm:$0xff]
  %v36 = vld [vmem:[%s1 + $0x30] sm:$0xff]
  %v37 = vld [vmem:[%s1 + $0x38] sm:$0xff]
  %v38 = vld [vmem:[%s1 + $0x40] sm:$0xff]
  %v39 = vld [vmem:[%s1 + $0x48] sm:$0xff]
  %v40 = vld [vmem:[%s1 + $0x50] sm:$0xff]
  %v41 = vld [vmem:[%s1 + $0x58] sm:$0xff]
  %v42 = vld [vmem:[%s1 + $0x60] sm:$0xff]
  %v43 = vld [vmem:[%s1 + $0x68] sm:$0xff]
  %v44 = vld [vmem:[%s1 + $0x70] sm:$0xff]
  %v45 = vld [vmem:[%s1 + $0x78] sm:$0xff]
  %v46 = vld [vmem:[%s1 + $0x80] sm:$0xff]
  %v47 = vld [vmem:[%s1 + $0x88] sm:$0xff]
  %v48 = vld [vmem:[%s1 + $0x90] sm:$0xff]
  %v49 = vld [vmem:[%s1 + $0x98] sm:$0xff]
  %v50 = vld [vmem:[%s1 + $0xa0] sm:$0xff]
  %v51 = vld [vmem:[%s1 + $0xa8] sm:$0xff]
  %v52 = vld [vmem:[%s1 + $0xb0] sm:$0xff]
  %v53 = vld [vmem:[%s1 + $0xb8] sm:$0xff]
  %v54 = vld [vmem:[%s1 + $0xc0] sm:$0xff]
  %v55 = vld [vmem:[%s1 + $0xc8] sm:$0xff]
  %v56 = vld [vmem:[%s1 + $0xd0] sm:$0xff]
  %v57 = vld [vmem:[%s1 + $0xd8] sm:$0xff]
  %v58 = vld [vmem:[%s1 + $0xe0] sm:$0xff]
  %v59 = vld [vmem:[%s1 + $0xe8] sm:$0xff]
  %v60 = vld [vmem:[%s1 + $0xf0] sm:$0xff]
  %v61 = vld [vmem:[%s1 + $0xf8] sm:$0xff]
  %v62 = vld [vmem:[%s1 + $0x100] sm:$0xff]
  %v63 = vld [vmem:[%s1 + $0x108] sm:$0xff]
  %v64 = vld [vmem:[%s1 + $0x110] sm:$0xff]
  %v65 = vld [vmem:[%s1 + $0x118] sm:$0xff]
  %v66 = vld [vmem:[%s1 + $0x120] sm:$0xff]
  %v67 = vld [vmem:[%s1 + $0x128] sm:$0xff]
  %v68 = vld [vmem:[%s1 + $0x130] sm:$0xff]
  %v69 = vld [vmem:[%s1 + $0x138] sm:$0xff]
  %v70 = vld [vmem:[%s1 + $0x140] sm:$0xff]
  %v71 = vld [vmem:[%s1 + $0x148] sm:$0xff]
  %v72 = vld [vmem:[%s1 + $0x150] sm:$0xff]
  %v73 = vld [vmem:[%s1 + $0x158] sm:$0xff]
  %v74 = vld [vmem:[%s1 + $0x160] sm:$0xff]
  %v75 = vld [vmem:[%s1 + $0x168] sm:$0xff]
  %v76 = vld [vmem:[%s1 + $0x170] sm:$0xff]
  %v77 = vld [vmem:[%s1 + $0x178] sm:$0xff]
  %v78 = vld [vmem:[%s1 + $0x180] sm:$0xff]
  %v79 = vld [vmem:[%s1 + $0x188] sm:$0xff]
  %v80 = vld [vmem:[%s1 + $0x190] sm:$0xff]
  %v81 = vld [vmem:[%s1 + $0x198] sm:$0xff]
  %v82 = vld [vmem:[%s1 + $0x1a0] sm:$0xff]
  %v83 = vld [vmem:[%s1 + $0x1a8] sm:$0xff]
  %v84 = vld [vmem:[%s1 + $0x1b0] sm:$0xff]
  %v85 = vld [vmem:[%s1 + $0x1b8] sm:$0xff]
  %v86 = vld [vmem:[%s1 + $0x1c0] sm:$0xff]
  %v87 = vld [vmem:[%s1 + $0x1c8] sm:$0xff]
  %v88 = vld [vmem:[%s1 + $0x1d0] sm:$0xff]
  %v89 = vld [vmem:[%s1 + $0x1d8] sm:$0xff]
  %v90 = vld [vmem:[%s1 + $0x1e0] sm:$0xff]
  %v91 = vld [vmem:[%s1 + $0x1e8] sm:$0xff]
  %v92 = vld [vmem:[%s1 + $0x1f0] sm:$0xff]
  %v93 = vld [vmem:[%s1 + $0x1f8] sm:$0xff]
  %v98 = vunpack.c.l.b16 %v26
  %v99 = vunpack.c.h.b16 %v26
  %v100 = vunpack.c.l.b16 %v27
  %v101 = vunpack.c.h.b16 %v27
  %v102 = vunpack.c.l.b16 %v28
  %v103 = vunpack.c.h.b16 %v28
  %v104 = vunpack.c.l.b16 %v29
  %v105 = vunpack.c.h.b16 %v29
  %v106 = vpack.c.b16 %v102, %v98
  %v107 = vpack.c.b16 %v103, %v99
  %v108 = vpack.c.b16 %v104, %v100
  %v109 = vpack.c.b16 %v105, %v101
  %v178 = vunpack.c.l.b16 %v30
  %v179 = vunpack.c.h.b16 %v30
  %v180 = vunpack.c.l.b16 %v31
  %v181 = vunpack.c.h.b16 %v31
  %v182 = vunpack.c.l.b16 %v32
  %v183 = vunpack.c.h.b16 %v32
  %v184 = vunpack.c.l.b16 %v33
  %v185 = vunpack.c.h.b16 %v33
  %v186 = vunpack.c.l.b16 %v34
  %v187 = vunpack.c.h.b16 %v34
  %v188 = vunpack.c.l.b16 %v35
  %v189 = vunpack.c.h.b16 %v35
  %v190 = vunpack.c.l.b16 %v36
  %v191 = vunpack.c.h.b16 %v36
  %v192 = vunpack.c.l.b16 %v37
  %v193 = vunpack.c.h.b16 %v37
  %v194 = vunpack.c.l.b16 %v38
  %v195 = vunpack.c.h.b16 %v38
  %v196 = vunpack.c.l.b16 %v39
  %v197 = vunpack.c.h.b16 %v39
  %v198 = vunpack.c.l.b16 %v40
  %v199 = vunpack.c.h.b16 %v40
  %v200 = vunpack.c.l.b16 %v41
  %v201 = vunpack.c.h.b16 %v41
  %v202 = vunpack.c.l.b16 %v42
  %v203 = vunpack.c.h.b16 %v42
  %v204 = vunpack.c.l.b16 %v43
  %v205 = vunpack.c.h.b16 %v43
  %v206 = vunpack.c.l.b16 %v44
  %v207 = vunpack.c.h.b16 %v44
  %v208 = vunpack.c.l.b16 %v45
  %v209 = vunpack.c.h.b16 %v45
  %v210 = vunpack.c.l.b16 %v46
  %v211 = vunpack.c.h.b16 %v46
  %v212 = vunpack.c.l.b16 %v47
  %v213 = vunpack.c.h.b16 %v47
  %v214 = vunpack.c.l.b16 %v48
  %v215 = vunpack.c.h.b16 %v48
  %v216 = vunpack.c.l.b16 %v49
  %v217 = vunpack.c.h.b16 %v49
  %v218 = vunpack.c.l.b16 %v50
  %v219 = vunpack.c.h.b16 %v50
  %v220 = vunpack.c.l.b16 %v51
  %v221 = vunpack.c.h.b16 %v51
  %v222 = vunpack.c.l.b16 %v52
  %v223 = vunpack.c.h.b16 %v52
  %v224 = vunpack.c.l.b16 %v53
  %v225 = vunpack.c.h.b16 %v53
  %v226 = vunpack.c.l.b16 %v54
  %v227 = vunpack.c.h.b16 %v54
  %v228 = vunpack.c.l.b16 %v55
  %v229 = vunpack.c.h.b16 %v55
  %v230 = vunpack.c.l.b16 %v56
  %v231 = vunpack.c.h.b16 %v56
  %v232 = vunpack.c.l.b16 %v57
  %v233 = vunpack.c.h.b16 %v57
  %v234 = vunpack.c.l.b16 %v58
  %v235 = vunpack.c.h.b16 %v58
  %v236 = vunpack.c.l.b16 %v59
  %v237 = vunpack.c.h.b16 %v59
  %v238 = vunpack.c.l.b16 %v60
  %v239 = vunpack.c.h.b16 %v60
  %v240 = vunpack.c.l.b16 %v61
  %v241 = vunpack.c.h.b16 %v61
  %v242 = vunpack.c.l.b16 %v62
  %v243 = vunpack.c.h.b16 %v62
  %v244 = vunpack.c.l.b16 %v63
  %v245 = vunpack.c.h.b16 %v63
  %v246 = vunpack.c.l.b16 %v64
  %v247 = vunpack.c.h.b16 %v64
  %v248 = vunpack.c.l.b16 %v65
  %v249 = vunpack.c.h.b16 %v65
  %v250 = vunpack.c.l.b16 %v66
  %v251 = vunpack.c.h.b16 %v66
  %v252 = vunpack.c.l.b16 %v67
  %v253 = vunpack.c.h.b16 %v67
  %v254 = vunpack.c.l.b16 %v68
  %v255 = vunpack.c.h.b16 %v68
  %v256 = vunpack.c.l.b16 %v69
  %v257 = vunpack.c.h.b16 %v69
  %v258 = vunpack.c.l.b16 %v70
  %v259 = vunpack.c.h.b16 %v70
  %v260 = vunpack.c.l.b16 %v71
  %v261 = vunpack.c.h.b16 %v71
  %v262 = vunpack.c.l.b16 %v72
  %v263 = vunpack.c.h.b16 %v72
  %v264 = vunpack.c.l.b16 %v73
  %v265 = vunpack.c.h.b16 %v73
  %v266 = vunpack.c.l.b16 %v74
  %v267 = vunpack.c.h.b16 %v74
  %v268 = vunpack.c.l.b16 %v75
  %v269 = vunpack.c.h.b16 %v75
  %v270 = vunpack.c.l.b16 %v76
  %v271 = vunpack.c.h.b16 %v76
  %v272 = vunpack.c.l.b16 %v77
  %v273 = vunpack.c.h.b16 %v77
  %v274 = vunpack.c.l.b16 %v78
  %v275 = vunpack.c.h.b16 %v78
  %v276 = vunpack.c.l.b16 %v79
  %v277 = vunpack.c.h.b16 %v79
  %v278 = vunpack.c.l.b16 %v80
  %v279 = vunpack.c.h.b16 %v80
  %v280 = vunpack.c.l.b16 %v81
  %v281 = vunpack.c.h.b16 %v81
  %v282 = vunpack.c.l.b16 %v82
  %v283 = vunpack.c.h.b16 %v82
  %v284 = vunpack.c.l.b16 %v83
  %v285 = vunpack.c.h.b16 %v83
  %v286 = vunpack.c.l.b16 %v84
  %v287 = vunpack.c.h.b16 %v84
  %v288 = vunpack.c.l.b16 %v85
  %v289 = vunpack.c.h.b16 %v85
  %v290 = vunpack.c.l.b16 %v86
  %v291 = vunpack.c.h.b16 %v86
  %v292 = vunpack.c.l.b16 %v87
  %v293 = vunpack.c.h.b16 %v87
  %v294 = vunpack.c.l.b16 %v88
  %v295 = vunpack.c.h.b16 %v88
  %v296 = vunpack.c.l.b16 %v89
  %v297 = vunpack.c.h.b16 %v89
  %v298 = vunpack.c.l.b16 %v90
  %v299 = vunpack.c.h.b16 %v90
  %v300 = vunpack.c.l.b16 %v91
  %v301 = vunpack.c.h.b16 %v91
  %v302 = vunpack.c.l.b16 %v92
  %v303 = vunpack.c.h.b16 %v92
  %v304 = vunpack.c.l.b16 %v93
  %v305 = vunpack.c.h.b16 %v93
  %v306 = vpack.c.b16 %v180, %v178
  %v307 = vpack.c.b16 %v181, %v179
  %v308 = vpack.c.b16 %v184, %v182
  %v309 = vpack.c.b16 %v185, %v183
  %v310 = vpack.c.b16 %v188, %v186
  %v311 = vpack.c.b16 %v189, %v187
  %v312 = vpack.c.b16 %v192, %v190
  %v313 = vpack.c.b16 %v193, %v191
  %v314 = vpack.c.b16 %v196, %v194
  %v315 = vpack.c.b16 %v197, %v195
  %v316 = vpack.c.b16 %v200, %v198
  %v317 = vpack.c.b16 %v201, %v199
  %v318 = vpack.c.b16 %v204, %v202
  %v319 = vpack.c.b16 %v205, %v203
  %v320 = vpack.c.b16 %v208, %v206
  %v321 = vpack.c.b16 %v209, %v207
  %v322 = vpack.c.b16 %v212, %v210
  %v323 = vpack.c.b16 %v213, %v211
  %v324 = vpack.c.b16 %v216, %v214
  %v325 = vpack.c.b16 %v217, %v215
  %v326 = vpack.c.b16 %v220, %v218
  %v327 = vpack.c.b16 %v221, %v219
  %v328 = vpack.c.b16 %v224, %v222
  %v329 = vpack.c.b16 %v225, %v223
  %v330 = vpack.c.b16 %v228, %v226
  %v331 = vpack.c.b16 %v229, %v227
  %v332 = vpack.c.b16 %v232, %v230
  %v333 = vpack.c.b16 %v233, %v231
  %v334 = vpack.c.b16 %v236, %v234
  %v335 = vpack.c.b16 %v237, %v235
  %v336 = vpack.c.b16 %v240, %v238
  %v337 = vpack.c.b16 %v241, %v239
  %v338 = vpack.c.b16 %v244, %v242
  %v339 = vpack.c.b16 %v245, %v243
  %v340 = vpack.c.b16 %v248, %v246
  %v341 = vpack.c.b16 %v249, %v247
  %v342 = vpack.c.b16 %v252, %v250
  %v343 = vpack.c.b16 %v253, %v251
  %v344 = vpack.c.b16 %v256, %v254
  %v345 = vpack.c.b16 %v257, %v255
  %v346 = vpack.c.b16 %v260, %v258
  %v347 = vpack.c.b16 %v261, %v259
  %v348 = vpack.c.b16 %v264, %v262
  %v349 = vpack.c.b16 %v265, %v263
  %v350 = vpack.c.b16 %v268, %v266
  %v351 = vpack.c.b16 %v269, %v267
  %v352 = vpack.c.b16 %v272, %v270
  %v353 = vpack.c.b16 %v273, %v271
  %v354 = vpack.c.b16 %v276, %v274
  %v355 = vpack.c.b16 %v277, %v275
  %v356 = vpack.c.b16 %v280, %v278
  %v357 = vpack.c.b16 %v281, %v279
  %v358 = vpack.c.b16 %v284, %v282
  %v359 = vpack.c.b16 %v285, %v283
  %v360 = vpack.c.b16 %v288, %v286
  %v361 = vpack.c.b16 %v289, %v287
  %v362 = vpack.c.b16 %v292, %v290
  %v363 = vpack.c.b16 %v293, %v291
  %v364 = vpack.c.b16 %v296, %v294
  %v365 = vpack.c.b16 %v297, %v295
  %v366 = vpack.c.b16 %v300, %v298
  %v367 = vpack.c.b16 %v301, %v299
  %v368 = vpack.c.b16 %v304, %v302
  %v369 = vpack.c.b16 %v305, %v303
  %434 = vmatprep.subr.bf16.mxu0 %v307
  %435 = vmatpush1.bf16.msra.mxu0 %v306
  %436 = vmatprep.subr.bf16.mxu0 %v309
  %437 = vmatpush1.bf16.msra.mxu0 %v308
  %438 = vmatprep.subr.bf16.mxu0 %v311
  %439 = vmatpush1.bf16.msra.mxu0 %v310
  %440 = vmatprep.subr.bf16.mxu0 %v313
  %441 = vmatpush1.bf16.msra.mxu0 %v312
  %442 = vmatprep.subr.bf16.mxu0 %v315
  %443 = vmatpush1.bf16.msra.mxu0 %v314
  %444 = vmatprep.subr.bf16.mxu0 %v317
  %445 = vmatpush1.bf16.msra.mxu0 %v316
  %446 = vmatprep.subr.bf16.mxu0 %v319
  %447 = vmatpush1.bf16.msra.mxu0 %v318
  %448 = vmatprep.subr.bf16.mxu0 %v321
  %449 = vmatpush1.bf16.msra.mxu0 %v320
  %450 = vmatprep.subr.bf16.mxu0 %v323
  %451 = vmatpush1.bf16.msra.mxu0 %v322
  %452 = vmatprep.subr.bf16.mxu0 %v325
  %453 = vmatpush1.bf16.msra.mxu0 %v324
  %454 = vmatprep.subr.bf16.mxu0 %v327
  %455 = vmatpush1.bf16.msra.mxu0 %v326
  %456 = vmatprep.subr.bf16.mxu0 %v329
  %457 = vmatpush1.bf16.msra.mxu0 %v328
  %458 = vmatprep.subr.bf16.mxu0 %v331
  %459 = vmatpush1.bf16.msra.mxu0 %v330
  %460 = vmatprep.subr.bf16.mxu0 %v333
  %461 = vmatpush1.bf16.msra.mxu0 %v332
  %462 = vmatprep.subr.bf16.mxu0 %v335
  %463 = vmatpush1.bf16.msra.mxu0 %v334
  %464 = vmatprep.subr.bf16.mxu0 %v337
  %465 = vmatpush1.bf16.msra.mxu0 %v336
  %466 = vmatprep.mubr.bf16.mxu0 %v107
  %467 = vmatmul.mubr.bf16.gmra.mrb[0].mxu0 %v106
  %v468 = vpop.f32.mrb[0].mxu0
  %v469 = vadd.f32 0.0, %v468
  %v470 = vpop.f32.mrb[0].mxu0
  %v471 = vadd.f32 0.0, %v470
  %v472 = vpop.f32.mrb[0].mxu0
  %v473 = vadd.f32 0.0, %v472
  %v474 = vpop.f32.mrb[0].mxu0
  %v475 = vadd.f32 0.0, %v474
  %476 = vdwg.mxu0
  %477 = vmatprep.subr.bf16.mxu0 %v339
  %478 = vmatpush1.bf16.msra.mxu0 %v338
  %479 = vmatprep.subr.bf16.mxu0 %v341
  %480 = vmatpush1.bf16.msra.mxu0 %v340
  %481 = vmatprep.subr.bf16.mxu0 %v343
  %482 = vmatpush1.bf16.msra.mxu0 %v342
  %483 = vmatprep.subr.bf16.mxu0 %v345
  %484 = vmatpush1.bf16.msra.mxu0 %v344
  %485 = vmatprep.subr.bf16.mxu0 %v347
  %486 = vmatpush1.bf16.msra.mxu0 %v346
  %487 = vmatprep.subr.bf16.mxu0 %v349
  %488 = vmatpush1.bf16.msra.mxu0 %v348
  %489 = vmatprep.subr.bf16.mxu0 %v351
  %490 = vmatpush1.bf16.msra.mxu0 %v350
  %491 = vmatprep.subr.bf16.mxu0 %v353
  %492 = vmatpush1.bf16.msra.mxu0 %v352
  %493 = vmatprep.subr.bf16.mxu0 %v355
  %494 = vmatpush1.bf16.msra.mxu0 %v354
  %495 = vmatprep.subr.bf16.mxu0 %v357
  %496 = vmatpush1.bf16.msra.mxu0 %v356
  %497 = vmatprep.subr.bf16.mxu0 %v359
  %498 = vmatpush1.bf16.msra.mxu0 %v358
  %499 = vmatprep.subr.bf16.mxu0 %v361
  %500 = vmatpush1.bf16.msra.mxu0 %v360
  %501 = vmatprep.subr.bf16.mxu0 %v363
  %502 = vmatpush1.bf16.msra.mxu0 %v362
  %503 = vmatprep.subr.bf16.mxu0 %v365
  %504 = vmatpush1.bf16.msra.mxu0 %v364
  %505 = vmatprep.subr.bf16.mxu0 %v367
  %506 = vmatpush1.bf16.msra.mxu0 %v366
  %507 = vmatprep.subr.bf16.mxu0 %v369
  %508 = vmatpush1.bf16.msra.mxu0 %v368
  %509 = vmatprep.mubr.bf16.mxu0 %v109
  %510 = vmatmul.mubr.bf16.gmra.mrb[0].mxu0 %v108
  %v511 = vpop.f32.mrb[0].mxu0
  %v512 = vadd.f32 %v469, %v511
  %v513 = vpop.f32.mrb[0].mxu0
  %v514 = vadd.f32 %v471, %v513
  %v515 = vpop.f32.mrb[0].mxu0
  %v516 = vadd.f32 %v473, %v515
  %v517 = vpop.f32.mrb[0].mxu0
  %v518 = vadd.f32 %v475, %v517
  %519 = vdwg.mxu0
  %v520 = vadd.f32 %v22, %v512
  %v521 = vadd.f32 %v23, %v514
  %v522 = vadd.f32 %v24, %v516
  %v523 = vadd.f32 %v25, %v518
  %524 = vst [vmem:[#allocation2] sm:$0xff] %v520
  %525 = vst [vmem:[#allocation2 + $0x8] sm:$0xff] %v521
  %526 = vst [vmem:[#allocation2 + $0x10] sm:$0xff] %v522
  %527 = vst [vmem:[#allocation2 + $0x18] sm:$0xff] %v523
  // Predicated region
  $region18: #{yolo_pafpn_forward.83} parent=0 // pred_check
    %p528 = pneg %p14
  $region19: #{yolo_pafpn_forward.83} parent=0 // pred_check_branch
    %530 = sbr.rel (%p528) target = $region21
  $region20: #{yolo_pafpn_forward.83} parent=0 // pred_region
    %v531 = vld [vmem:[#allocation2] sm:$0xff]
    %v532 = vld [vmem:[#allocation2 + $0x8] sm:$0xff]
    %v533 = vld [vmem:[#allocation2 + $0x10] sm:$0xff]
    %v534 = vld [vmem:[#allocation2 + $0x18] sm:$0xff]
    %v535 = vld [vmem:[%s2] sm:$0x3]
    %v537 = vlaneseq
    %v538 = vshrl.u32 %v537, 7
    %v539 = vsub.s32 0, %v538
    %v540 = vrot.slane %v535, %v539
    %v541 = vlaneseq
    %v542 = vshrl.u32 %v541, 7
    %v543 = vsub.s32 1, %v542
    %v544 = vrot.slane %v535, %v543
    %v547 = vadd.f32 %v531, %v540
    %v548 = vadd.f32 %v532, %v544
    %v549 = vadd.f32 %v533, %v540
    %v550 = vadd.f32 %v534, %v544
    %v551 = vand.u32 2147483647, %v547
    %v552 = vand.u32 2147483647, %v548
    %v553 = vand.u32 2147483647, %v549
    %v554 = vand.u32 2147483647, %v550
    %v555 = vsub.f32 0.0, %v551
    %v556 = vsub.f32 0.0, %v552
    %v557 = vsub.f32 0.0, %v553
    %v558 = vsub.f32 0.0, %v554
    %v559 = vmul.f32 %v555, 1.442695
    %v560 = vpow.pop %v559
    %v561 = vmul.f32 %v556, 1.442695
    %v562 = vpow.pop %v561
    %v563 = vmul.f32 %v557, 1.442695
    %v564 = vpow.pop %v563
    %v565 = vmul.f32 %v558, 1.442695
    %v566 = vpow.pop %v565
    %v567 = vadd.f32 %v560, 1.0
    %v568 = vadd.f32 %v562, 1.0
    %v569 = vadd.f32 %v564, 1.0
    %v570 = vadd.f32 %v566, 1.0
    %v571 = vrcp.pop %v567
    %v572 = vrcp.pop %v568
    %v573 = vrcp.pop %v569
    %v574 = vrcp.pop %v570
    %vm575 = vcmp.ge.f32.partialorder %v547, 0.0
    %vm576 = vcmp.ge.f32.partialorder %v548, 0.0
    %vm577 = vcmp.ge.f32.partialorder %v549, 0.0
    %vm578 = vcmp.ge.f32.partialorder %v550, 0.0
    %v579 = vsub.f32 1.0, %v571
    %v580 = vsub.f32 1.0, %v572
    %v581 = vsub.f32 1.0, %v573
    %v582 = vsub.f32 1.0, %v574
    %v583 = vsel %vm575, %v571, %v579
    %v584 = vsel %vm576, %v572, %v580
    %v585 = vsel %vm577, %v573, %v581
    %v586 = vsel %vm578, %v574, %v582
    %v587 = vmul.f32 %v547, %v583
    %v588 = vmul.f32 %v548, %v584
    %v589 = vmul.f32 %v549, %v585
    %v590 = vmul.f32 %v550, %v586
    %v591 = vpack.c.bf16 %v589, %v587
    %v592 = vpack.c.bf16 %v590, %v588
    %v595 = vunpack.c.l.b16 %v591
    %v596 = vunpack.c.l.b16 %v592
    %v597 = vunpack.c.h.b16 %v591
    %v598 = vunpack.c.h.b16 %v592
    %v599 = vpack.c.b16 %v596, %v595
    %v600 = vpack.c.b16 %v598, %v597
    %603 = vst [vmem:[%s3] sm:$0xff] %v599
    %604 = vst [vmem:[%s3 + $0x8] sm:$0xff] %v600
  $region21: #{yolo_pafpn_forward.83} parent=0 // pred_fallthru
    _
  // Predicated region
  $region22: #{yolo_pafpn_forward.83} parent=0 // pred_check
    _
  $region23: #{yolo_pafpn_forward.83} parent=0 // pred_check_branch
    %606 = sbr.rel (0) target = $region25
  $region24: #{yolo_pafpn_forward.83} parent=0 // pred_region
    _
  $region25: #{yolo_pafpn_forward.83} parent=0 // pred_fallthru
    _
  // Predicated region
  $region26: #{yolo_pafpn_forward.83} parent=0 // pred_check
    _
  $region27: #{yolo_pafpn_forward.83} parent=0 // pred_check_branch
    %608 = sbr.rel (0) target = $region29
  $region28: #{yolo_pafpn_forward.83} parent=0 // pred_region
    _
  $region29: #{yolo_pafpn_forward.83} parent=0 // pred_fallthru
    _

// kernel: yolo_pafpn_forward.86
$region0: #{yolo_pafpn_forward.86}
  #allocation0 [shape = 'u32[]', space=smem, size = 0x4, offset = 0x4, fixed_abs, tag = 'smem constant byte address 0x4 - core index']
  #allocation1 [shape = 'u32[144,128]{1,0:T(1,128)}', space=vmem, size = 0x12000, scoped, tag = 'internal scratch']
  #allocation2 [shape = 'f32[16,128]{1,0:T(8,128)}', space=vmem, size = 0x2000, scoped, tag = 'scratch operand']
  %s0 = inlined_call_operand.vmem [shape: bf16[16,1152], index: 0, kind: input, shape index: {}]
  %s1 = inlined_call_operand.vmem [shape: bf16[1152,128], index: 1, kind: input, shape index: {}]
  %s2 = inlined_call_operand.vmem [shape: f32[1,128], index: 2, kind: input, shape index: {}]
  %s3 = inlined_call_operand.vmem [shape: bf16[16,128], index: 3, kind: output, shape index: {}]
  %s4 = sld [smem:[#allocation0]]
  $region94: #{yolo_pafpn_forward.86} parent=0
    _
  %s6 = ssub.s32 1, %s4
  %s7 = scalar_select 0, %s6, %s4
  $region1: #{yolo_pafpn_forward.86} parent=0
    #allocation3 [shape = 'u8[8192]{0}', space=vmem, size = 0x2000, scoped, tag = 'input window, operand 0']
    loop: start=0, step=1, limit=11
    $region2: #{yolo_pafpn_forward.86} parent=1 // loop_pre_header
      _
    $region3: #{yolo_pafpn_forward.86} parent=1 // loop_header
      %s9 = sphi 0, %s13
      %p10 = scmp.ge.s32.totalorder %s9, 11
      %s16 = sphi 0, %s35
      %s17 = sphi 0, %s31
      %s18 = sphi 0, %s27
      %s19 = sphi 0, %s16
      %s20 = sphi 0, %s17
      %s21 = sphi 0, %s18
      %s22 = sphi 0, %s19
      %s23 = sphi 0, %s20
      %s24 = sphi 0, %s21
      %s40 = sphi 0, %s42
      %s43 = sphi 0, %s40
      %s44 = sphi 0, %s43
      %s60 = sphi 0, %s44
      %s68 = sphi 0, %s70
      %s71 = sphi 0, %s68
      %s72 = sphi 0, %s71
      %s88 = sphi 0, %s72
      %s94 = sphi 0, %s96
      %s97 = sphi 0, %s94
      %s98 = sphi 0, %s97
      %s114 = sphi 0, %s98
      %s122 = sphi 0, %s124
      %s125 = sphi 0, %s122
      %s126 = sphi 0, %s125
      %s142 = sphi 0, %s126
    $region4: #{yolo_pafpn_forward.86} parent=1 // loop_header_branch
      %12 = sbr.rel (%p10) target = $region8
    $region5: #{yolo_pafpn_forward.86} parent=1 // loop_body
      %s14 = ssub.s32 %s9, 1
      %s15 = ssub.s32 %s9, 2
      %s25 = sadd.s32 1, %s18
      %p26 = scmp.ge.s32.totalorder %s25, 9
      %s27 = scalar_select %p26, 0, %s25
      %s28 = sadd.s32 1, %s17
      %s29 = scalar_select %p26, %s28, %s17
      %p30 = scmp.ge.s32.totalorder %s29, 1
      %s31 = scalar_select %p30, 0, %s29
      %s32 = sadd.s32 1, %s16
      %s33 = scalar_select %p30, %s32, %s16
      %p34 = scmp.ge.s32.totalorder %s33, 1
      %s35 = scalar_select %p34, 0, %s33
      %s36 = ssub.s32 %s16, %s35
      %s37 = ssub.s32 %s18, %s27
      %s38 = sor.u32 %s36, %s37
      %p39 = scmp.eq.s32.totalorder %s38, 0
      %s41 = sadd.s32 %s40, 1
      %s42 = scalar_select %p39, %s40, %s41
      %p45 = pneg %p39
      %p46 = scmp.eq.s32.totalorder %s9, 8
      %p47 = por %p45, %p46
      %p48 = scmp.ne.s32.totalorder %s40, %s43
      %p49 = scmp.eq.s32.totalorder %s9, 0
      %p50 = por %p48, %p49
      %p51 = scmp.ne.s32.totalorder %s40, %s43
      %p52 = scmp.eq.s32.totalorder %s14, 8
      %p53 = por %p51, %p52
      %p54 = scmp.ne.s32.totalorder %s43, %s44
      %p55 = scmp.eq.s32.totalorder %s14, 0
      %p56 = por %p54, %p55
      %p57 = scmp.ne.s32.totalorder %s43, %s44
      %p58 = scmp.eq.s32.totalorder %s15, 8
      %p59 = por %p57, %p58
      %p61 = scmp.ne.s32.totalorder %s44, %s60
      %p62 = scmp.eq.s32.totalorder %s15, 0
      %p63 = por %p61, %p62
      %s64 = ssub.s32 %s18, %s27
      %s65 = ssub.s32 %s17, %s31
      %s66 = sor.u32 %s64, %s65
      %p67 = scmp.eq.s32.totalorder %s66, 0
      %s69 = sadd.s32 %s68, 1
      %s70 = scalar_select %p67, %s68, %s69
      %p73 = pneg %p67
      %p74 = scmp.eq.s32.totalorder %s9, 8
      %p75 = por %p73, %p74
      %p76 = scmp.ne.s32.totalorder %s68, %s71
      %p77 = scmp.eq.s32.totalorder %s9, 0
      %p78 = por %p76, %p77
      %p79 = scmp.ne.s32.totalorder %s68, %s71
      %p80 = scmp.eq.s32.totalorder %s14, 8
      %p81 = por %p79, %p80
      %p82 = scmp.ne.s32.totalorder %s71, %s72
      %p83 = scmp.eq.s32.totalorder %s14, 0
      %p84 = por %p82, %p83
      %p85 = scmp.ne.s32.totalorder %s71, %s72
      %p86 = scmp.eq.s32.totalorder %s15, 8
      %p87 = por %p85, %p86
      %p89 = scmp.ne.s32.totalorder %s72, %s88
      %p90 = scmp.eq.s32.totalorder %s15, 0
      %p91 = por %p89, %p90
      %s92 = ssub.s32 %s17, %s31
      %p93 = scmp.eq.s32.totalorder %s92, 0
      %s95 = sadd.s32 %s94, 1
      %s96 = scalar_select %p93, %s94, %s95
      %p99 = pneg %p93
      %p100 = scmp.eq.s32.totalorder %s9, 8
      %p101 = por %p99, %p100
      %p102 = scmp.ne.s32.totalorder %s94, %s97
      %p103 = scmp.eq.s32.totalorder %s9, 0
      %p104 = por %p102, %p103
      %p105 = scmp.ne.s32.totalorder %s94, %s97
      %p106 = scmp.eq.s32.totalorder %s14, 8
      %p107 = por %p105, %p106
      %p108 = scmp.ne.s32.totalorder %s97, %s98
      %p109 = scmp.eq.s32.totalorder %s14, 0
      %p110 = por %p108, %p109
      %p111 = scmp.ne.s32.totalorder %s97, %s98
      %p112 = scmp.eq.s32.totalorder %s15, 8
      %p113 = por %p111, %p112
      %p115 = scmp.ne.s32.totalorder %s98, %s114
      %p116 = scmp.eq.s32.totalorder %s15, 0
      %p117 = por %p115, %p116
      %s118 = ssub.s32 %s16, %s35
      %s119 = ssub.s32 %s17, %s31
      %s120 = sor.u32 %s118, %s119
      %p121 = scmp.eq.s32.totalorder %s120, 0
      %s123 = sadd.s32 %s122, 1
      %s124 = scalar_select %p121, %s122, %s123
      %p127 = pneg %p121
      %p128 = scmp.eq.s32.totalorder %s9, 8
      %p129 = por %p127, %p128
      %p130 = scmp.ne.s32.totalorder %s122, %s125
      %p131 = scmp.eq.s32.totalorder %s9, 0
      %p132 = por %p130, %p131
      %p133 = scmp.ne.s32.totalorder %s122, %s125
      %p134 = scmp.eq.s32.totalorder %s14, 8
      %p135 = por %p133, %p134
      %p136 = scmp.ne.s32.totalorder %s125, %s126
      %p137 = scmp.eq.s32.totalorder %s14, 0
      %p138 = por %p136, %p137
      %p139 = scmp.ne.s32.totalorder %s125, %s126
      %p140 = scmp.eq.s32.totalorder %s15, 8
      %p141 = por %p139, %p140
      %p143 = scmp.ne.s32.totalorder %s126, %s142
      %p144 = scmp.eq.s32.totalorder %s15, 0
      %p145 = por %p143, %p144
      %p146 = scmp.le.s32.totalorder 1, %s9
      %p147 = scmp.lt.s32.totalorder %s9, 10
      %p148 = pnand %p146, %p147
      %p149 = pneg %p148
      // Predicated region
      $region9: #{yolo_pafpn_forward.86} parent=5 // pred_check
        _
      $region10: #{yolo_pafpn_forward.86} parent=5 // pred_check_branch
        %151 = sbr.rel (%p148) target = $region12
      $region11: #{yolo_pafpn_forward.86} parent=5 // pred_region
        %s152 = ssub.s32 %s9, 1
        // Predicated region
        $region13: #{yolo_pafpn_forward.86} parent=11 // pred_check
          %p153 = pneg %p110
        $region14: #{yolo_pafpn_forward.86} parent=11 // pred_check_branch
          %155 = sbr.rel (%p153) target = $region16
        $region15: #{yolo_pafpn_forward.86} parent=11 // pred_region
          %p156 = scmp.lt.s32.totalorder %s20, 0
          %s157 = scalar_select %p156, %s20, 0
          %s158 = scalar_lea.vmem %s2, %s157
        $region16: #{yolo_pafpn_forward.86} parent=11 // pred_fallthru
          _
      $region12: #{yolo_pafpn_forward.86} parent=5 // pred_fallthru
        _
      %p159 = scmp.lt.s32.totalorder %s9, 9
      // Predicated region
      $region17: #{yolo_pafpn_forward.86} parent=5 // pred_check
        %p160 = pneg %p159
      $region18: #{yolo_pafpn_forward.86} parent=5 // pred_check_branch
        %162 = sbr.rel (%p160) target = $region20
      $region19: #{yolo_pafpn_forward.86} parent=5 // pred_region
        // Predicated region
        $region21: #{yolo_pafpn_forward.86} parent=19 // pred_check
          %p163 = pneg %p50
        $region22: #{yolo_pafpn_forward.86} parent=19 // pred_check_branch
          %165 = sbr.rel (%p163) target = $region24
        $region23: #{yolo_pafpn_forward.86} parent=19 // pred_region
          %s166 = sand.u32 %s40, 1
          %s167 = sand.u32 %s40, 1
          %s168 = smul.addr %s167, 8
          %s169 = scalar_lea.vmem [#allocation3], %s168
          %s170 = smul.u32 2, %s16
          %s171 = smul.addr %s170, 9
          %s172 = sadd.s32 %s18, %s171
          %s173 = smul.addr %s172, 4
          %s174 = scalar_lea.vmem %s0, %s173
          // Predicated region
          $region25: #{yolo_pafpn_forward.86} parent=23 // pred_check
            _
          $region26: #{yolo_pafpn_forward.86} parent=23 // pred_check_branch
            %176 = sbr.rel (0) target = $region28
          $region27: #{yolo_pafpn_forward.86} parent=23 // pred_region
            // Predicated region
            $region29: #{yolo_pafpn_forward.86} parent=27 // pred_check
              _
            $region30: #{yolo_pafpn_forward.86} parent=27 // pred_check_branch
              %178 = sbr.rel target = $region32
            $region31: #{yolo_pafpn_forward.86} parent=27 // pred_region
              // Predicated region
              $region44: #{yolo_pafpn_forward.86} parent=31 // pred_check
                _
              $region45: #{yolo_pafpn_forward.86} parent=31 // pred_check_branch
                %195 = sbr.rel (0) target = $region47
              $region46: #{yolo_pafpn_forward.86} parent=31 // pred_region
                loop: start=0, step=1, limit=1
                $region48: #{yolo_pafpn_forward.86} parent=46 // loop_pre_header
                  _
                $region49: #{yolo_pafpn_forward.86} parent=46 // loop_header
                  %s197 = sphi 0, %s201
                  %p198 = scmp.ge.s32.totalorder %s197, 1
                  %s202 = sphi %s174, %s174
                  %s203 = sphi %s169, %s169
                $region50: #{yolo_pafpn_forward.86} parent=46 // loop_header_branch
                  %200 = sbr.rel (%p198) target = $region54
                $region51: #{yolo_pafpn_forward.86} parent=46 // loop_body
                  _
                $region52: #{yolo_pafpn_forward.86} parent=46 // loop_footer
                  %s201 = sadd.s32 1, %s197
                $region53: #{yolo_pafpn_forward.86} parent=46 // loop_footer_branch
                  %196 = sbr.rel target = $region49
                $region54: #{yolo_pafpn_forward.86} parent=46 // loop_exit
                  _
                loop: start=0, step=1, limit=1
                $region55: #{yolo_pafpn_forward.86} parent=46 // loop_pre_header
                  _
                $region56: #{yolo_pafpn_forward.86} parent=46 // loop_header
                  %s206 = sphi 0, %s210
                  %p207 = scmp.ge.s32.totalorder %s206, 1
                  %s211 = sphi %s174, %s174
                  %s212 = sphi %s169, %s169
                $region57: #{yolo_pafpn_forward.86} parent=46 // loop_header_branch
                  %209 = sbr.rel (%p207) target = $region61
                $region58: #{yolo_pafpn_forward.86} parent=46 // loop_body
                  %v213 = vld [vmem:[%s211] sm:$0xf]
                  %214 = vst [vmem:[%s212] sm:$0xf] %v213
                  %v215 = vld [vmem:[%s211 + $0x24] sm:$0xf]
                  %216 = vst [vmem:[%s212 + $0x4] sm:$0xf] %v215
                $region59: #{yolo_pafpn_forward.86} parent=46 // loop_footer
                  %s210 = sadd.s32 1, %s206
                $region60: #{yolo_pafpn_forward.86} parent=46 // loop_footer_branch
                  %205 = sbr.rel target = $region56
                $region61: #{yolo_pafpn_forward.86} parent=46 // loop_exit
                  _
              $region47: #{yolo_pafpn_forward.86} parent=31 // pred_fallthru
                _
            $region32: #{yolo_pafpn_forward.86} parent=27 // pred_fallthru
              _
            // Predicated region
            $region33: #{yolo_pafpn_forward.86} parent=27 // pred_check
              _
            $region34: #{yolo_pafpn_forward.86} parent=27 // pred_check_branch
              %180 = sbr.rel (0) target = $region36
            $region35: #{yolo_pafpn_forward.86} parent=27 // pred_region
              loop: start=0, step=1, limit=1
              $region37: #{yolo_pafpn_forward.86} parent=35 // loop_pre_header
                _
              $region38: #{yolo_pafpn_forward.86} parent=35 // loop_header
                %s183 = sphi 0, %s187
                %p184 = scmp.ge.s32.totalorder %s183, 1
                %s188 = sphi %s174, %s174
                %s189 = sphi %s169, %s169
              $region39: #{yolo_pafpn_forward.86} parent=35 // loop_header_branch
                %186 = sbr.rel (%p184) target = $region43
              $region40: #{yolo_pafpn_forward.86} parent=35 // loop_body
                %v190 = vld [vmem:[%s188] sm:$0xf]
                %191 = vst [vmem:[%s189] sm:$0xf] %v190
                %v192 = vld [vmem:[%s188 + $0x24] sm:$0xf]
                %193 = vst [vmem:[%s189 + $0x4] sm:$0xf] %v192
              $region41: #{yolo_pafpn_forward.86} parent=35 // loop_footer
                %s187 = sadd.s32 1, %s183
              $region42: #{yolo_pafpn_forward.86} parent=35 // loop_footer_branch
                %182 = sbr.rel target = $region38
              $region43: #{yolo_pafpn_forward.86} parent=35 // loop_exit
                _
            $region36: #{yolo_pafpn_forward.86} parent=27 // pred_fallthru
              _
          $region28: #{yolo_pafpn_forward.86} parent=23 // pred_fallthru
            _
          %217 = vnop
        $region24: #{yolo_pafpn_forward.86} parent=19 // pred_fallthru
          _
        // Predicated region
        $region62: #{yolo_pafpn_forward.86} parent=19 // pred_check
          %p218 = pneg %p78
        $region63: #{yolo_pafpn_forward.86} parent=19 // pred_check_branch
          %220 = sbr.rel (%p218) target = $region65
        $region64: #{yolo_pafpn_forward.86} parent=19 // pred_region
          %s221 = smul.u32 16, %s18
          %p222 = scmp.lt.s32.totalorder %s221, 143
          %s223 = scalar_select %p222, %s221, 143
          %p224 = scmp.lt.s32.totalorder %s17, 0
          %s225 = scalar_select %p224, %s17, 0
          %s226 = sadd.s32 %s225, %s223
          %s227 = smul.addr %s226, 4
          %s228 = scalar_lea.vmem %s1, %s227
          %s229 = smul.u32 16, %s18
        $region65: #{yolo_pafpn_forward.86} parent=19 // pred_fallthru
          _
      $region20: #{yolo_pafpn_forward.86} parent=5 // pred_fallthru
        _
      %p230 = scmp.le.s32.totalorder 1, %s9
      %p231 = scmp.lt.s32.totalorder %s9, 10
      %p232 = pnand %p230, %p231
      %p233 = pneg %p232
      // Predicated region
      $region66: #{yolo_pafpn_forward.86} parent=5 // pred_check
        _
      $region67: #{yolo_pafpn_forward.86} parent=5 // pred_check_branch
        %235 = sbr.rel (%p232) target = $region69
      $region68: #{yolo_pafpn_forward.86} parent=5 // pred_region
        %s236 = ssub.s32 %s9, 1
        %s237 = sand.u32 %s43, 1
        %s238 = sand.u32 %s43, 1
        %s239 = smul.addr %s238, 8
        %s240 = scalar_lea.vmem [#allocation3], %s239
        // Predicated region
        $region70: #{yolo_pafpn_forward.86} parent=68 // pred_check
          %p241 = pneg %p56
        $region71: #{yolo_pafpn_forward.86} parent=68 // pred_check_branch
          %243 = sbr.rel (%p241) target = $region73
        $region72: #{yolo_pafpn_forward.86} parent=68 // pred_region
          _
        $region73: #{yolo_pafpn_forward.86} parent=68 // pred_fallthru
          _
        %s244 = sand.u32 %s43, 1
        %s245 = sand.u32 %s43, 1
        %s246 = smul.addr %s245, 8
        %s247 = scalar_lea.vmem [#allocation3], %s246
        %p248 = pneg %p56
        %p249 = pneg %p53
        %s250 = smul.u32 16, %s21
        %p251 = scmp.lt.s32.totalorder %s250, 143
        %s252 = scalar_select %p251, %s250, 143
        %p253 = scmp.lt.s32.totalorder %s20, 0
        %s254 = scalar_select %p253, %s20, 0
        %s255 = sadd.s32 %s254, %s252
        %s256 = smul.addr %s255, 4
        %s257 = scalar_lea.vmem %s1, %s256
        %p258 = pneg %p84
        %p259 = pneg %p81
        %p260 = scmp.lt.s32.totalorder %s20, 0
        %s261 = scalar_select %p260, %s20, 0
        %s262 = scalar_lea.vmem %s2, %s261
        %p263 = pneg %p110
        %p264 = pneg %p107
        %p265 = pneg %p138
        %p266 = pneg %p135
        %s267 = smul.u32 2, %s19
        %p268 = scmp.lt.s32.totalorder %s267, 1
        %s269 = scalar_select %p268, %s267, 1
        %p270 = scmp.lt.s32.totalorder %s20, 0
        %s271 = scalar_select %p270, %s20, 0
        %s272 = sadd.s32 %s271, %s269
        %s273 = smul.addr %s272, 4
        %s274 = scalar_lea.vmem %s3, %s273
        %s275 = smul.u32 2, %s19
        %s276 = smul.u32 16, %s21
        %p277 = scmp.lt.s32.totalorder %s276, 143
        %s278 = scalar_select %p277, %s276, 143
        %p279 = scmp.lt.s32.totalorder %s20, 0
        %s280 = scalar_select %p279, %s20, 0
        %s281 = sadd.s32 %s280, %s278
        %s282 = smul.addr %s281, 4
        %s283 = scalar_lea.vmem %s1, %s282
        %s284 = smul.u32 16, %s21
        %p285 = scmp.lt.s32.totalorder %s20, 0
        %s286 = scalar_select %p285, %s20, 0
        %s287 = scalar_lea.vmem %s2, %s286
        %s288 = smul.u32 2, %s19
        %p289 = scmp.lt.s32.totalorder %s288, 1
        %s290 = scalar_select %p289, %s288, 1
        %p291 = scmp.lt.s32.totalorder %s20, 0
        %s292 = scalar_select %p291, %s20, 0
        %s293 = sadd.s32 %s292, %s290
        %s294 = smul.addr %s293, 4
        %s295 = scalar_lea.vmem %s3, %s294
        %s296 = smul.u32 2, %s19
        %p298 = scmp.eq.s32.totalorder %s21, 0
        // Predicated region
        $region74: #{yolo_pafpn_forward.86} parent=68 // pred_check
          %p299 = pneg %p298
        $region75: #{yolo_pafpn_forward.86} parent=68 // pred_check_branch
          %301 = sbr.rel (%p299) target = $region77
        $region76: #{yolo_pafpn_forward.86} parent=68 // pred_region
          %302 = vst [vmem:[#allocation2] sm:$0xff] 0.0
          %303 = vst [vmem:[#allocation2 + $0x8] sm:$0xff] 0.0
        $region77: #{yolo_pafpn_forward.86} parent=68 // pred_fallthru
          _
        %v304 = vld [vmem:[#allocation2] sm:$0xff]
        %v305 = vld [vmem:[#allocation2 + $0x8] sm:$0xff]
        %v306 = vld [vmem:[%s240] sm:$0xf]
        %v307 = vld [vmem:[%s240 + $0x4] sm:$0xf]
        %v308 = vld [vmem:[%s283] sm:$0xf]
        %v309 = vld [vmem:[%s283 + $0x4] sm:$0xf]
        %v310 = vld [vmem:[%s283 + $0x8] sm:$0xf]
        %v311 = vld [vmem:[%s283 + $0xc] sm:$0xf]
        %v312 = vld [vmem:[%s283 + $0x10] sm:$0xf]
        %v313 = vld [vmem:[%s283 + $0x14] sm:$0xf]
        %v314 = vld [vmem:[%s283 + $0x18] sm:$0xf]
        %v315 = vld [vmem:[%s283 + $0x1c] sm:$0xf]
        %v316 = vld [vmem:[%s283 + $0x20] sm:$0xf]
        %v317 = vld [vmem:[%s283 + $0x24] sm:$0xf]
        %v318 = vld [vmem:[%s283 + $0x28] sm:$0xf]
        %v319 = vld [vmem:[%s283 + $0x2c] sm:$0xf]
        %v320 = vld [vmem:[%s283 + $0x30] sm:$0xf]
        %v321 = vld [vmem:[%s283 + $0x34] sm:$0xf]
        %v322 = vld [vmem:[%s283 + $0x38] sm:$0xf]
        %v323 = vld [vmem:[%s283 + $0x3c] sm:$0xf]
        %v326 = vunpack.c.l.b16 %v306
        %v327 = vunpack.c.l.b16 %v307
        %v328 = vpack.c.b16 %v327, %v326
        %v346 = vunpack.c.l.b16 %v308
        %v347 = vunpack.c.l.b16 %v309
        %v348 = vunpack.c.l.b16 %v310
        %v349 = vunpack.c.l.b16 %v311
        %v350 = vunpack.c.l.b16 %v312
        %v351 = vunpack.c.l.b16 %v313
        %v352 = vunpack.c.l.b16 %v314
        %v353 = vunpack.c.l.b16 %v315
        %v354 = vunpack.c.l.b16 %v316
        %v355 = vunpack.c.l.b16 %v317
        %v356 = vunpack.c.l.b16 %v318
        %v357 = vunpack.c.l.b16 %v319
        %v358 = vunpack.c.l.b16 %v320
        %v359 = vunpack.c.l.b16 %v321
        %v360 = vunpack.c.l.b16 %v322
        %v361 = vunpack.c.l.b16 %v323
        %v362 = vpack.c.b16 %v347, %v346
        %v363 = vpack.c.b16 %v349, %v348
        %v364 = vpack.c.b16 %v351, %v350
        %v365 = vpack.c.b16 %v353, %v352
        %v366 = vpack.c.b16 %v355, %v354
        %v367 = vpack.c.b16 %v357, %v356
        %v368 = vpack.c.b16 %v359, %v358
        %v369 = vpack.c.b16 %v361, %v360
        %378 = vmatprep.subr.bf16.mxu0 0
        %379 = vmatpush1.bf16.msra.mxu0 %v362
        %380 = vmatprep.subr.bf16.mxu0 0
        %381 = vmatpush1.bf16.msra.mxu0 %v363
        %382 = vmatprep.subr.bf16.mxu0 0
        %383 = vmatpush1.bf16.msra.mxu0 %v364
        %384 = vmatprep.subr.bf16.mxu0 0
        %385 = vmatpush1.bf16.msra.mxu0 %v365
        %386 = vmatprep.subr.bf16.mxu0 0
        %387 = vmatpush1.bf16.msra.mxu0 %v366
        %388 = vmatprep.subr.bf16.mxu0 0
        %389 = vmatpush1.bf16.msra.mxu0 %v367
        %390 = vmatprep.subr.bf16.mxu0 0
        %391 = vmatpush1.bf16.msra.mxu0 %v368
        %392 = vmatprep.subr.bf16.mxu0 0
        %393 = vmatpush1.bf16.msra.mxu0 %v369
        %394 = vmatprep.subr.bf16.mxu0 0
        %395 = vmatpush1.bf16.msra.mxu0 0
        %396 = vmatprep.subr.bf16.mxu0 0
        %397 = vmatpush1.bf16.msra.mxu0 0
        %398 = vmatprep.subr.bf16.mxu0 0
        %399 = vmatpush1.bf16.msra.mxu0 0
        %400 = vmatprep.subr.bf16.mxu0 0
        %401 = vmatpush1.bf16.msra.mxu0 0
        %402 = vmatprep.subr.bf16.mxu0 0
        %403 = vmatpush1.bf16.msra.mxu0 0
        %404 = vmatprep.subr.bf16.mxu0 0
        %405 = vmatpush1.bf16.msra.mxu0 0
        %406 = vmatprep.subr.bf16.mxu0 0
        %407 = vmatpush1.bf16.msra.mxu0 0
        %408 = vmatprep.subr.bf16.mxu0 0
        %409 = vmatpush1.bf16.msra.mxu0 0
        %410 = vmatprep.mubr.bf16.mxu0 0
        %411 = vmatmul.mubr.bf16.gmra.mrb[0].mxu0 %v328
        %v412 = vpop.f32.mrb[0].mxu0
        %v413 = vadd.f32 0.0, %v412
        %v414 = vpop.f32.mrb[0].mxu0
        %v415 = vpop.f32.mrb[0].mxu0
        %v416 = vadd.f32 0.0, %v415
        %v417 = vpop.f32.mrb[0].mxu0
        %418 = vdwg.mxu0
        %v419 = vadd.f32 %v304, %v413
        %v420 = vadd.f32 %v305, %v416
        %421 = vst [vmem:[#allocation2] sm:$0xff] %v419
        %422 = vst [vmem:[#allocation2 + $0x8] sm:$0xff] %v420
        %p423 = scmp.eq.s32.totalorder %s21, 8
        // Predicated region
        $region78: #{yolo_pafpn_forward.86} parent=68 // pred_check
          %p424 = pneg %p423
        $region79: #{yolo_pafpn_forward.86} parent=68 // pred_check_branch
          %426 = sbr.rel (%p424) target = $region81
        $region80: #{yolo_pafpn_forward.86} parent=68 // pred_region
          %v427 = vld [vmem:[#allocation2] sm:$0xff]
          %v428 = vld [vmem:[#allocation2 + $0x8] sm:$0xff]
          %v429 = vld [vmem:[%s287] sm:$0x1]
          %v431 = vlaneseq
          %v432 = vshrl.u32 %v431, 7
          %v433 = vsub.s32 0, %v432
          %v434 = vrot.slane %v429, %v433
          %v436 = vadd.f32 %v427, %v434
          %v437 = vadd.f32 %v428, %v434
          %v438 = vand.u32 2147483647, %v436
          %v439 = vand.u32 2147483647, %v437
          %v440 = vsub.f32 0.0, %v438
          %v441 = vsub.f32 0.0, %v439
          %v442 = vmul.f32 %v440, 1.442695
          %v443 = vpow.pop %v442
          %v444 = vmul.f32 %v441, 1.442695
          %v445 = vpow.pop %v444
          %v446 = vadd.f32 %v443, 1.0
          %v447 = vadd.f32 %v445, 1.0
          %v448 = vrcp.pop %v446
          %v449 = vrcp.pop %v447
          %vm450 = vcmp.ge.f32.partialorder %v436, 0.0
          %vm451 = vcmp.ge.f32.partialorder %v437, 0.0
          %v452 = vsub.f32 1.0, %v448
          %v453 = vsub.f32 1.0, %v449
          %v454 = vsel %vm450, %v448, %v452
          %v455 = vsel %vm451, %v449, %v453
          %v456 = vmul.f32 %v436, %v454
          %v457 = vmul.f32 %v437, %v455
          %v458 = vpack.c.bf16 %v457, %v456
          %v460 = vunpack.c.l.b16 %v458
          %v461 = vunpack.c.h.b16 %v458
          %v462 = vpack.c.b16 %v460, %v460
          %v463 = vpack.c.b16 %v461, %v461
          %466 = vst [vmem:[%s295] sm:$0xf] %v462
          %467 = vst [vmem:[%s295 + $0x4] sm:$0xf] %v463
        $region81: #{yolo_pafpn_forward.86} parent=68 // pred_fallthru
          _
        %s468 = smul.u32 2, %s19
        %p469 = scmp.lt.s32.totalorder %s468, 1
        %s470 = scalar_select %p469, %s468, 1
        %p471 = scmp.lt.s32.totalorder %s20, 0
        %s472 = scalar_select %p471, %s20, 0
        %s473 = sadd.s32 %s472, %s470
        %s474 = smul.addr %s473, 4
        %s475 = scalar_lea.vmem %s3, %s474
        // Predicated region
        $region82: #{yolo_pafpn_forward.86} parent=68 // pred_check
          %p476 = pneg %p135
        $region83: #{yolo_pafpn_forward.86} parent=68 // pred_check_branch
          %478 = sbr.rel (%p476) target = $region85
        $region84: #{yolo_pafpn_forward.86} parent=68 // pred_region
          %s479 = smul.u32 2, %s19
        $region85: #{yolo_pafpn_forward.86} parent=68 // pred_fallthru
          _
        // Predicated region
        $region86: #{yolo_pafpn_forward.86} parent=68 // pred_check
          %p480 = pneg %p135
        $region87: #{yolo_pafpn_forward.86} parent=68 // pred_check_branch
          %482 = sbr.rel (%p480) target = $region89
        $region88: #{yolo_pafpn_forward.86} parent=68 // pred_region
          %s483 = smul.u32 2, %s19
          %p484 = scmp.lt.s32.totalorder %s483, 1
          %s485 = scalar_select %p484, %s483, 1
          %p486 = scmp.lt.s32.totalorder %s20, 0
          %s487 = scalar_select %p486, %s20, 0
          %s488 = sadd.s32 %s487, %s485
          %s489 = smul.addr %s488, 4
          %s490 = scalar_lea.vmem %s3, %s489
        $region89: #{yolo_pafpn_forward.86} parent=68 // pred_fallthru
          _
      $region69: #{yolo_pafpn_forward.86} parent=5 // pred_fallthru
        _
      %p491 = scmp.le.s32.totalorder 2, %s9
      // Predicated region
      $region90: #{yolo_pafpn_forward.86} parent=5 // pred_check
        %p492 = pneg %p491
      $region91: #{yolo_pafpn_forward.86} parent=5 // pred_check_branch
        %494 = sbr.rel (%p492) target = $region93
      $region92: #{yolo_pafpn_forward.86} parent=5 // pred_region
        %s495 = ssub.s32 %s9, 2
      $region93: #{yolo_pafpn_forward.86} parent=5 // pred_fallthru
        _
    $region6: #{yolo_pafpn_forward.86} parent=1 // loop_footer
      %s13 = sadd.s32 1, %s9
    $region7: #{yolo_pafpn_forward.86} parent=1 // loop_footer_branch
      %8 = sbr.rel target = $region3
    $region8: #{yolo_pafpn_forward.86} parent=1 // loop_exit
      _

// kernel: yolo_pafpn_forward.89
$region0: #{yolo_pafpn_forward.89}
  #allocation0 [shape = 'u32[]', space=smem, size = 0x4, offset = 0x4, fixed_abs, tag = 'smem constant byte address 0x4 - core index']
  #allocation1 [shape = 'u32[144,128]{1,0:T(1,128)}', space=vmem, size = 0x12000, scoped, tag = 'internal scratch']
  #allocation2 [shape = 'f32[32,128]{1,0:T(8,128)}', space=vmem, size = 0x4000, scoped, tag = 'scratch operand']
  %s0 = inlined_call_operand.vmem [shape: bf16[32,256], index: 0, kind: input, shape index: {}]
  %s1 = inlined_call_operand.vmem [shape: bf16[256,128], index: 1, kind: input, shape index: {}]
  %s2 = inlined_call_operand.vmem [shape: f32[1,128], index: 2, kind: input, shape index: {}]
  %s3 = inlined_call_operand.vmem [shape: bf16[32,128], index: 3, kind: output, shape index: {}]
  %s4 = sld [smem:[#allocation0]]
  $region30: #{yolo_pafpn_forward.89} parent=0
    _
  %s6 = ssub.s32 1, %s4
  %s7 = scalar_select 0, %s6, %s4
  // Predicated region
  $region2: #{yolo_pafpn_forward.89} parent=0 // pred_check
    _
  $region3: #{yolo_pafpn_forward.89} parent=0 // pred_check_branch
    %9 = sbr.rel (0) target = $region5
  $region4: #{yolo_pafpn_forward.89} parent=0 // pred_region
    _
  $region5: #{yolo_pafpn_forward.89} parent=0 // pred_fallthru
    _
  // Predicated region
  $region6: #{yolo_pafpn_forward.89} parent=0 // pred_check
    _
  $region7: #{yolo_pafpn_forward.89} parent=0 // pred_check_branch
    %11 = sbr.rel (0) target = $region9
  $region8: #{yolo_pafpn_forward.89} parent=0 // pred_region
    _
  $region9: #{yolo_pafpn_forward.89} parent=0 // pred_fallthru
    _
  // Predicated region
  $region10: #{yolo_pafpn_forward.89} parent=0 // pred_check
    _
  $region11: #{yolo_pafpn_forward.89} parent=0 // pred_check_branch
    %13 = sbr.rel (0) target = $region13
  $region12: #{yolo_pafpn_forward.89} parent=0 // pred_region
    _
  $region13: #{yolo_pafpn_forward.89} parent=0 // pred_fallthru
    _
  %p15 = scmp.eq.s32.totalorder 0, 0
  // Predicated region
  $region14: #{yolo_pafpn_forward.89} parent=0 // pred_check
    %p16 = pneg %p15
  $region15: #{yolo_pafpn_forward.89} parent=0 // pred_check_branch
    %18 = sbr.rel (%p16) target = $region17
  $region16: #{yolo_pafpn_forward.89} parent=0 // pred_region
    %19 = vst [vmem:[#allocation2] sm:$0xff] 0.0
    %20 = vst [vmem:[#allocation2 + $0x8] sm:$0xff] 0.0
    %21 = vst [vmem:[#allocation2 + $0x10] sm:$0xff] 0.0
    %22 = vst [vmem:[#allocation2 + $0x18] sm:$0xff] 0.0
  $region17: #{yolo_pafpn_forward.89} parent=0 // pred_fallthru
    _
  %v23 = vld [vmem:[#allocation2] sm:$0xff]
  %v24 = vld [vmem:[#allocation2 + $0x8] sm:$0xff]
  %v25 = vld [vmem:[#allocation2 + $0x10] sm:$0xff]
  %v26 = vld [vmem:[#allocation2 + $0x18] sm:$0xff]
  %v27 = vld [vmem:[%s0] sm:$0xff]
  %v28 = vld [vmem:[%s0 + $0x8] sm:$0xff]
  %v29 = vld [vmem:[%s0 + $0x10] sm:$0xff]
  %v30 = vld [vmem:[%s0 + $0x18] sm:$0xff]
  %v31 = vld [vmem:[%s1] sm:$0xf]
  %v32 = vld [vmem:[%s1 + $0x4] sm:$0xf]
  %v33 = vld [vmem:[%s1 + $0x8] sm:$0xf]
  %v34 = vld [vmem:[%s1 + $0xc] sm:$0xf]
  %v35 = vld [vmem:[%s1 + $0x10] sm:$0xf]
  %v36 = vld [vmem:[%s1 + $0x14] sm:$0xf]
  %v37 = vld [vmem:[%s1 + $0x18] sm:$0xf]
  %v38 = vld [vmem:[%s1 + $0x1c] sm:$0xf]
  %v39 = vld [vmem:[%s1 + $0x20] sm:$0xf]
  %v40 = vld [vmem:[%s1 + $0x24] sm:$0xf]
  %v41 = vld [vmem:[%s1 + $0x28] sm:$0xf]
  %v42 = vld [vmem:[%s1 + $0x2c] sm:$0xf]
  %v43 = vld [vmem:[%s1 + $0x30] sm:$0xf]
  %v44 = vld [vmem:[%s1 + $0x34] sm:$0xf]
  %v45 = vld [vmem:[%s1 + $0x38] sm:$0xf]
  %v46 = vld [vmem:[%s1 + $0x3c] sm:$0xf]
  %v47 = vld [vmem:[%s1 + $0x40] sm:$0xf]
  %v48 = vld [vmem:[%s1 + $0x44] sm:$0xf]
  %v49 = vld [vmem:[%s1 + $0x48] sm:$0xf]
  %v50 = vld [vmem:[%s1 + $0x4c] sm:$0xf]
  %v51 = vld [vmem:[%s1 + $0x50] sm:$0xf]
  %v52 = vld [vmem:[%s1 + $0x54] sm:$0xf]
  %v53 = vld [vmem:[%s1 + $0x58] sm:$0xf]
  %v54 = vld [vmem:[%s1 + $0x5c] sm:$0xf]
  %v55 = vld [vmem:[%s1 + $0x60] sm:$0xf]
  %v56 = vld [vmem:[%s1 + $0x64] sm:$0xf]
  %v57 = vld [vmem:[%s1 + $0x68] sm:$0xf]
  %v58 = vld [vmem:[%s1 + $0x6c] sm:$0xf]
  %v59 = vld [vmem:[%s1 + $0x70] sm:$0xf]
  %v60 = vld [vmem:[%s1 + $0x74] sm:$0xf]
  %v61 = vld [vmem:[%s1 + $0x78] sm:$0xf]
  %v62 = vld [vmem:[%s1 + $0x7c] sm:$0xf]
  %v67 = vunpack.c.l.b16 %v27
  %v68 = vunpack.c.h.b16 %v27
  %v69 = vunpack.c.l.b16 %v28
  %v70 = vunpack.c.h.b16 %v28
  %v71 = vunpack.c.l.b16 %v29
  %v72 = vunpack.c.h.b16 %v29
  %v73 = vunpack.c.l.b16 %v30
  %v74 = vunpack.c.h.b16 %v30
  %v75 = vpack.c.b16 %v69, %v67
  %v76 = vpack.c.b16 %v70, %v68
  %v77 = vpack.c.b16 %v73, %v71
  %v78 = vpack.c.b16 %v74, %v72
  %v115 = vunpack.c.l.b16 %v31
  %v116 = vunpack.c.l.b16 %v32
  %v117 = vunpack.c.l.b16 %v33
  %v118 = vunpack.c.l.b16 %v34
  %v119 = vunpack.c.l.b16 %v35
  %v120 = vunpack.c.l.b16 %v36
  %v121 = vunpack.c.l.b16 %v37
  %v122 = vunpack.c.l.b16 %v38
  %v123 = vunpack.c.l.b16 %v39
  %v124 = vunpack.c.l.b16 %v40
  %v125 = vunpack.c.l.b16 %v41
  %v126 = vunpack.c.l.b16 %v42
  %v127 = vunpack.c.l.b16 %v43
  %v128 = vunpack.c.l.b16 %v44
  %v129 = vunpack.c.l.b16 %v45
  %v130 = vunpack.c.l.b16 %v46
  %v131 = vunpack.c.l.b16 %v47
  %v132 = vunpack.c.l.b16 %v48
  %v133 = vunpack.c.l.b16 %v49
  %v134 = vunpack.c.l.b16 %v50
  %v135 = vunpack.c.l.b16 %v51
  %v136 = vunpack.c.l.b16 %v52
  %v137 = vunpack.c.l.b16 %v53
  %v138 = vunpack.c.l.b16 %v54
  %v139 = vunpack.c.l.b16 %v55
  %v140 = vunpack.c.l.b16 %v56
  %v141 = vunpack.c.l.b16 %v57
  %v142 = vunpack.c.l.b16 %v58
  %v143 = vunpack.c.l.b16 %v59
  %v144 = vunpack.c.l.b16 %v60
  %v145 = vunpack.c.l.b16 %v61
  %v146 = vunpack.c.l.b16 %v62
  %v147 = vpack.c.b16 %v116, %v115
  %v148 = vpack.c.b16 %v118, %v117
  %v149 = vpack.c.b16 %v120, %v119
  %v150 = vpack.c.b16 %v122, %v121
  %v151 = vpack.c.b16 %v124, %v123
  %v152 = vpack.c.b16 %v126, %v125
  %v153 = vpack.c.b16 %v128, %v127
  %v154 = vpack.c.b16 %v130, %v129
  %v155 = vpack.c.b16 %v132, %v131
  %v156 = vpack.c.b16 %v134, %v133
  %v157 = vpack.c.b16 %v136, %v135
  %v158 = vpack.c.b16 %v138, %v137
  %v159 = vpack.c.b16 %v140, %v139
  %v160 = vpack.c.b16 %v142, %v141
  %v161 = vpack.c.b16 %v144, %v143
  %v162 = vpack.c.b16 %v146, %v145
  %179 = vmatprep.subr.bf16.mxu0 0
  %180 = vmatpush1.bf16.msra.mxu0 %v147
  %181 = vmatprep.subr.bf16.mxu0 0
  %182 = vmatpush1.bf16.msra.mxu0 %v148
  %183 = vmatprep.subr.bf16.mxu0 0
  %184 = vmatpush1.bf16.msra.mxu0 %v149
  %185 = vmatprep.subr.bf16.mxu0 0
  %186 = vmatpush1.bf16.msra.mxu0 %v150
  %187 = vmatprep.subr.bf16.mxu0 0
  %188 = vmatpush1.bf16.msra.mxu0 %v151
  %189 = vmatprep.subr.bf16.mxu0 0
  %190 = vmatpush1.bf16.msra.mxu0 %v152
  %191 = vmatprep.subr.bf16.mxu0 0
  %192 = vmatpush1.bf16.msra.mxu0 %v153
  %193 = vmatprep.subr.bf16.mxu0 0
  %194 = vmatpush1.bf16.msra.mxu0 %v154
  %195 = vmatprep.subr.bf16.mxu0 0
  %196 = vmatpush1.bf16.msra.mxu0 %v155
  %197 = vmatprep.subr.bf16.mxu0 0
  %198 = vmatpush1.bf16.msra.mxu0 %v156
  %199 = vmatprep.subr.bf16.mxu0 0
  %200 = vmatpush1.bf16.msra.mxu0 %v157
  %201 = vmatprep.subr.bf16.mxu0 0
  %202 = vmatpush1.bf16.msra.mxu0 %v158
  %203 = vmatprep.subr.bf16.mxu0 0
  %204 = vmatpush1.bf16.msra.mxu0 %v159
  %205 = vmatprep.subr.bf16.mxu0 0
  %206 = vmatpush1.bf16.msra.mxu0 %v160
  %207 = vmatprep.subr.bf16.mxu0 0
  %208 = vmatpush1.bf16.msra.mxu0 %v161
  %209 = vmatprep.subr.bf16.mxu0 0
  %210 = vmatpush1.bf16.msra.mxu0 %v162
  %211 = vmatprep.mubr.bf16.mxu0 %v76
  %212 = vmatmul.mubr.bf16.gmra.mrb[0].mxu0 %v75
  %v213 = vpop.f32.mrb[0].mxu0
  %v214 = vadd.f32 0.0, %v213
  %v215 = vpop.f32.mrb[0].mxu0
  %v216 = vpop.f32.mrb[0].mxu0
  %v217 = vadd.f32 0.0, %v216
  %v218 = vpop.f32.mrb[0].mxu0
  %219 = vmatprep.mubr.bf16.mxu0 %v78
  %220 = vmatmul.mubr.bf16.gmra.mrb[0].mxu0 %v77
  %v221 = vpop.f32.mrb[0].mxu0
  %v222 = vadd.f32 0.0, %v221
  %v223 = vpop.f32.mrb[0].mxu0
  %v224 = vpop.f32.mrb[0].mxu0
  %v225 = vadd.f32 0.0, %v224
  %v226 = vpop.f32.mrb[0].mxu0
  %227 = vdwg.mxu0
  %v228 = vadd.f32 %v23, %v214
  %v229 = vadd.f32 %v24, %v217
  %v230 = vadd.f32 %v25, %v222
  %v231 = vadd.f32 %v26, %v225
  %232 = vst [vmem:[#allocation2] sm:$0xff] %v228
  %233 = vst [vmem:[#allocation2 + $0x8] sm:$0xff] %v229
  %234 = vst [vmem:[#allocation2 + $0x10] sm:$0xff] %v230
  %235 = vst [vmem:[#allocation2 + $0x18] sm:$0xff] %v231
  // Predicated region
  $region18: #{yolo_pafpn_forward.89} parent=0 // pred_check
    %p236 = pneg %p15
  $region19: #{yolo_pafpn_forward.89} parent=0 // pred_check_branch
    %238 = sbr.rel (%p236) target = $region21
  $region20: #{yolo_pafpn_forward.89} parent=0 // pred_region
    %v239 = vld [vmem:[#allocation2] sm:$0xff]
    %v240 = vld [vmem:[#allocation2 + $0x8] sm:$0xff]
    %v241 = vld [vmem:[#allocation2 + $0x10] sm:$0xff]
    %v242 = vld [vmem:[#allocation2 + $0x18] sm:$0xff]
    %v243 = vld [vmem:[%s2] sm:$0x1]
    %v245 = vlaneseq
    %v246 = vshrl.u32 %v245, 7
    %v247 = vsub.s32 0, %v246
    %v248 = vrot.slane %v243, %v247
    %v250 = vadd.f32 %v239, %v248
    %v251 = vadd.f32 %v240, %v248
    %v252 = vadd.f32 %v241, %v248
    %v253 = vadd.f32 %v242, %v248
    %v254 = vand.u32 2147483647, %v250
    %v255 = vand.u32 2147483647, %v251
    %v256 = vand.u32 2147483647, %v252
    %v257 = vand.u32 2147483647, %v253
    %v258 = vsub.f32 0.0, %v254
    %v259 = vsub.f32 0.0, %v255
    %v260 = vsub.f32 0.0, %v256
    %v261 = vsub.f32 0.0, %v257
    %v262 = vmul.f32 %v258, 1.442695
    %v263 = vpow.pop %v262
    %v264 = vmul.f32 %v259, 1.442695
    %v265 = vpow.pop %v264
    %v266 = vmul.f32 %v260, 1.442695
    %v267 = vpow.pop %v266
    %v268 = vmul.f32 %v261, 1.442695
    %v269 = vpow.pop %v268
    %v270 = vadd.f32 %v263, 1.0
    %v271 = vadd.f32 %v265, 1.0
    %v272 = vadd.f32 %v267, 1.0
    %v273 = vadd.f32 %v269, 1.0
    %v274 = vrcp.pop %v270
    %v275 = vrcp.pop %v271
    %v276 = vrcp.pop %v272
    %v277 = vrcp.pop %v273
    %vm278 = vcmp.ge.f32.partialorder %v250, 0.0
    %vm279 = vcmp.ge.f32.partialorder %v251, 0.0
    %vm280 = vcmp.ge.f32.partialorder %v252, 0.0
    %vm281 = vcmp.ge.f32.partialorder %v253, 0.0
    %v282 = vsub.f32 1.0, %v274
    %v283 = vsub.f32 1.0, %v275
    %v284 = vsub.f32 1.0, %v276
    %v285 = vsub.f32 1.0, %v277
    %v286 = vsel %vm278, %v274, %v282
    %v287 = vsel %vm279, %v275, %v283
    %v288 = vsel %vm280, %v276, %v284
    %v289 = vsel %vm281, %v277, %v285
    %v290 = vmul.f32 %v250, %v286
    %v291 = vmul.f32 %v251, %v287
    %v292 = vmul.f32 %v252, %v288
    %v293 = vmul.f32 %v253, %v289
    %v294 = vpack.c.bf16 %v291, %v290
    %v295 = vpack.c.bf16 %v293, %v292
    %v298 = vunpack.c.l.b16 %v294
    %v299 = vunpack.c.h.b16 %v294
    %v300 = vunpack.c.l.b16 %v295
    %v301 = vunpack.c.h.b16 %v295
    %v302 = vpack.c.b16 %v298, %v298
    %v303 = vpack.c.b16 %v299, %v299
    %v304 = vpack.c.b16 %v300, %v300
    %v305 = vpack.c.b16 %v301, %v301
    %310 = vst [vmem:[%s3] sm:$0xf] %v302
    %311 = vst [vmem:[%s3 + $0x4] sm:$0xf] %v303
    %312 = vst [vmem:[%s3 + $0x8] sm:$0xf] %v304
    %313 = vst [vmem:[%s3 + $0xc] sm:$0xf] %v305
  $region21: #{yolo_pafpn_forward.89} parent=0 // pred_fallthru
    _
  // Predicated region
  $region22: #{yolo_pafpn_forward.89} parent=0 // pred_check
    _
  $region23: #{yolo_pafpn_forward.89} parent=0 // pred_check_branch
    %315 = sbr.rel (0) target = $region25
  $region24: #{yolo_pafpn_forward.89} parent=0 // pred_region
    _
  $region25: #{yolo_pafpn_forward.89} parent=0 // pred_fallthru
    _
  // Predicated region
  $region26: #{yolo_pafpn_forward.89} parent=0 // pred_check
    _
  $region27: #{yolo_pafpn_forward.89} parent=0 // pred_check_branch
    %317 = sbr.rel (0) target = $region29
  $region28: #{yolo_pafpn_forward.89} parent=0 // pred_region
    _
  $region29: #{yolo_pafpn_forward.89} parent=0 // pred_fallthru
    _

</llo_original>
